<compile_context>
chip_gen: v6e
topology: v6e:2x2x1
jax: 0.10.0
libtpu: 0.0.40
codegen_flags: <defaults>
</compile_context>

<pallas_src>
import jax
import jax.numpy as jnp
from jax.experimental import pallas as pl
from jax.experimental.pallas import tpu as pltpu


# ----------------------------------------------------------------------------
# Fused kernel: GRU1 + GRU5 stack + Dense1000 -> Dense64 -> CLS -> Softmax
# PyTorch GRU gate equations (r, z, n order):
#   r = sig(Wir x + bir + Whr h + bhr)
#   z = sig(Wiz x + biz + Whz h + bhz)
#   n = tanh(Win x + bin + r * (Whn h + bhn))
#   h = (1 - z) * n + z * h
# ----------------------------------------------------------------------------
def _rnn_net_kernel(
        x_ref, w1ih_ref, w1hh_ref, b1i_ref, b1hn_ref,
        w5ih_ref, w5hh_ref, b5i_ref, b5hn_ref,
        wd1_hbm, bd1_ref, wd2_hbm, bd2_ref, wcls_ref, bcls_ref,
        o_ref,
        y_buf, wd1_v, wd2_v, dma_sem):
    f32 = jnp.float32
    bf16 = jnp.bfloat16

    B, T, C = x_ref.shape
    H1 = w1hh_ref.shape[0]                 # GRU1 hidden (= time_slot)
    depth = w5ih_ref.shape[0]
    H2 = w5hh_ref.shape[1] // 2            # GRU5 hidden per direction
    G2 = 3 * H2                            # per-direction fused gate width

    # ---- overlap the dense-weight HBM->VMEM DMA with the GRU compute ------
    cp1 = pltpu.make_async_copy(wd1_hbm, wd1_v, dma_sem.at[0])
    cp2 = pltpu.make_async_copy(wd2_hbm, wd2_v, dma_sem.at[1])
    cp1.start()
    cp2.start()

    # ------------------------- GRU1 (batch_first) --------------------------
    x = x_ref[...].astype(f32)             # (B, T, C)
    w1ih = w1ih_ref[...]                   # (C, 3*H1)  columns = [r|z|n]
    w1hh = w1hh_ref[...]                   # (H1, 3*H1)
    b1i = b1i_ref[...]                     # (1, 3*H1)  [bir+bhr, biz+bhz, bin]
    b1hn = b1hn_ref[...]                   # (1, H1)

    # Hoisted input projection for every (b, t): with tiny C this is a
    # broadcast multiply per channel, not a per-step matmul.
    xp = x[:, :, 0:1] * w1ih[0:1, :] + b1i                   # (B, T, 3*H1)
    for c in range(1, C):
        xp = xp + x[:, :, c:c + 1] * w1ih[c:c + 1, :]

    h = jnp.zeros((B, H1), f32)
    for t in range(T):                     # static unroll: ONE matmul per step
        gh = jnp.dot(h, w1hh, preferred_element_type=f32)    # (B, 3*H1)
        gt = xp[:, t, :]                                     # (B, 3*H1)
        r = jax.nn.sigmoid(gt[:, 0:H1] + gh[:, 0:H1])
        z = jax.nn.sigmoid(gt[:, H1:2 * H1] + gh[:, H1:2 * H1])
        n = jnp.tanh(gt[:, 2 * H1:] + r * (gh[:, 2 * H1:] + b1hn))
        h = (1.0 - z) * n + z * h
        y_buf[:, t, :] = h                 # stays in VMEM; no HBM round-trip

    # --------------- GRU5 stack: depth layers, bidirectional ---------------
    # The (B, T, H1) GRU1 output is interpreted as (seq=B, batch=T, feat),
    # exactly like the PyTorch reference (batch_first=False quirk).
    in0_flat = y_buf[...].reshape(B * T, H1)          # row = seq*T + batch

    f_flat = None                          # (B*T, H2) fwd hidden, seq-major
    r_flat = None                          # (B*T, H2) rev hidden, seq-major
    for l in range(depth):
        w5 = w5ih_ref[l]                   # (in, 6*H2) = [fwd r|z|n | rev r|z|n]
        whh = w5hh_ref[l]                  # (2*H2, 6*H2) block-diag (fwd, rev)
        bi5 = b5i_ref[l]                   # (1, 6*H2)
        bhn = b5hn_ref[l]                  # (1, 2*H2) = [bhn_fwd | bhn_rev]

        # Hoisted input projection: one GEMM per layer for BOTH directions and
        # all three gates.  Deeper layers use split-weight dot pairs instead of
        # materializing the bidirectional feature concat.
        if l == 0:
            g_all = jnp.dot(in0_flat, w5, preferred_element_type=f32) + bi5
        else:
            g_all = (jnp.dot(f_flat, w5[0:H2, :], preferred_element_type=f32)
                     + jnp.dot(r_flat, w5[H2:2 * H2, :],
                               preferred_element_type=f32) + bi5)

        # Fused bidirectional recurrence: h = [h_fwd | h_rev], one matmul/step.
        h = jnp.zeros((T, 2 * H2), f32)
        outs_f = [None] * B
        outs_r = [None] * B
        for k in range(B):                 # static unroll over the (short) seq
            kr = B - 1 - k
            gh = jnp.dot(h, whh, preferred_element_type=f32)     # (T, 6*H2)
            gf = g_all[k * T:(k + 1) * T, 0:G2]                  # fwd @ seq k
            gr = g_all[kr * T:(kr + 1) * T, G2:2 * G2]           # rev @ seq kr
            # forward direction
            rf = jax.nn.sigmoid(gf[:, 0:H2] + gh[:, 0:H2])
            zf = jax.nn.sigmoid(gf[:, H2:2 * H2] + gh[:, H2:2 * H2])
            nf = jnp.tanh(gf[:, 2 * H2:]
                          + rf * (gh[:, 2 * H2:G2] + bhn[:, 0:H2]))
            hf = (1.0 - zf) * nf + zf * h[:, 0:H2]
            # reverse direction
            rr = jax.nn.sigmoid(gr[:, 0:H2] + gh[:, G2:G2 + H2])
            zr = jax.nn.sigmoid(gr[:, H2:2 * H2] + gh[:, G2 + H2:G2 + 2 * H2])
            nr = jnp.tanh(gr[:, 2 * H2:]
                          + rr * (gh[:, G2 + 2 * H2:] + bhn[:, H2:2 * H2]))
            hr = (1.0 - zr) * nr + zr * h[:, H2:2 * H2]
            h = jnp.concatenate([hf, hr], axis=-1)               # (T, 2*H2)
            outs_f[k] = hf                 # fwd output for seq position k
            outs_r[kr] = hr                # rev output for seq position kr
        f_flat = jnp.concatenate(outs_f, axis=0)                 # (B*T, H2)
        r_flat = jnp.concatenate(outs_r, axis=0)                 # (B*T, H2)

    # -------- Dense1000 -> (Dropout: eval identity) -> Dense64 -> CLS ------
    cp1.wait()
    cp2.wait()
    wd1 = wd1_v[...]                       # (H1, 1024) bf16
    wd2 = wd2_v[...]                       # (1024, H1) bf16
    # TODO(synk): nn.Dropout(0.5) is stochastic in train mode; eval-mode
    # identity semantics are implemented here.
    h1 = (jnp.dot(f_flat.astype(bf16), wd1[0:H2, :], preferred_element_type=f32)
          + jnp.dot(r_flat.astype(bf16), wd1[H2:2 * H2, :],
                    preferred_element_type=f32)
          + bd1_ref[...])                                        # (B*T, 1024)
    h2 = (jnp.dot(h1.astype(bf16), wd2, preferred_element_type=f32)
          + bd2_ref[...])                                        # (B*T, H1)
    logits = (jnp.dot(h2, wcls_ref[...], preferred_element_type=f32)
              + bcls_ref[...])                     # (B*T, 128), pads = -1e30
    m = jnp.max(logits, axis=-1, keepdims=True)
    e = jnp.exp(logits - m)                        # padded columns -> 0
    probs = e / jnp.sum(e, axis=-1, keepdims=True)  # exact normalization
    o_ref[...] = probs.reshape(B, T, -1).astype(o_ref.dtype)


# ----------------------------------------------------------------------------
# pallas_call wrapper (single grid step; everything resident in VMEM)
# ----------------------------------------------------------------------------
def _full_spec(a):
    nd = a.ndim
    return pl.BlockSpec(a.shape, lambda i, _nd=nd: (0,) * _nd)


def _run_model(x, p):
    B, T, _ = x.shape
    H1 = p["w1hh"].shape[0]
    CP = p["wcls"].shape[1]

    args = (x, p["w1ih"], p["w1hh"], p["b1i"], p["b1hn"],
            p["w5ih"], p["w5hh"], p["b5i"], p["b5hn"],
            p["wd1"], p["bd1"], p["wd2"], p["bd2"], p["wcls"], p["bcls"])
    in_specs = [
        _full_spec(x), _full_spec(p["w1ih"]), _full_spec(p["w1hh"]),
        _full_spec(p["b1i"]), _full_spec(p["b1hn"]),
        _full_spec(p["w5ih"]), _full_spec(p["w5hh"]),
        _full_spec(p["b5i"]), _full_spec(p["b5hn"]),
        pl.BlockSpec(memory_space=pl.ANY),        # wd1 (bf16): manual DMA
        _full_spec(p["bd1"]),
        pl.BlockSpec(memory_space=pl.ANY),        # wd2 (bf16): manual DMA
        _full_spec(p["bd2"]),
        _full_spec(p["wcls"]), _full_spec(p["bcls"]),
    ]
    return pl.pallas_call(
        _rnn_net_kernel,
        out_shape=jax.ShapeDtypeStruct((B, T, CP), jnp.float32),
        grid_spec=pltpu.PrefetchScalarGridSpec(
            num_scalar_prefetch=0,
            grid=(1,),
            in_specs=in_specs,
            out_specs=pl.BlockSpec((B, T, CP), lambda i: (0, 0, 0)),
            scratch_shapes=[
                pltpu.VMEM((B, T, H1), jnp.float32),      # GRU1 output buffer
                pltpu.VMEM(p["wd1"].shape, jnp.bfloat16),  # Dense1000 weights
                pltpu.VMEM(p["wd2"].shape, jnp.bfloat16),  # Dense64 weights
                pltpu.SemaphoreType.DMA((2,)),
            ]),
        compiler_params=pltpu.CompilerParams(
            dimension_semantics=("arbitrary",)),
    )(*args)


def model_forward(x, params):
    out_padded = _run_model(x.astype(jnp.float32), params)
    return out_padded[..., :params["num_class"]]           # (B, T, num_class)


# ----------------------------------------------------------------------------
# Parameter init (deterministic, PyTorch-style uniform(-1/sqrt(fan), +...))
# in raw PyTorch layout, plus a ONE-TIME prep step that transposes, fuses
# per-gate / per-direction and pads everything into kernel-ready arrays.
# ----------------------------------------------------------------------------
def _uniform(key, shape, k):
    return jax.random.uniform(key, shape, jnp.float32, minval=-k, maxval=k)


def init_params(key, time_slot=64, depth=5, num_class=4, channel=1):
    params = {}
    H1 = time_slot
    k1 = 1.0 / (H1 ** 0.5)
    key, *ks = jax.random.split(key, 5)
    params["gru1"] = (
        _uniform(ks[0], (3 * H1, channel), k1),   # weight_ih_l0
        _uniform(ks[1], (3 * H1, H1), k1),        # weight_hh_l0
        _uniform(ks[2], (3 * H1,), k1),           # bias_ih_l0
        _uniform(ks[3], (3 * H1,), k1),           # bias_hh_l0
    )
    H2 = time_slot // 2
    k2 = 1.0 / (H2 ** 0.5)
    layers = []
    for layer in range(depth):
        in_sz = time_slot if layer == 0 else 2 * H2
        dirs = []
        for _ in range(2):  # forward, reverse
            key, *ks = jax.random.split(key, 5)
            dirs.append((
                _uniform(ks[0], (3 * H2, in_sz), k2),
                _uniform(ks[1], (3 * H2, H2), k2),
                _uniform(ks[2], (3 * H2,), k2),
                _uniform(ks[3], (3 * H2,), k2),
            ))
        layers.append(tuple(dirs))
    params["gru5"] = layers

    def lin(k_, out_f, in_f):
        kk = 1.0 / (in_f ** 0.5)
        ka, kb = jax.random.split(k_)
        return _uniform(ka, (out_f, in_f), kk), _uniform(kb, (out_f,), kk)

    key, ka, kb, kc = jax.random.split(key, 4)
    params["dense1000"] = lin(ka, 1000, time_slot)
    params["dense64"] = lin(kb, time_slot, 1000)
    params["cls"] = lin(kc, num_class, time_slot)
    return params


def prepare_params(raw):
    """One-time conversion of PyTorch-layout params into kernel-ready arrays."""
    f32 = jnp.float32
    bf16 = jnp.bfloat16

    # ---- GRU1: gate-fused [r|z|n] column layout ----------------------------
    wih1, whh1, bih1, bhh1 = raw["gru1"]
    H1 = whh1.shape[1]
    w1ih = jnp.asarray(wih1, f32).T                      # (C, 3*H1)
    w1hh = jnp.asarray(whh1, f32).T                      # (H1, 3*H1)
    b1i = jnp.concatenate([
        bih1[0:H1] + bhh1[0:H1],                         # r: bir + bhr
        bih1[H1:2 * H1] + bhh1[H1:2 * H1],               # z: biz + bhz
        bih1[2 * H1:3 * H1],                             # n: input-side bias
    ]).reshape(1, 3 * H1).astype(f32)
    b1hn = bhh1[2 * H1:3 * H1].reshape(1, H1).astype(f32)

    # ---- GRU5: gate-fused + direction-fused (block-diag) layouts -----------
    w5ih_l, w5hh_l, b5i_l, b5hn_l = [], [], [], []
    for fwd, rev in raw["gru5"]:
        wih_f, whh_f, bih_f, bhh_f = fwd
        wih_r, whh_r, bih_r, bhh_r = rev
        H2 = whh_f.shape[1]
        # input weights: (in, 6*H2), columns = [fwd r|z|n | rev r|z|n]
        w5ih_l.append(jnp.concatenate(
            [jnp.asarray(wih_f, f32).T, jnp.asarray(wih_r, f32).T], axis=1))
        # block-diagonal recurrent weights: h = [h_fwd | h_rev]
        whh = jnp.zeros((2 * H2, 6 * H2), f32)
        whh = whh.at[0:H2, 0:3 * H2].set(jnp.asarray(whh_f, f32).T)
        whh = whh.at[H2:2 * H2, 3 * H2:6 * H2].set(jnp.asarray(whh_r, f32).T)
        w5hh_l.append(whh)

        def _ibias(bih, bhh, H=H2):
            return jnp.concatenate([
                bih[0:H] + bhh[0:H],                     # r
                bih[H:2 * H] + bhh[H:2 * H],             # z
                bih[2 * H:3 * H],                        # n (input side)
            ])
        b5i_l.append(jnp.concatenate(
            [_ibias(bih_f, bhh_f),
             _ibias(bih_r, bhh_r)]).reshape(1, 6 * H2).astype(f32))
        b5hn_l.append(jnp.concatenate(
            [bhh_f[2 * H2:3 * H2],
             bhh_r[2 * H2:3 * H2]]).reshape(1, 2 * H2).astype(f32))

    prep = {
        "w1ih": w1ih, "w1hh": w1hh, "b1i": b1i, "b1hn": b1hn,
        "w5ih": jnp.stack(w5ih_l, 0), "w5hh": jnp.stack(w5hh_l, 0),
        "b5i": jnp.stack(b5i_l, 0), "b5hn": jnp.stack(b5hn_l, 0),
    }

    # ---- MLP: bf16 weights, Dense1000 padded 1000->1024, classes -> 128 ----
    w1d, b1d = raw["dense1000"]            # (1000, ts), (1000,)
    w2d, b2d = raw["dense64"]              # (ts, 1000), (ts,)
    w3d, b3d = raw["cls"]                  # (nc, ts), (nc,)
    ts = w1d.shape[1]
    D1 = w1d.shape[0]
    D1P = ((D1 + 127) // 128) * 128        # 1000 -> 1024 (lane aligned)
    prep["wd1"] = jnp.zeros((ts, D1P), bf16).at[:, 0:D1].set(
        jnp.asarray(w1d, f32).T.astype(bf16))
    prep["bd1"] = jnp.zeros((1, D1P), f32).at[0, 0:D1].set(
        jnp.asarray(b1d, f32))
    prep["wd2"] = jnp.zeros((D1P, ts), bf16).at[0:D1, :].set(
        jnp.asarray(w2d, f32).T.astype(bf16))
    prep["bd2"] = jnp.asarray(b2d, f32).reshape(1, ts)
    nc = int(w3d.shape[0])
    CP = max(128, ((nc + 127) // 128) * 128)          # lane-dense class axis
    prep["wcls"] = jnp.zeros((ts, CP), f32).at[:, 0:nc].set(
        jnp.asarray(w3d, f32).T)
    prep["bcls"] = jnp.full((1, CP), -1e30, f32).at[0, 0:nc].set(
        jnp.asarray(b3d, f32))
    prep["num_class"] = nc
    return prep


if __name__ == "__main__":
    TIME_SLOT, DEPTH, NUM_CLASS, CHANNEL = 64, 5, 4, 1
    B, T = 2, 8

    key = jax.random.PRNGKey(0)
    kx, kp = jax.random.split(key)
    x = jax.random.normal(kx, (B, T, CHANNEL), jnp.float32)
    raw = init_params(kp, TIME_SLOT, DEPTH, NUM_CLASS, CHANNEL)
    params = prepare_params(raw)       # one-time weight prep (no per-forward transposes)

    out = jax.block_until_ready(model_forward(x, params))

    assert out.shape == (B, T, NUM_CLASS), out.shape
    assert bool(jnp.all(jnp.isfinite(out)))
    # exact softmax normalization -> tight tolerance
    assert bool(jnp.allclose(jnp.sum(out, axis=2), 1.0, atol=1e-3))
    print("KERNEL_OK")
</pallas_src>

<mosaic_0001>
module attributes {stable_mosaic.version = 11 : i64} {
  func.func @_rnn_net_kernel(%arg0: i32, %arg1: memref<2x8x1xf32, #tpu.memory_space<vmem>>, %arg2: memref<1x192xf32, #tpu.memory_space<vmem>>, %arg3: memref<64x192xf32, #tpu.memory_space<vmem>>, %arg4: memref<1x192xf32, #tpu.memory_space<vmem>>, %arg5: memref<1x64xf32, #tpu.memory_space<vmem>>, %arg6: memref<5x64x192xf32, #tpu.memory_space<vmem>>, %arg7: memref<5x64x192xf32, #tpu.memory_space<vmem>>, %arg8: memref<5x1x192xf32, #tpu.memory_space<vmem>>, %arg9: memref<5x1x64xf32, #tpu.memory_space<vmem>>, %arg10: memref<64x1024xbf16, #tpu.memory_space<any>>, %arg11: memref<1x1024xf32, #tpu.memory_space<vmem>>, %arg12: memref<1024x64xbf16, #tpu.memory_space<any>>, %arg13: memref<1x64xf32, #tpu.memory_space<vmem>>, %arg14: memref<64x128xf32, #tpu.memory_space<vmem>>, %arg15: memref<1x128xf32, #tpu.memory_space<vmem>>, %arg16: memref<2x8x128xf32, #tpu.memory_space<vmem>>, %arg17: memref<2x8x64xf32, #tpu.memory_space<vmem>>, %arg18: memref<64x1024xbf16, #tpu.memory_space<vmem>>, %arg19: memref<1024x64xbf16, #tpu.memory_space<vmem>>, %arg20: memref<2x!tpu.dma_semaphore, #tpu.memory_space<semaphore_mem>>) attributes {dimension_semantics = [#tpu.dimension_semantics<arbitrary>], iteration_bounds = array<i64: 1>, scalar_prefetch = 0 : i64, scratch_operands = 4 : i64, tpu.core_type = #tpu.core_type<tc>, window_params = [{pipeline_mode = #tpu.pipeline_mode<synchronous>, transform_indices = @transform_0, window_bounds = array<i64: 2, 8, 1>}, {pipeline_mode = #tpu.pipeline_mode<synchronous>, transform_indices = @transform_1, window_bounds = array<i64: 1, 192>}, {pipeline_mode = #tpu.pipeline_mode<synchronous>, transform_indices = @transform_2, window_bounds = array<i64: 64, 192>}, {pipeline_mode = #tpu.pipeline_mode<synchronous>, transform_indices = @transform_3, window_bounds = array<i64: 1, 192>}, {pipeline_mode = #tpu.pipeline_mode<synchronous>, transform_indices = @transform_4, window_bounds = array<i64: 1, 64>}, {pipeline_mode = #tpu.pipeline_mode<synchronous>, transform_indices = @transform_5, window_bounds = array<i64: 5, 64, 192>}, {pipeline_mode = #tpu.pipeline_mode<synchronous>, transform_indices = @transform_6, window_bounds = array<i64: 5, 64, 192>}, {pipeline_mode = #tpu.pipeline_mode<synchronous>, transform_indices = @transform_7, window_bounds = array<i64: 5, 1, 192>}, {pipeline_mode = #tpu.pipeline_mode<synchronous>, transform_indices = @transform_8, window_bounds = array<i64: 5, 1, 64>}, {}, {pipeline_mode = #tpu.pipeline_mode<synchronous>, transform_indices = @transform_10, window_bounds = array<i64: 1, 1024>}, {}, {pipeline_mode = #tpu.pipeline_mode<synchronous>, transform_indices = @transform_12, window_bounds = array<i64: 1, 64>}, {pipeline_mode = #tpu.pipeline_mode<synchronous>, transform_indices = @transform_13, window_bounds = array<i64: 64, 128>}, {pipeline_mode = #tpu.pipeline_mode<synchronous>, transform_indices = @transform_14, window_bounds = array<i64: 1, 128>}, {pipeline_mode = #tpu.pipeline_mode<synchronous>, transform_indices = @transform_15, window_bounds = array<i64: 2, 8, 128>}]} {
    %c0_i32 = arith.constant 0 : i32
    %0 = tpu.memref_slice %arg20[%c0_i32] : memref<2x!tpu.dma_semaphore, #tpu.memory_space<semaphore_mem>> -> memref<1x!tpu.dma_semaphore, #tpu.memory_space<semaphore_mem>>
    %1 = tpu.memref_squeeze %0 : memref<1x!tpu.dma_semaphore, #tpu.memory_space<semaphore_mem>> -> memref<!tpu.dma_semaphore, #tpu.memory_space<semaphore_mem>>
    tpu.enqueue_dma source(%arg10 : memref<64x1024xbf16, #tpu.memory_space<any>>) target(%arg18 : memref<64x1024xbf16, #tpu.memory_space<vmem>>) target_semaphore(%1 : memref<!tpu.dma_semaphore, #tpu.memory_space<semaphore_mem>>)
    %c1_i32 = arith.constant 1 : i32
    %2 = tpu.memref_slice %arg20[%c1_i32] : memref<2x!tpu.dma_semaphore, #tpu.memory_space<semaphore_mem>> -> memref<1x!tpu.dma_semaphore, #tpu.memory_space<semaphore_mem>>
    %3 = tpu.memref_squeeze %2 : memref<1x!tpu.dma_semaphore, #tpu.memory_space<semaphore_mem>> -> memref<!tpu.dma_semaphore, #tpu.memory_space<semaphore_mem>>
    tpu.enqueue_dma source(%arg12 : memref<1024x64xbf16, #tpu.memory_space<any>>) target(%arg19 : memref<1024x64xbf16, #tpu.memory_space<vmem>>) target_semaphore(%3 : memref<!tpu.dma_semaphore, #tpu.memory_space<semaphore_mem>>)
    %c0 = arith.constant 0 : index
    %c0_0 = arith.constant 0 : index
    %c0_1 = arith.constant 0 : index
    %4 = vector.load %arg1[%c0, %c0_0, %c0_1] : memref<2x8x1xf32, #tpu.memory_space<vmem>>, vector<2x8x1xf32>
    %c0_2 = arith.constant 0 : index
    %c0_3 = arith.constant 0 : index
    %5 = vector.load %arg2[%c0_2, %c0_3] : memref<1x192xf32, #tpu.memory_space<vmem>>, vector<1x192xf32>
    %c0_4 = arith.constant 0 : index
    %c0_5 = arith.constant 0 : index
    %6 = vector.load %arg3[%c0_4, %c0_5] : memref<64x192xf32, #tpu.memory_space<vmem>>, vector<64x192xf32>
    %c0_6 = arith.constant 0 : index
    %c0_7 = arith.constant 0 : index
    %7 = vector.load %arg4[%c0_6, %c0_7] : memref<1x192xf32, #tpu.memory_space<vmem>>, vector<1x192xf32>
    %c0_8 = arith.constant 0 : index
    %c0_9 = arith.constant 0 : index
    %8 = vector.load %arg5[%c0_8, %c0_9] : memref<1x64xf32, #tpu.memory_space<vmem>>, vector<1x64xf32>
    %9 = vector.shape_cast %5 : vector<1x192xf32> to vector<1x1x192xf32>
    %10 = vector.broadcast %4 : vector<2x8x1xf32> to vector<2x8x192xf32>
    %11 = vector.broadcast %9 : vector<1x1x192xf32> to vector<2x8x192xf32>
    %12 = arith.mulf %10, %11 : vector<2x8x192xf32>
    %13 = vector.shape_cast %7 : vector<1x192xf32> to vector<1x1x192xf32>
    %14 = vector.broadcast %13 : vector<1x1x192xf32> to vector<2x8x192xf32>
    %15 = arith.addf %12, %14 : vector<2x8x192xf32>
    %cst = arith.constant 0.000000e+00 : f32
    %16 = vector.broadcast %cst : f32 to vector<2x64xf32>
    %cst_10 = arith.constant dense<0.000000e+00> : vector<2x192xf32>
    %17 = tpu.matmul %16, %6, %cst_10 {dimension_numbers = #tpu.dot_dimension_numbers<[1], [0], [0], [1], [0, 0, 1, 1], [], []>} : vector<2x64xf32>, vector<64x192xf32>, vector<2x192xf32> -> vector<2x192xf32>
    %18 = vector.extract_strided_slice %15 {offsets = [0, 0, 0], sizes = [2, 1, 192], strides = [1, 1, 1]} : vector<2x8x192xf32> to vector<2x1x192xf32>
    %19 = vector.shape_cast %18 : vector<2x1x192xf32> to vector<2x192xf32>
    %20 = vector.extract_strided_slice %19 {offsets = [0, 0], sizes = [2, 64], strides = [1, 1]} : vector<2x192xf32> to vector<2x64xf32>
    %21 = vector.extract_strided_slice %17 {offsets = [0, 0], sizes = [2, 64], strides = [1, 1]} : vector<2x192xf32> to vector<2x64xf32>
    %22 = arith.addf %20, %21 : vector<2x64xf32>
    %23 = arith.negf %22 : vector<2x64xf32>
    %24 = math.exp %23 : vector<2x64xf32>
    %cst_11 = arith.constant 1.000000e+00 : f32
    %25 = vector.broadcast %cst_11 : f32 to vector<2x64xf32>
    %26 = arith.addf %25, %24 : vector<2x64xf32>
    %27 = arith.divf %25, %26 : vector<2x64xf32>
    %28 = vector.extract_strided_slice %19 {offsets = [0, 64], sizes = [2, 64], strides = [1, 1]} : vector<2x192xf32> to vector<2x64xf32>
    %29 = vector.extract_strided_slice %17 {offsets = [0, 64], sizes = [2, 64], strides = [1, 1]} : vector<2x192xf32> to vector<2x64xf32>
    %30 = arith.addf %28, %29 : vector<2x64xf32>
    %31 = arith.negf %30 : vector<2x64xf32>
    %32 = math.exp %31 : vector<2x64xf32>
    %cst_12 = arith.constant 1.000000e+00 : f32
    %33 = vector.broadcast %cst_12 : f32 to vector<2x64xf32>
    %34 = arith.addf %33, %32 : vector<2x64xf32>
    %35 = arith.divf %33, %34 : vector<2x64xf32>
    %36 = vector.extract_strided_slice %19 {offsets = [0, 128], sizes = [2, 64], strides = [1, 1]} : vector<2x192xf32> to vector<2x64xf32>
    %37 = vector.extract_strided_slice %17 {offsets = [0, 128], sizes = [2, 64], strides = [1, 1]} : vector<2x192xf32> to vector<2x64xf32>
    %38 = vector.broadcast %8 : vector<1x64xf32> to vector<2x64xf32>
    %39 = arith.addf %37, %38 : vector<2x64xf32>
    %40 = arith.mulf %27, %39 : vector<2x64xf32>
    %41 = arith.addf %36, %40 : vector<2x64xf32>
    %42 = math.tanh %41 : vector<2x64xf32>
    %cst_13 = arith.constant 1.000000e+00 : f32
    %43 = vector.broadcast %cst_13 : f32 to vector<2x64xf32>
    %44 = arith.subf %43, %35 : vector<2x64xf32>
    %45 = arith.mulf %44, %42 : vector<2x64xf32>
    %46 = arith.mulf %35, %16 : vector<2x64xf32>
    %47 = arith.addf %45, %46 : vector<2x64xf32>
    %c0_14 = arith.constant 0 : index
    %c0_15 = arith.constant 0 : index
    %c0_16 = arith.constant 0 : index
    %48 = vector.load %arg17[%c0_14, %c0_15, %c0_16] : memref<2x8x64xf32, #tpu.memory_space<vmem>>, vector<2x1x64xf32>
    %49 = vector.shape_cast %48 : vector<2x1x64xf32> to vector<2x64xf32>
    %50 = vector.shape_cast %47 : vector<2x64xf32> to vector<2x1x64xf32>
    tpu.vector_store %arg17[%c0_14, %c0_15, %c0_16], %50 {strides = array<i32>} : memref<2x8x64xf32, #tpu.memory_space<vmem>>, vector<2x1x64xf32>,
    %cst_17 = arith.constant dense<0.000000e+00> : vector<2x192xf32>
    %51 = tpu.matmul %47, %6, %cst_17 {dimension_numbers = #tpu.dot_dimension_numbers<[1], [0], [0], [1], [0, 0, 1, 1], [], []>} : vector<2x64xf32>, vector<64x192xf32>, vector<2x192xf32> -> vector<2x192xf32>
    %52 = vector.extract_strided_slice %15 {offsets = [0, 1, 0], sizes = [2, 1, 192], strides = [1, 1, 1]} : vector<2x8x192xf32> to vector<2x1x192xf32>
    %53 = vector.shape_cast %52 : vector<2x1x192xf32> to vector<2x192xf32>
    %54 = vector.extract_strided_slice %53 {offsets = [0, 0], sizes = [2, 64], strides = [1, 1]} : vector<2x192xf32> to vector<2x64xf32>
    %55 = vector.extract_strided_slice %51 {offsets = [0, 0], sizes = [2, 64], strides = [1, 1]} : vector<2x192xf32> to vector<2x64xf32>
    %56 = arith.addf %54, %55 : vector<2x64xf32>
    %57 = arith.negf %56 : vector<2x64xf32>
    %58 = math.exp %57 : vector<2x64xf32>
    %cst_18 = arith.constant 1.000000e+00 : f32
    %59 = vector.broadcast %cst_18 : f32 to vector<2x64xf32>
    %60 = arith.addf %59, %58 : vector<2x64xf32>
    %61 = arith.divf %59, %60 : vector<2x64xf32>
    %62 = vector.extract_strided_slice %53 {offsets = [0, 64], sizes = [2, 64], strides = [1, 1]} : vector<2x192xf32> to vector<2x64xf32>
    %63 = vector.extract_strided_slice %51 {offsets = [0, 64], sizes = [2, 64], strides = [1, 1]} : vector<2x192xf32> to vector<2x64xf32>
    %64 = arith.addf %62, %63 : vector<2x64xf32>
    %65 = arith.negf %64 : vector<2x64xf32>
    %66 = math.exp %65 : vector<2x64xf32>
    %cst_19 = arith.constant 1.000000e+00 : f32
    %67 = vector.broadcast %cst_19 : f32 to vector<2x64xf32>
    %68 = arith.addf %67, %66 : vector<2x64xf32>
    %69 = arith.divf %67, %68 : vector<2x64xf32>
    %70 = vector.extract_strided_slice %53 {offsets = [0, 128], sizes = [2, 64], strides = [1, 1]} : vector<2x192xf32> to vector<2x64xf32>
    %71 = vector.extract_strided_slice %51 {offsets = [0, 128], sizes = [2, 64], strides = [1, 1]} : vector<2x192xf32> to vector<2x64xf32>
    %72 = vector.broadcast %8 : vector<1x64xf32> to vector<2x64xf32>
    %73 = arith.addf %71, %72 : vector<2x64xf32>
    %74 = arith.mulf %61, %73 : vector<2x64xf32>
    %75 = arith.addf %70, %74 : vector<2x64xf32>
    %76 = math.tanh %75 : vector<2x64xf32>
    %cst_20 = arith.constant 1.000000e+00 : f32
    %77 = vector.broadcast %cst_20 : f32 to vector<2x64xf32>
    %78 = arith.subf %77, %69 : vector<2x64xf32>
    %79 = arith.mulf %78, %76 : vector<2x64xf32>
    %80 = arith.mulf %69, %47 : vector<2x64xf32>
    %81 = arith.addf %79, %80 : vector<2x64xf32>
    %c0_21 = arith.constant 0 : index
    %c1 = arith.constant 1 : index
    %c0_22 = arith.constant 0 : index
    %82 = vector.load %arg17[%c0_21, %c1, %c0_22] : memref<2x8x64xf32, #tpu.memory_space<vmem>>, vector<2x1x64xf32>
    %83 = vector.shape_cast %82 : vector<2x1x64xf32> to vector<2x64xf32>
    %84 = vector.shape_cast %81 : vector<2x64xf32> to vector<2x1x64xf32>
    tpu.vector_store %arg17[%c0_21, %c1, %c0_22], %84 {strides = array<i32>} : memref<2x8x64xf32, #tpu.memory_space<vmem>>, vector<2x1x64xf32>,
    %cst_23 = arith.constant dense<0.000000e+00> : vector<2x192xf32>
    %85 = tpu.matmul %81, %6, %cst_23 {dimension_numbers = #tpu.dot_dimension_numbers<[1], [0], [0], [1], [0, 0, 1, 1], [], []>} : vector<2x64xf32>, vector<64x192xf32>, vector<2x192xf32> -> vector<2x192xf32>
    %86 = vector.extract_strided_slice %15 {offsets = [0, 2, 0], sizes = [2, 1, 192], strides = [1, 1, 1]} : vector<2x8x192xf32> to vector<2x1x192xf32>
    %87 = vector.shape_cast %86 : vector<2x1x192xf32> to vector<2x192xf32>
    %88 = vector.extract_strided_slice %87 {offsets = [0, 0], sizes = [2, 64], strides = [1, 1]} : vector<2x192xf32> to vector<2x64xf32>
    %89 = vector.extract_strided_slice %85 {offsets = [0, 0], sizes = [2, 64], strides = [1, 1]} : vector<2x192xf32> to vector<2x64xf32>
    %90 = arith.addf %88, %89 : vector<2x64xf32>
    %91 = arith.negf %90 : vector<2x64xf32>
    %92 = math.exp %91 : vector<2x64xf32>
    %cst_24 = arith.constant 1.000000e+00 : f32
    %93 = vector.broadcast %cst_24 : f32 to vector<2x64xf32>
    %94 = arith.addf %93, %92 : vector<2x64xf32>
    %95 = arith.divf %93, %94 : vector<2x64xf32>
    %96 = vector.extract_strided_slice %87 {offsets = [0, 64], sizes = [2, 64], strides = [1, 1]} : vector<2x192xf32> to vector<2x64xf32>
    %97 = vector.extract_strided_slice %85 {offsets = [0, 64], sizes = [2, 64], strides = [1, 1]} : vector<2x192xf32> to vector<2x64xf32>
    %98 = arith.addf %96, %97 : vector<2x64xf32>
    %99 = arith.negf %98 : vector<2x64xf32>
    %100 = math.exp %99 : vector<2x64xf32>
    %cst_25 = arith.constant 1.000000e+00 : f32
    %101 = vector.broadcast %cst_25 : f32 to vector<2x64xf32>
    %102 = arith.addf %101, %100 : vector<2x64xf32>
    %103 = arith.divf %101, %102 : vector<2x64xf32>
    %104 = vector.extract_strided_slice %87 {offsets = [0, 128], sizes = [2, 64], strides = [1, 1]} : vector<2x192xf32> to vector<2x64xf32>
    %105 = vector.extract_strided_slice %85 {offsets = [0, 128], sizes = [2, 64], strides = [1, 1]} : vector<2x192xf32> to vector<2x64xf32>
    %106 = vector.broadcast %8 : vector<1x64xf32> to vector<2x64xf32>
    %107 = arith.addf %105, %106 : vector<2x64xf32>
    %108 = arith.mulf %95, %107 : vector<2x64xf32>
    %109 = arith.addf %104, %108 : vector<2x64xf32>
    %110 = math.tanh %109 : vector<2x64xf32>
    %cst_26 = arith.constant 1.000000e+00 : f32
    %111 = vector.broadcast %cst_26 : f32 to vector<2x64xf32>
    %112 = arith.subf %111, %103 : vector<2x64xf32>
    %113 = arith.mulf %112, %110 : vector<2x64xf32>
    %114 = arith.mulf %103, %81 : vector<2x64xf32>
    %115 = arith.addf %113, %114 : vector<2x64xf32>
    %c0_27 = arith.constant 0 : index
    %c2 = arith.constant 2 : index
    %c0_28 = arith.constant 0 : index
    %116 = vector.load %arg17[%c0_27, %c2, %c0_28] : memref<2x8x64xf32, #tpu.memory_space<vmem>>, vector<2x1x64xf32>
    %117 = vector.shape_cast %116 : vector<2x1x64xf32> to vector<2x64xf32>
    %118 = vector.shape_cast %115 : vector<2x64xf32> to vector<2x1x64xf32>
    tpu.vector_store %arg17[%c0_27, %c2, %c0_28], %118 {strides = array<i32>} : memref<2x8x64xf32, #tpu.memory_space<vmem>>, vector<2x1x64xf32>,
    %cst_29 = arith.constant dense<0.000000e+00> : vector<2x192xf32>
    %119 = tpu.matmul %115, %6, %cst_29 {dimension_numbers = #tpu.dot_dimension_numbers<[1], [0], [0], [1], [0, 0, 1, 1], [], []>} : vector<2x64xf32>, vector<64x192xf32>, vector<2x192xf32> -> vector<2x192xf32>
    %120 = vector.extract_strided_slice %15 {offsets = [0, 3, 0], sizes = [2, 1, 192], strides = [1, 1, 1]} : vector<2x8x192xf32> to vector<2x1x192xf32>
    %121 = vector.shape_cast %120 : vector<2x1x192xf32> to vector<2x192xf32>
    %122 = vector.extract_strided_slice %121 {offsets = [0, 0], sizes = [2, 64], strides = [1, 1]} : vector<2x192xf32> to vector<2x64xf32>
    %123 = vector.extract_strided_slice %119 {offsets = [0, 0], sizes = [2, 64], strides = [1, 1]} : vector<2x192xf32> to vector<2x64xf32>
    %124 = arith.addf %122, %123 : vector<2x64xf32>
    %125 = arith.negf %124 : vector<2x64xf32>
    %126 = math.exp %125 : vector<2x64xf32>
    %cst_30 = arith.constant 1.000000e+00 : f32
    %127 = vector.broadcast %cst_30 : f32 to vector<2x64xf32>
    %128 = arith.addf %127, %126 : vector<2x64xf32>
    %129 = arith.divf %127, %128 : vector<2x64xf32>
    %130 = vector.extract_strided_slice %121 {offsets = [0, 64], sizes = [2, 64], strides = [1, 1]} : vector<2x192xf32> to vector<2x64xf32>
    %131 = vector.extract_strided_slice %119 {offsets = [0, 64], sizes = [2, 64], strides = [1, 1]} : vector<2x192xf32> to vector<2x64xf32>
    %132 = arith.addf %130, %131 : vector<2x64xf32>
    %133 = arith.negf %132 : vector<2x64xf32>
    %134 = math.exp %133 : vector<2x64xf32>
    %cst_31 = arith.constant 1.000000e+00 : f32
    %135 = vector.broadcast %cst_31 : f32 to vector<2x64xf32>
    %136 = arith.addf %135, %134 : vector<2x64xf32>
    %137 = arith.divf %135, %136 : vector<2x64xf32>
    %138 = vector.extract_strided_slice %121 {offsets = [0, 128], sizes = [2, 64], strides = [1, 1]} : vector<2x192xf32> to vector<2x64xf32>
    %139 = vector.extract_strided_slice %119 {offsets = [0, 128], sizes = [2, 64], strides = [1, 1]} : vector<2x192xf32> to vector<2x64xf32>
    %140 = vector.broadcast %8 : vector<1x64xf32> to vector<2x64xf32>
    %141 = arith.addf %139, %140 : vector<2x64xf32>
    %142 = arith.mulf %129, %141 : vector<2x64xf32>
    %143 = arith.addf %138, %142 : vector<2x64xf32>
    %144 = math.tanh %143 : vector<2x64xf32>
    %cst_32 = arith.constant 1.000000e+00 : f32
    %145 = vector.broadcast %cst_32 : f32 to vector<2x64xf32>
    %146 = arith.subf %145, %137 : vector<2x64xf32>
    %147 = arith.mulf %146, %144 : vector<2x64xf32>
    %148 = arith.mulf %137, %115 : vector<2x64xf32>
    %149 = arith.addf %147, %148 : vector<2x64xf32>
    %c0_33 = arith.constant 0 : index
    %c3 = arith.constant 3 : index
    %c0_34 = arith.constant 0 : index
    %150 = vector.load %arg17[%c0_33, %c3, %c0_34] : memref<2x8x64xf32, #tpu.memory_space<vmem>>, vector<2x1x64xf32>
    %151 = vector.shape_cast %150 : vector<2x1x64xf32> to vector<2x64xf32>
    %152 = vector.shape_cast %149 : vector<2x64xf32> to vector<2x1x64xf32>
    tpu.vector_store %arg17[%c0_33, %c3, %c0_34], %152 {strides = array<i32>} : memref<2x8x64xf32, #tpu.memory_space<vmem>>, vector<2x1x64xf32>,
    %cst_35 = arith.constant dense<0.000000e+00> : vector<2x192xf32>
    %153 = tpu.matmul %149, %6, %cst_35 {dimension_numbers = #tpu.dot_dimension_numbers<[1], [0], [0], [1], [0, 0, 1, 1], [], []>} : vector<2x64xf32>, vector<64x192xf32>, vector<2x192xf32> -> vector<2x192xf32>
    %154 = vector.extract_strided_slice %15 {offsets = [0, 4, 0], sizes = [2, 1, 192], strides = [1, 1, 1]} : vector<2x8x192xf32> to vector<2x1x192xf32>
    %155 = vector.shape_cast %154 : vector<2x1x192xf32> to vector<2x192xf32>
    %156 = vector.extract_strided_slice %155 {offsets = [0, 0], sizes = [2, 64], strides = [1, 1]} : vector<2x192xf32> to vector<2x64xf32>
    %157 = vector.extract_strided_slice %153 {offsets = [0, 0], sizes = [2, 64], strides = [1, 1]} : vector<2x192xf32> to vector<2x64xf32>
    %158 = arith.addf %156, %157 : vector<2x64xf32>
    %159 = arith.negf %158 : vector<2x64xf32>
    %160 = math.exp %159 : vector<2x64xf32>
    %cst_36 = arith.constant 1.000000e+00 : f32
    %161 = vector.broadcast %cst_36 : f32 to vector<2x64xf32>
    %162 = arith.addf %161, %160 : vector<2x64xf32>
    %163 = arith.divf %161, %162 : vector<2x64xf32>
    %164 = vector.extract_strided_slice %155 {offsets = [0, 64], sizes = [2, 64], strides = [1, 1]} : vector<2x192xf32> to vector<2x64xf32>
    %165 = vector.extract_strided_slice %153 {offsets = [0, 64], sizes = [2, 64], strides = [1, 1]} : vector<2x192xf32> to vector<2x64xf32>
    %166 = arith.addf %164, %165 : vector<2x64xf32>
    %167 = arith.negf %166 : vector<2x64xf32>
    %168 = math.exp %167 : vector<2x64xf32>
    %cst_37 = arith.constant 1.000000e+00 : f32
    %169 = vector.broadcast %cst_37 : f32 to vector<2x64xf32>
    %170 = arith.addf %169, %168 : vector<2x64xf32>
    %171 = arith.divf %169, %170 : vector<2x64xf32>
    %172 = vector.extract_strided_slice %155 {offsets = [0, 128], sizes = [2, 64], strides = [1, 1]} : vector<2x192xf32> to vector<2x64xf32>
    %173 = vector.extract_strided_slice %153 {offsets = [0, 128], sizes = [2, 64], strides = [1, 1]} : vector<2x192xf32> to vector<2x64xf32>
    %174 = vector.broadcast %8 : vector<1x64xf32> to vector<2x64xf32>
    %175 = arith.addf %173, %174 : vector<2x64xf32>
    %176 = arith.mulf %163, %175 : vector<2x64xf32>
    %177 = arith.addf %172, %176 : vector<2x64xf32>
    %178 = math.tanh %177 : vector<2x64xf32>
    %cst_38 = arith.constant 1.000000e+00 : f32
    %179 = vector.broadcast %cst_38 : f32 to vector<2x64xf32>
    %180 = arith.subf %179, %171 : vector<2x64xf32>
    %181 = arith.mulf %180, %178 : vector<2x64xf32>
    %182 = arith.mulf %171, %149 : vector<2x64xf32>
    %183 = arith.addf %181, %182 : vector<2x64xf32>
    %c0_39 = arith.constant 0 : index
    %c4 = arith.constant 4 : index
    %c0_40 = arith.constant 0 : index
    %184 = vector.load %arg17[%c0_39, %c4, %c0_40] : memref<2x8x64xf32, #tpu.memory_space<vmem>>, vector<2x1x64xf32>
    %185 = vector.shape_cast %184 : vector<2x1x64xf32> to vector<2x64xf32>
    %186 = vector.shape_cast %183 : vector<2x64xf32> to vector<2x1x64xf32>
    tpu.vector_store %arg17[%c0_39, %c4, %c0_40], %186 {strides = array<i32>} : memref<2x8x64xf32, #tpu.memory_space<vmem>>, vector<2x1x64xf32>,
    %cst_41 = arith.constant dense<0.000000e+00> : vector<2x192xf32>
    %187 = tpu.matmul %183, %6, %cst_41 {dimension_numbers = #tpu.dot_dimension_numbers<[1], [0], [0], [1], [0, 0, 1, 1], [], []>} : vector<2x64xf32>, vector<64x192xf32>, vector<2x192xf32> -> vector<2x192xf32>
    %188 = vector.extract_strided_slice %15 {offsets = [0, 5, 0], sizes = [2, 1, 192], strides = [1, 1, 1]} : vector<2x8x192xf32> to vector<2x1x192xf32>
    %189 = vector.shape_cast %188 : vector<2x1x192xf32> to vector<2x192xf32>
    %190 = vector.extract_strided_slice %189 {offsets = [0, 0], sizes = [2, 64], strides = [1, 1]} : vector<2x192xf32> to vector<2x64xf32>
    %191 = vector.extract_strided_slice %187 {offsets = [0, 0], sizes = [2, 64], strides = [1, 1]} : vector<2x192xf32> to vector<2x64xf32>
    %192 = arith.addf %190, %191 : vector<2x64xf32>
    %193 = arith.negf %192 : vector<2x64xf32>
    %194 = math.exp %193 : vector<2x64xf32>
    %cst_42 = arith.constant 1.000000e+00 : f32
    %195 = vector.broadcast %cst_42 : f32 to vector<2x64xf32>
    %196 = arith.addf %195, %194 : vector<2x64xf32>
    %197 = arith.divf %195, %196 : vector<2x64xf32>
    %198 = vector.extract_strided_slice %189 {offsets = [0, 64], sizes = [2, 64], strides = [1, 1]} : vector<2x192xf32> to vector<2x64xf32>
    %199 = vector.extract_strided_slice %187 {offsets = [0, 64], sizes = [2, 64], strides = [1, 1]} : vector<2x192xf32> to vector<2x64xf32>
    %200 = arith.addf %198, %199 : vector<2x64xf32>
    %201 = arith.negf %200 : vector<2x64xf32>
    %202 = math.exp %201 : vector<2x64xf32>
    %cst_43 = arith.constant 1.000000e+00 : f32
    %203 = vector.broadcast %cst_43 : f32 to vector<2x64xf32>
    %204 = arith.addf %203, %202 : vector<2x64xf32>
    %205 = arith.divf %203, %204 : vector<2x64xf32>
    %206 = vector.extract_strided_slice %189 {offsets = [0, 128], sizes = [2, 64], strides = [1, 1]} : vector<2x192xf32> to vector<2x64xf32>
    %207 = vector.extract_strided_slice %187 {offsets = [0, 128], sizes = [2, 64], strides = [1, 1]} : vector<2x192xf32> to vector<2x64xf32>
    %208 = vector.broadcast %8 : vector<1x64xf32> to vector<2x64xf32>
    %209 = arith.addf %207, %208 : vector<2x64xf32>
    %210 = arith.mulf %197, %209 : vector<2x64xf32>
    %211 = arith.addf %206, %210 : vector<2x64xf32>
    %212 = math.tanh %211 : vector<2x64xf32>
    %cst_44 = arith.constant 1.000000e+00 : f32
    %213 = vector.broadcast %cst_44 : f32 to vector<2x64xf32>
    %214 = arith.subf %213, %205 : vector<2x64xf32>
    %215 = arith.mulf %214, %212 : vector<2x64xf32>
    %216 = arith.mulf %205, %183 : vector<2x64xf32>
    %217 = arith.addf %215, %216 : vector<2x64xf32>
    %c0_45 = arith.constant 0 : index
    %c5 = arith.constant 5 : index
    %c0_46 = arith.constant 0 : index
    %218 = vector.load %arg17[%c0_45, %c5, %c0_46] : memref<2x8x64xf32, #tpu.memory_space<vmem>>, vector<2x1x64xf32>
    %219 = vector.shape_cast %218 : vector<2x1x64xf32> to vector<2x64xf32>
    %220 = vector.shape_cast %217 : vector<2x64xf32> to vector<2x1x64xf32>
    tpu.vector_store %arg17[%c0_45, %c5, %c0_46], %220 {strides = array<i32>} : memref<2x8x64xf32, #tpu.memory_space<vmem>>, vector<2x1x64xf32>,
    %cst_47 = arith.constant dense<0.000000e+00> : vector<2x192xf32>
    %221 = tpu.matmul %217, %6, %cst_47 {dimension_numbers = #tpu.dot_dimension_numbers<[1], [0], [0], [1], [0, 0, 1, 1], [], []>} : vector<2x64xf32>, vector<64x192xf32>, vector<2x192xf32> -> vector<2x192xf32>
    %222 = vector.extract_strided_slice %15 {offsets = [0, 6, 0], sizes = [2, 1, 192], strides = [1, 1, 1]} : vector<2x8x192xf32> to vector<2x1x192xf32>
    %223 = vector.shape_cast %222 : vector<2x1x192xf32> to vector<2x192xf32>
    %224 = vector.extract_strided_slice %223 {offsets = [0, 0], sizes = [2, 64], strides = [1, 1]} : vector<2x192xf32> to vector<2x64xf32>
    %225 = vector.extract_strided_slice %221 {offsets = [0, 0], sizes = [2, 64], strides = [1, 1]} : vector<2x192xf32> to vector<2x64xf32>
    %226 = arith.addf %224, %225 : vector<2x64xf32>
    %227 = arith.negf %226 : vector<2x64xf32>
    %228 = math.exp %227 : vector<2x64xf32>
    %cst_48 = arith.constant 1.000000e+00 : f32
    %229 = vector.broadcast %cst_48 : f32 to vector<2x64xf32>
    %230 = arith.addf %229, %228 : vector<2x64xf32>
    %231 = arith.divf %229, %230 : vector<2x64xf32>
    %232 = vector.extract_strided_slice %223 {offsets = [0, 64], sizes = [2, 64], strides = [1, 1]} : vector<2x192xf32> to vector<2x64xf32>
    %233 = vector.extract_strided_slice %221 {offsets = [0, 64], sizes = [2, 64], strides = [1, 1]} : vector<2x192xf32> to vector<2x64xf32>
    %234 = arith.addf %232, %233 : vector<2x64xf32>
    %235 = arith.negf %234 : vector<2x64xf32>
    %236 = math.exp %235 : vector<2x64xf32>
    %cst_49 = arith.constant 1.000000e+00 : f32
    %237 = vector.broadcast %cst_49 : f32 to vector<2x64xf32>
    %238 = arith.addf %237, %236 : vector<2x64xf32>
    %239 = arith.divf %237, %238 : vector<2x64xf32>
    %240 = vector.extract_strided_slice %223 {offsets = [0, 128], sizes = [2, 64], strides = [1, 1]} : vector<2x192xf32> to vector<2x64xf32>
    %241 = vector.extract_strided_slice %221 {offsets = [0, 128], sizes = [2, 64], strides = [1, 1]} : vector<2x192xf32> to vector<2x64xf32>
    %242 = vector.broadcast %8 : vector<1x64xf32> to vector<2x64xf32>
    %243 = arith.addf %241, %242 : vector<2x64xf32>
    %244 = arith.mulf %231, %243 : vector<2x64xf32>
    %245 = arith.addf %240, %244 : vector<2x64xf32>
    %246 = math.tanh %245 : vector<2x64xf32>
    %cst_50 = arith.constant 1.000000e+00 : f32
    %247 = vector.broadcast %cst_50 : f32 to vector<2x64xf32>
    %248 = arith.subf %247, %239 : vector<2x64xf32>
    %249 = arith.mulf %248, %246 : vector<2x64xf32>
    %250 = arith.mulf %239, %217 : vector<2x64xf32>
    %251 = arith.addf %249, %250 : vector<2x64xf32>
    %c0_51 = arith.constant 0 : index
    %c6 = arith.constant 6 : index
    %c0_52 = arith.constant 0 : index
    %252 = vector.load %arg17[%c0_51, %c6, %c0_52] : memref<2x8x64xf32, #tpu.memory_space<vmem>>, vector<2x1x64xf32>
    %253 = vector.shape_cast %252 : vector<2x1x64xf32> to vector<2x64xf32>
    %254 = vector.shape_cast %251 : vector<2x64xf32> to vector<2x1x64xf32>
    tpu.vector_store %arg17[%c0_51, %c6, %c0_52], %254 {strides = array<i32>} : memref<2x8x64xf32, #tpu.memory_space<vmem>>, vector<2x1x64xf32>,
    %cst_53 = arith.constant dense<0.000000e+00> : vector<2x192xf32>
    %255 = tpu.matmul %251, %6, %cst_53 {dimension_numbers = #tpu.dot_dimension_numbers<[1], [0], [0], [1], [0, 0, 1, 1], [], []>} : vector<2x64xf32>, vector<64x192xf32>, vector<2x192xf32> -> vector<2x192xf32>
    %256 = vector.extract_strided_slice %15 {offsets = [0, 7, 0], sizes = [2, 1, 192], strides = [1, 1, 1]} : vector<2x8x192xf32> to vector<2x1x192xf32>
    %257 = vector.shape_cast %256 : vector<2x1x192xf32> to vector<2x192xf32>
    %258 = vector.extract_strided_slice %257 {offsets = [0, 0], sizes = [2, 64], strides = [1, 1]} : vector<2x192xf32> to vector<2x64xf32>
    %259 = vector.extract_strided_slice %255 {offsets = [0, 0], sizes = [2, 64], strides = [1, 1]} : vector<2x192xf32> to vector<2x64xf32>
    %260 = arith.addf %258, %259 : vector<2x64xf32>
    %261 = arith.negf %260 : vector<2x64xf32>
    %262 = math.exp %261 : vector<2x64xf32>
    %cst_54 = arith.constant 1.000000e+00 : f32
    %263 = vector.broadcast %cst_54 : f32 to vector<2x64xf32>
    %264 = arith.addf %263, %262 : vector<2x64xf32>
    %265 = arith.divf %263, %264 : vector<2x64xf32>
    %266 = vector.extract_strided_slice %257 {offsets = [0, 64], sizes = [2, 64], strides = [1, 1]} : vector<2x192xf32> to vector<2x64xf32>
    %267 = vector.extract_strided_slice %255 {offsets = [0, 64], sizes = [2, 64], strides = [1, 1]} : vector<2x192xf32> to vector<2x64xf32>
    %268 = arith.addf %266, %267 : vector<2x64xf32>
    %269 = arith.negf %268 : vector<2x64xf32>
    %270 = math.exp %269 : vector<2x64xf32>
    %cst_55 = arith.constant 1.000000e+00 : f32
    %271 = vector.broadcast %cst_55 : f32 to vector<2x64xf32>
    %272 = arith.addf %271, %270 : vector<2x64xf32>
    %273 = arith.divf %271, %272 : vector<2x64xf32>
    %274 = vector.extract_strided_slice %257 {offsets = [0, 128], sizes = [2, 64], strides = [1, 1]} : vector<2x192xf32> to vector<2x64xf32>
    %275 = vector.extract_strided_slice %255 {offsets = [0, 128], sizes = [2, 64], strides = [1, 1]} : vector<2x192xf32> to vector<2x64xf32>
    %276 = vector.broadcast %8 : vector<1x64xf32> to vector<2x64xf32>
    %277 = arith.addf %275, %276 : vector<2x64xf32>
    %278 = arith.mulf %265, %277 : vector<2x64xf32>
    %279 = arith.addf %274, %278 : vector<2x64xf32>
    %280 = math.tanh %279 : vector<2x64xf32>
    %cst_56 = arith.constant 1.000000e+00 : f32
    %281 = vector.broadcast %cst_56 : f32 to vector<2x64xf32>
    %282 = arith.subf %281, %273 : vector<2x64xf32>
    %283 = arith.mulf %282, %280 : vector<2x64xf32>
    %284 = arith.mulf %273, %251 : vector<2x64xf32>
    %285 = arith.addf %283, %284 : vector<2x64xf32>
    %c0_57 = arith.constant 0 : index
    %c7 = arith.constant 7 : index
    %c0_58 = arith.constant 0 : index
    %286 = vector.load %arg17[%c0_57, %c7, %c0_58] : memref<2x8x64xf32, #tpu.memory_space<vmem>>, vector<2x1x64xf32>
    %287 = vector.shape_cast %286 : vector<2x1x64xf32> to vector<2x64xf32>
    %288 = vector.shape_cast %285 : vector<2x64xf32> to vector<2x1x64xf32>
    tpu.vector_store %arg17[%c0_57, %c7, %c0_58], %288 {strides = array<i32>} : memref<2x8x64xf32, #tpu.memory_space<vmem>>, vector<2x1x64xf32>,
    %c0_59 = arith.constant 0 : index
    %c0_60 = arith.constant 0 : index
    %c0_61 = arith.constant 0 : index
    %289 = vector.load %arg17[%c0_59, %c0_60, %c0_61] : memref<2x8x64xf32, #tpu.memory_space<vmem>>, vector<2x8x64xf32>
    %290 = vector.shape_cast %289 : vector<2x8x64xf32> to vector<16x64xf32>
    %c0_62 = arith.constant 0 : index
    %c0_63 = arith.constant 0 : index
    %c0_64 = arith.constant 0 : index
    %291 = vector.load %arg6[%c0_62, %c0_63, %c0_64] : memref<5x64x192xf32, #tpu.memory_space<vmem>>, vector<1x64x192xf32>
    %292 = vector.shape_cast %291 : vector<1x64x192xf32> to vector<64x192xf32>
    %c0_65 = arith.constant 0 : index
    %c0_66 = arith.constant 0 : index
    %c0_67 = arith.constant 0 : index
    %293 = vector.load %arg7[%c0_65, %c0_66, %c0_67] : memref<5x64x192xf32, #tpu.memory_space<vmem>>, vector<1x64x192xf32>
    %294 = vector.shape_cast %293 : vector<1x64x192xf32> to vector<64x192xf32>
    %c0_68 = arith.constant 0 : index
    %c0_69 = arith.constant 0 : index
    %c0_70 = arith.constant 0 : index
    %295 = vector.load %arg8[%c0_68, %c0_69, %c0_70] : memref<5x1x192xf32, #tpu.memory_space<vmem>>, vector<1x1x192xf32>
    %296 = vector.shape_cast %295 : vector<1x1x192xf32> to vector<1x192xf32>
    %c0_71 = arith.constant 0 : index
    %c0_72 = arith.constant 0 : index
    %c0_73 = arith.constant 0 : index
    %297 = vector.load %arg9[%c0_71, %c0_72, %c0_73] : memref<5x1x64xf32, #tpu.memory_space<vmem>>, vector<1x1x64xf32>
    %298 = vector.shape_cast %297 : vector<1x1x64xf32> to vector<1x64xf32>
    %cst_74 = arith.constant dense<0.000000e+00> : vector<16x192xf32>
    %299 = tpu.matmul %290, %292, %cst_74 {dimension_numbers = #tpu.dot_dimension_numbers<[1], [0], [0], [1], [0, 0, 1, 1], [], []>} : vector<16x64xf32>, vector<64x192xf32>, vector<16x192xf32> -> vector<16x192xf32>
    %300 = vector.broadcast %296 : vector<1x192xf32> to vector<16x192xf32>
    %301 = arith.addf %299, %300 : vector<16x192xf32>
    %cst_75 = arith.constant 0.000000e+00 : f32
    %302 = vector.broadcast %cst_75 : f32 to vector<8x64xf32>
    %cst_76 = arith.constant dense<0.000000e+00> : vector<8x192xf32>
    %303 = tpu.matmul %302, %294, %cst_76 {dimension_numbers = #tpu.dot_dimension_numbers<[1], [0], [0], [1], [0, 0, 1, 1], [], []>} : vector<8x64xf32>, vector<64x192xf32>, vector<8x192xf32> -> vector<8x192xf32>
    %304 = vector.extract_strided_slice %301 {offsets = [0, 0], sizes = [8, 96], strides = [1, 1]} : vector<16x192xf32> to vector<8x96xf32>
    %305 = vector.extract_strided_slice %301 {offsets = [8, 96], sizes = [8, 96], strides = [1, 1]} : vector<16x192xf32> to vector<8x96xf32>
    %306 = vector.extract_strided_slice %304 {offsets = [0, 0], sizes = [8, 32], strides = [1, 1]} : vector<8x96xf32> to vector<8x32xf32>
    %307 = vector.extract_strided_slice %303 {offsets = [0, 0], sizes = [8, 32], strides = [1, 1]} : vector<8x192xf32> to vector<8x32xf32>
    %308 = arith.addf %306, %307 : vector<8x32xf32>
    %309 = arith.negf %308 : vector<8x32xf32>
    %310 = math.exp %309 : vector<8x32xf32>
    %cst_77 = arith.constant 1.000000e+00 : f32
    %311 = vector.broadcast %cst_77 : f32 to vector<8x32xf32>
    %312 = arith.addf %311, %310 : vector<8x32xf32>
    %313 = arith.divf %311, %312 : vector<8x32xf32>
    %314 = vector.extract_strided_slice %304 {offsets = [0, 32], sizes = [8, 32], strides = [1, 1]} : vector<8x96xf32> to vector<8x32xf32>
    %315 = vector.extract_strided_slice %303 {offsets = [0, 32], sizes = [8, 32], strides = [1, 1]} : vector<8x192xf32> to vector<8x32xf32>
    %316 = arith.addf %314, %315 : vector<8x32xf32>
    %317 = arith.negf %316 : vector<8x32xf32>
    %318 = math.exp %317 : vector<8x32xf32>
    %cst_78 = arith.constant 1.000000e+00 : f32
    %319 = vector.broadcast %cst_78 : f32 to vector<8x32xf32>
    %320 = arith.addf %319, %318 : vector<8x32xf32>
    %321 = arith.divf %319, %320 : vector<8x32xf32>
    %322 = vector.extract_strided_slice %304 {offsets = [0, 64], sizes = [8, 32], strides = [1, 1]} : vector<8x96xf32> to vector<8x32xf32>
    %323 = vector.extract_strided_slice %303 {offsets = [0, 64], sizes = [8, 32], strides = [1, 1]} : vector<8x192xf32> to vector<8x32xf32>
    %324 = vector.extract_strided_slice %298 {offsets = [0, 0], sizes = [1, 32], strides = [1, 1]} : vector<1x64xf32> to vector<1x32xf32>
    %325 = vector.broadcast %324 : vector<1x32xf32> to vector<8x32xf32>
    %326 = arith.addf %323, %325 : vector<8x32xf32>
    %327 = arith.mulf %313, %326 : vector<8x32xf32>
    %328 = arith.addf %322, %327 : vector<8x32xf32>
    %329 = math.tanh %328 : vector<8x32xf32>
    %cst_79 = arith.constant 1.000000e+00 : f32
    %330 = vector.broadcast %cst_79 : f32 to vector<8x32xf32>
    %331 = arith.subf %330, %321 : vector<8x32xf32>
    %332 = arith.mulf %331, %329 : vector<8x32xf32>
    %333 = vector.extract_strided_slice %302 {offsets = [0, 0], sizes = [8, 32], strides = [1, 1]} : vector<8x64xf32> to vector<8x32xf32>
    %334 = arith.mulf %321, %333 : vector<8x32xf32>
    %335 = arith.addf %332, %334 : vector<8x32xf32>
    %336 = vector.extract_strided_slice %305 {offsets = [0, 0], sizes = [8, 32], strides = [1, 1]} : vector<8x96xf32> to vector<8x32xf32>
    %337 = vector.extract_strided_slice %303 {offsets = [0, 96], sizes = [8, 32], strides = [1, 1]} : vector<8x192xf32> to vector<8x32xf32>
    %338 = arith.addf %336, %337 : vector<8x32xf32>
    %339 = arith.negf %338 : vector<8x32xf32>
    %340 = math.exp %339 : vector<8x32xf32>
    %cst_80 = arith.constant 1.000000e+00 : f32
    %341 = vector.broadcast %cst_80 : f32 to vector<8x32xf32>
    %342 = arith.addf %341, %340 : vector<8x32xf32>
    %343 = arith.divf %341, %342 : vector<8x32xf32>
    %344 = vector.extract_strided_slice %305 {offsets = [0, 32], sizes = [8, 32], strides = [1, 1]} : vector<8x96xf32> to vector<8x32xf32>
    %345 = vector.extract_strided_slice %303 {offsets = [0, 128], sizes = [8, 32], strides = [1, 1]} : vector<8x192xf32> to vector<8x32xf32>
    %346 = arith.addf %344, %345 : vector<8x32xf32>
    %347 = arith.negf %346 : vector<8x32xf32>
    %348 = math.exp %347 : vector<8x32xf32>
    %cst_81 = arith.constant 1.000000e+00 : f32
    %349 = vector.broadcast %cst_81 : f32 to vector<8x32xf32>
    %350 = arith.addf %349, %348 : vector<8x32xf32>
    %351 = arith.divf %349, %350 : vector<8x32xf32>
    %352 = vector.extract_strided_slice %305 {offsets = [0, 64], sizes = [8, 32], strides = [1, 1]} : vector<8x96xf32> to vector<8x32xf32>
    %353 = vector.extract_strided_slice %303 {offsets = [0, 160], sizes = [8, 32], strides = [1, 1]} : vector<8x192xf32> to vector<8x32xf32>
    %354 = vector.extract_strided_slice %298 {offsets = [0, 32], sizes = [1, 32], strides = [1, 1]} : vector<1x64xf32> to vector<1x32xf32>
    %355 = vector.broadcast %354 : vector<1x32xf32> to vector<8x32xf32>
    %356 = arith.addf %353, %355 : vector<8x32xf32>
    %357 = arith.mulf %343, %356 : vector<8x32xf32>
    %358 = arith.addf %352, %357 : vector<8x32xf32>
    %359 = math.tanh %358 : vector<8x32xf32>
    %cst_82 = arith.constant 1.000000e+00 : f32
    %360 = vector.broadcast %cst_82 : f32 to vector<8x32xf32>
    %361 = arith.subf %360, %351 : vector<8x32xf32>
    %362 = arith.mulf %361, %359 : vector<8x32xf32>
    %363 = vector.extract_strided_slice %302 {offsets = [0, 32], sizes = [8, 32], strides = [1, 1]} : vector<8x64xf32> to vector<8x32xf32>
    %364 = arith.mulf %351, %363 : vector<8x32xf32>
    %365 = arith.addf %362, %364 : vector<8x32xf32>
    %366 = tpu.concatenate %335, %365 in 1 : vector<8x32xf32>, vector<8x32xf32> -> vector<8x64xf32>
    %cst_83 = arith.constant dense<0.000000e+00> : vector<8x192xf32>
    %367 = tpu.matmul %366, %294, %cst_83 {dimension_numbers = #tpu.dot_dimension_numbers<[1], [0], [0], [1], [0, 0, 1, 1], [], []>} : vector<8x64xf32>, vector<64x192xf32>, vector<8x192xf32> -> vector<8x192xf32>
    %368 = vector.extract_strided_slice %301 {offsets = [8, 0], sizes = [8, 96], strides = [1, 1]} : vector<16x192xf32> to vector<8x96xf32>
    %369 = vector.extract_strided_slice %301 {offsets = [0, 96], sizes = [8, 96], strides = [1, 1]} : vector<16x192xf32> to vector<8x96xf32>
    %370 = vector.extract_strided_slice %368 {offsets = [0, 0], sizes = [8, 32], strides = [1, 1]} : vector<8x96xf32> to vector<8x32xf32>
    %371 = vector.extract_strided_slice %367 {offsets = [0, 0], sizes = [8, 32], strides = [1, 1]} : vector<8x192xf32> to vector<8x32xf32>
    %372 = arith.addf %370, %371 : vector<8x32xf32>
    %373 = arith.negf %372 : vector<8x32xf32>
    %374 = math.exp %373 : vector<8x32xf32>
    %cst_84 = arith.constant 1.000000e+00 : f32
    %375 = vector.broadcast %cst_84 : f32 to vector<8x32xf32>
    %376 = arith.addf %375, %374 : vector<8x32xf32>
    %377 = arith.divf %375, %376 : vector<8x32xf32>
    %378 = vector.extract_strided_slice %368 {offsets = [0, 32], sizes = [8, 32], strides = [1, 1]} : vector<8x96xf32> to vector<8x32xf32>
    %379 = vector.extract_strided_slice %367 {offsets = [0, 32], sizes = [8, 32], strides = [1, 1]} : vector<8x192xf32> to vector<8x32xf32>
    %380 = arith.addf %378, %379 : vector<8x32xf32>
    %381 = arith.negf %380 : vector<8x32xf32>
    %382 = math.exp %381 : vector<8x32xf32>
    %cst_85 = arith.constant 1.000000e+00 : f32
    %383 = vector.broadcast %cst_85 : f32 to vector<8x32xf32>
    %384 = arith.addf %383, %382 : vector<8x32xf32>
    %385 = arith.divf %383, %384 : vector<8x32xf32>
    %386 = vector.extract_strided_slice %368 {offsets = [0, 64], sizes = [8, 32], strides = [1, 1]} : vector<8x96xf32> to vector<8x32xf32>
    %387 = vector.extract_strided_slice %367 {offsets = [0, 64], sizes = [8, 32], strides = [1, 1]} : vector<8x192xf32> to vector<8x32xf32>
    %388 = vector.extract_strided_slice %298 {offsets = [0, 0], sizes = [1, 32], strides = [1, 1]} : vector<1x64xf32> to vector<1x32xf32>
    %389 = vector.broadcast %388 : vector<1x32xf32> to vector<8x32xf32>
    %390 = arith.addf %387, %389 : vector<8x32xf32>
    %391 = arith.mulf %377, %390 : vector<8x32xf32>
    %392 = arith.addf %386, %391 : vector<8x32xf32>
    %393 = math.tanh %392 : vector<8x32xf32>
    %cst_86 = arith.constant 1.000000e+00 : f32
    %394 = vector.broadcast %cst_86 : f32 to vector<8x32xf32>
    %395 = arith.subf %394, %385 : vector<8x32xf32>
    %396 = arith.mulf %395, %393 : vector<8x32xf32>
    %397 = vector.extract_strided_slice %366 {offsets = [0, 0], sizes = [8, 32], strides = [1, 1]} : vector<8x64xf32> to vector<8x32xf32>
    %398 = arith.mulf %385, %397 : vector<8x32xf32>
    %399 = arith.addf %396, %398 : vector<8x32xf32>
    %400 = vector.extract_strided_slice %369 {offsets = [0, 0], sizes = [8, 32], strides = [1, 1]} : vector<8x96xf32> to vector<8x32xf32>
    %401 = vector.extract_strided_slice %367 {offsets = [0, 96], sizes = [8, 32], strides = [1, 1]} : vector<8x192xf32> to vector<8x32xf32>
    %402 = arith.addf %400, %401 : vector<8x32xf32>
    %403 = arith.negf %402 : vector<8x32xf32>
    %404 = math.exp %403 : vector<8x32xf32>
    %cst_87 = arith.constant 1.000000e+00 : f32
    %405 = vector.broadcast %cst_87 : f32 to vector<8x32xf32>
    %406 = arith.addf %405, %404 : vector<8x32xf32>
    %407 = arith.divf %405, %406 : vector<8x32xf32>
    %408 = vector.extract_strided_slice %369 {offsets = [0, 32], sizes = [8, 32], strides = [1, 1]} : vector<8x96xf32> to vector<8x32xf32>
    %409 = vector.extract_strided_slice %367 {offsets = [0, 128], sizes = [8, 32], strides = [1, 1]} : vector<8x192xf32> to vector<8x32xf32>
    %410 = arith.addf %408, %409 : vector<8x32xf32>
    %411 = arith.negf %410 : vector<8x32xf32>
    %412 = math.exp %411 : vector<8x32xf32>
    %cst_88 = arith.constant 1.000000e+00 : f32
    %413 = vector.broadcast %cst_88 : f32 to vector<8x32xf32>
    %414 = arith.addf %413, %412 : vector<8x32xf32>
    %415 = arith.divf %413, %414 : vector<8x32xf32>
    %416 = vector.extract_strided_slice %369 {offsets = [0, 64], sizes = [8, 32], strides = [1, 1]} : vector<8x96xf32> to vector<8x32xf32>
    %417 = vector.extract_strided_slice %367 {offsets = [0, 160], sizes = [8, 32], strides = [1, 1]} : vector<8x192xf32> to vector<8x32xf32>
    %418 = vector.extract_strided_slice %298 {offsets = [0, 32], sizes = [1, 32], strides = [1, 1]} : vector<1x64xf32> to vector<1x32xf32>
    %419 = vector.broadcast %418 : vector<1x32xf32> to vector<8x32xf32>
    %420 = arith.addf %417, %419 : vector<8x32xf32>
    %421 = arith.mulf %407, %420 : vector<8x32xf32>
    %422 = arith.addf %416, %421 : vector<8x32xf32>
    %423 = math.tanh %422 : vector<8x32xf32>
    %cst_89 = arith.constant 1.000000e+00 : f32
    %424 = vector.broadcast %cst_89 : f32 to vector<8x32xf32>
    %425 = arith.subf %424, %415 : vector<8x32xf32>
    %426 = arith.mulf %425, %423 : vector<8x32xf32>
    %427 = vector.extract_strided_slice %366 {offsets = [0, 32], sizes = [8, 32], strides = [1, 1]} : vector<8x64xf32> to vector<8x32xf32>
    %428 = arith.mulf %415, %427 : vector<8x32xf32>
    %429 = arith.addf %426, %428 : vector<8x32xf32>
    %430 = tpu.concatenate %335, %399 in 0 : vector<8x32xf32>, vector<8x32xf32> -> vector<16x32xf32>
    %431 = tpu.concatenate %429, %365 in 0 : vector<8x32xf32>, vector<8x32xf32> -> vector<16x32xf32>
    %c1_90 = arith.constant 1 : index
    %c0_91 = arith.constant 0 : index
    %c0_92 = arith.constant 0 : index
    %432 = vector.load %arg6[%c1_90, %c0_91, %c0_92] : memref<5x64x192xf32, #tpu.memory_space<vmem>>, vector<1x64x192xf32>
    %433 = vector.shape_cast %432 : vector<1x64x192xf32> to vector<64x192xf32>
    %c1_93 = arith.constant 1 : index
    %c0_94 = arith.constant 0 : index
    %c0_95 = arith.constant 0 : index
    %434 = vector.load %arg7[%c1_93, %c0_94, %c0_95] : memref<5x64x192xf32, #tpu.memory_space<vmem>>, vector<1x64x192xf32>
    %435 = vector.shape_cast %434 : vector<1x64x192xf32> to vector<64x192xf32>
    %c1_96 = arith.constant 1 : index
    %c0_97 = arith.constant 0 : index
    %c0_98 = arith.constant 0 : index
    %436 = vector.load %arg8[%c1_96, %c0_97, %c0_98] : memref<5x1x192xf32, #tpu.memory_space<vmem>>, vector<1x1x192xf32>
    %437 = vector.shape_cast %436 : vector<1x1x192xf32> to vector<1x192xf32>
    %c1_99 = arith.constant 1 : index
    %c0_100 = arith.constant 0 : index
    %c0_101 = arith.constant 0 : index
    %438 = vector.load %arg9[%c1_99, %c0_100, %c0_101] : memref<5x1x64xf32, #tpu.memory_space<vmem>>, vector<1x1x64xf32>
    %439 = vector.shape_cast %438 : vector<1x1x64xf32> to vector<1x64xf32>
    %440 = vector.extract_strided_slice %433 {offsets = [0, 0], sizes = [32, 192], strides = [1, 1]} : vector<64x192xf32> to vector<32x192xf32>
    %cst_102 = arith.constant dense<0.000000e+00> : vector<16x192xf32>
    %441 = tpu.matmul %430, %440, %cst_102 {dimension_numbers = #tpu.dot_dimension_numbers<[1], [0], [0], [1], [0, 0, 1, 1], [], []>} : vector<16x32xf32>, vector<32x192xf32>, vector<16x192xf32> -> vector<16x192xf32>
    %442 = vector.extract_strided_slice %433 {offsets = [32, 0], sizes = [32, 192], strides = [1, 1]} : vector<64x192xf32> to vector<32x192xf32>
    %cst_103 = arith.constant dense<0.000000e+00> : vector<16x192xf32>
    %443 = tpu.matmul %431, %442, %cst_103 {dimension_numbers = #tpu.dot_dimension_numbers<[1], [0], [0], [1], [0, 0, 1, 1], [], []>} : vector<16x32xf32>, vector<32x192xf32>, vector<16x192xf32> -> vector<16x192xf32>
    %444 = arith.addf %441, %443 : vector<16x192xf32>
    %445 = vector.broadcast %437 : vector<1x192xf32> to vector<16x192xf32>
    %446 = arith.addf %444, %445 : vector<16x192xf32>
    %cst_104 = arith.constant 0.000000e+00 : f32
    %447 = vector.broadcast %cst_104 : f32 to vector<8x64xf32>
    %cst_105 = arith.constant dense<0.000000e+00> : vector<8x192xf32>
    %448 = tpu.matmul %447, %435, %cst_105 {dimension_numbers = #tpu.dot_dimension_numbers<[1], [0], [0], [1], [0, 0, 1, 1], [], []>} : vector<8x64xf32>, vector<64x192xf32>, vector<8x192xf32> -> vector<8x192xf32>
    %449 = vector.extract_strided_slice %446 {offsets = [0, 0], sizes = [8, 96], strides = [1, 1]} : vector<16x192xf32> to vector<8x96xf32>
    %450 = vector.extract_strided_slice %446 {offsets = [8, 96], sizes = [8, 96], strides = [1, 1]} : vector<16x192xf32> to vector<8x96xf32>
    %451 = vector.extract_strided_slice %449 {offsets = [0, 0], sizes = [8, 32], strides = [1, 1]} : vector<8x96xf32> to vector<8x32xf32>
    %452 = vector.extract_strided_slice %448 {offsets = [0, 0], sizes = [8, 32], strides = [1, 1]} : vector<8x192xf32> to vector<8x32xf32>
    %453 = arith.addf %451, %452 : vector<8x32xf32>
    %454 = arith.negf %453 : vector<8x32xf32>
    %455 = math.exp %454 : vector<8x32xf32>
    %cst_106 = arith.constant 1.000000e+00 : f32
    %456 = vector.broadcast %cst_106 : f32 to vector<8x32xf32>
    %457 = arith.addf %456, %455 : vector<8x32xf32>
    %458 = arith.divf %456, %457 : vector<8x32xf32>
    %459 = vector.extract_strided_slice %449 {offsets = [0, 32], sizes = [8, 32], strides = [1, 1]} : vector<8x96xf32> to vector<8x32xf32>
    %460 = vector.extract_strided_slice %448 {offsets = [0, 32], sizes = [8, 32], strides = [1, 1]} : vector<8x192xf32> to vector<8x32xf32>
    %461 = arith.addf %459, %460 : vector<8x32xf32>
    %462 = arith.negf %461 : vector<8x32xf32>
    %463 = math.exp %462 : vector<8x32xf32>
    %cst_107 = arith.constant 1.000000e+00 : f32
    %464 = vector.broadcast %cst_107 : f32 to vector<8x32xf32>
    %465 = arith.addf %464, %463 : vector<8x32xf32>
    %466 = arith.divf %464, %465 : vector<8x32xf32>
    %467 = vector.extract_strided_slice %449 {offsets = [0, 64], sizes = [8, 32], strides = [1, 1]} : vector<8x96xf32> to vector<8x32xf32>
    %468 = vector.extract_strided_slice %448 {offsets = [0, 64], sizes = [8, 32], strides = [1, 1]} : vector<8x192xf32> to vector<8x32xf32>
    %469 = vector.extract_strided_slice %439 {offsets = [0, 0], sizes = [1, 32], strides = [1, 1]} : vector<1x64xf32> to vector<1x32xf32>
    %470 = vector.broadcast %469 : vector<1x32xf32> to vector<8x32xf32>
    %471 = arith.addf %468, %470 : vector<8x32xf32>
    %472 = arith.mulf %458, %471 : vector<8x32xf32>
    %473 = arith.addf %467, %472 : vector<8x32xf32>
    %474 = math.tanh %473 : vector<8x32xf32>
    %cst_108 = arith.constant 1.000000e+00 : f32
    %475 = vector.broadcast %cst_108 : f32 to vector<8x32xf32>
    %476 = arith.subf %475, %466 : vector<8x32xf32>
    %477 = arith.mulf %476, %474 : vector<8x32xf32>
    %478 = vector.extract_strided_slice %447 {offsets = [0, 0], sizes = [8, 32], strides = [1, 1]} : vector<8x64xf32> to vector<8x32xf32>
    %479 = arith.mulf %466, %478 : vector<8x32xf32>
    %480 = arith.addf %477, %479 : vector<8x32xf32>
    %481 = vector.extract_strided_slice %450 {offsets = [0, 0], sizes = [8, 32], strides = [1, 1]} : vector<8x96xf32> to vector<8x32xf32>
    %482 = vector.extract_strided_slice %448 {offsets = [0, 96], sizes = [8, 32], strides = [1, 1]} : vector<8x192xf32> to vector<8x32xf32>
    %483 = arith.addf %481, %482 : vector<8x32xf32>
    %484 = arith.negf %483 : vector<8x32xf32>
    %485 = math.exp %484 : vector<8x32xf32>
    %cst_109 = arith.constant 1.000000e+00 : f32
    %486 = vector.broadcast %cst_109 : f32 to vector<8x32xf32>
    %487 = arith.addf %486, %485 : vector<8x32xf32>
    %488 = arith.divf %486, %487 : vector<8x32xf32>
    %489 = vector.extract_strided_slice %450 {offsets = [0, 32], sizes = [8, 32], strides = [1, 1]} : vector<8x96xf32> to vector<8x32xf32>
    %490 = vector.extract_strided_slice %448 {offsets = [0, 128], sizes = [8, 32], strides = [1, 1]} : vector<8x192xf32> to vector<8x32xf32>
    %491 = arith.addf %489, %490 : vector<8x32xf32>
    %492 = arith.negf %491 : vector<8x32xf32>
    %493 = math.exp %492 : vector<8x32xf32>
    %cst_110 = arith.constant 1.000000e+00 : f32
    %494 = vector.broadcast %cst_110 : f32 to vector<8x32xf32>
    %495 = arith.addf %494, %493 : vector<8x32xf32>
    %496 = arith.divf %494, %495 : vector<8x32xf32>
    %497 = vector.extract_strided_slice %450 {offsets = [0, 64], sizes = [8, 32], strides = [1, 1]} : vector<8x96xf32> to vector<8x32xf32>
    %498 = vector.extract_strided_slice %448 {offsets = [0, 160], sizes = [8, 32], strides = [1, 1]} : vector<8x192xf32> to vector<8x32xf32>
    %499 = vector.extract_strided_slice %439 {offsets = [0, 32], sizes = [1, 32], strides = [1, 1]} : vector<1x64xf32> to vector<1x32xf32>
    %500 = vector.broadcast %499 : vector<1x32xf32> to vector<8x32xf32>
    %501 = arith.addf %498, %500 : vector<8x32xf32>
    %502 = arith.mulf %488, %501 : vector<8x32xf32>
    %503 = arith.addf %497, %502 : vector<8x32xf32>
    %504 = math.tanh %503 : vector<8x32xf32>
    %cst_111 = arith.constant 1.000000e+00 : f32
    %505 = vector.broadcast %cst_111 : f32 to vector<8x32xf32>
    %506 = arith.subf %505, %496 : vector<8x32xf32>
    %507 = arith.mulf %506, %504 : vector<8x32xf32>
    %508 = vector.extract_strided_slice %447 {offsets = [0, 32], sizes = [8, 32], strides = [1, 1]} : vector<8x64xf32> to vector<8x32xf32>
    %509 = arith.mulf %496, %508 : vector<8x32xf32>
    %510 = arith.addf %507, %509 : vector<8x32xf32>
    %511 = tpu.concatenate %480, %510 in 1 : vector<8x32xf32>, vector<8x32xf32> -> vector<8x64xf32>
    %cst_112 = arith.constant dense<0.000000e+00> : vector<8x192xf32>
    %512 = tpu.matmul %511, %435, %cst_112 {dimension_numbers = #tpu.dot_dimension_numbers<[1], [0], [0], [1], [0, 0, 1, 1], [], []>} : vector<8x64xf32>, vector<64x192xf32>, vector<8x192xf32> -> vector<8x192xf32>
    %513 = vector.extract_strided_slice %446 {offsets = [8, 0], sizes = [8, 96], strides = [1, 1]} : vector<16x192xf32> to vector<8x96xf32>
    %514 = vector.extract_strided_slice %446 {offsets = [0, 96], sizes = [8, 96], strides = [1, 1]} : vector<16x192xf32> to vector<8x96xf32>
    %515 = vector.extract_strided_slice %513 {offsets = [0, 0], sizes = [8, 32], strides = [1, 1]} : vector<8x96xf32> to vector<8x32xf32>
    %516 = vector.extract_strided_slice %512 {offsets = [0, 0], sizes = [8, 32], strides = [1, 1]} : vector<8x192xf32> to vector<8x32xf32>
    %517 = arith.addf %515, %516 : vector<8x32xf32>
    %518 = arith.negf %517 : vector<8x32xf32>
    %519 = math.exp %518 : vector<8x32xf32>
    %cst_113 = arith.constant 1.000000e+00 : f32
    %520 = vector.broadcast %cst_113 : f32 to vector<8x32xf32>
    %521 = arith.addf %520, %519 : vector<8x32xf32>
    %522 = arith.divf %520, %521 : vector<8x32xf32>
    %523 = vector.extract_strided_slice %513 {offsets = [0, 32], sizes = [8, 32], strides = [1, 1]} : vector<8x96xf32> to vector<8x32xf32>
    %524 = vector.extract_strided_slice %512 {offsets = [0, 32], sizes = [8, 32], strides = [1, 1]} : vector<8x192xf32> to vector<8x32xf32>
    %525 = arith.addf %523, %524 : vector<8x32xf32>
    %526 = arith.negf %525 : vector<8x32xf32>
    %527 = math.exp %526 : vector<8x32xf32>
    %cst_114 = arith.constant 1.000000e+00 : f32
    %528 = vector.broadcast %cst_114 : f32 to vector<8x32xf32>
    %529 = arith.addf %528, %527 : vector<8x32xf32>
    %530 = arith.divf %528, %529 : vector<8x32xf32>
    %531 = vector.extract_strided_slice %513 {offsets = [0, 64], sizes = [8, 32], strides = [1, 1]} : vector<8x96xf32> to vector<8x32xf32>
    %532 = vector.extract_strided_slice %512 {offsets = [0, 64], sizes = [8, 32], strides = [1, 1]} : vector<8x192xf32> to vector<8x32xf32>
    %533 = vector.extract_strided_slice %439 {offsets = [0, 0], sizes = [1, 32], strides = [1, 1]} : vector<1x64xf32> to vector<1x32xf32>
    %534 = vector.broadcast %533 : vector<1x32xf32> to vector<8x32xf32>
    %535 = arith.addf %532, %534 : vector<8x32xf32>
    %536 = arith.mulf %522, %535 : vector<8x32xf32>
    %537 = arith.addf %531, %536 : vector<8x32xf32>
    %538 = math.tanh %537 : vector<8x32xf32>
    %cst_115 = arith.constant 1.000000e+00 : f32
    %539 = vector.broadcast %cst_115 : f32 to vector<8x32xf32>
    %540 = arith.subf %539, %530 : vector<8x32xf32>
    %541 = arith.mulf %540, %538 : vector<8x32xf32>
    %542 = vector.extract_strided_slice %511 {offsets = [0, 0], sizes = [8, 32], strides = [1, 1]} : vector<8x64xf32> to vector<8x32xf32>
    %543 = arith.mulf %530, %542 : vector<8x32xf32>
    %544 = arith.addf %541, %543 : vector<8x32xf32>
    %545 = vector.extract_strided_slice %514 {offsets = [0, 0], sizes = [8, 32], strides = [1, 1]} : vector<8x96xf32> to vector<8x32xf32>
    %546 = vector.extract_strided_slice %512 {offsets = [0, 96], sizes = [8, 32], strides = [1, 1]} : vector<8x192xf32> to vector<8x32xf32>
    %547 = arith.addf %545, %546 : vector<8x32xf32>
    %548 = arith.negf %547 : vector<8x32xf32>
    %549 = math.exp %548 : vector<8x32xf32>
    %cst_116 = arith.constant 1.000000e+00 : f32
    %550 = vector.broadcast %cst_116 : f32 to vector<8x32xf32>
    %551 = arith.addf %550, %549 : vector<8x32xf32>
    %552 = arith.divf %550, %551 : vector<8x32xf32>
    %553 = vector.extract_strided_slice %514 {offsets = [0, 32], sizes = [8, 32], strides = [1, 1]} : vector<8x96xf32> to vector<8x32xf32>
    %554 = vector.extract_strided_slice %512 {offsets = [0, 128], sizes = [8, 32], strides = [1, 1]} : vector<8x192xf32> to vector<8x32xf32>
    %555 = arith.addf %553, %554 : vector<8x32xf32>
    %556 = arith.negf %555 : vector<8x32xf32>
    %557 = math.exp %556 : vector<8x32xf32>
    %cst_117 = arith.constant 1.000000e+00 : f32
    %558 = vector.broadcast %cst_117 : f32 to vector<8x32xf32>
    %559 = arith.addf %558, %557 : vector<8x32xf32>
    %560 = arith.divf %558, %559 : vector<8x32xf32>
    %561 = vector.extract_strided_slice %514 {offsets = [0, 64], sizes = [8, 32], strides = [1, 1]} : vector<8x96xf32> to vector<8x32xf32>
    %562 = vector.extract_strided_slice %512 {offsets = [0, 160], sizes = [8, 32], strides = [1, 1]} : vector<8x192xf32> to vector<8x32xf32>
    %563 = vector.extract_strided_slice %439 {offsets = [0, 32], sizes = [1, 32], strides = [1, 1]} : vector<1x64xf32> to vector<1x32xf32>
    %564 = vector.broadcast %563 : vector<1x32xf32> to vector<8x32xf32>
    %565 = arith.addf %562, %564 : vector<8x32xf32>
    %566 = arith.mulf %552, %565 : vector<8x32xf32>
    %567 = arith.addf %561, %566 : vector<8x32xf32>
    %568 = math.tanh %567 : vector<8x32xf32>
    %cst_118 = arith.constant 1.000000e+00 : f32
    %569 = vector.broadcast %cst_118 : f32 to vector<8x32xf32>
    %570 = arith.subf %569, %560 : vector<8x32xf32>
    %571 = arith.mulf %570, %568 : vector<8x32xf32>
    %572 = vector.extract_strided_slice %511 {offsets = [0, 32], sizes = [8, 32], strides = [1, 1]} : vector<8x64xf32> to vector<8x32xf32>
    %573 = arith.mulf %560, %572 : vector<8x32xf32>
    %574 = arith.addf %571, %573 : vector<8x32xf32>
    %575 = tpu.concatenate %480, %544 in 0 : vector<8x32xf32>, vector<8x32xf32> -> vector<16x32xf32>
    %576 = tpu.concatenate %574, %510 in 0 : vector<8x32xf32>, vector<8x32xf32> -> vector<16x32xf32>
    %c2_119 = arith.constant 2 : index
    %c0_120 = arith.constant 0 : index
    %c0_121 = arith.constant 0 : index
    %577 = vector.load %arg6[%c2_119, %c0_120, %c0_121] : memref<5x64x192xf32, #tpu.memory_space<vmem>>, vector<1x64x192xf32>
    %578 = vector.shape_cast %577 : vector<1x64x192xf32> to vector<64x192xf32>
    %c2_122 = arith.constant 2 : index
    %c0_123 = arith.constant 0 : index
    %c0_124 = arith.constant 0 : index
    %579 = vector.load %arg7[%c2_122, %c0_123, %c0_124] : memref<5x64x192xf32, #tpu.memory_space<vmem>>, vector<1x64x192xf32>
    %580 = vector.shape_cast %579 : vector<1x64x192xf32> to vector<64x192xf32>
    %c2_125 = arith.constant 2 : index
    %c0_126 = arith.constant 0 : index
    %c0_127 = arith.constant 0 : index
    %581 = vector.load %arg8[%c2_125, %c0_126, %c0_127] : memref<5x1x192xf32, #tpu.memory_space<vmem>>, vector<1x1x192xf32>
    %582 = vector.shape_cast %581 : vector<1x1x192xf32> to vector<1x192xf32>
    %c2_128 = arith.constant 2 : index
    %c0_129 = arith.constant 0 : index
    %c0_130 = arith.constant 0 : index
    %583 = vector.load %arg9[%c2_128, %c0_129, %c0_130] : memref<5x1x64xf32, #tpu.memory_space<vmem>>, vector<1x1x64xf32>
    %584 = vector.shape_cast %583 : vector<1x1x64xf32> to vector<1x64xf32>
    %585 = vector.extract_strided_slice %578 {offsets = [0, 0], sizes = [32, 192], strides = [1, 1]} : vector<64x192xf32> to vector<32x192xf32>
    %cst_131 = arith.constant dense<0.000000e+00> : vector<16x192xf32>
    %586 = tpu.matmul %575, %585, %cst_131 {dimension_numbers = #tpu.dot_dimension_numbers<[1], [0], [0], [1], [0, 0, 1, 1], [], []>} : vector<16x32xf32>, vector<32x192xf32>, vector<16x192xf32> -> vector<16x192xf32>
    %587 = vector.extract_strided_slice %578 {offsets = [32, 0], sizes = [32, 192], strides = [1, 1]} : vector<64x192xf32> to vector<32x192xf32>
    %cst_132 = arith.constant dense<0.000000e+00> : vector<16x192xf32>
    %588 = tpu.matmul %576, %587, %cst_132 {dimension_numbers = #tpu.dot_dimension_numbers<[1], [0], [0], [1], [0, 0, 1, 1], [], []>} : vector<16x32xf32>, vector<32x192xf32>, vector<16x192xf32> -> vector<16x192xf32>
    %589 = arith.addf %586, %588 : vector<16x192xf32>
    %590 = vector.broadcast %582 : vector<1x192xf32> to vector<16x192xf32>
    %591 = arith.addf %589, %590 : vector<16x192xf32>
    %cst_133 = arith.constant 0.000000e+00 : f32
    %592 = vector.broadcast %cst_133 : f32 to vector<8x64xf32>
    %cst_134 = arith.constant dense<0.000000e+00> : vector<8x192xf32>
    %593 = tpu.matmul %592, %580, %cst_134 {dimension_numbers = #tpu.dot_dimension_numbers<[1], [0], [0], [1], [0, 0, 1, 1], [], []>} : vector<8x64xf32>, vector<64x192xf32>, vector<8x192xf32> -> vector<8x192xf32>
    %594 = vector.extract_strided_slice %591 {offsets = [0, 0], sizes = [8, 96], strides = [1, 1]} : vector<16x192xf32> to vector<8x96xf32>
    %595 = vector.extract_strided_slice %591 {offsets = [8, 96], sizes = [8, 96], strides = [1, 1]} : vector<16x192xf32> to vector<8x96xf32>
    %596 = vector.extract_strided_slice %594 {offsets = [0, 0], sizes = [8, 32], strides = [1, 1]} : vector<8x96xf32> to vector<8x32xf32>
    %597 = vector.extract_strided_slice %593 {offsets = [0, 0], sizes = [8, 32], strides = [1, 1]} : vector<8x192xf32> to vector<8x32xf32>
    %598 = arith.addf %596, %597 : vector<8x32xf32>
    %599 = arith.negf %598 : vector<8x32xf32>
    %600 = math.exp %599 : vector<8x32xf32>
    %cst_135 = arith.constant 1.000000e+00 : f32
    %601 = vector.broadcast %cst_135 : f32 to vector<8x32xf32>
    %602 = arith.addf %601, %600 : vector<8x32xf32>
    %603 = arith.divf %601, %602 : vector<8x32xf32>
    %604 = vector.extract_strided_slice %594 {offsets = [0, 32], sizes = [8, 32], strides = [1, 1]} : vector<8x96xf32> to vector<8x32xf32>
    %605 = vector.extract_strided_slice %593 {offsets = [0, 32], sizes = [8, 32], strides = [1, 1]} : vector<8x192xf32> to vector<8x32xf32>
    %606 = arith.addf %604, %605 : vector<8x32xf32>
    %607 = arith.negf %606 : vector<8x32xf32>
    %608 = math.exp %607 : vector<8x32xf32>
    %cst_136 = arith.constant 1.000000e+00 : f32
    %609 = vector.broadcast %cst_136 : f32 to vector<8x32xf32>
    %610 = arith.addf %609, %608 : vector<8x32xf32>
    %611 = arith.divf %609, %610 : vector<8x32xf32>
    %612 = vector.extract_strided_slice %594 {offsets = [0, 64], sizes = [8, 32], strides = [1, 1]} : vector<8x96xf32> to vector<8x32xf32>
    %613 = vector.extract_strided_slice %593 {offsets = [0, 64], sizes = [8, 32], strides = [1, 1]} : vector<8x192xf32> to vector<8x32xf32>
    %614 = vector.extract_strided_slice %584 {offsets = [0, 0], sizes = [1, 32], strides = [1, 1]} : vector<1x64xf32> to vector<1x32xf32>
    %615 = vector.broadcast %614 : vector<1x32xf32> to vector<8x32xf32>
    %616 = arith.addf %613, %615 : vector<8x32xf32>
    %617 = arith.mulf %603, %616 : vector<8x32xf32>
    %618 = arith.addf %612, %617 : vector<8x32xf32>
    %619 = math.tanh %618 : vector<8x32xf32>
    %cst_137 = arith.constant 1.000000e+00 : f32
    %620 = vector.broadcast %cst_137 : f32 to vector<8x32xf32>
    %621 = arith.subf %620, %611 : vector<8x32xf32>
    %622 = arith.mulf %621, %619 : vector<8x32xf32>
    %623 = vector.extract_strided_slice %592 {offsets = [0, 0], sizes = [8, 32], strides = [1, 1]} : vector<8x64xf32> to vector<8x32xf32>
    %624 = arith.mulf %611, %623 : vector<8x32xf32>
    %625 = arith.addf %622, %624 : vector<8x32xf32>
    %626 = vector.extract_strided_slice %595 {offsets = [0, 0], sizes = [8, 32], strides = [1, 1]} : vector<8x96xf32> to vector<8x32xf32>
    %627 = vector.extract_strided_slice %593 {offsets = [0, 96], sizes = [8, 32], strides = [1, 1]} : vector<8x192xf32> to vector<8x32xf32>
    %628 = arith.addf %626, %627 : vector<8x32xf32>
    %629 = arith.negf %628 : vector<8x32xf32>
    %630 = math.exp %629 : vector<8x32xf32>
    %cst_138 = arith.constant 1.000000e+00 : f32
    %631 = vector.broadcast %cst_138 : f32 to vector<8x32xf32>
    %632 = arith.addf %631, %630 : vector<8x32xf32>
    %633 = arith.divf %631, %632 : vector<8x32xf32>
    %634 = vector.extract_strided_slice %595 {offsets = [0, 32], sizes = [8, 32], strides = [1, 1]} : vector<8x96xf32> to vector<8x32xf32>
    %635 = vector.extract_strided_slice %593 {offsets = [0, 128], sizes = [8, 32], strides = [1, 1]} : vector<8x192xf32> to vector<8x32xf32>
    %636 = arith.addf %634, %635 : vector<8x32xf32>
    %637 = arith.negf %636 : vector<8x32xf32>
    %638 = math.exp %637 : vector<8x32xf32>
    %cst_139 = arith.constant 1.000000e+00 : f32
    %639 = vector.broadcast %cst_139 : f32 to vector<8x32xf32>
    %640 = arith.addf %639, %638 : vector<8x32xf32>
    %641 = arith.divf %639, %640 : vector<8x32xf32>
    %642 = vector.extract_strided_slice %595 {offsets = [0, 64], sizes = [8, 32], strides = [1, 1]} : vector<8x96xf32> to vector<8x32xf32>
    %643 = vector.extract_strided_slice %593 {offsets = [0, 160], sizes = [8, 32], strides = [1, 1]} : vector<8x192xf32> to vector<8x32xf32>
    %644 = vector.extract_strided_slice %584 {offsets = [0, 32], sizes = [1, 32], strides = [1, 1]} : vector<1x64xf32> to vector<1x32xf32>
    %645 = vector.broadcast %644 : vector<1x32xf32> to vector<8x32xf32>
    %646 = arith.addf %643, %645 : vector<8x32xf32>
    %647 = arith.mulf %633, %646 : vector<8x32xf32>
    %648 = arith.addf %642, %647 : vector<8x32xf32>
    %649 = math.tanh %648 : vector<8x32xf32>
    %cst_140 = arith.constant 1.000000e+00 : f32
    %650 = vector.broadcast %cst_140 : f32 to vector<8x32xf32>
    %651 = arith.subf %650, %641 : vector<8x32xf32>
    %652 = arith.mulf %651, %649 : vector<8x32xf32>
    %653 = vector.extract_strided_slice %592 {offsets = [0, 32], sizes = [8, 32], strides = [1, 1]} : vector<8x64xf32> to vector<8x32xf32>
    %654 = arith.mulf %641, %653 : vector<8x32xf32>
    %655 = arith.addf %652, %654 : vector<8x32xf32>
    %656 = tpu.concatenate %625, %655 in 1 : vector<8x32xf32>, vector<8x32xf32> -> vector<8x64xf32>
    %cst_141 = arith.constant dense<0.000000e+00> : vector<8x192xf32>
    %657 = tpu.matmul %656, %580, %cst_141 {dimension_numbers = #tpu.dot_dimension_numbers<[1], [0], [0], [1], [0, 0, 1, 1], [], []>} : vector<8x64xf32>, vector<64x192xf32>, vector<8x192xf32> -> vector<8x192xf32>
    %658 = vector.extract_strided_slice %591 {offsets = [8, 0], sizes = [8, 96], strides = [1, 1]} : vector<16x192xf32> to vector<8x96xf32>
    %659 = vector.extract_strided_slice %591 {offsets = [0, 96], sizes = [8, 96], strides = [1, 1]} : vector<16x192xf32> to vector<8x96xf32>
    %660 = vector.extract_strided_slice %658 {offsets = [0, 0], sizes = [8, 32], strides = [1, 1]} : vector<8x96xf32> to vector<8x32xf32>
    %661 = vector.extract_strided_slice %657 {offsets = [0, 0], sizes = [8, 32], strides = [1, 1]} : vector<8x192xf32> to vector<8x32xf32>
    %662 = arith.addf %660, %661 : vector<8x32xf32>
    %663 = arith.negf %662 : vector<8x32xf32>
    %664 = math.exp %663 : vector<8x32xf32>
    %cst_142 = arith.constant 1.000000e+00 : f32
    %665 = vector.broadcast %cst_142 : f32 to vector<8x32xf32>
    %666 = arith.addf %665, %664 : vector<8x32xf32>
    %667 = arith.divf %665, %666 : vector<8x32xf32>
    %668 = vector.extract_strided_slice %658 {offsets = [0, 32], sizes = [8, 32], strides = [1, 1]} : vector<8x96xf32> to vector<8x32xf32>
    %669 = vector.extract_strided_slice %657 {offsets = [0, 32], sizes = [8, 32], strides = [1, 1]} : vector<8x192xf32> to vector<8x32xf32>
    %670 = arith.addf %668, %669 : vector<8x32xf32>
    %671 = arith.negf %670 : vector<8x32xf32>
    %672 = math.exp %671 : vector<8x32xf32>
    %cst_143 = arith.constant 1.000000e+00 : f32
    %673 = vector.broadcast %cst_143 : f32 to vector<8x32xf32>
    %674 = arith.addf %673, %672 : vector<8x32xf32>
    %675 = arith.divf %673, %674 : vector<8x32xf32>
    %676 = vector.extract_strided_slice %658 {offsets = [0, 64], sizes = [8, 32], strides = [1, 1]} : vector<8x96xf32> to vector<8x32xf32>
    %677 = vector.extract_strided_slice %657 {offsets = [0, 64], sizes = [8, 32], strides = [1, 1]} : vector<8x192xf32> to vector<8x32xf32>
    %678 = vector.extract_strided_slice %584 {offsets = [0, 0], sizes = [1, 32], strides = [1, 1]} : vector<1x64xf32> to vector<1x32xf32>
    %679 = vector.broadcast %678 : vector<1x32xf32> to vector<8x32xf32>
    %680 = arith.addf %677, %679 : vector<8x32xf32>
    %681 = arith.mulf %667, %680 : vector<8x32xf32>
    %682 = arith.addf %676, %681 : vector<8x32xf32>
    %683 = math.tanh %682 : vector<8x32xf32>
    %cst_144 = arith.constant 1.000000e+00 : f32
    %684 = vector.broadcast %cst_144 : f32 to vector<8x32xf32>
    %685 = arith.subf %684, %675 : vector<8x32xf32>
    %686 = arith.mulf %685, %683 : vector<8x32xf32>
    %687 = vector.extract_strided_slice %656 {offsets = [0, 0], sizes = [8, 32], strides = [1, 1]} : vector<8x64xf32> to vector<8x32xf32>
    %688 = arith.mulf %675, %687 : vector<8x32xf32>
    %689 = arith.addf %686, %688 : vector<8x32xf32>
    %690 = vector.extract_strided_slice %659 {offsets = [0, 0], sizes = [8, 32], strides = [1, 1]} : vector<8x96xf32> to vector<8x32xf32>
    %691 = vector.extract_strided_slice %657 {offsets = [0, 96], sizes = [8, 32], strides = [1, 1]} : vector<8x192xf32> to vector<8x32xf32>
    %692 = arith.addf %690, %691 : vector<8x32xf32>
    %693 = arith.negf %692 : vector<8x32xf32>
    %694 = math.exp %693 : vector<8x32xf32>
    %cst_145 = arith.constant 1.000000e+00 : f32
    %695 = vector.broadcast %cst_145 : f32 to vector<8x32xf32>
    %696 = arith.addf %695, %694 : vector<8x32xf32>
    %697 = arith.divf %695, %696 : vector<8x32xf32>
    %698 = vector.extract_strided_slice %659 {offsets = [0, 32], sizes = [8, 32], strides = [1, 1]} : vector<8x96xf32> to vector<8x32xf32>
    %699 = vector.extract_strided_slice %657 {offsets = [0, 128], sizes = [8, 32], strides = [1, 1]} : vector<8x192xf32> to vector<8x32xf32>
    %700 = arith.addf %698, %699 : vector<8x32xf32>
    %701 = arith.negf %700 : vector<8x32xf32>
    %702 = math.exp %701 : vector<8x32xf32>
    %cst_146 = arith.constant 1.000000e+00 : f32
    %703 = vector.broadcast %cst_146 : f32 to vector<8x32xf32>
    %704 = arith.addf %703, %702 : vector<8x32xf32>
    %705 = arith.divf %703, %704 : vector<8x32xf32>
    %706 = vector.extract_strided_slice %659 {offsets = [0, 64], sizes = [8, 32], strides = [1, 1]} : vector<8x96xf32> to vector<8x32xf32>
    %707 = vector.extract_strided_slice %657 {offsets = [0, 160], sizes = [8, 32], strides = [1, 1]} : vector<8x192xf32> to vector<8x32xf32>
    %708 = vector.extract_strided_slice %584 {offsets = [0, 32], sizes = [1, 32], strides = [1, 1]} : vector<1x64xf32> to vector<1x32xf32>
    %709 = vector.broadcast %708 : vector<1x32xf32> to vector<8x32xf32>
    %710 = arith.addf %707, %709 : vector<8x32xf32>
    %711 = arith.mulf %697, %710 : vector<8x32xf32>
    %712 = arith.addf %706, %711 : vector<8x32xf32>
    %713 = math.tanh %712 : vector<8x32xf32>
    %cst_147 = arith.constant 1.000000e+00 : f32
    %714 = vector.broadcast %cst_147 : f32 to vector<8x32xf32>
    %715 = arith.subf %714, %705 : vector<8x32xf32>
    %716 = arith.mulf %715, %713 : vector<8x32xf32>
    %717 = vector.extract_strided_slice %656 {offsets = [0, 32], sizes = [8, 32], strides = [1, 1]} : vector<8x64xf32> to vector<8x32xf32>
    %718 = arith.mulf %705, %717 : vector<8x32xf32>
    %719 = arith.addf %716, %718 : vector<8x32xf32>
    %720 = tpu.concatenate %625, %689 in 0 : vector<8x32xf32>, vector<8x32xf32> -> vector<16x32xf32>
    %721 = tpu.concatenate %719, %655 in 0 : vector<8x32xf32>, vector<8x32xf32> -> vector<16x32xf32>
    %c3_148 = arith.constant 3 : index
    %c0_149 = arith.constant 0 : index
    %c0_150 = arith.constant 0 : index
    %722 = vector.load %arg6[%c3_148, %c0_149, %c0_150] : memref<5x64x192xf32, #tpu.memory_space<vmem>>, vector<1x64x192xf32>
    %723 = vector.shape_cast %722 : vector<1x64x192xf32> to vector<64x192xf32>
    %c3_151 = arith.constant 3 : index
    %c0_152 = arith.constant 0 : index
    %c0_153 = arith.constant 0 : index
    %724 = vector.load %arg7[%c3_151, %c0_152, %c0_153] : memref<5x64x192xf32, #tpu.memory_space<vmem>>, vector<1x64x192xf32>
    %725 = vector.shape_cast %724 : vector<1x64x192xf32> to vector<64x192xf32>
    %c3_154 = arith.constant 3 : index
    %c0_155 = arith.constant 0 : index
    %c0_156 = arith.constant 0 : index
    %726 = vector.load %arg8[%c3_154, %c0_155, %c0_156] : memref<5x1x192xf32, #tpu.memory_space<vmem>>, vector<1x1x192xf32>
    %727 = vector.shape_cast %726 : vector<1x1x192xf32> to vector<1x192xf32>
    %c3_157 = arith.constant 3 : index
    %c0_158 = arith.constant 0 : index
    %c0_159 = arith.constant 0 : index
    %728 = vector.load %arg9[%c3_157, %c0_158, %c0_159] : memref<5x1x64xf32, #tpu.memory_space<vmem>>, vector<1x1x64xf32>
    %729 = vector.shape_cast %728 : vector<1x1x64xf32> to vector<1x64xf32>
    %730 = vector.extract_strided_slice %723 {offsets = [0, 0], sizes = [32, 192], strides = [1, 1]} : vector<64x192xf32> to vector<32x192xf32>
    %cst_160 = arith.constant dense<0.000000e+00> : vector<16x192xf32>
    %731 = tpu.matmul %720, %730, %cst_160 {dimension_numbers = #tpu.dot_dimension_numbers<[1], [0], [0], [1], [0, 0, 1, 1], [], []>} : vector<16x32xf32>, vector<32x192xf32>, vector<16x192xf32> -> vector<16x192xf32>
    %732 = vector.extract_strided_slice %723 {offsets = [32, 0], sizes = [32, 192], strides = [1, 1]} : vector<64x192xf32> to vector<32x192xf32>
    %cst_161 = arith.constant dense<0.000000e+00> : vector<16x192xf32>
    %733 = tpu.matmul %721, %732, %cst_161 {dimension_numbers = #tpu.dot_dimension_numbers<[1], [0], [0], [1], [0, 0, 1, 1], [], []>} : vector<16x32xf32>, vector<32x192xf32>, vector<16x192xf32> -> vector<16x192xf32>
    %734 = arith.addf %731, %733 : vector<16x192xf32>
    %735 = vector.broadcast %727 : vector<1x192xf32> to vector<16x192xf32>
    %736 = arith.addf %734, %735 : vector<16x192xf32>
    %cst_162 = arith.constant 0.000000e+00 : f32
    %737 = vector.broadcast %cst_162 : f32 to vector<8x64xf32>
    %cst_163 = arith.constant dense<0.000000e+00> : vector<8x192xf32>
    %738 = tpu.matmul %737, %725, %cst_163 {dimension_numbers = #tpu.dot_dimension_numbers<[1], [0], [0], [1], [0, 0, 1, 1], [], []>} : vector<8x64xf32>, vector<64x192xf32>, vector<8x192xf32> -> vector<8x192xf32>
    %739 = vector.extract_strided_slice %736 {offsets = [0, 0], sizes = [8, 96], strides = [1, 1]} : vector<16x192xf32> to vector<8x96xf32>
    %740 = vector.extract_strided_slice %736 {offsets = [8, 96], sizes = [8, 96], strides = [1, 1]} : vector<16x192xf32> to vector<8x96xf32>
    %741 = vector.extract_strided_slice %739 {offsets = [0, 0], sizes = [8, 32], strides = [1, 1]} : vector<8x96xf32> to vector<8x32xf32>
    %742 = vector.extract_strided_slice %738 {offsets = [0, 0], sizes = [8, 32], strides = [1, 1]} : vector<8x192xf32> to vector<8x32xf32>
    %743 = arith.addf %741, %742 : vector<8x32xf32>
    %744 = arith.negf %743 : vector<8x32xf32>
    %745 = math.exp %744 : vector<8x32xf32>
    %cst_164 = arith.constant 1.000000e+00 : f32
    %746 = vector.broadcast %cst_164 : f32 to vector<8x32xf32>
    %747 = arith.addf %746, %745 : vector<8x32xf32>
    %748 = arith.divf %746, %747 : vector<8x32xf32>
    %749 = vector.extract_strided_slice %739 {offsets = [0, 32], sizes = [8, 32], strides = [1, 1]} : vector<8x96xf32> to vector<8x32xf32>
    %750 = vector.extract_strided_slice %738 {offsets = [0, 32], sizes = [8, 32], strides = [1, 1]} : vector<8x192xf32> to vector<8x32xf32>
    %751 = arith.addf %749, %750 : vector<8x32xf32>
    %752 = arith.negf %751 : vector<8x32xf32>
    %753 = math.exp %752 : vector<8x32xf32>
    %cst_165 = arith.constant 1.000000e+00 : f32
    %754 = vector.broadcast %cst_165 : f32 to vector<8x32xf32>
    %755 = arith.addf %754, %753 : vector<8x32xf32>
    %756 = arith.divf %754, %755 : vector<8x32xf32>
    %757 = vector.extract_strided_slice %739 {offsets = [0, 64], sizes = [8, 32], strides = [1, 1]} : vector<8x96xf32> to vector<8x32xf32>
    %758 = vector.extract_strided_slice %738 {offsets = [0, 64], sizes = [8, 32], strides = [1, 1]} : vector<8x192xf32> to vector<8x32xf32>
    %759 = vector.extract_strided_slice %729 {offsets = [0, 0], sizes = [1, 32], strides = [1, 1]} : vector<1x64xf32> to vector<1x32xf32>
    %760 = vector.broadcast %759 : vector<1x32xf32> to vector<8x32xf32>
    %761 = arith.addf %758, %760 : vector<8x32xf32>
    %762 = arith.mulf %748, %761 : vector<8x32xf32>
    %763 = arith.addf %757, %762 : vector<8x32xf32>
    %764 = math.tanh %763 : vector<8x32xf32>
    %cst_166 = arith.constant 1.000000e+00 : f32
    %765 = vector.broadcast %cst_166 : f32 to vector<8x32xf32>
    %766 = arith.subf %765, %756 : vector<8x32xf32>
    %767 = arith.mulf %766, %764 : vector<8x32xf32>
    %768 = vector.extract_strided_slice %737 {offsets = [0, 0], sizes = [8, 32], strides = [1, 1]} : vector<8x64xf32> to vector<8x32xf32>
    %769 = arith.mulf %756, %768 : vector<8x32xf32>
    %770 = arith.addf %767, %769 : vector<8x32xf32>
    %771 = vector.extract_strided_slice %740 {offsets = [0, 0], sizes = [8, 32], strides = [1, 1]} : vector<8x96xf32> to vector<8x32xf32>
    %772 = vector.extract_strided_slice %738 {offsets = [0, 96], sizes = [8, 32], strides = [1, 1]} : vector<8x192xf32> to vector<8x32xf32>
    %773 = arith.addf %771, %772 : vector<8x32xf32>
    %774 = arith.negf %773 : vector<8x32xf32>
    %775 = math.exp %774 : vector<8x32xf32>
    %cst_167 = arith.constant 1.000000e+00 : f32
    %776 = vector.broadcast %cst_167 : f32 to vector<8x32xf32>
    %777 = arith.addf %776, %775 : vector<8x32xf32>
    %778 = arith.divf %776, %777 : vector<8x32xf32>
    %779 = vector.extract_strided_slice %740 {offsets = [0, 32], sizes = [8, 32], strides = [1, 1]} : vector<8x96xf32> to vector<8x32xf32>
    %780 = vector.extract_strided_slice %738 {offsets = [0, 128], sizes = [8, 32], strides = [1, 1]} : vector<8x192xf32> to vector<8x32xf32>
    %781 = arith.addf %779, %780 : vector<8x32xf32>
    %782 = arith.negf %781 : vector<8x32xf32>
    %783 = math.exp %782 : vector<8x32xf32>
    %cst_168 = arith.constant 1.000000e+00 : f32
    %784 = vector.broadcast %cst_168 : f32 to vector<8x32xf32>
    %785 = arith.addf %784, %783 : vector<8x32xf32>
    %786 = arith.divf %784, %785 : vector<8x32xf32>
    %787 = vector.extract_strided_slice %740 {offsets = [0, 64], sizes = [8, 32], strides = [1, 1]} : vector<8x96xf32> to vector<8x32xf32>
    %788 = vector.extract_strided_slice %738 {offsets = [0, 160], sizes = [8, 32], strides = [1, 1]} : vector<8x192xf32> to vector<8x32xf32>
    %789 = vector.extract_strided_slice %729 {offsets = [0, 32], sizes = [1, 32], strides = [1, 1]} : vector<1x64xf32> to vector<1x32xf32>
    %790 = vector.broadcast %789 : vector<1x32xf32> to vector<8x32xf32>
    %791 = arith.addf %788, %790 : vector<8x32xf32>
    %792 = arith.mulf %778, %791 : vector<8x32xf32>
    %793 = arith.addf %787, %792 : vector<8x32xf32>
    %794 = math.tanh %793 : vector<8x32xf32>
    %cst_169 = arith.constant 1.000000e+00 : f32
    %795 = vector.broadcast %cst_169 : f32 to vector<8x32xf32>
    %796 = arith.subf %795, %786 : vector<8x32xf32>
    %797 = arith.mulf %796, %794 : vector<8x32xf32>
    %798 = vector.extract_strided_slice %737 {offsets = [0, 32], sizes = [8, 32], strides = [1, 1]} : vector<8x64xf32> to vector<8x32xf32>
    %799 = arith.mulf %786, %798 : vector<8x32xf32>
    %800 = arith.addf %797, %799 : vector<8x32xf32>
    %801 = tpu.concatenate %770, %800 in 1 : vector<8x32xf32>, vector<8x32xf32> -> vector<8x64xf32>
    %cst_170 = arith.constant dense<0.000000e+00> : vector<8x192xf32>
    %802 = tpu.matmul %801, %725, %cst_170 {dimension_numbers = #tpu.dot_dimension_numbers<[1], [0], [0], [1], [0, 0, 1, 1], [], []>} : vector<8x64xf32>, vector<64x192xf32>, vector<8x192xf32> -> vector<8x192xf32>
    %803 = vector.extract_strided_slice %736 {offsets = [8, 0], sizes = [8, 96], strides = [1, 1]} : vector<16x192xf32> to vector<8x96xf32>
    %804 = vector.extract_strided_slice %736 {offsets = [0, 96], sizes = [8, 96], strides = [1, 1]} : vector<16x192xf32> to vector<8x96xf32>
    %805 = vector.extract_strided_slice %803 {offsets = [0, 0], sizes = [8, 32], strides = [1, 1]} : vector<8x96xf32> to vector<8x32xf32>
    %806 = vector.extract_strided_slice %802 {offsets = [0, 0], sizes = [8, 32], strides = [1, 1]} : vector<8x192xf32> to vector<8x32xf32>
    %807 = arith.addf %805, %806 : vector<8x32xf32>
    %808 = arith.negf %807 : vector<8x32xf32>
    %809 = math.exp %808 : vector<8x32xf32>
    %cst_171 = arith.constant 1.000000e+00 : f32
    %810 = vector.broadcast %cst_171 : f32 to vector<8x32xf32>
    %811 = arith.addf %810, %809 : vector<8x32xf32>
    %812 = arith.divf %810, %811 : vector<8x32xf32>
    %813 = vector.extract_strided_slice %803 {offsets = [0, 32], sizes = [8, 32], strides = [1, 1]} : vector<8x96xf32> to vector<8x32xf32>
    %814 = vector.extract_strided_slice %802 {offsets = [0, 32], sizes = [8, 32], strides = [1, 1]} : vector<8x192xf32> to vector<8x32xf32>
    %815 = arith.addf %813, %814 : vector<8x32xf32>
    %816 = arith.negf %815 : vector<8x32xf32>
    %817 = math.exp %816 : vector<8x32xf32>
    %cst_172 = arith.constant 1.000000e+00 : f32
    %818 = vector.broadcast %cst_172 : f32 to vector<8x32xf32>
    %819 = arith.addf %818, %817 : vector<8x32xf32>
    %820 = arith.divf %818, %819 : vector<8x32xf32>
    %821 = vector.extract_strided_slice %803 {offsets = [0, 64], sizes = [8, 32], strides = [1, 1]} : vector<8x96xf32> to vector<8x32xf32>
    %822 = vector.extract_strided_slice %802 {offsets = [0, 64], sizes = [8, 32], strides = [1, 1]} : vector<8x192xf32> to vector<8x32xf32>
    %823 = vector.extract_strided_slice %729 {offsets = [0, 0], sizes = [1, 32], strides = [1, 1]} : vector<1x64xf32> to vector<1x32xf32>
    %824 = vector.broadcast %823 : vector<1x32xf32> to vector<8x32xf32>
    %825 = arith.addf %822, %824 : vector<8x32xf32>
    %826 = arith.mulf %812, %825 : vector<8x32xf32>
    %827 = arith.addf %821, %826 : vector<8x32xf32>
    %828 = math.tanh %827 : vector<8x32xf32>
    %cst_173 = arith.constant 1.000000e+00 : f32
    %829 = vector.broadcast %cst_173 : f32 to vector<8x32xf32>
    %830 = arith.subf %829, %820 : vector<8x32xf32>
    %831 = arith.mulf %830, %828 : vector<8x32xf32>
    %832 = vector.extract_strided_slice %801 {offsets = [0, 0], sizes = [8, 32], strides = [1, 1]} : vector<8x64xf32> to vector<8x32xf32>
    %833 = arith.mulf %820, %832 : vector<8x32xf32>
    %834 = arith.addf %831, %833 : vector<8x32xf32>
    %835 = vector.extract_strided_slice %804 {offsets = [0, 0], sizes = [8, 32], strides = [1, 1]} : vector<8x96xf32> to vector<8x32xf32>
    %836 = vector.extract_strided_slice %802 {offsets = [0, 96], sizes = [8, 32], strides = [1, 1]} : vector<8x192xf32> to vector<8x32xf32>
    %837 = arith.addf %835, %836 : vector<8x32xf32>
    %838 = arith.negf %837 : vector<8x32xf32>
    %839 = math.exp %838 : vector<8x32xf32>
    %cst_174 = arith.constant 1.000000e+00 : f32
    %840 = vector.broadcast %cst_174 : f32 to vector<8x32xf32>
    %841 = arith.addf %840, %839 : vector<8x32xf32>
    %842 = arith.divf %840, %841 : vector<8x32xf32>
    %843 = vector.extract_strided_slice %804 {offsets = [0, 32], sizes = [8, 32], strides = [1, 1]} : vector<8x96xf32> to vector<8x32xf32>
    %844 = vector.extract_strided_slice %802 {offsets = [0, 128], sizes = [8, 32], strides = [1, 1]} : vector<8x192xf32> to vector<8x32xf32>
    %845 = arith.addf %843, %844 : vector<8x32xf32>
    %846 = arith.negf %845 : vector<8x32xf32>
    %847 = math.exp %846 : vector<8x32xf32>
    %cst_175 = arith.constant 1.000000e+00 : f32
    %848 = vector.broadcast %cst_175 : f32 to vector<8x32xf32>
    %849 = arith.addf %848, %847 : vector<8x32xf32>
    %850 = arith.divf %848, %849 : vector<8x32xf32>
    %851 = vector.extract_strided_slice %804 {offsets = [0, 64], sizes = [8, 32], strides = [1, 1]} : vector<8x96xf32> to vector<8x32xf32>
    %852 = vector.extract_strided_slice %802 {offsets = [0, 160], sizes = [8, 32], strides = [1, 1]} : vector<8x192xf32> to vector<8x32xf32>
    %853 = vector.extract_strided_slice %729 {offsets = [0, 32], sizes = [1, 32], strides = [1, 1]} : vector<1x64xf32> to vector<1x32xf32>
    %854 = vector.broadcast %853 : vector<1x32xf32> to vector<8x32xf32>
    %855 = arith.addf %852, %854 : vector<8x32xf32>
    %856 = arith.mulf %842, %855 : vector<8x32xf32>
    %857 = arith.addf %851, %856 : vector<8x32xf32>
    %858 = math.tanh %857 : vector<8x32xf32>
    %cst_176 = arith.constant 1.000000e+00 : f32
    %859 = vector.broadcast %cst_176 : f32 to vector<8x32xf32>
    %860 = arith.subf %859, %850 : vector<8x32xf32>
    %861 = arith.mulf %860, %858 : vector<8x32xf32>
    %862 = vector.extract_strided_slice %801 {offsets = [0, 32], sizes = [8, 32], strides = [1, 1]} : vector<8x64xf32> to vector<8x32xf32>
    %863 = arith.mulf %850, %862 : vector<8x32xf32>
    %864 = arith.addf %861, %863 : vector<8x32xf32>
    %865 = tpu.concatenate %770, %834 in 0 : vector<8x32xf32>, vector<8x32xf32> -> vector<16x32xf32>
    %866 = tpu.concatenate %864, %800 in 0 : vector<8x32xf32>, vector<8x32xf32> -> vector<16x32xf32>
    %c4_177 = arith.constant 4 : index
    %c0_178 = arith.constant 0 : index
    %c0_179 = arith.constant 0 : index
    %867 = vector.load %arg6[%c4_177, %c0_178, %c0_179] : memref<5x64x192xf32, #tpu.memory_space<vmem>>, vector<1x64x192xf32>
    %868 = vector.shape_cast %867 : vector<1x64x192xf32> to vector<64x192xf32>
    %c4_180 = arith.constant 4 : index
    %c0_181 = arith.constant 0 : index
    %c0_182 = arith.constant 0 : index
    %869 = vector.load %arg7[%c4_180, %c0_181, %c0_182] : memref<5x64x192xf32, #tpu.memory_space<vmem>>, vector<1x64x192xf32>
    %870 = vector.shape_cast %869 : vector<1x64x192xf32> to vector<64x192xf32>
    %c4_183 = arith.constant 4 : index
    %c0_184 = arith.constant 0 : index
    %c0_185 = arith.constant 0 : index
    %871 = vector.load %arg8[%c4_183, %c0_184, %c0_185] : memref<5x1x192xf32, #tpu.memory_space<vmem>>, vector<1x1x192xf32>
    %872 = vector.shape_cast %871 : vector<1x1x192xf32> to vector<1x192xf32>
    %c4_186 = arith.constant 4 : index
    %c0_187 = arith.constant 0 : index
    %c0_188 = arith.constant 0 : index
    %873 = vector.load %arg9[%c4_186, %c0_187, %c0_188] : memref<5x1x64xf32, #tpu.memory_space<vmem>>, vector<1x1x64xf32>
    %874 = vector.shape_cast %873 : vector<1x1x64xf32> to vector<1x64xf32>
    %875 = vector.extract_strided_slice %868 {offsets = [0, 0], sizes = [32, 192], strides = [1, 1]} : vector<64x192xf32> to vector<32x192xf32>
    %cst_189 = arith.constant dense<0.000000e+00> : vector<16x192xf32>
    %876 = tpu.matmul %865, %875, %cst_189 {dimension_numbers = #tpu.dot_dimension_numbers<[1], [0], [0], [1], [0, 0, 1, 1], [], []>} : vector<16x32xf32>, vector<32x192xf32>, vector<16x192xf32> -> vector<16x192xf32>
    %877 = vector.extract_strided_slice %868 {offsets = [32, 0], sizes = [32, 192], strides = [1, 1]} : vector<64x192xf32> to vector<32x192xf32>
    %cst_190 = arith.constant dense<0.000000e+00> : vector<16x192xf32>
    %878 = tpu.matmul %866, %877, %cst_190 {dimension_numbers = #tpu.dot_dimension_numbers<[1], [0], [0], [1], [0, 0, 1, 1], [], []>} : vector<16x32xf32>, vector<32x192xf32>, vector<16x192xf32> -> vector<16x192xf32>
    %879 = arith.addf %876, %878 : vector<16x192xf32>
    %880 = vector.broadcast %872 : vector<1x192xf32> to vector<16x192xf32>
    %881 = arith.addf %879, %880 : vector<16x192xf32>
    %cst_191 = arith.constant 0.000000e+00 : f32
    %882 = vector.broadcast %cst_191 : f32 to vector<8x64xf32>
    %cst_192 = arith.constant dense<0.000000e+00> : vector<8x192xf32>
    %883 = tpu.matmul %882, %870, %cst_192 {dimension_numbers = #tpu.dot_dimension_numbers<[1], [0], [0], [1], [0, 0, 1, 1], [], []>} : vector<8x64xf32>, vector<64x192xf32>, vector<8x192xf32> -> vector<8x192xf32>
    %884 = vector.extract_strided_slice %881 {offsets = [0, 0], sizes = [8, 96], strides = [1, 1]} : vector<16x192xf32> to vector<8x96xf32>
    %885 = vector.extract_strided_slice %881 {offsets = [8, 96], sizes = [8, 96], strides = [1, 1]} : vector<16x192xf32> to vector<8x96xf32>
    %886 = vector.extract_strided_slice %884 {offsets = [0, 0], sizes = [8, 32], strides = [1, 1]} : vector<8x96xf32> to vector<8x32xf32>
    %887 = vector.extract_strided_slice %883 {offsets = [0, 0], sizes = [8, 32], strides = [1, 1]} : vector<8x192xf32> to vector<8x32xf32>
    %888 = arith.addf %886, %887 : vector<8x32xf32>
    %889 = arith.negf %888 : vector<8x32xf32>
    %890 = math.exp %889 : vector<8x32xf32>
    %cst_193 = arith.constant 1.000000e+00 : f32
    %891 = vector.broadcast %cst_193 : f32 to vector<8x32xf32>
    %892 = arith.addf %891, %890 : vector<8x32xf32>
    %893 = arith.divf %891, %892 : vector<8x32xf32>
    %894 = vector.extract_strided_slice %884 {offsets = [0, 32], sizes = [8, 32], strides = [1, 1]} : vector<8x96xf32> to vector<8x32xf32>
    %895 = vector.extract_strided_slice %883 {offsets = [0, 32], sizes = [8, 32], strides = [1, 1]} : vector<8x192xf32> to vector<8x32xf32>
    %896 = arith.addf %894, %895 : vector<8x32xf32>
    %897 = arith.negf %896 : vector<8x32xf32>
    %898 = math.exp %897 : vector<8x32xf32>
    %cst_194 = arith.constant 1.000000e+00 : f32
    %899 = vector.broadcast %cst_194 : f32 to vector<8x32xf32>
    %900 = arith.addf %899, %898 : vector<8x32xf32>
    %901 = arith.divf %899, %900 : vector<8x32xf32>
    %902 = vector.extract_strided_slice %884 {offsets = [0, 64], sizes = [8, 32], strides = [1, 1]} : vector<8x96xf32> to vector<8x32xf32>
    %903 = vector.extract_strided_slice %883 {offsets = [0, 64], sizes = [8, 32], strides = [1, 1]} : vector<8x192xf32> to vector<8x32xf32>
    %904 = vector.extract_strided_slice %874 {offsets = [0, 0], sizes = [1, 32], strides = [1, 1]} : vector<1x64xf32> to vector<1x32xf32>
    %905 = vector.broadcast %904 : vector<1x32xf32> to vector<8x32xf32>
    %906 = arith.addf %903, %905 : vector<8x32xf32>
    %907 = arith.mulf %893, %906 : vector<8x32xf32>
    %908 = arith.addf %902, %907 : vector<8x32xf32>
    %909 = math.tanh %908 : vector<8x32xf32>
    %cst_195 = arith.constant 1.000000e+00 : f32
    %910 = vector.broadcast %cst_195 : f32 to vector<8x32xf32>
    %911 = arith.subf %910, %901 : vector<8x32xf32>
    %912 = arith.mulf %911, %909 : vector<8x32xf32>
    %913 = vector.extract_strided_slice %882 {offsets = [0, 0], sizes = [8, 32], strides = [1, 1]} : vector<8x64xf32> to vector<8x32xf32>
    %914 = arith.mulf %901, %913 : vector<8x32xf32>
    %915 = arith.addf %912, %914 : vector<8x32xf32>
    %916 = vector.extract_strided_slice %885 {offsets = [0, 0], sizes = [8, 32], strides = [1, 1]} : vector<8x96xf32> to vector<8x32xf32>
    %917 = vector.extract_strided_slice %883 {offsets = [0, 96], sizes = [8, 32], strides = [1, 1]} : vector<8x192xf32> to vector<8x32xf32>
    %918 = arith.addf %916, %917 : vector<8x32xf32>
    %919 = arith.negf %918 : vector<8x32xf32>
    %920 = math.exp %919 : vector<8x32xf32>
    %cst_196 = arith.constant 1.000000e+00 : f32
    %921 = vector.broadcast %cst_196 : f32 to vector<8x32xf32>
    %922 = arith.addf %921, %920 : vector<8x32xf32>
    %923 = arith.divf %921, %922 : vector<8x32xf32>
    %924 = vector.extract_strided_slice %885 {offsets = [0, 32], sizes = [8, 32], strides = [1, 1]} : vector<8x96xf32> to vector<8x32xf32>
    %925 = vector.extract_strided_slice %883 {offsets = [0, 128], sizes = [8, 32], strides = [1, 1]} : vector<8x192xf32> to vector<8x32xf32>
    %926 = arith.addf %924, %925 : vector<8x32xf32>
    %927 = arith.negf %926 : vector<8x32xf32>
    %928 = math.exp %927 : vector<8x32xf32>
    %cst_197 = arith.constant 1.000000e+00 : f32
    %929 = vector.broadcast %cst_197 : f32 to vector<8x32xf32>
    %930 = arith.addf %929, %928 : vector<8x32xf32>
    %931 = arith.divf %929, %930 : vector<8x32xf32>
    %932 = vector.extract_strided_slice %885 {offsets = [0, 64], sizes = [8, 32], strides = [1, 1]} : vector<8x96xf32> to vector<8x32xf32>
    %933 = vector.extract_strided_slice %883 {offsets = [0, 160], sizes = [8, 32], strides = [1, 1]} : vector<8x192xf32> to vector<8x32xf32>
    %934 = vector.extract_strided_slice %874 {offsets = [0, 32], sizes = [1, 32], strides = [1, 1]} : vector<1x64xf32> to vector<1x32xf32>
    %935 = vector.broadcast %934 : vector<1x32xf32> to vector<8x32xf32>
    %936 = arith.addf %933, %935 : vector<8x32xf32>
    %937 = arith.mulf %923, %936 : vector<8x32xf32>
    %938 = arith.addf %932, %937 : vector<8x32xf32>
    %939 = math.tanh %938 : vector<8x32xf32>
    %cst_198 = arith.constant 1.000000e+00 : f32
    %940 = vector.broadcast %cst_198 : f32 to vector<8x32xf32>
    %941 = arith.subf %940, %931 : vector<8x32xf32>
    %942 = arith.mulf %941, %939 : vector<8x32xf32>
    %943 = vector.extract_strided_slice %882 {offsets = [0, 32], sizes = [8, 32], strides = [1, 1]} : vector<8x64xf32> to vector<8x32xf32>
    %944 = arith.mulf %931, %943 : vector<8x32xf32>
    %945 = arith.addf %942, %944 : vector<8x32xf32>
    %946 = tpu.concatenate %915, %945 in 1 : vector<8x32xf32>, vector<8x32xf32> -> vector<8x64xf32>
    %cst_199 = arith.constant dense<0.000000e+00> : vector<8x192xf32>
    %947 = tpu.matmul %946, %870, %cst_199 {dimension_numbers = #tpu.dot_dimension_numbers<[1], [0], [0], [1], [0, 0, 1, 1], [], []>} : vector<8x64xf32>, vector<64x192xf32>, vector<8x192xf32> -> vector<8x192xf32>
    %948 = vector.extract_strided_slice %881 {offsets = [8, 0], sizes = [8, 96], strides = [1, 1]} : vector<16x192xf32> to vector<8x96xf32>
    %949 = vector.extract_strided_slice %881 {offsets = [0, 96], sizes = [8, 96], strides = [1, 1]} : vector<16x192xf32> to vector<8x96xf32>
    %950 = vector.extract_strided_slice %948 {offsets = [0, 0], sizes = [8, 32], strides = [1, 1]} : vector<8x96xf32> to vector<8x32xf32>
    %951 = vector.extract_strided_slice %947 {offsets = [0, 0], sizes = [8, 32], strides = [1, 1]} : vector<8x192xf32> to vector<8x32xf32>
    %952 = arith.addf %950, %951 : vector<8x32xf32>
    %953 = arith.negf %952 : vector<8x32xf32>
    %954 = math.exp %953 : vector<8x32xf32>
    %cst_200 = arith.constant 1.000000e+00 : f32
    %955 = vector.broadcast %cst_200 : f32 to vector<8x32xf32>
    %956 = arith.addf %955, %954 : vector<8x32xf32>
    %957 = arith.divf %955, %956 : vector<8x32xf32>
    %958 = vector.extract_strided_slice %948 {offsets = [0, 32], sizes = [8, 32], strides = [1, 1]} : vector<8x96xf32> to vector<8x32xf32>
    %959 = vector.extract_strided_slice %947 {offsets = [0, 32], sizes = [8, 32], strides = [1, 1]} : vector<8x192xf32> to vector<8x32xf32>
    %960 = arith.addf %958, %959 : vector<8x32xf32>
    %961 = arith.negf %960 : vector<8x32xf32>
    %962 = math.exp %961 : vector<8x32xf32>
    %cst_201 = arith.constant 1.000000e+00 : f32
    %963 = vector.broadcast %cst_201 : f32 to vector<8x32xf32>
    %964 = arith.addf %963, %962 : vector<8x32xf32>
    %965 = arith.divf %963, %964 : vector<8x32xf32>
    %966 = vector.extract_strided_slice %948 {offsets = [0, 64], sizes = [8, 32], strides = [1, 1]} : vector<8x96xf32> to vector<8x32xf32>
    %967 = vector.extract_strided_slice %947 {offsets = [0, 64], sizes = [8, 32], strides = [1, 1]} : vector<8x192xf32> to vector<8x32xf32>
    %968 = vector.extract_strided_slice %874 {offsets = [0, 0], sizes = [1, 32], strides = [1, 1]} : vector<1x64xf32> to vector<1x32xf32>
    %969 = vector.broadcast %968 : vector<1x32xf32> to vector<8x32xf32>
    %970 = arith.addf %967, %969 : vector<8x32xf32>
    %971 = arith.mulf %957, %970 : vector<8x32xf32>
    %972 = arith.addf %966, %971 : vector<8x32xf32>
    %973 = math.tanh %972 : vector<8x32xf32>
    %cst_202 = arith.constant 1.000000e+00 : f32
    %974 = vector.broadcast %cst_202 : f32 to vector<8x32xf32>
    %975 = arith.subf %974, %965 : vector<8x32xf32>
    %976 = arith.mulf %975, %973 : vector<8x32xf32>
    %977 = vector.extract_strided_slice %946 {offsets = [0, 0], sizes = [8, 32], strides = [1, 1]} : vector<8x64xf32> to vector<8x32xf32>
    %978 = arith.mulf %965, %977 : vector<8x32xf32>
    %979 = arith.addf %976, %978 : vector<8x32xf32>
    %980 = vector.extract_strided_slice %949 {offsets = [0, 0], sizes = [8, 32], strides = [1, 1]} : vector<8x96xf32> to vector<8x32xf32>
    %981 = vector.extract_strided_slice %947 {offsets = [0, 96], sizes = [8, 32], strides = [1, 1]} : vector<8x192xf32> to vector<8x32xf32>
    %982 = arith.addf %980, %981 : vector<8x32xf32>
    %983 = arith.negf %982 : vector<8x32xf32>
    %984 = math.exp %983 : vector<8x32xf32>
    %cst_203 = arith.constant 1.000000e+00 : f32
    %985 = vector.broadcast %cst_203 : f32 to vector<8x32xf32>
    %986 = arith.addf %985, %984 : vector<8x32xf32>
    %987 = arith.divf %985, %986 : vector<8x32xf32>
    %988 = vector.extract_strided_slice %949 {offsets = [0, 32], sizes = [8, 32], strides = [1, 1]} : vector<8x96xf32> to vector<8x32xf32>
    %989 = vector.extract_strided_slice %947 {offsets = [0, 128], sizes = [8, 32], strides = [1, 1]} : vector<8x192xf32> to vector<8x32xf32>
    %990 = arith.addf %988, %989 : vector<8x32xf32>
    %991 = arith.negf %990 : vector<8x32xf32>
    %992 = math.exp %991 : vector<8x32xf32>
    %cst_204 = arith.constant 1.000000e+00 : f32
    %993 = vector.broadcast %cst_204 : f32 to vector<8x32xf32>
    %994 = arith.addf %993, %992 : vector<8x32xf32>
    %995 = arith.divf %993, %994 : vector<8x32xf32>
    %996 = vector.extract_strided_slice %949 {offsets = [0, 64], sizes = [8, 32], strides = [1, 1]} : vector<8x96xf32> to vector<8x32xf32>
    %997 = vector.extract_strided_slice %947 {offsets = [0, 160], sizes = [8, 32], strides = [1, 1]} : vector<8x192xf32> to vector<8x32xf32>
    %998 = vector.extract_strided_slice %874 {offsets = [0, 32], sizes = [1, 32], strides = [1, 1]} : vector<1x64xf32> to vector<1x32xf32>
    %999 = vector.broadcast %998 : vector<1x32xf32> to vector<8x32xf32>
    %1000 = arith.addf %997, %999 : vector<8x32xf32>
    %1001 = arith.mulf %987, %1000 : vector<8x32xf32>
    %1002 = arith.addf %996, %1001 : vector<8x32xf32>
    %1003 = math.tanh %1002 : vector<8x32xf32>
    %cst_205 = arith.constant 1.000000e+00 : f32
    %1004 = vector.broadcast %cst_205 : f32 to vector<8x32xf32>
    %1005 = arith.subf %1004, %995 : vector<8x32xf32>
    %1006 = arith.mulf %1005, %1003 : vector<8x32xf32>
    %1007 = vector.extract_strided_slice %946 {offsets = [0, 32], sizes = [8, 32], strides = [1, 1]} : vector<8x64xf32> to vector<8x32xf32>
    %1008 = arith.mulf %995, %1007 : vector<8x32xf32>
    %1009 = arith.addf %1006, %1008 : vector<8x32xf32>
    %1010 = tpu.concatenate %915, %979 in 0 : vector<8x32xf32>, vector<8x32xf32> -> vector<16x32xf32>
    %1011 = tpu.concatenate %1009, %945 in 0 : vector<8x32xf32>, vector<8x32xf32> -> vector<16x32xf32>
    %c0_i32_206 = arith.constant 0 : i32
    %1012 = tpu.memref_slice %arg20[%c0_i32_206] : memref<2x!tpu.dma_semaphore, #tpu.memory_space<semaphore_mem>> -> memref<1x!tpu.dma_semaphore, #tpu.memory_space<semaphore_mem>>
    %1013 = tpu.memref_squeeze %1012 : memref<1x!tpu.dma_semaphore, #tpu.memory_space<semaphore_mem>> -> memref<!tpu.dma_semaphore, #tpu.memory_space<semaphore_mem>>
    tpu.wait_dma2 semaphore(%1013 : memref<!tpu.dma_semaphore, #tpu.memory_space<semaphore_mem>>) src(%arg10 : memref<64x1024xbf16, #tpu.memory_space<any>>) dst(%arg18 : memref<64x1024xbf16, #tpu.memory_space<vmem>>)
    %c1_i32_207 = arith.constant 1 : i32
    %1014 = tpu.memref_slice %arg20[%c1_i32_207] : memref<2x!tpu.dma_semaphore, #tpu.memory_space<semaphore_mem>> -> memref<1x!tpu.dma_semaphore, #tpu.memory_space<semaphore_mem>>
    %1015 = tpu.memref_squeeze %1014 : memref<1x!tpu.dma_semaphore, #tpu.memory_space<semaphore_mem>> -> memref<!tpu.dma_semaphore, #tpu.memory_space<semaphore_mem>>
    tpu.wait_dma2 semaphore(%1015 : memref<!tpu.dma_semaphore, #tpu.memory_space<semaphore_mem>>) src(%arg12 : memref<1024x64xbf16, #tpu.memory_space<any>>) dst(%arg19 : memref<1024x64xbf16, #tpu.memory_space<vmem>>)
    %c0_208 = arith.constant 0 : index
    %c0_209 = arith.constant 0 : index
    %1016 = vector.load %arg18[%c0_208, %c0_209] : memref<64x1024xbf16, #tpu.memory_space<vmem>>, vector<64x1024xbf16>
    %c0_210 = arith.constant 0 : index
    %c0_211 = arith.constant 0 : index
    %1017 = vector.load %arg19[%c0_210, %c0_211] : memref<1024x64xbf16, #tpu.memory_space<vmem>>, vector<1024x64xbf16>
    %1018 = arith.truncf %1010 : vector<16x32xf32> to vector<16x32xbf16>
    %1019 = vector.extract_strided_slice %1016 {offsets = [0, 0], sizes = [32, 1024], strides = [1, 1]} : vector<64x1024xbf16> to vector<32x1024xbf16>
    %cst_212 = arith.constant dense<0.000000e+00> : vector<16x1024xf32>
    %1020 = tpu.matmul %1018, %1019, %cst_212 {dimension_numbers = #tpu.dot_dimension_numbers<[1], [0], [0], [1], [0, 0, 1, 1], [], []>} : vector<16x32xbf16>, vector<32x1024xbf16>, vector<16x1024xf32> -> vector<16x1024xf32>
    %1021 = arith.truncf %1011 : vector<16x32xf32> to vector<16x32xbf16>
    %1022 = vector.extract_strided_slice %1016 {offsets = [32, 0], sizes = [32, 1024], strides = [1, 1]} : vector<64x1024xbf16> to vector<32x1024xbf16>
    %cst_213 = arith.constant dense<0.000000e+00> : vector<16x1024xf32>
    %1023 = tpu.matmul %1021, %1022, %cst_213 {dimension_numbers = #tpu.dot_dimension_numbers<[1], [0], [0], [1], [0, 0, 1, 1], [], []>} : vector<16x32xbf16>, vector<32x1024xbf16>, vector<16x1024xf32> -> vector<16x1024xf32>
    %1024 = arith.addf %1020, %1023 : vector<16x1024xf32>
    %c0_214 = arith.constant 0 : index
    %c0_215 = arith.constant 0 : index
    %1025 = vector.load %arg11[%c0_214, %c0_215] : memref<1x1024xf32, #tpu.memory_space<vmem>>, vector<1x1024xf32>
    %1026 = vector.broadcast %1025 : vector<1x1024xf32> to vector<16x1024xf32>
    %1027 = arith.addf %1024, %1026 : vector<16x1024xf32>
    %1028 = arith.truncf %1027 : vector<16x1024xf32> to vector<16x1024xbf16>
    %cst_216 = arith.constant dense<0.000000e+00> : vector<16x64xf32>
    %1029 = tpu.matmul %1028, %1017, %cst_216 {dimension_numbers = #tpu.dot_dimension_numbers<[1], [0], [0], [1], [0, 0, 1, 1], [], []>} : vector<16x1024xbf16>, vector<1024x64xbf16>, vector<16x64xf32> -> vector<16x64xf32>
    %c0_217 = arith.constant 0 : index
    %c0_218 = arith.constant 0 : index
    %1030 = vector.load %arg13[%c0_217, %c0_218] : memref<1x64xf32, #tpu.memory_space<vmem>>, vector<1x64xf32>
    %1031 = vector.broadcast %1030 : vector<1x64xf32> to vector<16x64xf32>
    %1032 = arith.addf %1029, %1031 : vector<16x64xf32>
    %c0_219 = arith.constant 0 : index
    %c0_220 = arith.constant 0 : index
    %1033 = vector.load %arg14[%c0_219, %c0_220] : memref<64x128xf32, #tpu.memory_space<vmem>>, vector<64x128xf32>
    %cst_221 = arith.constant dense<0.000000e+00> : vector<16x128xf32>
    %1034 = tpu.matmul %1032, %1033, %cst_221 {dimension_numbers = #tpu.dot_dimension_numbers<[1], [0], [0], [1], [0, 0, 1, 1], [], []>} : vector<16x64xf32>, vector<64x128xf32>, vector<16x128xf32> -> vector<16x128xf32>
    %c0_222 = arith.constant 0 : index
    %c0_223 = arith.constant 0 : index
    %1035 = vector.load %arg15[%c0_222, %c0_223] : memref<1x128xf32, #tpu.memory_space<vmem>>, vector<1x128xf32>
    %1036 = vector.broadcast %1035 : vector<1x128xf32> to vector<16x128xf32>
    %1037 = arith.addf %1034, %1036 : vector<16x128xf32>
    %cst_224 = arith.constant dense<0xFF800000> : vector<16xf32>
    %1038 = vector.multi_reduction <maximumf>, %1037, %cst_224 [1] : vector<16x128xf32> to vector<16xf32>
    %1039 = vector.shape_cast %1038 : vector<16xf32> to vector<16x1xf32>
    %1040 = vector.broadcast %1039 : vector<16x1xf32> to vector<16x128xf32>
    %1041 = arith.subf %1037, %1040 : vector<16x128xf32>
    %1042 = math.exp %1041 : vector<16x128xf32>
    %cst_225 = arith.constant dense<0.000000e+00> : vector<16xf32>
    %1043 = vector.multi_reduction <add>, %1042, %cst_225 [1] : vector<16x128xf32> to vector<16xf32>
    %1044 = vector.shape_cast %1043 : vector<16xf32> to vector<16x1xf32>
    %1045 = vector.broadcast %1044 : vector<16x1xf32> to vector<16x128xf32>
    %1046 = arith.divf %1042, %1045 : vector<16x128xf32>
    %1047 = vector.shape_cast %1046 : vector<16x128xf32> to vector<2x8x128xf32>
    %c0_226 = arith.constant 0 : index
    %c0_227 = arith.constant 0 : index
    %c0_228 = arith.constant 0 : index
    %1048 = vector.load %arg16[%c0_226, %c0_227, %c0_228] : memref<2x8x128xf32, #tpu.memory_space<vmem>>, vector<2x8x128xf32>
    tpu.vector_store %arg16[%c0_226, %c0_227, %c0_228], %1047 {strides = array<i32>} : memref<2x8x128xf32, #tpu.memory_space<vmem>>, vector<2x8x128xf32>,
    return
  }
  func.func @transform_0(%arg0: i32) -> (i32, i32, i32) {
    %c0_i32 = arith.constant 0 : i32
    %c0_i32_0 = arith.constant 0 : i32
    %c0_i32_1 = arith.constant 0 : i32
    %c0_i32_2 = arith.constant 0 : i32
    return %c0_i32, %c0_i32_0, %c0_i32_1 : i32, i32, i32
  }
  func.func @transform_1(%arg0: i32) -> (i32, i32) {
    %c0_i32 = arith.constant 0 : i32
    %c0_i32_0 = arith.constant 0 : i32
    %c0_i32_1 = arith.constant 0 : i32
    return %c0_i32, %c0_i32_0 : i32, i32
  }
  func.func @transform_2(%arg0: i32) -> (i32, i32) {
    %c0_i32 = arith.constant 0 : i32
    %c0_i32_0 = arith.constant 0 : i32
    %c0_i32_1 = arith.constant 0 : i32
    return %c0_i32, %c0_i32_0 : i32, i32
  }
  func.func @transform_3(%arg0: i32) -> (i32, i32) {
    %c0_i32 = arith.constant 0 : i32
    %c0_i32_0 = arith.constant 0 : i32
    %c0_i32_1 = arith.constant 0 : i32
    return %c0_i32, %c0_i32_0 : i32, i32
  }
  func.func @transform_4(%arg0: i32) -> (i32, i32) {
    %c0_i32 = arith.constant 0 : i32
    %c0_i32_0 = arith.constant 0 : i32
    %c0_i32_1 = arith.constant 0 : i32
    return %c0_i32, %c0_i32_0 : i32, i32
  }
  func.func @transform_5(%arg0: i32) -> (i32, i32, i32) {
    %c0_i32 = arith.constant 0 : i32
    %c0_i32_0 = arith.constant 0 : i32
    %c0_i32_1 = arith.constant 0 : i32
    %c0_i32_2 = arith.constant 0 : i32
    return %c0_i32, %c0_i32_0, %c0_i32_1 : i32, i32, i32
  }
  func.func @transform_6(%arg0: i32) -> (i32, i32, i32) {
    %c0_i32 = arith.constant 0 : i32
    %c0_i32_0 = arith.constant 0 : i32
    %c0_i32_1 = arith.constant 0 : i32
    %c0_i32_2 = arith.constant 0 : i32
    return %c0_i32, %c0_i32_0, %c0_i32_1 : i32, i32, i32
  }
  func.func @transform_7(%arg0: i32) -> (i32, i32, i32) {
    %c0_i32 = arith.constant 0 : i32
    %c0_i32_0 = arith.constant 0 : i32
    %c0_i32_1 = arith.constant 0 : i32
    %c0_i32_2 = arith.constant 0 : i32
    return %c0_i32, %c0_i32_0, %c0_i32_1 : i32, i32, i32
  }
  func.func @transform_8(%arg0: i32) -> (i32, i32, i32) {
    %c0_i32 = arith.constant 0 : i32
    %c0_i32_0 = arith.constant 0 : i32
    %c0_i32_1 = arith.constant 0 : i32
    %c0_i32_2 = arith.constant 0 : i32
    return %c0_i32, %c0_i32_0, %c0_i32_1 : i32, i32, i32
  }
  func.func @transform_10(%arg0: i32) -> (i32, i32) {
    %c0_i32 = arith.constant 0 : i32
    %c0_i32_0 = arith.constant 0 : i32
    %c0_i32_1 = arith.constant 0 : i32
    return %c0_i32, %c0_i32_0 : i32, i32
  }
  func.func @transform_12(%arg0: i32) -> (i32, i32) {
    %c0_i32 = arith.constant 0 : i32
    %c0_i32_0 = arith.constant 0 : i32
    %c0_i32_1 = arith.constant 0 : i32
    return %c0_i32, %c0_i32_0 : i32, i32
  }
  func.func @transform_13(%arg0: i32) -> (i32, i32) {
    %c0_i32 = arith.constant 0 : i32
    %c0_i32_0 = arith.constant 0 : i32
    %c0_i32_1 = arith.constant 0 : i32
    return %c0_i32, %c0_i32_0 : i32, i32
  }
  func.func @transform_14(%arg0: i32) -> (i32, i32) {
    %c0_i32 = arith.constant 0 : i32
    %c0_i32_0 = arith.constant 0 : i32
    %c0_i32_1 = arith.constant 0 : i32
    return %c0_i32, %c0_i32_0 : i32, i32
  }
  func.func @transform_15(%arg0: i32) -> (i32, i32, i32) {
    %c0_i32 = arith.constant 0 : i32
    %c0_i32_0 = arith.constant 0 : i32
    %c0_i32_1 = arith.constant 0 : i32
    %c0_i32_2 = arith.constant 0 : i32
    return %c0_i32, %c0_i32_0, %c0_i32_1 : i32, i32, i32
  }
}

</mosaic_0001>

<llo_original>
// kernel: tpu_custom_call.1
$region0: #{tpu_custom_call.1}
  #allocation0 [shape = 'u32[]', space=smem, size = 0x4, offset = 0x4, fixed_abs, tag = 'smem constant byte address 0x4 - core index']
  #allocation1 [shape = 'u32[144,128]{1,0:T(1,128)}', space=vmem, size = 0x12000, scoped, tag = 'internal scratch']
  #allocation2 [shape = 'f32[2,8,64]{2,1,0:T(8,128)}', space=vmem, size = 0x2000, scoped, tag = 'scratch operand']
  #allocation3 [shape = 'bf16[64,1024]{1,0:T(8,128)(2,1)}', space=vmem, size = 0x20000, scoped, tag = 'scratch operand']
  #allocation4 [shape = 'bf16[1024,64]{1,0:T(8,128)(2,1)}', space=vmem, size = 0x40000, scoped, tag = 'scratch operand']
  #allocation5 [shape = 's32[2]{0}', space=sflag, size = 0x8, scoped, tag = 'scratch operand']
  #allocation13 [shape = 's32[]', space=sflag, size = 0x4, offset = 0, fixed_abs, tag = 'sflag constant byte address 0x0 - dummy sync flag']
  #allocation14 [shape = 's32[]', space=sflag, size = 0x4, offset = 0, fixed_abs, tag = 'sflag constant byte address 0x0 - dummy sync flag']
  #allocation15 [shape = 'u32[]', space=smem, size = 0x4, offset = 0x44, fixed_abs, tag = 'smem constant byte address 0x44 - assertion arg 0']
  #allocation16 [shape = 'u32[]', space=smem, size = 0x4, offset = 0x48, fixed_abs, tag = 'smem constant byte address 0x48 - assertion arg 1']
  #allocation17 [shape = 's32[]', space=sflag, size = 0x4, offset = 0, fixed_abs, tag = 'sflag constant byte address 0x0 - dummy sync flag']
  %s0 = inlined_call_operand.vmem [shape: f32[2,8,1], index: 0, kind: input, shape index: {}]
  %s1 = inlined_call_operand.vmem [shape: f32[1,192], index: 1, kind: input, shape index: {}]
  %s2 = inlined_call_operand.vmem [shape: f32[64,192], index: 2, kind: input, shape index: {}]
  %s3 = inlined_call_operand.vmem [shape: f32[1,192], index: 3, kind: input, shape index: {}]
  %s4 = inlined_call_operand.hbm [shape: f32[1,64], index: 4, kind: input, shape index: {}]
  %s5 = inlined_call_operand.vmem [shape: f32[5,64,192], index: 5, kind: input, shape index: {}]
  %s6 = inlined_call_operand.hbm [shape: f32[5,64,192], index: 6, kind: input, shape index: {}]
  %s7 = inlined_call_operand.vmem [shape: f32[5,1,192], index: 7, kind: input, shape index: {}]
  %s8 = inlined_call_operand.vmem [shape: f32[5,1,64], index: 8, kind: input, shape index: {}]
  %s9 = inlined_call_operand.hbm [shape: bf16[64,1024], index: 9, kind: input, shape index: {}]
  %s10 = inlined_call_operand.vmem [shape: f32[1,1024], index: 10, kind: input, shape index: {}]
  %s11 = inlined_call_operand.vmem [shape: bf16[1024,64], index: 11, kind: input, shape index: {}]
  %s12 = inlined_call_operand.vmem [shape: f32[1,64], index: 12, kind: input, shape index: {}]
  %s13 = inlined_call_operand.hbm [shape: f32[64,128], index: 13, kind: input, shape index: {}]
  %s14 = inlined_call_operand.vmem [shape: f32[1,128], index: 14, kind: input, shape index: {}]
  %s15 = inlined_call_operand.hbm [shape: f32[2,8,128], index: 15, kind: output, shape index: {}]
  %s16 = sld [smem:[#allocation0]]
  $region112: #{tpu_custom_call.1} parent=0
    _
  %s18 = ssub.s32 1, %s16
  %s19 = scalar_select 0, %s18, %s16
  $region1: #{tpu_custom_call.1} parent=0
    #allocation6 [shape = 'u8[512]{0}', space=vmem, size = 0x400, scoped, tag = 'input window, operand 4, single buffered']
    #allocation7 [shape = 's32[1]{0}', space=sflag, size = 0x4, scoped, tag = 'scoped memory for tpu_custom_call.1']
    #allocation8 [shape = 's32[1]{0}', space=sflag, size = 0x4, scoped, tag = 'scoped memory for tpu_custom_call.1']
    #allocation9 [shape = 'u8[327680]{0}', space=vmem, size = 0x50000, scoped, tag = 'input window, operand 6, single buffered']
    #allocation10 [shape = 's32[1]{0}', space=sflag, size = 0x4, scoped, tag = 'scoped memory for tpu_custom_call.1']
    #allocation11 [shape = 'u8[32768]{0}', space=vmem, size = 0x8000, scoped, tag = 'input window, operand 13, single buffered']
    #allocation12 [shape = 'u8[8192]{0}', space=vmem, size = 0x2000, scoped, tag = 'output window, operand 0, single buffered']
    %20 = vsyncpa [#allocation7], 0
    %21 = vsyncpa [#allocation10], 0
    %22 = vsyncpa [#allocation8], 0
    // Predicated region
    $region2: #{tpu_custom_call.1} parent=1 // pred_check
      _
    $region3: #{tpu_custom_call.1} parent=1 // pred_check_branch
      %24 = sbr.rel (0) target = $region5
    $region4: #{tpu_custom_call.1} parent=1 // pred_region
      _
    $region5: #{tpu_custom_call.1} parent=1 // pred_fallthru
      _
    // Predicated region
    $region6: #{tpu_custom_call.1} parent=1 // pred_check
      _
    $region7: #{tpu_custom_call.1} parent=1 // pred_check_branch
      %26 = sbr.rel (0) target = $region9
    $region8: #{tpu_custom_call.1} parent=1 // pred_region
      _
    $region9: #{tpu_custom_call.1} parent=1 // pred_fallthru
      _
    // Predicated region
    $region10: #{tpu_custom_call.1} parent=1 // pred_check
      _
    $region11: #{tpu_custom_call.1} parent=1 // pred_check_branch
      %28 = sbr.rel (0) target = $region13
    $region12: #{tpu_custom_call.1} parent=1 // pred_region
      _
    $region13: #{tpu_custom_call.1} parent=1 // pred_fallthru
      _
    // Predicated region
    $region14: #{tpu_custom_call.1} parent=1 // pred_check
      _
    $region15: #{tpu_custom_call.1} parent=1 // pred_check_branch
      %30 = sbr.rel (0) target = $region17
    $region16: #{tpu_custom_call.1} parent=1 // pred_region
      _
    $region17: #{tpu_custom_call.1} parent=1 // pred_fallthru
      _
    // Predicated region
    $region18: #{tpu_custom_call.1} parent=1 // pred_check
      _
    $region19: #{tpu_custom_call.1} parent=1 // pred_check_branch
      %32 = sbr.rel (0) target = $region21
    $region20: #{tpu_custom_call.1} parent=1 // pred_region
      %s34 = ssub.s32 16, 16
      %35 = vsyncadd [#allocation7], %s34
      %s37 = sshll.u32 [#allocation6], 4
      %s38 = int_to_ptr.vmem [resolvable:$true] %s37
      %40 = dma.hbm_to_vmem [thread:$0]  %s4, 16, %s38, [#allocation7]
    $region21: #{tpu_custom_call.1} parent=1 // pred_fallthru
      _
    // Predicated region
    $region22: #{tpu_custom_call.1} parent=1 // pred_check
      _
    $region23: #{tpu_custom_call.1} parent=1 // pred_check_branch
      %42 = sbr.rel (0) target = $region25
    $region24: #{tpu_custom_call.1} parent=1 // pred_region
      _
    $region25: #{tpu_custom_call.1} parent=1 // pred_fallthru
      _
    // Predicated region
    $region26: #{tpu_custom_call.1} parent=1 // pred_check
      _
    $region27: #{tpu_custom_call.1} parent=1 // pred_check_branch
      %44 = sbr.rel (0) target = $region29
    $region28: #{tpu_custom_call.1} parent=1 // pred_region
      %s46 = ssub.s32 10240, 10240
      %47 = vsyncadd [#allocation10], %s46
      %s48 = sshll.u32 [#allocation9], 4
      %s49 = int_to_ptr.vmem [resolvable:$true] %s48
      %54 = dma.hbm_to_vmem [thread:$0]  %s6, 10240, %s49, [#allocation10], 256, 256, 16
    $region29: #{tpu_custom_call.1} parent=1 // pred_fallthru
      _
    // Predicated region
    $region30: #{tpu_custom_call.1} parent=1 // pred_check
      _
    $region31: #{tpu_custom_call.1} parent=1 // pred_check_branch
      %56 = sbr.rel (0) target = $region33
    $region32: #{tpu_custom_call.1} parent=1 // pred_region
      _
    $region33: #{tpu_custom_call.1} parent=1 // pred_fallthru
      _
    // Predicated region
    $region34: #{tpu_custom_call.1} parent=1 // pred_check
      _
    $region35: #{tpu_custom_call.1} parent=1 // pred_check_branch
      %58 = sbr.rel (0) target = $region37
    $region36: #{tpu_custom_call.1} parent=1 // pred_region
      _
    $region37: #{tpu_custom_call.1} parent=1 // pred_fallthru
      _
    // Predicated region
    $region38: #{tpu_custom_call.1} parent=1 // pred_check
      _
    $region39: #{tpu_custom_call.1} parent=1 // pred_check_branch
      %60 = sbr.rel (0) target = $region41
    $region40: #{tpu_custom_call.1} parent=1 // pred_region
      _
    $region41: #{tpu_custom_call.1} parent=1 // pred_fallthru
      _
    // Predicated region
    $region42: #{tpu_custom_call.1} parent=1 // pred_check
      _
    $region43: #{tpu_custom_call.1} parent=1 // pred_check_branch
      %62 = sbr.rel (0) target = $region45
    $region44: #{tpu_custom_call.1} parent=1 // pred_region
      _
    $region45: #{tpu_custom_call.1} parent=1 // pred_fallthru
      _
    // Predicated region
    $region46: #{tpu_custom_call.1} parent=1 // pred_check
      _
    $region47: #{tpu_custom_call.1} parent=1 // pred_check_branch
      %64 = sbr.rel (0) target = $region49
    $region48: #{tpu_custom_call.1} parent=1 // pred_region
      %s66 = ssub.s32 1024, 1024
      %67 = vsyncadd [#allocation10], %s66
      %s68 = sshll.u32 [#allocation11], 4
      %s69 = int_to_ptr.vmem [resolvable:$true] %s68
      %74 = dma.hbm_to_vmem [thread:$0]  %s13, 1024, %s69, [#allocation10], 128, 128, 8
    $region49: #{tpu_custom_call.1} parent=1 // pred_fallthru
      _
    // Predicated region
    $region50: #{tpu_custom_call.1} parent=1 // pred_check
      _
    $region51: #{tpu_custom_call.1} parent=1 // pred_check_branch
      %76 = sbr.rel (0) target = $region53
    $region52: #{tpu_custom_call.1} parent=1 // pred_region
      _
    $region53: #{tpu_custom_call.1} parent=1 // pred_fallthru
      _
    // Predicated region
    $region54: #{tpu_custom_call.1} parent=1 // pred_check
      _
    $region55: #{tpu_custom_call.1} parent=1 // pred_check_branch
      %78 = sbr.rel (0) target = $region57
    $region56: #{tpu_custom_call.1} parent=1 // pred_region
      %79 = dma.done [#allocation7], 16
    $region57: #{tpu_custom_call.1} parent=1 // pred_fallthru
      _
    // Predicated region
    $region58: #{tpu_custom_call.1} parent=1 // pred_check
      _
    $region59: #{tpu_custom_call.1} parent=1 // pred_check_branch
      %81 = sbr.rel (0) target = $region61
    $region60: #{tpu_custom_call.1} parent=1 // pred_region
      %82 = dma.done [#allocation10], 10240
    $region61: #{tpu_custom_call.1} parent=1 // pred_fallthru
      _
    // Predicated region
    $region62: #{tpu_custom_call.1} parent=1 // pred_check
      _
    $region63: #{tpu_custom_call.1} parent=1 // pred_check_branch
      %84 = sbr.rel (0) target = $region65
    $region64: #{tpu_custom_call.1} parent=1 // pred_region
      %85 = dma.done [#allocation10], 1024
    $region65: #{tpu_custom_call.1} parent=1 // pred_fallthru
      _
    // Predicated region
    $region66: #{tpu_custom_call.1} parent=1 // pred_check
      _
    $region67: #{tpu_custom_call.1} parent=1 // pred_check_branch
      %88 = sbr.rel target = $region69
    $region68: #{tpu_custom_call.1} parent=1 // pred_region
      %89 = sst [smem:[#allocation15]] [#allocation14]
      %90 = sst [smem:[#allocation16]] [#allocation13]
    $region69: #{tpu_custom_call.1} parent=1 // pred_fallthru
      _
    %92 = shalt.err (0)
    %s94 = sshll.u32 [#allocation3], 4
    %s95 = int_to_ptr.vmem [resolvable:$true] %s94
    %97 = dma.hbm_to_vmem [thread:$0]  %s9, 4096, %s95, [#allocation5]
    %s98 = scalar_lea.sflag [#allocation5], 1
    %p100 = scmp.lt.u32.totalorder 512, 8
    %p101 = pneg %p100
    // Predicated region
    $region70: #{tpu_custom_call.1} parent=1 // pred_check
      _
    $region71: #{tpu_custom_call.1} parent=1 // pred_check_branch
      %103 = sbr.rel (%p100) target = $region73
    $region72: #{tpu_custom_call.1} parent=1 // pred_region
      %s119 = sand.u32 512, 7
      %p120 = scmp.eq.s32.totalorder %s119, 0
      // Predicated region
      $region85: #{tpu_custom_call.1} parent=72 // pred_check
        %p121 = pneg %p120
      $region86: #{tpu_custom_call.1} parent=72 // pred_check_branch
        %123 = sbr.rel (%p121) target = $region88
      $region87: #{tpu_custom_call.1} parent=72 // pred_region
        loop: start=0, step=1, limit=1
        $region89: #{tpu_custom_call.1} parent=87 // loop_pre_header
          _
        $region90: #{tpu_custom_call.1} parent=87 // loop_header
          %s125 = sphi 0, %s129
          %p126 = scmp.ge.s32.totalorder %s125, 1
          %s130 = sphi %s11, %s11
          %s131 = sphi [#allocation4], [#allocation4]
        $region91: #{tpu_custom_call.1} parent=87 // loop_header_branch
          %128 = sbr.rel (%p126) target = $region95
        $region92: #{tpu_custom_call.1} parent=87 // loop_body
          %v132 = vld [vmem:[%s130] sm:$0xff]
          %133 = vst [vmem:[%s131] sm:$0xff] %v132
          %v134 = vld [vmem:[%s130 + $0x8] sm:$0xff]
          %135 = vst [vmem:[%s131 + $0x8] sm:$0xff] %v134
          %v136 = vld [vmem:[%s130 + $0x10] sm:$0xff]
          %137 = vst [vmem:[%s131 + $0x10] sm:$0xff] %v136
          %v138 = vld [vmem:[%s130 + $0x18] sm:$0xff]
          %139 = vst [vmem:[%s131 + $0x18] sm:$0xff] %v138
          %v140 = vld [vmem:[%s130 + $0x20] sm:$0xff]
          %141 = vst [vmem:[%s131 + $0x20] sm:$0xff] %v140
          %v142 = vld [vmem:[%s130 + $0x28] sm:$0xff]
          %143 = vst [vmem:[%s131 + $0x28] sm:$0xff] %v142
          %v144 = vld [vmem:[%s130 + $0x30] sm:$0xff]
          %145 = vst [vmem:[%s131 + $0x30] sm:$0xff] %v144
          %v146 = vld [vmem:[%s130 + $0x38] sm:$0xff]
          %147 = vst [vmem:[%s131 + $0x38] sm:$0xff] %v146
          %v148 = vld [vmem:[%s130 + $0x40] sm:$0xff]
          %149 = vst [vmem:[%s131 + $0x40] sm:$0xff] %v148
          %v150 = vld [vmem:[%s130 + $0x48] sm:$0xff]
          %151 = vst [vmem:[%s131 + $0x48] sm:$0xff] %v150
          %v152 = vld [vmem:[%s130 + $0x50] sm:$0xff]
          %153 = vst [vmem:[%s131 + $0x50] sm:$0xff] %v152
          %v154 = vld [vmem:[%s130 + $0x58] sm:$0xff]
          %155 = vst [vmem:[%s131 + $0x58] sm:$0xff] %v154
          %v156 = vld [vmem:[%s130 + $0x60] sm:$0xff]
          %157 = vst [vmem:[%s131 + $0x60] sm:$0xff] %v156
          %v158 = vld [vmem:[%s130 + $0x68] sm:$0xff]
          %159 = vst [vmem:[%s131 + $0x68] sm:$0xff] %v158
          %v160 = vld [vmem:[%s130 + $0x70] sm:$0xff]
          %161 = vst [vmem:[%s131 + $0x70] sm:$0xff] %v160
          %v162 = vld [vmem:[%s130 + $0x78] sm:$0xff]
          %163 = vst [vmem:[%s131 + $0x78] sm:$0xff] %v162
          %v164 = vld [vmem:[%s130 + $0x80] sm:$0xff]
          %165 = vst [vmem:[%s131 + $0x80] sm:$0xff] %v164
          %v166 = vld [vmem:[%s130 + $0x88] sm:$0xff]
          %167 = vst [vmem:[%s131 + $0x88] sm:$0xff] %v166
          %v168 = vld [vmem:[%s130 + $0x90] sm:$0xff]
          %169 = vst [vmem:[%s131 + $0x90] sm:$0xff] %v168
          %v170 = vld [vmem:[%s130 + $0x98] sm:$0xff]
          %171 = vst [vmem:[%s131 + $0x98] sm:$0xff] %v170
          %v172 = vld [vmem:[%s130 + $0xa0] sm:$0xff]
          %173 = vst [vmem:[%s131 + $0xa0] sm:$0xff] %v172
          %v174 = vld [vmem:[%s130 + $0xa8] sm:$0xff]
          %175 = vst [vmem:[%s131 + $0xa8] sm:$0xff] %v174
          %v176 = vld [vmem:[%s130 + $0xb0] sm:$0xff]
          %177 = vst [vmem:[%s131 + $0xb0] sm:$0xff] %v176
          %v178 = vld [vmem:[%s130 + $0xb8] sm:$0xff]
          %179 = vst [vmem:[%s131 + $0xb8] sm:$0xff] %v178
          %v180 = vld [vmem:[%s130 + $0xc0] sm:$0xff]
          %181 = vst [vmem:[%s131 + $0xc0] sm:$0xff] %v180
          %v182 = vld [vmem:[%s130 + $0xc8] sm:$0xff]
          %183 = vst [vmem:[%s131 + $0xc8] sm:$0xff] %v182
          %v184 = vld [vmem:[%s130 + $0xd0] sm:$0xff]
          %185 = vst [vmem:[%s131 + $0xd0] sm:$0xff] %v184
          %v186 = vld [vmem:[%s130 + $0xd8] sm:$0xff]
          %187 = vst [vmem:[%s131 + $0xd8] sm:$0xff] %v186
          %v188 = vld [vmem:[%s130 + $0xe0] sm:$0xff]
          %189 = vst [vmem:[%s131 + $0xe0] sm:$0xff] %v188
          %v190 = vld [vmem:[%s130 + $0xe8] sm:$0xff]
          %191 = vst [vmem:[%s131 + $0xe8] sm:$0xff] %v190
          %v192 = vld [vmem:[%s130 + $0xf0] sm:$0xff]
          %193 = vst [vmem:[%s131 + $0xf0] sm:$0xff] %v192
          %v194 = vld [vmem:[%s130 + $0xf8] sm:$0xff]
          %195 = vst [vmem:[%s131 + $0xf8] sm:$0xff] %v194
          %v196 = vld [vmem:[%s130 + $0x100] sm:$0xff]
          %197 = vst [vmem:[%s131 + $0x100] sm:$0xff] %v196
          %v198 = vld [vmem:[%s130 + $0x108] sm:$0xff]
          %199 = vst [vmem:[%s131 + $0x108] sm:$0xff] %v198
          %v200 = vld [vmem:[%s130 + $0x110] sm:$0xff]
          %201 = vst [vmem:[%s131 + $0x110] sm:$0xff] %v200
          %v202 = vld [vmem:[%s130 + $0x118] sm:$0xff]
          %203 = vst [vmem:[%s131 + $0x118] sm:$0xff] %v202
          %v204 = vld [vmem:[%s130 + $0x120] sm:$0xff]
          %205 = vst [vmem:[%s131 + $0x120] sm:$0xff] %v204
          %v206 = vld [vmem:[%s130 + $0x128] sm:$0xff]
          %207 = vst [vmem:[%s131 + $0x128] sm:$0xff] %v206
          %v208 = vld [vmem:[%s130 + $0x130] sm:$0xff]
          %209 = vst [vmem:[%s131 + $0x130] sm:$0xff] %v208
          %v210 = vld [vmem:[%s130 + $0x138] sm:$0xff]
          %211 = vst [vmem:[%s131 + $0x138] sm:$0xff] %v210
          %v212 = vld [vmem:[%s130 + $0x140] sm:$0xff]
          %213 = vst [vmem:[%s131 + $0x140] sm:$0xff] %v212
          %v214 = vld [vmem:[%s130 + $0x148] sm:$0xff]
          %215 = vst [vmem:[%s131 + $0x148] sm:$0xff] %v214
          %v216 = vld [vmem:[%s130 + $0x150] sm:$0xff]
          %217 = vst [vmem:[%s131 + $0x150] sm:$0xff] %v216
          %v218 = vld [vmem:[%s130 + $0x158] sm:$0xff]
          %219 = vst [vmem:[%s131 + $0x158] sm:$0xff] %v218
          %v220 = vld [vmem:[%s130 + $0x160] sm:$0xff]
          %221 = vst [vmem:[%s131 + $0x160] sm:$0xff] %v220
          %v222 = vld [vmem:[%s130 + $0x168] sm:$0xff]
          %223 = vst [vmem:[%s131 + $0x168] sm:$0xff] %v222
          %v224 = vld [vmem:[%s130 + $0x170] sm:$0xff]
          %225 = vst [vmem:[%s131 + $0x170] sm:$0xff] %v224
          %v226 = vld [vmem:[%s130 + $0x178] sm:$0xff]
          %227 = vst [vmem:[%s131 + $0x178] sm:$0xff] %v226
          %v228 = vld [vmem:[%s130 + $0x180] sm:$0xff]
          %229 = vst [vmem:[%s131 + $0x180] sm:$0xff] %v228
          %v230 = vld [vmem:[%s130 + $0x188] sm:$0xff]
          %231 = vst [vmem:[%s131 + $0x188] sm:$0xff] %v230
          %v232 = vld [vmem:[%s130 + $0x190] sm:$0xff]
          %233 = vst [vmem:[%s131 + $0x190] sm:$0xff] %v232
          %v234 = vld [vmem:[%s130 + $0x198] sm:$0xff]
          %235 = vst [vmem:[%s131 + $0x198] sm:$0xff] %v234
          %v236 = vld [vmem:[%s130 + $0x1a0] sm:$0xff]
          %237 = vst [vmem:[%s131 + $0x1a0] sm:$0xff] %v236
          %v238 = vld [vmem:[%s130 + $0x1a8] sm:$0xff]
          %239 = vst [vmem:[%s131 + $0x1a8] sm:$0xff] %v238
          %v240 = vld [vmem:[%s130 + $0x1b0] sm:$0xff]
          %241 = vst [vmem:[%s131 + $0x1b0] sm:$0xff] %v240
          %v242 = vld [vmem:[%s130 + $0x1b8] sm:$0xff]
          %243 = vst [vmem:[%s131 + $0x1b8] sm:$0xff] %v242
          %v244 = vld [vmem:[%s130 + $0x1c0] sm:$0xff]
          %245 = vst [vmem:[%s131 + $0x1c0] sm:$0xff] %v244
          %v246 = vld [vmem:[%s130 + $0x1c8] sm:$0xff]
          %247 = vst [vmem:[%s131 + $0x1c8] sm:$0xff] %v246
          %v248 = vld [vmem:[%s130 + $0x1d0] sm:$0xff]
          %249 = vst [vmem:[%s131 + $0x1d0] sm:$0xff] %v248
          %v250 = vld [vmem:[%s130 + $0x1d8] sm:$0xff]
          %251 = vst [vmem:[%s131 + $0x1d8] sm:$0xff] %v250
          %v252 = vld [vmem:[%s130 + $0x1e0] sm:$0xff]
          %253 = vst [vmem:[%s131 + $0x1e0] sm:$0xff] %v252
          %v254 = vld [vmem:[%s130 + $0x1e8] sm:$0xff]
          %255 = vst [vmem:[%s131 + $0x1e8] sm:$0xff] %v254
          %v256 = vld [vmem:[%s130 + $0x1f0] sm:$0xff]
          %257 = vst [vmem:[%s131 + $0x1f0] sm:$0xff] %v256
          %v258 = vld [vmem:[%s130 + $0x1f8] sm:$0xff]
          %259 = vst [vmem:[%s131 + $0x1f8] sm:$0xff] %v258
        $region93: #{tpu_custom_call.1} parent=87 // loop_footer
          %s129 = sadd.s32 1, %s125
        $region94: #{tpu_custom_call.1} parent=87 // loop_footer_branch
          %124 = sbr.rel target = $region90
        $region95: #{tpu_custom_call.1} parent=87 // loop_exit
          _
      $region88: #{tpu_custom_call.1} parent=72 // pred_fallthru
        _
      %p260 = pneg %p120
      // Predicated region
      $region96: #{tpu_custom_call.1} parent=72 // pred_check
        _
      $region97: #{tpu_custom_call.1} parent=72 // pred_check_branch
        %262 = sbr.rel (%p120) target = $region99
      $region98: #{tpu_custom_call.1} parent=72 // pred_region
        %s263 = sand.u32 512, 7
      $region99: #{tpu_custom_call.1} parent=72 // pred_fallthru
        _
    $region73: #{tpu_custom_call.1} parent=1 // pred_fallthru
      _
    // Predicated region
    $region74: #{tpu_custom_call.1} parent=1 // pred_check
      %p104 = pneg %p100
    $region75: #{tpu_custom_call.1} parent=1 // pred_check_branch
      %106 = sbr.rel (%p104) target = $region77
    $region76: #{tpu_custom_call.1} parent=1 // pred_region
      %s107 = sshll.u32 1, 512
      %s108 = ssub.s32 %s107, 1
      loop: start=0, step=1, limit=1
      $region78: #{tpu_custom_call.1} parent=76 // loop_pre_header
        _
      $region79: #{tpu_custom_call.1} parent=76 // loop_header
        %s110 = sphi 0, %s114
        %p111 = scmp.ge.s32.totalorder %s110, 1
        %s115 = sphi %s11, %s11
        %s116 = sphi [#allocation4], [#allocation4]
      $region80: #{tpu_custom_call.1} parent=76 // loop_header_branch
        %113 = sbr.rel (%p111) target = $region84
      $region81: #{tpu_custom_call.1} parent=76 // loop_body
        %v117 = vld [vmem:[%s115] sm:%s108]
        %118 = vst [vmem:[%s116] sm:%s108] %v117
      $region82: #{tpu_custom_call.1} parent=76 // loop_footer
        %s114 = sadd.s32 1, %s110
      $region83: #{tpu_custom_call.1} parent=76 // loop_footer_branch
        %109 = sbr.rel target = $region79
      $region84: #{tpu_custom_call.1} parent=76 // loop_exit
        _
    $region77: #{tpu_custom_call.1} parent=1 // pred_fallthru
      _
    // Predicated region
    $region100: #{tpu_custom_call.1} parent=1 // pred_check
      _
    $region101: #{tpu_custom_call.1} parent=1 // pred_check_branch
      %266 = sbr.rel (0) target = $region103
    $region102: #{tpu_custom_call.1} parent=1 // pred_region
      %267 = vsyncadd %s98, 8192
    $region103: #{tpu_custom_call.1} parent=1 // pred_fallthru
      _
    %v268 = vld [vmem:[%s0] sm:$0xff]
    %v269 = vld [vmem:[%s0 + $0x8] sm:$0xff]
    %v270 = vld [vmem:[%s1] sm:$0x3]
    %v271 = vld [vmem:[%s2] sm:$0xff]
    %v272 = vld [vmem:[%s2 + $0x8] sm:$0xff]
    %v273 = vld [vmem:[%s2 + $0x10] sm:$0xff]
    %v274 = vld [vmem:[%s2 + $0x18] sm:$0xff]
    %v275 = vld [vmem:[%s2 + $0x20] sm:$0xff]
    %v276 = vld [vmem:[%s2 + $0x28] sm:$0xff]
    %v277 = vld [vmem:[%s2 + $0x30] sm:$0xff]
    %v278 = vld [vmem:[%s2 + $0x38] sm:$0xff]
    %v279 = vld [vmem:[%s2 + $0x40] sm:$0xff]
    %v280 = vld [vmem:[%s2 + $0x48] sm:$0xff]
    %v281 = vld [vmem:[%s2 + $0x50] sm:$0xff]
    %v282 = vld [vmem:[%s2 + $0x58] sm:$0xff]
    %v283 = vld [vmem:[%s2 + $0x60] sm:$0xff]
    %v284 = vld [vmem:[%s2 + $0x68] sm:$0xff]
    %v285 = vld [vmem:[%s2 + $0x70] sm:$0xff]
    %v286 = vld [vmem:[%s2 + $0x78] sm:$0xff]
    %v287 = vld [vmem:[%s3] sm:$0x3]
    %v288 = vld [vmem:[#allocation6] sm:$0x1]
    %290 = vset.pattern.permute.xlu0 0
    %291 = vperm.xlu0 %290, %v268
    %v292 = vpop.permute.xlu0 %291
    %295 = vset.pattern.permute.xlu0 0
    %296 = vperm.xlu0 %295, %v269
    %v297 = vpop.permute.xlu0 %296
    %v300 = vlaneseq
    %v301 = vshrl.u32 %v300, 7
    %v302 = vsub.s32 0, %v301
    %v303 = vrot.slane %v270, %v302
    %v304 = vlaneseq
    %v305 = vshrl.u32 %v304, 7
    %v306 = vsub.s32 1, %v305
    %v307 = vrot.slane %v270, %v306
    %v310 = vmul.f32 %v292, %v303
    %v311 = vmul.f32 %v292, %v307
    %v312 = vmul.f32 %v297, %v303
    %v313 = vmul.f32 %v297, %v307
    %v315 = vlaneseq
    %v316 = vshrl.u32 %v315, 7
    %v317 = vsub.s32 0, %v316
    %v318 = vrot.slane %v287, %v317
    %v319 = vlaneseq
    %v320 = vshrl.u32 %v319, 7
    %v321 = vsub.s32 1, %v320
    %v322 = vrot.slane %v287, %v321
    %v325 = vadd.f32 %v310, %v318
    %v326 = vadd.f32 %v311, %v322
    %v327 = vadd.f32 %v312, %v318
    %v328 = vadd.f32 %v313, %v322
    %vm329 = vcmask 523264
    %v331 = vsel %vm329, 0.0, 0
    %333 = vmatprep.subr.mxu0 0.0
    %334 = vmatpush1.msra.mxu0 0.0
    %335 = vmatprep.subr.mxu0 0.0
    %336 = vmatpush1.msra.mxu0 0.0
    %337 = vmatprep.subr.mxu0 0.0
    %338 = vmatpush1.msra.mxu0 0.0
    %339 = vmatprep.subr.mxu0 0.0
    %340 = vmatpush1.msra.mxu0 0.0
    %341 = vmatprep.subr.mxu0 0.0
    %342 = vmatpush1.msra.mxu0 0.0
    %343 = vmatprep.subr.mxu0 0.0
    %344 = vmatpush1.msra.mxu0 0.0
    %345 = vmatprep.subr.mxu0 0.0
    %346 = vmatpush1.msra.mxu0 0.0
    %347 = vmatprep.subr.mxu0 0.0
    %348 = vmatpush1.msra.mxu0 0.0
    %349 = vmatprep.subr.mxu0 %v286
    %350 = vmatpush1.msra.mxu0 %v285
    %351 = vmatprep.subr.mxu0 %v284
    %352 = vmatpush1.msra.mxu0 %v283
    %353 = vmatprep.subr.mxu0 %v282
    %354 = vmatpush1.msra.mxu0 %v281
    %355 = vmatprep.subr.mxu0 %v280
    %356 = vmatpush1.msra.mxu0 %v279
    %357 = vmatprep.subr.mxu0 %v278
    %358 = vmatpush1.msra.mxu0 %v277
    %359 = vmatprep.subr.mxu0 %v276
    %360 = vmatpush1.msra.mxu0 %v275
    %361 = vmatprep.subr.mxu0 %v274
    %362 = vmatpush1.msra.mxu0 %v273
    %363 = vmatprep.subr.mxu0 %v272
    %364 = vmatpush1.msra.mxu0 %v271
    %365 = vmatprep.subr.mxu0 0.0
    %366 = vmatpush2.msra.mxu0 0.0
    %367 = vmatprep.subr.mxu0 0.0
    %368 = vmatpush2.msra.mxu0 0.0
    %369 = vmatprep.subr.mxu0 0.0
    %370 = vmatpush2.msra.mxu0 0.0
    %371 = vmatprep.subr.mxu0 0.0
    %372 = vmatpush2.msra.mxu0 0.0
    %373 = vmatprep.subr.mxu0 0.0
    %374 = vmatpush2.msra.mxu0 0.0
    %375 = vmatprep.subr.mxu0 0.0
    %376 = vmatpush2.msra.mxu0 0.0
    %377 = vmatprep.subr.mxu0 0.0
    %378 = vmatpush2.msra.mxu0 0.0
    %379 = vmatprep.subr.mxu0 0.0
    %380 = vmatpush2.msra.mxu0 0.0
    %381 = vmatprep.subr.mxu0 0.0
    %382 = vmatpush2.msra.mxu0 0.0
    %383 = vmatprep.subr.mxu0 0.0
    %384 = vmatpush2.msra.mxu0 0.0
    %385 = vmatprep.subr.mxu0 0.0
    %386 = vmatpush2.msra.mxu0 0.0
    %387 = vmatprep.subr.mxu0 0.0
    %388 = vmatpush2.msra.mxu0 0.0
    %389 = vmatprep.subr.mxu0 0.0
    %390 = vmatpush2.msra.mxu0 0.0
    %391 = vmatprep.subr.mxu0 0.0
    %392 = vmatpush2.msra.mxu0 0.0
    %393 = vmatprep.subr.mxu0 0.0
    %394 = vmatpush2.msra.mxu0 0.0
    %395 = vmatprep.subr.mxu0 0.0
    %396 = vmatpush2.msra.mxu0 0.0
    %397 = vmatprep.mubr.f32.mxu0 0.0
    %398 = vmatmul.mubr.f32.gmra.mxu0 %v331
    %v399 = vpop.f32.mrf.mxu0
    %v400 = vadd.f32 0.0, %v399
    %v401 = vpop.f32.mrf.mxu0
    %v402 = vadd.f32 0.0, %v401
    %403 = vdwg.mxu0
    %v405 = vrot.slane %v400, 1
    %v408 = vadd.f32 %v325, %v400
    %v409 = vadd.f32 %v327, %v405
    %v410 = vxor.u32 %v408, 2147483648
    %v411 = vxor.u32 %v409, 2147483648
    %v412 = vmul.f32 %v410, 1.442695
    %v413 = vpow.pop %v412
    %v414 = vmul.f32 %v411, 1.442695
    %v415 = vpow.pop %v414
    %v416 = vadd.f32 %v413, 1.0
    %v417 = vadd.f32 %v415, 1.0
    %v418 = vrcp.pop %v416
    %v419 = vmul.f32 1.0, %v418
    %v420 = vrcp.pop %v417
    %v421 = vmul.f32 1.0, %v420
    %v423 = vlaneseq
    %v424 = vshrl.u32 %v423, 7
    %v425 = vsub.s32 0, %v424
    %v426 = vrot.slane %v288, %v425
    %v428 = vadd.f32 %v402, %v426
    %v430 = vrot.slane %v428, 1
    %v433 = vmul.f32 %v419, %v428
    %v434 = vmul.f32 %v421, %v430
    %v435 = vadd.f32 %v326, %v433
    %v436 = vadd.f32 %v328, %v434
    %v437 = vtanh.pop %v435
    %v438 = vtanh.pop %v436
    %v439 = vsub.f32 1.0, %v419
    %v440 = vsub.f32 1.0, %v421
    %443 = vrot.lane.b32.xlu0 %v437, 64
    %v444 = vpop.permute.xlu0 %443
    %445 = vrot.lane.b32.xlu0 %v438, 64
    %v446 = vpop.permute.xlu0 %445
    %v449 = vmul.f32 %v439, %v444
    %v450 = vmul.f32 %v440, %v446
    %v451 = vmul.f32 %v419, 0.0
    %v452 = vmul.f32 %v421, 0.0
    %v453 = vadd.f32 %v449, %v451
    %v454 = vadd.f32 %v450, %v452
    %457 = vrot.lane.b32.xlu0 %v453, 64
    %v458 = vpop.permute.xlu0 %457
    %459 = vrot.lane.b32.xlu0 %v454, 64
    %v460 = vpop.permute.xlu0 %459
    %vm463 = vcmask 516096
    %464 = vst.msk [vmem:[#allocation2] sm:$0x1] %vm463, %v458
    %465 = vst.msk [vmem:[#allocation2 + $0x8] sm:$0x1] %vm463, %v460
    %v466 = vrot.slane %v454, 7
    %vm467 = vcmask 1041409
    %v468 = vsel %vm467, %v466, %v453
    %469 = vrot.lane.b32.xlu0 %v468, 64
    %v470 = vpop.permute.xlu0 %469
    %v471 = vsel %vm329, %v470, 0
    %473 = vmatprep.subr.mxu0 0.0
    %474 = vmatpush1.msra.mxu0 0.0
    %475 = vmatprep.subr.mxu0 0.0
    %476 = vmatpush1.msra.mxu0 0.0
    %477 = vmatprep.subr.mxu0 0.0
    %478 = vmatpush1.msra.mxu0 0.0
    %479 = vmatprep.subr.mxu0 0.0
    %480 = vmatpush1.msra.mxu0 0.0
    %481 = vmatprep.subr.mxu0 0.0
    %482 = vmatpush1.msra.mxu0 0.0
    %483 = vmatprep.subr.mxu0 0.0
    %484 = vmatpush1.msra.mxu0 0.0
    %485 = vmatprep.subr.mxu0 0.0
    %486 = vmatpush1.msra.mxu0 0.0
    %487 = vmatprep.subr.mxu0 0.0
    %488 = vmatpush1.msra.mxu0 0.0
    %489 = vmatprep.subr.mxu0 %v286
    %490 = vmatpush1.msra.mxu0 %v285
    %491 = vmatprep.subr.mxu0 %v284
    %492 = vmatpush1.msra.mxu0 %v283
    %493 = vmatprep.subr.mxu0 %v282
    %494 = vmatpush1.msra.mxu0 %v281
    %495 = vmatprep.subr.mxu0 %v280
    %496 = vmatpush1.msra.mxu0 %v279
    %497 = vmatprep.subr.mxu0 %v278
    %498 = vmatpush1.msra.mxu0 %v277
    %499 = vmatprep.subr.mxu0 %v276
    %500 = vmatpush1.msra.mxu0 %v275
    %501 = vmatprep.subr.mxu0 %v274
    %502 = vmatpush1.msra.mxu0 %v273
    %503 = vmatprep.subr.mxu0 %v272
    %504 = vmatpush1.msra.mxu0 %v271
    %505 = vmatprep.subr.mxu0 0.0
    %506 = vmatpush2.msra.mxu0 0.0
    %507 = vmatprep.subr.mxu0 0.0
    %508 = vmatpush2.msra.mxu0 0.0
    %509 = vmatprep.subr.mxu0 0.0
    %510 = vmatpush2.msra.mxu0 0.0
    %511 = vmatprep.subr.mxu0 0.0
    %512 = vmatpush2.msra.mxu0 0.0
    %513 = vmatprep.subr.mxu0 0.0
    %514 = vmatpush2.msra.mxu0 0.0
    %515 = vmatprep.subr.mxu0 0.0
    %516 = vmatpush2.msra.mxu0 0.0
    %517 = vmatprep.subr.mxu0 0.0
    %518 = vmatpush2.msra.mxu0 0.0
    %519 = vmatprep.subr.mxu0 0.0
    %520 = vmatpush2.msra.mxu0 0.0
    %521 = vmatprep.subr.mxu0 0.0
    %522 = vmatpush2.msra.mxu0 0.0
    %523 = vmatprep.subr.mxu0 0.0
    %524 = vmatpush2.msra.mxu0 0.0
    %525 = vmatprep.subr.mxu0 0.0
    %526 = vmatpush2.msra.mxu0 0.0
    %527 = vmatprep.subr.mxu0 0.0
    %528 = vmatpush2.msra.mxu0 0.0
    %529 = vmatprep.subr.mxu0 0.0
    %530 = vmatpush2.msra.mxu0 0.0
    %531 = vmatprep.subr.mxu0 0.0
    %532 = vmatpush2.msra.mxu0 0.0
    %533 = vmatprep.subr.mxu0 0.0
    %534 = vmatpush2.msra.mxu0 0.0
    %535 = vmatprep.subr.mxu0 0.0
    %536 = vmatpush2.msra.mxu0 0.0
    %537 = vmatprep.mubr.f32.mxu0 0.0
    %538 = vmatmul.mubr.f32.gmra.mxu0 %v471
    %v539 = vpop.f32.mrf.mxu0
    %v540 = vadd.f32 0.0, %v539
    %v541 = vpop.f32.mrf.mxu0
    %v542 = vadd.f32 0.0, %v541
    %543 = vdwg.mxu0
    %v545 = vrot.slane %v540, 7
    %v548 = vadd.f32 %v325, %v545
    %v549 = vadd.f32 %v327, %v540
    %v550 = vxor.u32 %v548, 2147483648
    %v551 = vxor.u32 %v549, 2147483648
    %v552 = vmul.f32 %v550, 1.442695
    %v553 = vpow.pop %v552
    %v554 = vmul.f32 %v551, 1.442695
    %v555 = vpow.pop %v554
    %v556 = vadd.f32 %v553, 1.0
    %v557 = vadd.f32 %v555, 1.0
    %v558 = vrcp.pop %v556
    %v559 = vmul.f32 1.0, %v558
    %v560 = vrcp.pop %v557
    %v561 = vmul.f32 1.0, %v560
    %v562 = vadd.f32 %v542, %v426
    %v564 = vrot.slane %v562, 7
    %v567 = vmul.f32 %v559, %v564
    %v568 = vmul.f32 %v561, %v562
    %v569 = vadd.f32 %v326, %v567
    %v570 = vadd.f32 %v328, %v568
    %v571 = vtanh.pop %v569
    %v572 = vtanh.pop %v570
    %v573 = vsub.f32 1.0, %v559
    %v574 = vsub.f32 1.0, %v561
    %577 = vrot.lane.b32.xlu0 %v571, 64
    %v578 = vpop.permute.xlu0 %577
    %579 = vrot.lane.b32.xlu0 %v572, 64
    %v580 = vpop.permute.xlu0 %579
    %v583 = vmul.f32 %v573, %v578
    %v584 = vmul.f32 %v574, %v580
    %v585 = vrot.slane %v453, 7
    %v588 = vmul.f32 %v559, %v585
    %v589 = vmul.f32 %v561, %v466
    %v590 = vadd.f32 %v583, %v588
    %v591 = vadd.f32 %v584, %v589
    %594 = vrot.lane.b32.xlu0 %v590, 64
    %v595 = vpop.permute.xlu0 %594
    %596 = vrot.lane.b32.xlu0 %v591, 64
    %v597 = vpop.permute.xlu0 %596
    %vm600 = vcmask 517121
    %601 = vst.msk [vmem:[#allocation2] sm:$0x2] %vm600, %v595
    %602 = vst.msk [vmem:[#allocation2 + $0x8] sm:$0x2] %vm600, %v597
    %v603 = vrot.slane %v590, 1
    %v604 = vsel %vm467, %v591, %v603
    %605 = vrot.lane.b32.xlu0 %v604, 64
    %v606 = vpop.permute.xlu0 %605
    %v607 = vsel %vm329, %v606, 0
    %609 = vmatprep.subr.mxu0 0.0
    %610 = vmatpush1.msra.mxu0 0.0
    %611 = vmatprep.subr.mxu0 0.0
    %612 = vmatpush1.msra.mxu0 0.0
    %613 = vmatprep.subr.mxu0 0.0
    %614 = vmatpush1.msra.mxu0 0.0
    %615 = vmatprep.subr.mxu0 0.0
    %616 = vmatpush1.msra.mxu0 0.0
    %617 = vmatprep.subr.mxu0 0.0
    %618 = vmatpush1.msra.mxu0 0.0
    %619 = vmatprep.subr.mxu0 0.0
    %620 = vmatpush1.msra.mxu0 0.0
    %621 = vmatprep.subr.mxu0 0.0
    %622 = vmatpush1.msra.mxu0 0.0
    %623 = vmatprep.subr.mxu0 0.0
    %624 = vmatpush1.msra.mxu0 0.0
    %625 = vmatprep.subr.mxu0 %v286
    %626 = vmatpush1.msra.mxu0 %v285
    %627 = vmatprep.subr.mxu0 %v284
    %628 = vmatpush1.msra.mxu0 %v283
    %629 = vmatprep.subr.mxu0 %v282
    %630 = vmatpush1.msra.mxu0 %v281
    %631 = vmatprep.subr.mxu0 %v280
    %632 = vmatpush1.msra.mxu0 %v279
    %633 = vmatprep.subr.mxu0 %v278
    %634 = vmatpush1.msra.mxu0 %v277
    %635 = vmatprep.subr.mxu0 %v276
    %636 = vmatpush1.msra.mxu0 %v275
    %637 = vmatprep.subr.mxu0 %v274
    %638 = vmatpush1.msra.mxu0 %v273
    %639 = vmatprep.subr.mxu0 %v272
    %640 = vmatpush1.msra.mxu0 %v271
    %641 = vmatprep.subr.mxu0 0.0
    %642 = vmatpush2.msra.mxu0 0.0
    %643 = vmatprep.subr.mxu0 0.0
    %644 = vmatpush2.msra.mxu0 0.0
    %645 = vmatprep.subr.mxu0 0.0
    %646 = vmatpush2.msra.mxu0 0.0
    %647 = vmatprep.subr.mxu0 0.0
    %648 = vmatpush2.msra.mxu0 0.0
    %649 = vmatprep.subr.mxu0 0.0
    %650 = vmatpush2.msra.mxu0 0.0
    %651 = vmatprep.subr.mxu0 0.0
    %652 = vmatpush2.msra.mxu0 0.0
    %653 = vmatprep.subr.mxu0 0.0
    %654 = vmatpush2.msra.mxu0 0.0
    %655 = vmatprep.subr.mxu0 0.0
    %656 = vmatpush2.msra.mxu0 0.0
    %657 = vmatprep.subr.mxu0 0.0
    %658 = vmatpush2.msra.mxu0 0.0
    %659 = vmatprep.subr.mxu0 0.0
    %660 = vmatpush2.msra.mxu0 0.0
    %661 = vmatprep.subr.mxu0 0.0
    %662 = vmatpush2.msra.mxu0 0.0
    %663 = vmatprep.subr.mxu0 0.0
    %664 = vmatpush2.msra.mxu0 0.0
    %665 = vmatprep.subr.mxu0 0.0
    %666 = vmatpush2.msra.mxu0 0.0
    %667 = vmatprep.subr.mxu0 0.0
    %668 = vmatpush2.msra.mxu0 0.0
    %669 = vmatprep.subr.mxu0 0.0
    %670 = vmatpush2.msra.mxu0 0.0
    %671 = vmatprep.subr.mxu0 0.0
    %672 = vmatpush2.msra.mxu0 0.0
    %673 = vmatprep.mubr.f32.mxu0 0.0
    %674 = vmatmul.mubr.f32.gmra.mxu0 %v607
    %v675 = vpop.f32.mrf.mxu0
    %v676 = vadd.f32 0.0, %v675
    %v677 = vpop.f32.mrf.mxu0
    %v678 = vadd.f32 0.0, %v677
    %679 = vdwg.mxu0
    %v681 = vrot.slane %v676, 6
    %v682 = vrot.slane %v676, 7
    %v685 = vadd.f32 %v325, %v681
    %v686 = vadd.f32 %v327, %v682
    %v687 = vxor.u32 %v685, 2147483648
    %v688 = vxor.u32 %v686, 2147483648
    %v689 = vmul.f32 %v687, 1.442695
    %v690 = vpow.pop %v689
    %v691 = vmul.f32 %v688, 1.442695
    %v692 = vpow.pop %v691
    %v693 = vadd.f32 %v690, 1.0
    %v694 = vadd.f32 %v692, 1.0
    %v695 = vrcp.pop %v693
    %v696 = vmul.f32 1.0, %v695
    %v697 = vrcp.pop %v694
    %v698 = vmul.f32 1.0, %v697
    %v699 = vadd.f32 %v678, %v426
    %v701 = vrot.slane %v699, 6
    %v702 = vrot.slane %v699, 7
    %v705 = vmul.f32 %v696, %v701
    %v706 = vmul.f32 %v698, %v702
    %v707 = vadd.f32 %v326, %v705
    %v708 = vadd.f32 %v328, %v706
    %v709 = vtanh.pop %v707
    %v710 = vtanh.pop %v708
    %v711 = vsub.f32 1.0, %v696
    %v712 = vsub.f32 1.0, %v698
    %715 = vrot.lane.b32.xlu0 %v709, 64
    %v716 = vpop.permute.xlu0 %715
    %717 = vrot.lane.b32.xlu0 %v710, 64
    %v718 = vpop.permute.xlu0 %717
    %v721 = vmul.f32 %v711, %v716
    %v722 = vmul.f32 %v712, %v718
    %v723 = vrot.slane %v590, 7
    %v724 = vrot.slane %v591, 7
    %v727 = vmul.f32 %v696, %v723
    %v728 = vmul.f32 %v698, %v724
    %v729 = vadd.f32 %v721, %v727
    %v730 = vadd.f32 %v722, %v728
    %733 = vrot.lane.b32.xlu0 %v729, 64
    %v734 = vpop.permute.xlu0 %733
    %735 = vrot.lane.b32.xlu0 %v730, 64
    %v736 = vpop.permute.xlu0 %735
    %vm739 = vcmask 518146
    %740 = vst.msk [vmem:[#allocation2] sm:$0x4] %vm739, %v734
    %741 = vst.msk [vmem:[#allocation2 + $0x8] sm:$0x4] %vm739, %v736
    %v742 = vrot.slane %v729, 2
    %v743 = vrot.slane %v730, 1
    %v744 = vsel %vm467, %v743, %v742
    %745 = vrot.lane.b32.xlu0 %v744, 64
    %v746 = vpop.permute.xlu0 %745
    %v747 = vsel %vm329, %v746, 0
    %749 = vmatprep.subr.mxu0 0.0
    %750 = vmatpush1.msra.mxu0 0.0
    %751 = vmatprep.subr.mxu0 0.0
    %752 = vmatpush1.msra.mxu0 0.0
    %753 = vmatprep.subr.mxu0 0.0
    %754 = vmatpush1.msra.mxu0 0.0
    %755 = vmatprep.subr.mxu0 0.0
    %756 = vmatpush1.msra.mxu0 0.0
    %757 = vmatprep.subr.mxu0 0.0
    %758 = vmatpush1.msra.mxu0 0.0
    %759 = vmatprep.subr.mxu0 0.0
    %760 = vmatpush1.msra.mxu0 0.0
    %761 = vmatprep.subr.mxu0 0.0
    %762 = vmatpush1.msra.mxu0 0.0
    %763 = vmatprep.subr.mxu0 0.0
    %764 = vmatpush1.msra.mxu0 0.0
    %765 = vmatprep.subr.mxu0 %v286
    %766 = vmatpush1.msra.mxu0 %v285
    %767 = vmatprep.subr.mxu0 %v284
    %768 = vmatpush1.msra.mxu0 %v283
    %769 = vmatprep.subr.mxu0 %v282
    %770 = vmatpush1.msra.mxu0 %v281
    %771 = vmatprep.subr.mxu0 %v280
    %772 = vmatpush1.msra.mxu0 %v279
    %773 = vmatprep.subr.mxu0 %v278
    %774 = vmatpush1.msra.mxu0 %v277
    %775 = vmatprep.subr.mxu0 %v276
    %776 = vmatpush1.msra.mxu0 %v275
    %777 = vmatprep.subr.mxu0 %v274
    %778 = vmatpush1.msra.mxu0 %v273
    %779 = vmatprep.subr.mxu0 %v272
    %780 = vmatpush1.msra.mxu0 %v271
    %781 = vmatprep.subr.mxu0 0.0
    %782 = vmatpush2.msra.mxu0 0.0
    %783 = vmatprep.subr.mxu0 0.0
    %784 = vmatpush2.msra.mxu0 0.0
    %785 = vmatprep.subr.mxu0 0.0
    %786 = vmatpush2.msra.mxu0 0.0
    %787 = vmatprep.subr.mxu0 0.0
    %788 = vmatpush2.msra.mxu0 0.0
    %789 = vmatprep.subr.mxu0 0.0
    %790 = vmatpush2.msra.mxu0 0.0
    %791 = vmatprep.subr.mxu0 0.0
    %792 = vmatpush2.msra.mxu0 0.0
    %793 = vmatprep.subr.mxu0 0.0
    %794 = vmatpush2.msra.mxu0 0.0
    %795 = vmatprep.subr.mxu0 0.0
    %796 = vmatpush2.msra.mxu0 0.0
    %797 = vmatprep.subr.mxu0 0.0
    %798 = vmatpush2.msra.mxu0 0.0
    %799 = vmatprep.subr.mxu0 0.0
    %800 = vmatpush2.msra.mxu0 0.0
    %801 = vmatprep.subr.mxu0 0.0
    %802 = vmatpush2.msra.mxu0 0.0
    %803 = vmatprep.subr.mxu0 0.0
    %804 = vmatpush2.msra.mxu0 0.0
    %805 = vmatprep.subr.mxu0 0.0
    %806 = vmatpush2.msra.mxu0 0.0
    %807 = vmatprep.subr.mxu0 0.0
    %808 = vmatpush2.msra.mxu0 0.0
    %809 = vmatprep.subr.mxu0 0.0
    %810 = vmatpush2.msra.mxu0 0.0
    %811 = vmatprep.subr.mxu0 0.0
    %812 = vmatpush2.msra.mxu0 0.0
    %813 = vmatprep.mubr.f32.mxu0 0.0
    %814 = vmatmul.mubr.f32.gmra.mxu0 %v747
    %v815 = vpop.f32.mrf.mxu0
    %v816 = vadd.f32 0.0, %v815
    %v817 = vpop.f32.mrf.mxu0
    %v818 = vadd.f32 0.0, %v817
    %819 = vdwg.mxu0
    %v821 = vrot.slane %v816, 5
    %v822 = vrot.slane %v816, 6
    %v825 = vadd.f32 %v325, %v821
    %v826 = vadd.f32 %v327, %v822
    %v827 = vxor.u32 %v825, 2147483648
    %v828 = vxor.u32 %v826, 2147483648
    %v829 = vmul.f32 %v827, 1.442695
    %v830 = vpow.pop %v829
    %v831 = vmul.f32 %v828, 1.442695
    %v832 = vpow.pop %v831
    %v833 = vadd.f32 %v830, 1.0
    %v834 = vadd.f32 %v832, 1.0
    %v835 = vrcp.pop %v833
    %v836 = vmul.f32 1.0, %v835
    %v837 = vrcp.pop %v834
    %v838 = vmul.f32 1.0, %v837
    %v839 = vadd.f32 %v818, %v426
    %v841 = vrot.slane %v839, 5
    %v842 = vrot.slane %v839, 6
    %v845 = vmul.f32 %v836, %v841
    %v846 = vmul.f32 %v838, %v842
    %v847 = vadd.f32 %v326, %v845
    %v848 = vadd.f32 %v328, %v846
    %v849 = vtanh.pop %v847
    %v850 = vtanh.pop %v848
    %v851 = vsub.f32 1.0, %v836
    %v852 = vsub.f32 1.0, %v838
    %855 = vrot.lane.b32.xlu0 %v849, 64
    %v856 = vpop.permute.xlu0 %855
    %857 = vrot.lane.b32.xlu0 %v850, 64
    %v858 = vpop.permute.xlu0 %857
    %v861 = vmul.f32 %v851, %v856
    %v862 = vmul.f32 %v852, %v858
    %v863 = vrot.slane %v729, 7
    %v864 = vrot.slane %v730, 7
    %v867 = vmul.f32 %v836, %v863
    %v868 = vmul.f32 %v838, %v864
    %v869 = vadd.f32 %v861, %v867
    %v870 = vadd.f32 %v862, %v868
    %873 = vrot.lane.b32.xlu0 %v869, 64
    %v874 = vpop.permute.xlu0 %873
    %875 = vrot.lane.b32.xlu0 %v870, 64
    %v876 = vpop.permute.xlu0 %875
    %vm879 = vcmask 519171
    %880 = vst.msk [vmem:[#allocation2] sm:$0x8] %vm879, %v874
    %881 = vst.msk [vmem:[#allocation2 + $0x8] sm:$0x8] %vm879, %v876
    %v882 = vrot.slane %v869, 3
    %v883 = vrot.slane %v870, 2
    %v884 = vsel %vm467, %v883, %v882
    %885 = vrot.lane.b32.xlu0 %v884, 64
    %v886 = vpop.permute.xlu0 %885
    %v887 = vsel %vm329, %v886, 0
    %889 = vmatprep.subr.mxu0 0.0
    %890 = vmatpush1.msra.mxu0 0.0
    %891 = vmatprep.subr.mxu0 0.0
    %892 = vmatpush1.msra.mxu0 0.0
    %893 = vmatprep.subr.mxu0 0.0
    %894 = vmatpush1.msra.mxu0 0.0
    %895 = vmatprep.subr.mxu0 0.0
    %896 = vmatpush1.msra.mxu0 0.0
    %897 = vmatprep.subr.mxu0 0.0
    %898 = vmatpush1.msra.mxu0 0.0
    %899 = vmatprep.subr.mxu0 0.0
    %900 = vmatpush1.msra.mxu0 0.0
    %901 = vmatprep.subr.mxu0 0.0
    %902 = vmatpush1.msra.mxu0 0.0
    %903 = vmatprep.subr.mxu0 0.0
    %904 = vmatpush1.msra.mxu0 0.0
    %905 = vmatprep.subr.mxu0 %v286
    %906 = vmatpush1.msra.mxu0 %v285
    %907 = vmatprep.subr.mxu0 %v284
    %908 = vmatpush1.msra.mxu0 %v283
    %909 = vmatprep.subr.mxu0 %v282
    %910 = vmatpush1.msra.mxu0 %v281
    %911 = vmatprep.subr.mxu0 %v280
    %912 = vmatpush1.msra.mxu0 %v279
    %913 = vmatprep.subr.mxu0 %v278
    %914 = vmatpush1.msra.mxu0 %v277
    %915 = vmatprep.subr.mxu0 %v276
    %916 = vmatpush1.msra.mxu0 %v275
    %917 = vmatprep.subr.mxu0 %v274
    %918 = vmatpush1.msra.mxu0 %v273
    %919 = vmatprep.subr.mxu0 %v272
    %920 = vmatpush1.msra.mxu0 %v271
    %921 = vmatprep.subr.mxu0 0.0
    %922 = vmatpush2.msra.mxu0 0.0
    %923 = vmatprep.subr.mxu0 0.0
    %924 = vmatpush2.msra.mxu0 0.0
    %925 = vmatprep.subr.mxu0 0.0
    %926 = vmatpush2.msra.mxu0 0.0
    %927 = vmatprep.subr.mxu0 0.0
    %928 = vmatpush2.msra.mxu0 0.0
    %929 = vmatprep.subr.mxu0 0.0
    %930 = vmatpush2.msra.mxu0 0.0
    %931 = vmatprep.subr.mxu0 0.0
    %932 = vmatpush2.msra.mxu0 0.0
    %933 = vmatprep.subr.mxu0 0.0
    %934 = vmatpush2.msra.mxu0 0.0
    %935 = vmatprep.subr.mxu0 0.0
    %936 = vmatpush2.msra.mxu0 0.0
    %937 = vmatprep.subr.mxu0 0.0
    %938 = vmatpush2.msra.mxu0 0.0
    %939 = vmatprep.subr.mxu0 0.0
    %940 = vmatpush2.msra.mxu0 0.0
    %941 = vmatprep.subr.mxu0 0.0
    %942 = vmatpush2.msra.mxu0 0.0
    %943 = vmatprep.subr.mxu0 0.0
    %944 = vmatpush2.msra.mxu0 0.0
    %945 = vmatprep.subr.mxu0 0.0
    %946 = vmatpush2.msra.mxu0 0.0
    %947 = vmatprep.subr.mxu0 0.0
    %948 = vmatpush2.msra.mxu0 0.0
    %949 = vmatprep.subr.mxu0 0.0
    %950 = vmatpush2.msra.mxu0 0.0
    %951 = vmatprep.subr.mxu0 0.0
    %952 = vmatpush2.msra.mxu0 0.0
    %953 = vmatprep.mubr.f32.mxu0 0.0
    %954 = vmatmul.mubr.f32.gmra.mxu0 %v887
    %v955 = vpop.f32.mrf.mxu0
    %v956 = vadd.f32 0.0, %v955
    %v957 = vpop.f32.mrf.mxu0
    %v958 = vadd.f32 0.0, %v957
    %959 = vdwg.mxu0
    %v961 = vrot.slane %v956, 4
    %v962 = vrot.slane %v956, 5
    %v965 = vadd.f32 %v325, %v961
    %v966 = vadd.f32 %v327, %v962
    %v967 = vxor.u32 %v965, 2147483648
    %v968 = vxor.u32 %v966, 2147483648
    %v969 = vmul.f32 %v967, 1.442695
    %v970 = vpow.pop %v969
    %v971 = vmul.f32 %v968, 1.442695
    %v972 = vpow.pop %v971
    %v973 = vadd.f32 %v970, 1.0
    %v974 = vadd.f32 %v972, 1.0
    %v975 = vrcp.pop %v973
    %v976 = vmul.f32 1.0, %v975
    %v977 = vrcp.pop %v974
    %v978 = vmul.f32 1.0, %v977
    %v979 = vadd.f32 %v958, %v426
    %v981 = vrot.slane %v979, 4
    %v982 = vrot.slane %v979, 5
    %v985 = vmul.f32 %v976, %v981
    %v986 = vmul.f32 %v978, %v982
    %v987 = vadd.f32 %v326, %v985
    %v988 = vadd.f32 %v328, %v986
    %v989 = vtanh.pop %v987
    %v990 = vtanh.pop %v988
    %v991 = vsub.f32 1.0, %v976
    %v992 = vsub.f32 1.0, %v978
    %995 = vrot.lane.b32.xlu0 %v989, 64
    %v996 = vpop.permute.xlu0 %995
    %997 = vrot.lane.b32.xlu0 %v990, 64
    %v998 = vpop.permute.xlu0 %997
    %v1001 = vmul.f32 %v991, %v996
    %v1002 = vmul.f32 %v992, %v998
    %v1003 = vrot.slane %v869, 7
    %v1004 = vrot.slane %v870, 7
    %v1007 = vmul.f32 %v976, %v1003
    %v1008 = vmul.f32 %v978, %v1004
    %v1009 = vadd.f32 %v1001, %v1007
    %v1010 = vadd.f32 %v1002, %v1008
    %1013 = vrot.lane.b32.xlu0 %v1009, 64
    %v1014 = vpop.permute.xlu0 %1013
    %1015 = vrot.lane.b32.xlu0 %v1010, 64
    %v1016 = vpop.permute.xlu0 %1015
    %vm1019 = vcmask 520196
    %1020 = vst.msk [vmem:[#allocation2] sm:$0x10] %vm1019, %v1014
    %1021 = vst.msk [vmem:[#allocation2 + $0x8] sm:$0x10] %vm1019, %v1016
    %v1022 = vrot.slane %v1009, 4
    %v1023 = vrot.slane %v1010, 3
    %v1024 = vsel %vm467, %v1023, %v1022
    %1025 = vrot.lane.b32.xlu0 %v1024, 64
    %v1026 = vpop.permute.xlu0 %1025
    %v1027 = vsel %vm329, %v1026, 0
    %1029 = vmatprep.subr.mxu0 0.0
    %1030 = vmatpush1.msra.mxu0 0.0
    %1031 = vmatprep.subr.mxu0 0.0
    %1032 = vmatpush1.msra.mxu0 0.0
    %1033 = vmatprep.subr.mxu0 0.0
    %1034 = vmatpush1.msra.mxu0 0.0
    %1035 = vmatprep.subr.mxu0 0.0
    %1036 = vmatpush1.msra.mxu0 0.0
    %1037 = vmatprep.subr.mxu0 0.0
    %1038 = vmatpush1.msra.mxu0 0.0
    %1039 = vmatprep.subr.mxu0 0.0
    %1040 = vmatpush1.msra.mxu0 0.0
    %1041 = vmatprep.subr.mxu0 0.0
    %1042 = vmatpush1.msra.mxu0 0.0
    %1043 = vmatprep.subr.mxu0 0.0
    %1044 = vmatpush1.msra.mxu0 0.0
    %1045 = vmatprep.subr.mxu0 %v286
    %1046 = vmatpush1.msra.mxu0 %v285
    %1047 = vmatprep.subr.mxu0 %v284
    %1048 = vmatpush1.msra.mxu0 %v283
    %1049 = vmatprep.subr.mxu0 %v282
    %1050 = vmatpush1.msra.mxu0 %v281
    %1051 = vmatprep.subr.mxu0 %v280
    %1052 = vmatpush1.msra.mxu0 %v279
    %1053 = vmatprep.subr.mxu0 %v278
    %1054 = vmatpush1.msra.mxu0 %v277
    %1055 = vmatprep.subr.mxu0 %v276
    %1056 = vmatpush1.msra.mxu0 %v275
    %1057 = vmatprep.subr.mxu0 %v274
    %1058 = vmatpush1.msra.mxu0 %v273
    %1059 = vmatprep.subr.mxu0 %v272
    %1060 = vmatpush1.msra.mxu0 %v271
    %1061 = vmatprep.subr.mxu0 0.0
    %1062 = vmatpush2.msra.mxu0 0.0
    %1063 = vmatprep.subr.mxu0 0.0
    %1064 = vmatpush2.msra.mxu0 0.0
    %1065 = vmatprep.subr.mxu0 0.0
    %1066 = vmatpush2.msra.mxu0 0.0
    %1067 = vmatprep.subr.mxu0 0.0
    %1068 = vmatpush2.msra.mxu0 0.0
    %1069 = vmatprep.subr.mxu0 0.0
    %1070 = vmatpush2.msra.mxu0 0.0
    %1071 = vmatprep.subr.mxu0 0.0
    %1072 = vmatpush2.msra.mxu0 0.0
    %1073 = vmatprep.subr.mxu0 0.0
    %1074 = vmatpush2.msra.mxu0 0.0
    %1075 = vmatprep.subr.mxu0 0.0
    %1076 = vmatpush2.msra.mxu0 0.0
    %1077 = vmatprep.subr.mxu0 0.0
    %1078 = vmatpush2.msra.mxu0 0.0
    %1079 = vmatprep.subr.mxu0 0.0
    %1080 = vmatpush2.msra.mxu0 0.0
    %1081 = vmatprep.subr.mxu0 0.0
    %1082 = vmatpush2.msra.mxu0 0.0
    %1083 = vmatprep.subr.mxu0 0.0
    %1084 = vmatpush2.msra.mxu0 0.0
    %1085 = vmatprep.subr.mxu0 0.0
    %1086 = vmatpush2.msra.mxu0 0.0
    %1087 = vmatprep.subr.mxu0 0.0
    %1088 = vmatpush2.msra.mxu0 0.0
    %1089 = vmatprep.subr.mxu0 0.0
    %1090 = vmatpush2.msra.mxu0 0.0
    %1091 = vmatprep.subr.mxu0 0.0
    %1092 = vmatpush2.msra.mxu0 0.0
    %1093 = vmatprep.mubr.f32.mxu0 0.0
    %1094 = vmatmul.mubr.f32.gmra.mxu0 %v1027
    %v1095 = vpop.f32.mrf.mxu0
    %v1096 = vadd.f32 0.0, %v1095
    %v1097 = vpop.f32.mrf.mxu0
    %v1098 = vadd.f32 0.0, %v1097
    %1099 = vdwg.mxu0
    %v1101 = vrot.slane %v1096, 3
    %v1102 = vrot.slane %v1096, 4
    %v1105 = vadd.f32 %v325, %v1101
    %v1106 = vadd.f32 %v327, %v1102
    %v1107 = vxor.u32 %v1105, 2147483648
    %v1108 = vxor.u32 %v1106, 2147483648
    %v1109 = vmul.f32 %v1107, 1.442695
    %v1110 = vpow.pop %v1109
    %v1111 = vmul.f32 %v1108, 1.442695
    %v1112 = vpow.pop %v1111
    %v1113 = vadd.f32 %v1110, 1.0
    %v1114 = vadd.f32 %v1112, 1.0
    %v1115 = vrcp.pop %v1113
    %v1116 = vmul.f32 1.0, %v1115
    %v1117 = vrcp.pop %v1114
    %v1118 = vmul.f32 1.0, %v1117
    %v1119 = vadd.f32 %v1098, %v426
    %v1121 = vrot.slane %v1119, 3
    %v1122 = vrot.slane %v1119, 4
    %v1125 = vmul.f32 %v1116, %v1121
    %v1126 = vmul.f32 %v1118, %v1122
    %v1127 = vadd.f32 %v326, %v1125
    %v1128 = vadd.f32 %v328, %v1126
    %v1129 = vtanh.pop %v1127
    %v1130 = vtanh.pop %v1128
    %v1131 = vsub.f32 1.0, %v1116
    %v1132 = vsub.f32 1.0, %v1118
    %1135 = vrot.lane.b32.xlu0 %v1129, 64
    %v1136 = vpop.permute.xlu0 %1135
    %1137 = vrot.lane.b32.xlu0 %v1130, 64
    %v1138 = vpop.permute.xlu0 %1137
    %v1141 = vmul.f32 %v1131, %v1136
    %v1142 = vmul.f32 %v1132, %v1138
    %v1143 = vrot.slane %v1009, 7
    %v1144 = vrot.slane %v1010, 7
    %v1147 = vmul.f32 %v1116, %v1143
    %v1148 = vmul.f32 %v1118, %v1144
    %v1149 = vadd.f32 %v1141, %v1147
    %v1150 = vadd.f32 %v1142, %v1148
    %1153 = vrot.lane.b32.xlu0 %v1149, 64
    %v1154 = vpop.permute.xlu0 %1153
    %1155 = vrot.lane.b32.xlu0 %v1150, 64
    %v1156 = vpop.permute.xlu0 %1155
    %vm1159 = vcmask 521221
    %1160 = vst.msk [vmem:[#allocation2] sm:$0x20] %vm1159, %v1154
    %1161 = vst.msk [vmem:[#allocation2 + $0x8] sm:$0x20] %vm1159, %v1156
    %v1162 = vrot.slane %v1149, 5
    %v1163 = vrot.slane %v1150, 4
    %v1164 = vsel %vm467, %v1163, %v1162
    %1165 = vrot.lane.b32.xlu0 %v1164, 64
    %v1166 = vpop.permute.xlu0 %1165
    %v1167 = vsel %vm329, %v1166, 0
    %1169 = vmatprep.subr.mxu0 0.0
    %1170 = vmatpush1.msra.mxu0 0.0
    %1171 = vmatprep.subr.mxu0 0.0
    %1172 = vmatpush1.msra.mxu0 0.0
    %1173 = vmatprep.subr.mxu0 0.0
    %1174 = vmatpush1.msra.mxu0 0.0
    %1175 = vmatprep.subr.mxu0 0.0
    %1176 = vmatpush1.msra.mxu0 0.0
    %1177 = vmatprep.subr.mxu0 0.0
    %1178 = vmatpush1.msra.mxu0 0.0
    %1179 = vmatprep.subr.mxu0 0.0
    %1180 = vmatpush1.msra.mxu0 0.0
    %1181 = vmatprep.subr.mxu0 0.0
    %1182 = vmatpush1.msra.mxu0 0.0
    %1183 = vmatprep.subr.mxu0 0.0
    %1184 = vmatpush1.msra.mxu0 0.0
    %1185 = vmatprep.subr.mxu0 %v286
    %1186 = vmatpush1.msra.mxu0 %v285
    %1187 = vmatprep.subr.mxu0 %v284
    %1188 = vmatpush1.msra.mxu0 %v283
    %1189 = vmatprep.subr.mxu0 %v282
    %1190 = vmatpush1.msra.mxu0 %v281
    %1191 = vmatprep.subr.mxu0 %v280
    %1192 = vmatpush1.msra.mxu0 %v279
    %1193 = vmatprep.subr.mxu0 %v278
    %1194 = vmatpush1.msra.mxu0 %v277
    %1195 = vmatprep.subr.mxu0 %v276
    %1196 = vmatpush1.msra.mxu0 %v275
    %1197 = vmatprep.subr.mxu0 %v274
    %1198 = vmatpush1.msra.mxu0 %v273
    %1199 = vmatprep.subr.mxu0 %v272
    %1200 = vmatpush1.msra.mxu0 %v271
    %1201 = vmatprep.subr.mxu0 0.0
    %1202 = vmatpush2.msra.mxu0 0.0
    %1203 = vmatprep.subr.mxu0 0.0
    %1204 = vmatpush2.msra.mxu0 0.0
    %1205 = vmatprep.subr.mxu0 0.0
    %1206 = vmatpush2.msra.mxu0 0.0
    %1207 = vmatprep.subr.mxu0 0.0
    %1208 = vmatpush2.msra.mxu0 0.0
    %1209 = vmatprep.subr.mxu0 0.0
    %1210 = vmatpush2.msra.mxu0 0.0
    %1211 = vmatprep.subr.mxu0 0.0
    %1212 = vmatpush2.msra.mxu0 0.0
    %1213 = vmatprep.subr.mxu0 0.0
    %1214 = vmatpush2.msra.mxu0 0.0
    %1215 = vmatprep.subr.mxu0 0.0
    %1216 = vmatpush2.msra.mxu0 0.0
    %1217 = vmatprep.subr.mxu0 0.0
    %1218 = vmatpush2.msra.mxu0 0.0
    %1219 = vmatprep.subr.mxu0 0.0
    %1220 = vmatpush2.msra.mxu0 0.0
    %1221 = vmatprep.subr.mxu0 0.0
    %1222 = vmatpush2.msra.mxu0 0.0
    %1223 = vmatprep.subr.mxu0 0.0
    %1224 = vmatpush2.msra.mxu0 0.0
    %1225 = vmatprep.subr.mxu0 0.0
    %1226 = vmatpush2.msra.mxu0 0.0
    %1227 = vmatprep.subr.mxu0 0.0
    %1228 = vmatpush2.msra.mxu0 0.0
    %1229 = vmatprep.subr.mxu0 0.0
    %1230 = vmatpush2.msra.mxu0 0.0
    %1231 = vmatprep.subr.mxu0 0.0
    %1232 = vmatpush2.msra.mxu0 0.0
    %1233 = vmatprep.mubr.f32.mxu0 0.0
    %1234 = vmatmul.mubr.f32.gmra.mxu0 %v1167
    %v1235 = vpop.f32.mrf.mxu0
    %v1236 = vadd.f32 0.0, %v1235
    %v1237 = vpop.f32.mrf.mxu0
    %v1238 = vadd.f32 0.0, %v1237
    %1239 = vdwg.mxu0
    %v1241 = vrot.slane %v1236, 2
    %v1242 = vrot.slane %v1236, 3
    %v1245 = vadd.f32 %v325, %v1241
    %v1246 = vadd.f32 %v327, %v1242
    %v1247 = vxor.u32 %v1245, 2147483648
    %v1248 = vxor.u32 %v1246, 2147483648
    %v1249 = vmul.f32 %v1247, 1.442695
    %v1250 = vpow.pop %v1249
    %v1251 = vmul.f32 %v1248, 1.442695
    %v1252 = vpow.pop %v1251
    %v1253 = vadd.f32 %v1250, 1.0
    %v1254 = vadd.f32 %v1252, 1.0
    %v1255 = vrcp.pop %v1253
    %v1256 = vmul.f32 1.0, %v1255
    %v1257 = vrcp.pop %v1254
    %v1258 = vmul.f32 1.0, %v1257
    %v1259 = vadd.f32 %v1238, %v426
    %v1261 = vrot.slane %v1259, 2
    %v1262 = vrot.slane %v1259, 3
    %v1265 = vmul.f32 %v1256, %v1261
    %v1266 = vmul.f32 %v1258, %v1262
    %v1267 = vadd.f32 %v326, %v1265
    %v1268 = vadd.f32 %v328, %v1266
    %v1269 = vtanh.pop %v1267
    %v1270 = vtanh.pop %v1268
    %v1271 = vsub.f32 1.0, %v1256
    %v1272 = vsub.f32 1.0, %v1258
    %1275 = vrot.lane.b32.xlu0 %v1269, 64
    %v1276 = vpop.permute.xlu0 %1275
    %1277 = vrot.lane.b32.xlu0 %v1270, 64
    %v1278 = vpop.permute.xlu0 %1277
    %v1281 = vmul.f32 %v1271, %v1276
    %v1282 = vmul.f32 %v1272, %v1278
    %v1283 = vrot.slane %v1149, 7
    %v1284 = vrot.slane %v1150, 7
    %v1287 = vmul.f32 %v1256, %v1283
    %v1288 = vmul.f32 %v1258, %v1284
    %v1289 = vadd.f32 %v1281, %v1287
    %v1290 = vadd.f32 %v1282, %v1288
    %1293 = vrot.lane.b32.xlu0 %v1289, 64
    %v1294 = vpop.permute.xlu0 %1293
    %1295 = vrot.lane.b32.xlu0 %v1290, 64
    %v1296 = vpop.permute.xlu0 %1295
    %vm1299 = vcmask 522246
    %1300 = vst.msk [vmem:[#allocation2] sm:$0x40] %vm1299, %v1294
    %1301 = vst.msk [vmem:[#allocation2 + $0x8] sm:$0x40] %vm1299, %v1296
    %v1302 = vrot.slane %v1289, 6
    %v1303 = vrot.slane %v1290, 5
    %v1304 = vsel %vm467, %v1303, %v1302
    %1305 = vrot.lane.b32.xlu0 %v1304, 64
    %v1306 = vpop.permute.xlu0 %1305
    %v1307 = vsel %vm329, %v1306, 0
    %1309 = vmatprep.subr.mxu0 0.0
    %1310 = vmatpush1.msra.mxu0 0.0
    %1311 = vmatprep.subr.mxu0 0.0
    %1312 = vmatpush1.msra.mxu0 0.0
    %1313 = vmatprep.subr.mxu0 0.0
    %1314 = vmatpush1.msra.mxu0 0.0
    %1315 = vmatprep.subr.mxu0 0.0
    %1316 = vmatpush1.msra.mxu0 0.0
    %1317 = vmatprep.subr.mxu0 0.0
    %1318 = vmatpush1.msra.mxu0 0.0
    %1319 = vmatprep.subr.mxu0 0.0
    %1320 = vmatpush1.msra.mxu0 0.0
    %1321 = vmatprep.subr.mxu0 0.0
    %1322 = vmatpush1.msra.mxu0 0.0
    %1323 = vmatprep.subr.mxu0 0.0
    %1324 = vmatpush1.msra.mxu0 0.0
    %1325 = vmatprep.subr.mxu0 %v286
    %1326 = vmatpush1.msra.mxu0 %v285
    %1327 = vmatprep.subr.mxu0 %v284
    %1328 = vmatpush1.msra.mxu0 %v283
    %1329 = vmatprep.subr.mxu0 %v282
    %1330 = vmatpush1.msra.mxu0 %v281
    %1331 = vmatprep.subr.mxu0 %v280
    %1332 = vmatpush1.msra.mxu0 %v279
    %1333 = vmatprep.subr.mxu0 %v278
    %1334 = vmatpush1.msra.mxu0 %v277
    %1335 = vmatprep.subr.mxu0 %v276
    %1336 = vmatpush1.msra.mxu0 %v275
    %1337 = vmatprep.subr.mxu0 %v274
    %1338 = vmatpush1.msra.mxu0 %v273
    %1339 = vmatprep.subr.mxu0 %v272
    %1340 = vmatpush1.msra.mxu0 %v271
    %1341 = vmatprep.subr.mxu0 0.0
    %1342 = vmatpush2.msra.mxu0 0.0
    %1343 = vmatprep.subr.mxu0 0.0
    %1344 = vmatpush2.msra.mxu0 0.0
    %1345 = vmatprep.subr.mxu0 0.0
    %1346 = vmatpush2.msra.mxu0 0.0
    %1347 = vmatprep.subr.mxu0 0.0
    %1348 = vmatpush2.msra.mxu0 0.0
    %1349 = vmatprep.subr.mxu0 0.0
    %1350 = vmatpush2.msra.mxu0 0.0
    %1351 = vmatprep.subr.mxu0 0.0
    %1352 = vmatpush2.msra.mxu0 0.0
    %1353 = vmatprep.subr.mxu0 0.0
    %1354 = vmatpush2.msra.mxu0 0.0
    %1355 = vmatprep.subr.mxu0 0.0
    %1356 = vmatpush2.msra.mxu0 0.0
    %1357 = vmatprep.subr.mxu0 0.0
    %1358 = vmatpush2.msra.mxu0 0.0
    %1359 = vmatprep.subr.mxu0 0.0
    %1360 = vmatpush2.msra.mxu0 0.0
    %1361 = vmatprep.subr.mxu0 0.0
    %1362 = vmatpush2.msra.mxu0 0.0
    %1363 = vmatprep.subr.mxu0 0.0
    %1364 = vmatpush2.msra.mxu0 0.0
    %1365 = vmatprep.subr.mxu0 0.0
    %1366 = vmatpush2.msra.mxu0 0.0
    %1367 = vmatprep.subr.mxu0 0.0
    %1368 = vmatpush2.msra.mxu0 0.0
    %1369 = vmatprep.subr.mxu0 0.0
    %1370 = vmatpush2.msra.mxu0 0.0
    %1371 = vmatprep.subr.mxu0 0.0
    %1372 = vmatpush2.msra.mxu0 0.0
    %1373 = vmatprep.mubr.f32.mxu0 0.0
    %1374 = vmatmul.mubr.f32.gmra.mxu0 %v1307
    %v1375 = vpop.f32.mrf.mxu0
    %v1376 = vadd.f32 0.0, %v1375
    %v1377 = vpop.f32.mrf.mxu0
    %v1378 = vadd.f32 0.0, %v1377
    %1379 = vdwg.mxu0
    %v1381 = vrot.slane %v1376, 1
    %v1382 = vrot.slane %v1376, 2
    %v1385 = vadd.f32 %v325, %v1381
    %v1386 = vadd.f32 %v327, %v1382
    %v1387 = vxor.u32 %v1385, 2147483648
    %v1388 = vxor.u32 %v1386, 2147483648
    %v1389 = vmul.f32 %v1387, 1.442695
    %v1390 = vpow.pop %v1389
    %v1391 = vmul.f32 %v1388, 1.442695
    %v1392 = vpow.pop %v1391
    %v1393 = vadd.f32 %v1390, 1.0
    %v1394 = vadd.f32 %v1392, 1.0
    %v1395 = vrcp.pop %v1393
    %v1396 = vmul.f32 1.0, %v1395
    %v1397 = vrcp.pop %v1394
    %v1398 = vmul.f32 1.0, %v1397
    %v1399 = vadd.f32 %v1378, %v426
    %v1401 = vrot.slane %v1399, 1
    %v1402 = vrot.slane %v1399, 2
    %v1405 = vmul.f32 %v1396, %v1401
    %v1406 = vmul.f32 %v1398, %v1402
    %v1407 = vadd.f32 %v326, %v1405
    %v1408 = vadd.f32 %v328, %v1406
    %v1409 = vtanh.pop %v1407
    %v1410 = vtanh.pop %v1408
    %v1411 = vsub.f32 1.0, %v1396
    %v1412 = vsub.f32 1.0, %v1398
    %1415 = vrot.lane.b32.xlu0 %v1409, 64
    %v1416 = vpop.permute.xlu0 %1415
    %1417 = vrot.lane.b32.xlu0 %v1410, 64
    %v1418 = vpop.permute.xlu0 %1417
    %v1421 = vmul.f32 %v1411, %v1416
    %v1422 = vmul.f32 %v1412, %v1418
    %v1423 = vrot.slane %v1289, 7
    %v1424 = vrot.slane %v1290, 7
    %v1427 = vmul.f32 %v1396, %v1423
    %v1428 = vmul.f32 %v1398, %v1424
    %v1429 = vadd.f32 %v1421, %v1427
    %v1430 = vadd.f32 %v1422, %v1428
    %1433 = vrot.lane.b32.xlu0 %v1429, 64
    %v1434 = vpop.permute.xlu0 %1433
    %1435 = vrot.lane.b32.xlu0 %v1430, 64
    %v1436 = vpop.permute.xlu0 %1435
    %vm1439 = vcmask 523271
    %1440 = vst.msk [vmem:[#allocation2] sm:$0x80] %vm1439, %v1434
    %1441 = vst.msk [vmem:[#allocation2 + $0x8] sm:$0x80] %vm1439, %v1436
    %v1442 = vld [vmem:[#allocation2] sm:$0xff]
    %v1443 = vld [vmem:[#allocation2 + $0x8] sm:$0xff]
    %v1444 = vld [vmem:[%s5] sm:$0xff]
    %v1445 = vld [vmem:[%s5 + $0x8] sm:$0xff]
    %v1446 = vld [vmem:[%s5 + $0x10] sm:$0xff]
    %v1447 = vld [vmem:[%s5 + $0x18] sm:$0xff]
    %v1448 = vld [vmem:[%s5 + $0x20] sm:$0xff]
    %v1449 = vld [vmem:[%s5 + $0x28] sm:$0xff]
    %v1450 = vld [vmem:[%s5 + $0x30] sm:$0xff]
    %v1451 = vld [vmem:[%s5 + $0x38] sm:$0xff]
    %v1452 = vld [vmem:[%s5 + $0x40] sm:$0xff]
    %v1453 = vld [vmem:[%s5 + $0x48] sm:$0xff]
    %v1454 = vld [vmem:[%s5 + $0x50] sm:$0xff]
    %v1455 = vld [vmem:[%s5 + $0x58] sm:$0xff]
    %v1456 = vld [vmem:[%s5 + $0x60] sm:$0xff]
    %v1457 = vld [vmem:[%s5 + $0x68] sm:$0xff]
    %v1458 = vld [vmem:[%s5 + $0x70] sm:$0xff]
    %v1459 = vld [vmem:[%s5 + $0x78] sm:$0xff]
    %v1460 = vld [vmem:[#allocation9] sm:$0xff]
    %v1461 = vld [vmem:[#allocation9 + $0x8] sm:$0xff]
    %v1462 = vld [vmem:[#allocation9 + $0x10] sm:$0xff]
    %v1463 = vld [vmem:[#allocation9 + $0x18] sm:$0xff]
    %v1464 = vld [vmem:[#allocation9 + $0x20] sm:$0xff]
    %v1465 = vld [vmem:[#allocation9 + $0x28] sm:$0xff]
    %v1466 = vld [vmem:[#allocation9 + $0x30] sm:$0xff]
    %v1467 = vld [vmem:[#allocation9 + $0x38] sm:$0xff]
    %v1468 = vld [vmem:[#allocation9 + $0x40] sm:$0xff]
    %v1469 = vld [vmem:[#allocation9 + $0x48] sm:$0xff]
    %v1470 = vld [vmem:[#allocation9 + $0x50] sm:$0xff]
    %v1471 = vld [vmem:[#allocation9 + $0x58] sm:$0xff]
    %v1472 = vld [vmem:[#allocation9 + $0x60] sm:$0xff]
    %v1473 = vld [vmem:[#allocation9 + $0x68] sm:$0xff]
    %v1474 = vld [vmem:[#allocation9 + $0x70] sm:$0xff]
    %v1475 = vld [vmem:[#allocation9 + $0x78] sm:$0xff]
    %v1476 = vld [vmem:[%s7] sm:$0x3]
    %v1477 = vld [vmem:[%s8] sm:$0x1]
    %v1479 = vlaneseq
    %v1480 = vshrl.u32 %v1479, 7
    %v1481 = vsub.s32 0, %v1480
    %v1482 = vrot.slane %v1476, %v1481
    %v1483 = vlaneseq
    %v1484 = vshrl.u32 %v1483, 7
    %v1485 = vsub.s32 1, %v1484
    %v1486 = vrot.slane %v1476, %v1485
    %v1490 = vsel %vm329, %v1442, 0
    %v1493 = vsel %vm329, %v1443, 0
    %1495 = vmatprep.subr.mxu0 0.0
    %1496 = vmatpush1.msra.mxu0 0.0
    %1497 = vmatprep.subr.mxu0 0.0
    %1498 = vmatpush1.msra.mxu0 0.0
    %1499 = vmatprep.subr.mxu0 0.0
    %1500 = vmatpush1.msra.mxu0 0.0
    %1501 = vmatprep.subr.mxu0 0.0
    %1502 = vmatpush1.msra.mxu0 0.0
    %1503 = vmatprep.subr.mxu0 0.0
    %1504 = vmatpush1.msra.mxu0 0.0
    %1505 = vmatprep.subr.mxu0 0.0
    %1506 = vmatpush1.msra.mxu0 0.0
    %1507 = vmatprep.subr.mxu0 0.0
    %1508 = vmatpush1.msra.mxu0 0.0
    %1509 = vmatprep.subr.mxu0 0.0
    %1510 = vmatpush1.msra.mxu0 0.0
    %1511 = vmatprep.subr.mxu0 %v1459
    %1512 = vmatpush1.msra.mxu0 %v1458
    %1513 = vmatprep.subr.mxu0 %v1457
    %1514 = vmatpush1.msra.mxu0 %v1456
    %1515 = vmatprep.subr.mxu0 %v1455
    %1516 = vmatpush1.msra.mxu0 %v1454
    %1517 = vmatprep.subr.mxu0 %v1453
    %1518 = vmatpush1.msra.mxu0 %v1452
    %1519 = vmatprep.subr.mxu0 %v1451
    %1520 = vmatpush1.msra.mxu0 %v1450
    %1521 = vmatprep.subr.mxu0 %v1449
    %1522 = vmatpush1.msra.mxu0 %v1448
    %1523 = vmatprep.subr.mxu0 %v1447
    %1524 = vmatpush1.msra.mxu0 %v1446
    %1525 = vmatprep.subr.mxu0 %v1445
    %1526 = vmatpush1.msra.mxu0 %v1444
    %1527 = vmatprep.subr.mxu0 0.0
    %1528 = vmatpush2.msra.mxu0 0.0
    %1529 = vmatprep.subr.mxu0 0.0
    %1530 = vmatpush2.msra.mxu0 0.0
    %1531 = vmatprep.subr.mxu0 0.0
    %1532 = vmatpush2.msra.mxu0 0.0
    %1533 = vmatprep.subr.mxu0 0.0
    %1534 = vmatpush2.msra.mxu0 0.0
    %1535 = vmatprep.subr.mxu0 0.0
    %1536 = vmatpush2.msra.mxu0 0.0
    %1537 = vmatprep.subr.mxu0 0.0
    %1538 = vmatpush2.msra.mxu0 0.0
    %1539 = vmatprep.subr.mxu0 0.0
    %1540 = vmatpush2.msra.mxu0 0.0
    %1541 = vmatprep.subr.mxu0 0.0
    %1542 = vmatpush2.msra.mxu0 0.0
    %1543 = vmatprep.subr.mxu0 0.0
    %1544 = vmatpush2.msra.mxu0 0.0
    %1545 = vmatprep.subr.mxu0 0.0
    %1546 = vmatpush2.msra.mxu0 0.0
    %1547 = vmatprep.subr.mxu0 0.0
    %1548 = vmatpush2.msra.mxu0 0.0
    %1549 = vmatprep.subr.mxu0 0.0
    %1550 = vmatpush2.msra.mxu0 0.0
    %1551 = vmatprep.subr.mxu0 0.0
    %1552 = vmatpush2.msra.mxu0 0.0
    %1553 = vmatprep.subr.mxu0 0.0
    %1554 = vmatpush2.msra.mxu0 0.0
    %1555 = vmatprep.subr.mxu0 0.0
    %1556 = vmatpush2.msra.mxu0 0.0
    %1557 = vmatprep.subr.mxu0 0.0
    %1558 = vmatpush2.msra.mxu0 0.0
    %1559 = vmatprep.mubr.f32.mxu0 0.0
    %1560 = vmatmul.mubr.f32.gmra.mxu0 %v1490
    %v1561 = vpop.f32.mrf.mxu0
    %v1562 = vadd.f32 %v1482, %v1561
    %v1563 = vpop.f32.mrf.mxu0
    %v1564 = vadd.f32 %v1486, %v1563
    %1565 = vmatprep.mubr.f32.mxu0 0.0
    %1566 = vmatmul.mubr.f32.gmra.mxu0 %v1493
    %v1567 = vpop.f32.mrf.mxu0
    %v1568 = vadd.f32 %v1482, %v1567
    %v1569 = vpop.f32.mrf.mxu0
    %v1570 = vadd.f32 %v1486, %v1569
    %1571 = vdwg.mxu0
    %1572 = vmatprep.subr.mxu0 0.0
    %1573 = vmatpush1.msra.mxu0 0.0
    %1574 = vmatprep.subr.mxu0 0.0
    %1575 = vmatpush1.msra.mxu0 0.0
    %1576 = vmatprep.subr.mxu0 0.0
    %1577 = vmatpush1.msra.mxu0 0.0
    %1578 = vmatprep.subr.mxu0 0.0
    %1579 = vmatpush1.msra.mxu0 0.0
    %1580 = vmatprep.subr.mxu0 0.0
    %1581 = vmatpush1.msra.mxu0 0.0
    %1582 = vmatprep.subr.mxu0 0.0
    %1583 = vmatpush1.msra.mxu0 0.0
    %1584 = vmatprep.subr.mxu0 0.0
    %1585 = vmatpush1.msra.mxu0 0.0
    %1586 = vmatprep.subr.mxu0 0.0
    %1587 = vmatpush1.msra.mxu0 0.0
    %1588 = vmatprep.subr.mxu0 %v1475
    %1589 = vmatpush1.msra.mxu0 %v1474
    %1590 = vmatprep.subr.mxu0 %v1473
    %1591 = vmatpush1.msra.mxu0 %v1472
    %1592 = vmatprep.subr.mxu0 %v1471
    %1593 = vmatpush1.msra.mxu0 %v1470
    %1594 = vmatprep.subr.mxu0 %v1469
    %1595 = vmatpush1.msra.mxu0 %v1468
    %1596 = vmatprep.subr.mxu0 %v1467
    %1597 = vmatpush1.msra.mxu0 %v1466
    %1598 = vmatprep.subr.mxu0 %v1465
    %1599 = vmatpush1.msra.mxu0 %v1464
    %1600 = vmatprep.subr.mxu0 %v1463
    %1601 = vmatpush1.msra.mxu0 %v1462
    %1602 = vmatprep.subr.mxu0 %v1461
    %1603 = vmatpush1.msra.mxu0 %v1460
    %1604 = vmatprep.subr.mxu0 0.0
    %1605 = vmatpush2.msra.mxu0 0.0
    %1606 = vmatprep.subr.mxu0 0.0
    %1607 = vmatpush2.msra.mxu0 0.0
    %1608 = vmatprep.subr.mxu0 0.0
    %1609 = vmatpush2.msra.mxu0 0.0
    %1610 = vmatprep.subr.mxu0 0.0
    %1611 = vmatpush2.msra.mxu0 0.0
    %1612 = vmatprep.subr.mxu0 0.0
    %1613 = vmatpush2.msra.mxu0 0.0
    %1614 = vmatprep.subr.mxu0 0.0
    %1615 = vmatpush2.msra.mxu0 0.0
    %1616 = vmatprep.subr.mxu0 0.0
    %1617 = vmatpush2.msra.mxu0 0.0
    %1618 = vmatprep.subr.mxu0 0.0
    %1619 = vmatpush2.msra.mxu0 0.0
    %1620 = vmatprep.subr.mxu0 0.0
    %1621 = vmatpush2.msra.mxu0 0.0
    %1622 = vmatprep.subr.mxu0 0.0
    %1623 = vmatpush2.msra.mxu0 0.0
    %1624 = vmatprep.subr.mxu0 0.0
    %1625 = vmatpush2.msra.mxu0 0.0
    %1626 = vmatprep.subr.mxu0 0.0
    %1627 = vmatpush2.msra.mxu0 0.0
    %1628 = vmatprep.subr.mxu0 0.0
    %1629 = vmatpush2.msra.mxu0 0.0
    %1630 = vmatprep.subr.mxu0 0.0
    %1631 = vmatpush2.msra.mxu0 0.0
    %1632 = vmatprep.subr.mxu0 0.0
    %1633 = vmatpush2.msra.mxu0 0.0
    %1634 = vmatprep.subr.mxu0 0.0
    %1635 = vmatpush2.msra.mxu0 0.0
    %1636 = vmatprep.mubr.f32.mxu0 0.0
    %1637 = vmatmul.mubr.f32.gmra.mxu0 %v331
    %v1638 = vpop.f32.mrf.mxu0
    %v1639 = vadd.f32 0.0, %v1638
    %v1640 = vpop.f32.mrf.mxu0
    %v1641 = vadd.f32 0.0, %v1640
    %1642 = vdwg.mxu0
    %v1643 = vadd.f32 %v1562, %v1639
    %v1644 = vxor.u32 %v1643, 2147483648
    %v1645 = vmul.f32 %v1644, 1.442695
    %v1646 = vpow.pop %v1645
    %v1647 = vadd.f32 %v1646, 1.0
    %v1648 = vrcp.pop %v1647
    %v1649 = vmul.f32 1.0, %v1648
    %v1651 = vlaneseq
    %v1652 = vshrl.u32 %v1651, 7
    %v1653 = vsub.s32 0, %v1652
    %v1654 = vrot.slane %v1477, %v1653
    %1655 = vrot.lane.b32.xlu0 %v1654, 64
    %v1656 = vpop.permute.xlu0 %1655
    %v1658 = vadd.f32 %v1639, %v1656
    %1660 = vrot.lane.b32.xlu0 %v1658, 64
    %v1661 = vpop.permute.xlu0 %1660
    %v1663 = vmul.f32 %v1649, %v1661
    %1665 = vrot.lane.b32.xlu0 %v1663, 64
    %v1666 = vpop.permute.xlu0 %1665
    %v1668 = vadd.f32 %v1562, %v1666
    %v1669 = vtanh.pop %v1668
    %v1670 = vsub.f32 1.0, %v1649
    %1672 = vrot.lane.b32.xlu0 %v1669, 96
    %v1673 = vpop.permute.xlu0 %1672
    %v1675 = vmul.f32 %v1670, %v1673
    %v1676 = vmul.f32 %v1649, 0.0
    %v1677 = vadd.f32 %v1675, %v1676
    %v1678 = vadd.f32 %v1568, %v1639
    %v1679 = vxor.u32 %v1678, 2147483648
    %v1680 = vmul.f32 %v1679, 1.442695
    %v1681 = vpow.pop %v1680
    %v1682 = vadd.f32 %v1681, 1.0
    %v1683 = vrcp.pop %v1682
    %v1684 = vmul.f32 1.0, %v1683
    %v1685 = vadd.f32 %v1570, %v1641
    %v1686 = vxor.u32 %v1685, 2147483648
    %v1687 = vmul.f32 %v1686, 1.442695
    %v1688 = vpow.pop %v1687
    %v1689 = vadd.f32 %v1688, 1.0
    %v1690 = vrcp.pop %v1689
    %v1691 = vmul.f32 1.0, %v1690
    %v1693 = vadd.f32 %v1641, %v1654
    %1695 = vrot.lane.b32.xlu0 %v1693, 64
    %v1696 = vpop.permute.xlu0 %1695
    %v1698 = vmul.f32 %v1684, %v1696
    %1700 = vrot.lane.b32.xlu0 %v1698, 64
    %v1701 = vpop.permute.xlu0 %1700
    %v1703 = vadd.f32 %v1570, %v1701
    %v1704 = vtanh.pop %v1703
    %v1705 = vsub.f32 1.0, %v1691
    %1707 = vrot.lane.b32.xlu0 %v1704, 96
    %v1708 = vpop.permute.xlu0 %1707
    %v1710 = vmul.f32 %v1705, %v1708
    %v1711 = vmul.f32 %v1691, 0.0
    %v1712 = vadd.f32 %v1710, %v1711
    %1714 = vrot.lane.b32.xlu0 %v1677, 96
    %v1715 = vpop.permute.xlu0 %1714
    %1718 = vrot.lane.b32.xlu0 %v1712, 32
    %v1719 = vpop.permute.xlu0 %1718
    %vm1721 = vcmask 261120
    %v1722 = vsel %vm1721, %v1715, %v1719
    %v1724 = vsel %vm329, %v1722, 0
    %1726 = vmatprep.subr.mxu0 0.0
    %1727 = vmatpush1.msra.mxu0 0.0
    %1728 = vmatprep.subr.mxu0 0.0
    %1729 = vmatpush1.msra.mxu0 0.0
    %1730 = vmatprep.subr.mxu0 0.0
    %1731 = vmatpush1.msra.mxu0 0.0
    %1732 = vmatprep.subr.mxu0 0.0
    %1733 = vmatpush1.msra.mxu0 0.0
    %1734 = vmatprep.subr.mxu0 0.0
    %1735 = vmatpush1.msra.mxu0 0.0
    %1736 = vmatprep.subr.mxu0 0.0
    %1737 = vmatpush1.msra.mxu0 0.0
    %1738 = vmatprep.subr.mxu0 0.0
    %1739 = vmatpush1.msra.mxu0 0.0
    %1740 = vmatprep.subr.mxu0 0.0
    %1741 = vmatpush1.msra.mxu0 0.0
    %1742 = vmatprep.subr.mxu0 %v1475
    %1743 = vmatpush1.msra.mxu0 %v1474
    %1744 = vmatprep.subr.mxu0 %v1473
    %1745 = vmatpush1.msra.mxu0 %v1472
    %1746 = vmatprep.subr.mxu0 %v1471
    %1747 = vmatpush1.msra.mxu0 %v1470
    %1748 = vmatprep.subr.mxu0 %v1469
    %1749 = vmatpush1.msra.mxu0 %v1468
    %1750 = vmatprep.subr.mxu0 %v1467
    %1751 = vmatpush1.msra.mxu0 %v1466
    %1752 = vmatprep.subr.mxu0 %v1465
    %1753 = vmatpush1.msra.mxu0 %v1464
    %1754 = vmatprep.subr.mxu0 %v1463
    %1755 = vmatpush1.msra.mxu0 %v1462
    %1756 = vmatprep.subr.mxu0 %v1461
    %1757 = vmatpush1.msra.mxu0 %v1460
    %1758 = vmatprep.subr.mxu0 0.0
    %1759 = vmatpush2.msra.mxu0 0.0
    %1760 = vmatprep.subr.mxu0 0.0
    %1761 = vmatpush2.msra.mxu0 0.0
    %1762 = vmatprep.subr.mxu0 0.0
    %1763 = vmatpush2.msra.mxu0 0.0
    %1764 = vmatprep.subr.mxu0 0.0
    %1765 = vmatpush2.msra.mxu0 0.0
    %1766 = vmatprep.subr.mxu0 0.0
    %1767 = vmatpush2.msra.mxu0 0.0
    %1768 = vmatprep.subr.mxu0 0.0
    %1769 = vmatpush2.msra.mxu0 0.0
    %1770 = vmatprep.subr.mxu0 0.0
    %1771 = vmatpush2.msra.mxu0 0.0
    %1772 = vmatprep.subr.mxu0 0.0
    %1773 = vmatpush2.msra.mxu0 0.0
    %1774 = vmatprep.subr.mxu0 0.0
    %1775 = vmatpush2.msra.mxu0 0.0
    %1776 = vmatprep.subr.mxu0 0.0
    %1777 = vmatpush2.msra.mxu0 0.0
    %1778 = vmatprep.subr.mxu0 0.0
    %1779 = vmatpush2.msra.mxu0 0.0
    %1780 = vmatprep.subr.mxu0 0.0
    %1781 = vmatpush2.msra.mxu0 0.0
    %1782 = vmatprep.subr.mxu0 0.0
    %1783 = vmatpush2.msra.mxu0 0.0
    %1784 = vmatprep.subr.mxu0 0.0
    %1785 = vmatpush2.msra.mxu0 0.0
    %1786 = vmatprep.subr.mxu0 0.0
    %1787 = vmatpush2.msra.mxu0 0.0
    %1788 = vmatprep.subr.mxu0 0.0
    %1789 = vmatpush2.msra.mxu0 0.0
    %1790 = vmatprep.mubr.f32.mxu0 0.0
    %1791 = vmatmul.mubr.f32.gmra.mxu0 %v1724
    %v1792 = vpop.f32.mrf.mxu0
    %v1793 = vadd.f32 0.0, %v1792
    %v1794 = vpop.f32.mrf.mxu0
    %v1795 = vadd.f32 0.0, %v1794
    %1796 = vdwg.mxu0
    %v1797 = vadd.f32 %v1568, %v1793
    %v1798 = vxor.u32 %v1797, 2147483648
    %v1799 = vmul.f32 %v1798, 1.442695
    %v1800 = vpow.pop %v1799
    %v1801 = vadd.f32 %v1800, 1.0
    %v1802 = vrcp.pop %v1801
    %v1803 = vmul.f32 1.0, %v1802
    %v1804 = vadd.f32 %v1793, %v1656
    %1806 = vrot.lane.b32.xlu0 %v1804, 64
    %v1807 = vpop.permute.xlu0 %1806
    %v1809 = vmul.f32 %v1803, %v1807
    %1811 = vrot.lane.b32.xlu0 %v1809, 64
    %v1812 = vpop.permute.xlu0 %1811
    %v1814 = vadd.f32 %v1568, %v1812
    %v1815 = vtanh.pop %v1814
    %v1816 = vsub.f32 1.0, %v1803
    %1818 = vrot.lane.b32.xlu0 %v1815, 96
    %v1819 = vpop.permute.xlu0 %1818
    %v1821 = vmul.f32 %v1816, %v1819
    %1822 = vrot.lane.b32.xlu0 %v1722, 32
    %v1823 = vpop.permute.xlu0 %1822
    %v1825 = vmul.f32 %v1803, %v1823
    %v1826 = vadd.f32 %v1821, %v1825
    %v1827 = vadd.f32 %v1562, %v1793
    %v1828 = vxor.u32 %v1827, 2147483648
    %v1829 = vmul.f32 %v1828, 1.442695
    %v1830 = vpow.pop %v1829
    %v1831 = vadd.f32 %v1830, 1.0
    %v1832 = vrcp.pop %v1831
    %v1833 = vmul.f32 1.0, %v1832
    %v1834 = vadd.f32 %v1564, %v1795
    %v1835 = vxor.u32 %v1834, 2147483648
    %v1836 = vmul.f32 %v1835, 1.442695
    %v1837 = vpow.pop %v1836
    %v1838 = vadd.f32 %v1837, 1.0
    %v1839 = vrcp.pop %v1838
    %v1840 = vmul.f32 1.0, %v1839
    %v1841 = vadd.f32 %v1795, %v1654
    %1843 = vrot.lane.b32.xlu0 %v1841, 64
    %v1844 = vpop.permute.xlu0 %1843
    %v1846 = vmul.f32 %v1833, %v1844
    %1848 = vrot.lane.b32.xlu0 %v1846, 64
    %v1849 = vpop.permute.xlu0 %1848
    %v1851 = vadd.f32 %v1564, %v1849
    %v1852 = vtanh.pop %v1851
    %v1853 = vsub.f32 1.0, %v1840
    %1855 = vrot.lane.b32.xlu0 %v1852, 96
    %v1856 = vpop.permute.xlu0 %1855
    %v1858 = vmul.f32 %v1853, %v1856
    %1859 = vrot.lane.b32.xlu0 %v1722, 96
    %v1860 = vpop.permute.xlu0 %1859
    %v1862 = vmul.f32 %v1840, %v1860
    %v1863 = vadd.f32 %v1858, %v1862
    %s1864 = scalar_lea.vmem %s5, 128
    %v1865 = vld [vmem:[%s1864] sm:$0xff]
    %v1866 = vld [vmem:[%s1864 + $0x8] sm:$0xff]
    %v1867 = vld [vmem:[%s1864 + $0x10] sm:$0xff]
    %v1868 = vld [vmem:[%s1864 + $0x18] sm:$0xff]
    %v1869 = vld [vmem:[%s1864 + $0x20] sm:$0xff]
    %v1870 = vld [vmem:[%s1864 + $0x28] sm:$0xff]
    %v1871 = vld [vmem:[%s1864 + $0x30] sm:$0xff]
    %v1872 = vld [vmem:[%s1864 + $0x38] sm:$0xff]
    %v1873 = vld [vmem:[%s1864 + $0x40] sm:$0xff]
    %v1874 = vld [vmem:[%s1864 + $0x48] sm:$0xff]
    %v1875 = vld [vmem:[%s1864 + $0x50] sm:$0xff]
    %v1876 = vld [vmem:[%s1864 + $0x58] sm:$0xff]
    %v1877 = vld [vmem:[%s1864 + $0x60] sm:$0xff]
    %v1878 = vld [vmem:[%s1864 + $0x68] sm:$0xff]
    %v1879 = vld [vmem:[%s1864 + $0x70] sm:$0xff]
    %v1880 = vld [vmem:[%s1864 + $0x78] sm:$0xff]
    %s1881 = scalar_lea.vmem [#allocation9], 128
    %v1882 = vld [vmem:[%s1881] sm:$0xff]
    %v1883 = vld [vmem:[%s1881 + $0x8] sm:$0xff]
    %v1884 = vld [vmem:[%s1881 + $0x10] sm:$0xff]
    %v1885 = vld [vmem:[%s1881 + $0x18] sm:$0xff]
    %v1886 = vld [vmem:[%s1881 + $0x20] sm:$0xff]
    %v1887 = vld [vmem:[%s1881 + $0x28] sm:$0xff]
    %v1888 = vld [vmem:[%s1881 + $0x30] sm:$0xff]
    %v1889 = vld [vmem:[%s1881 + $0x38] sm:$0xff]
    %v1890 = vld [vmem:[%s1881 + $0x40] sm:$0xff]
    %v1891 = vld [vmem:[%s1881 + $0x48] sm:$0xff]
    %v1892 = vld [vmem:[%s1881 + $0x50] sm:$0xff]
    %v1893 = vld [vmem:[%s1881 + $0x58] sm:$0xff]
    %v1894 = vld [vmem:[%s1881 + $0x60] sm:$0xff]
    %v1895 = vld [vmem:[%s1881 + $0x68] sm:$0xff]
    %v1896 = vld [vmem:[%s1881 + $0x70] sm:$0xff]
    %v1897 = vld [vmem:[%s1881 + $0x78] sm:$0xff]
    %s1898 = scalar_lea.vmem %s7, 2
    %v1899 = vld [vmem:[%s1898] sm:$0x3]
    %s1900 = scalar_lea.vmem %s8, 1
    %v1901 = vld [vmem:[%s1900] sm:$0x1]
    %v1903 = vsel %vm1721, %v1863, 0
    %v1905 = vsel %vm1721, %v1712, 0
    %1907 = vmatprep.subr.mxu0 0.0
    %1908 = vmatpush1.msra.mxu0 0.0
    %1909 = vmatprep.subr.mxu0 0.0
    %1910 = vmatpush1.msra.mxu0 0.0
    %1911 = vmatprep.subr.mxu0 0.0
    %1912 = vmatpush1.msra.mxu0 0.0
    %1913 = vmatprep.subr.mxu0 0.0
    %1914 = vmatpush1.msra.mxu0 0.0
    %1915 = vmatprep.subr.mxu0 0.0
    %1916 = vmatpush1.msra.mxu0 0.0
    %1917 = vmatprep.subr.mxu0 0.0
    %1918 = vmatpush1.msra.mxu0 0.0
    %1919 = vmatprep.subr.mxu0 0.0
    %1920 = vmatpush1.msra.mxu0 0.0
    %1921 = vmatprep.subr.mxu0 0.0
    %1922 = vmatpush1.msra.mxu0 0.0
    %1923 = vmatprep.subr.mxu0 0.0
    %1924 = vmatpush1.msra.mxu0 0.0
    %1925 = vmatprep.subr.mxu0 0.0
    %1926 = vmatpush1.msra.mxu0 0.0
    %1927 = vmatprep.subr.mxu0 0.0
    %1928 = vmatpush1.msra.mxu0 0.0
    %1929 = vmatprep.subr.mxu0 0.0
    %1930 = vmatpush1.msra.mxu0 0.0
    %1931 = vmatprep.subr.mxu0 %v1880
    %1932 = vmatpush1.msra.mxu0 %v1879
    %1933 = vmatprep.subr.mxu0 %v1878
    %1934 = vmatpush1.msra.mxu0 %v1877
    %1935 = vmatprep.subr.mxu0 %v1876
    %1936 = vmatpush1.msra.mxu0 %v1875
    %1937 = vmatprep.subr.mxu0 %v1874
    %1938 = vmatpush1.msra.mxu0 %v1873
    %1939 = vmatprep.subr.mxu0 0.0
    %1940 = vmatpush2.msra.mxu0 0.0
    %1941 = vmatprep.subr.mxu0 0.0
    %1942 = vmatpush2.msra.mxu0 0.0
    %1943 = vmatprep.subr.mxu0 0.0
    %1944 = vmatpush2.msra.mxu0 0.0
    %1945 = vmatprep.subr.mxu0 0.0
    %1946 = vmatpush2.msra.mxu0 0.0
    %1947 = vmatprep.subr.mxu0 0.0
    %1948 = vmatpush2.msra.mxu0 0.0
    %1949 = vmatprep.subr.mxu0 0.0
    %1950 = vmatpush2.msra.mxu0 0.0
    %1951 = vmatprep.subr.mxu0 0.0
    %1952 = vmatpush2.msra.mxu0 0.0
    %1953 = vmatprep.subr.mxu0 0.0
    %1954 = vmatpush2.msra.mxu0 0.0
    %1955 = vmatprep.subr.mxu0 0.0
    %1956 = vmatpush2.msra.mxu0 0.0
    %1957 = vmatprep.subr.mxu0 0.0
    %1958 = vmatpush2.msra.mxu0 0.0
    %1959 = vmatprep.subr.mxu0 0.0
    %1960 = vmatpush2.msra.mxu0 0.0
    %1961 = vmatprep.subr.mxu0 0.0
    %1962 = vmatpush2.msra.mxu0 0.0
    %1963 = vmatprep.subr.mxu0 0.0
    %1964 = vmatpush2.msra.mxu0 0.0
    %1965 = vmatprep.subr.mxu0 0.0
    %1966 = vmatpush2.msra.mxu0 0.0
    %1967 = vmatprep.subr.mxu0 0.0
    %1968 = vmatpush2.msra.mxu0 0.0
    %1969 = vmatprep.subr.mxu0 0.0
    %1970 = vmatpush2.msra.mxu0 0.0
    %1971 = vmatprep.mubr.f32.mxu0 0.0
    %1972 = vmatmul.mubr.f32.gmra.mxu0 %v1903
    %v1973 = vpop.f32.mrf.mxu0
    %v1974 = vadd.f32 0.0, %v1973
    %v1975 = vpop.f32.mrf.mxu0
    %v1976 = vadd.f32 0.0, %v1975
    %1977 = vmatprep.mubr.f32.mxu0 0.0
    %1978 = vmatmul.mubr.f32.gmra.mxu0 %v1905
    %v1979 = vpop.f32.mrf.mxu0
    %v1980 = vadd.f32 0.0, %v1979
    %v1981 = vpop.f32.mrf.mxu0
    %v1982 = vadd.f32 0.0, %v1981
    %1983 = vdwg.mxu0
    %1985 = vrot.lane.b32.xlu0 %v1826, 96
    %v1986 = vpop.permute.xlu0 %1985
    %v1987 = vsel %vm1721, %v1715, 0
    %v1989 = vsel %vm1721, %v1986, 0
    %1991 = vmatprep.subr.mxu0 0.0
    %1992 = vmatpush1.msra.mxu0 0.0
    %1993 = vmatprep.subr.mxu0 0.0
    %1994 = vmatpush1.msra.mxu0 0.0
    %1995 = vmatprep.subr.mxu0 0.0
    %1996 = vmatpush1.msra.mxu0 0.0
    %1997 = vmatprep.subr.mxu0 0.0
    %1998 = vmatpush1.msra.mxu0 0.0
    %1999 = vmatprep.subr.mxu0 0.0
    %2000 = vmatpush1.msra.mxu0 0.0
    %2001 = vmatprep.subr.mxu0 0.0
    %2002 = vmatpush1.msra.mxu0 0.0
    %2003 = vmatprep.subr.mxu0 0.0
    %2004 = vmatpush1.msra.mxu0 0.0
    %2005 = vmatprep.subr.mxu0 0.0
    %2006 = vmatpush1.msra.mxu0 0.0
    %2007 = vmatprep.subr.mxu0 0.0
    %2008 = vmatpush1.msra.mxu0 0.0
    %2009 = vmatprep.subr.mxu0 0.0
    %2010 = vmatpush1.msra.mxu0 0.0
    %2011 = vmatprep.subr.mxu0 0.0
    %2012 = vmatpush1.msra.mxu0 0.0
    %2013 = vmatprep.subr.mxu0 0.0
    %2014 = vmatpush1.msra.mxu0 0.0
    %2015 = vmatprep.subr.mxu0 %v1872
    %2016 = vmatpush1.msra.mxu0 %v1871
    %2017 = vmatprep.subr.mxu0 %v1870
    %2018 = vmatpush1.msra.mxu0 %v1869
    %2019 = vmatprep.subr.mxu0 %v1868
    %2020 = vmatpush1.msra.mxu0 %v1867
    %2021 = vmatprep.subr.mxu0 %v1866
    %2022 = vmatpush1.msra.mxu0 %v1865
    %2023 = vmatprep.subr.mxu0 0.0
    %2024 = vmatpush2.msra.mxu0 0.0
    %2025 = vmatprep.subr.mxu0 0.0
    %2026 = vmatpush2.msra.mxu0 0.0
    %2027 = vmatprep.subr.mxu0 0.0
    %2028 = vmatpush2.msra.mxu0 0.0
    %2029 = vmatprep.subr.mxu0 0.0
    %2030 = vmatpush2.msra.mxu0 0.0
    %2031 = vmatprep.subr.mxu0 0.0
    %2032 = vmatpush2.msra.mxu0 0.0
    %2033 = vmatprep.subr.mxu0 0.0
    %2034 = vmatpush2.msra.mxu0 0.0
    %2035 = vmatprep.subr.mxu0 0.0
    %2036 = vmatpush2.msra.mxu0 0.0
    %2037 = vmatprep.subr.mxu0 0.0
    %2038 = vmatpush2.msra.mxu0 0.0
    %2039 = vmatprep.subr.mxu0 0.0
    %2040 = vmatpush2.msra.mxu0 0.0
    %2041 = vmatprep.subr.mxu0 0.0
    %2042 = vmatpush2.msra.mxu0 0.0
    %2043 = vmatprep.subr.mxu0 0.0
    %2044 = vmatpush2.msra.mxu0 0.0
    %2045 = vmatprep.subr.mxu0 0.0
    %2046 = vmatpush2.msra.mxu0 0.0
    %2047 = vmatprep.subr.mxu0 0.0
    %2048 = vmatpush2.msra.mxu0 0.0
    %2049 = vmatprep.subr.mxu0 0.0
    %2050 = vmatpush2.msra.mxu0 0.0
    %2051 = vmatprep.subr.mxu0 0.0
    %2052 = vmatpush2.msra.mxu0 0.0
    %2053 = vmatprep.subr.mxu0 0.0
    %2054 = vmatpush2.msra.mxu0 0.0
    %2055 = vmatprep.mubr.f32.mxu0 0.0
    %2056 = vmatmul.mubr.f32.gmra.mxu0 %v1987
    %v2057 = vpop.f32.mrf.mxu0
    %v2058 = vadd.f32 %v1974, %v2057
    %v2059 = vpop.f32.mrf.mxu0
    %v2060 = vadd.f32 %v1976, %v2059
    %2061 = vmatprep.mubr.f32.mxu0 0.0
    %2062 = vmatmul.mubr.f32.gmra.mxu0 %v1989
    %v2063 = vpop.f32.mrf.mxu0
    %v2064 = vadd.f32 %v1980, %v2063
    %v2065 = vpop.f32.mrf.mxu0
    %v2066 = vadd.f32 %v1982, %v2065
    %2067 = vdwg.mxu0
    %v2069 = vlaneseq
    %v2070 = vshrl.u32 %v2069, 7
    %v2071 = vsub.s32 0, %v2070
    %v2072 = vrot.slane %v1899, %v2071
    %v2073 = vlaneseq
    %v2074 = vshrl.u32 %v2073, 7
    %v2075 = vsub.s32 1, %v2074
    %v2076 = vrot.slane %v1899, %v2075
    %v2079 = vadd.f32 %v2058, %v2072
    %v2080 = vadd.f32 %v2060, %v2076
    %v2081 = vadd.f32 %v2064, %v2072
    %v2082 = vadd.f32 %v2066, %v2076
    %2083 = vmatprep.subr.mxu0 0.0
    %2084 = vmatpush1.msra.mxu0 0.0
    %2085 = vmatprep.subr.mxu0 0.0
    %2086 = vmatpush1.msra.mxu0 0.0
    %2087 = vmatprep.subr.mxu0 0.0
    %2088 = vmatpush1.msra.mxu0 0.0
    %2089 = vmatprep.subr.mxu0 0.0
    %2090 = vmatpush1.msra.mxu0 0.0
    %2091 = vmatprep.subr.mxu0 0.0
    %2092 = vmatpush1.msra.mxu0 0.0
    %2093 = vmatprep.subr.mxu0 0.0
    %2094 = vmatpush1.msra.mxu0 0.0
    %2095 = vmatprep.subr.mxu0 0.0
    %2096 = vmatpush1.msra.mxu0 0.0
    %2097 = vmatprep.subr.mxu0 0.0
    %2098 = vmatpush1.msra.mxu0 0.0
    %2099 = vmatprep.subr.mxu0 %v1897
    %2100 = vmatpush1.msra.mxu0 %v1896
    %2101 = vmatprep.subr.mxu0 %v1895
    %2102 = vmatpush1.msra.mxu0 %v1894
    %2103 = vmatprep.subr.mxu0 %v1893
    %2104 = vmatpush1.msra.mxu0 %v1892
    %2105 = vmatprep.subr.mxu0 %v1891
    %2106 = vmatpush1.msra.mxu0 %v1890
    %2107 = vmatprep.subr.mxu0 %v1889
    %2108 = vmatpush1.msra.mxu0 %v1888
    %2109 = vmatprep.subr.mxu0 %v1887
    %2110 = vmatpush1.msra.mxu0 %v1886
    %2111 = vmatprep.subr.mxu0 %v1885
    %2112 = vmatpush1.msra.mxu0 %v1884
    %2113 = vmatprep.subr.mxu0 %v1883
    %2114 = vmatpush1.msra.mxu0 %v1882
    %2115 = vmatprep.subr.mxu0 0.0
    %2116 = vmatpush2.msra.mxu0 0.0
    %2117 = vmatprep.subr.mxu0 0.0
    %2118 = vmatpush2.msra.mxu0 0.0
    %2119 = vmatprep.subr.mxu0 0.0
    %2120 = vmatpush2.msra.mxu0 0.0
    %2121 = vmatprep.subr.mxu0 0.0
    %2122 = vmatpush2.msra.mxu0 0.0
    %2123 = vmatprep.subr.mxu0 0.0
    %2124 = vmatpush2.msra.mxu0 0.0
    %2125 = vmatprep.subr.mxu0 0.0
    %2126 = vmatpush2.msra.mxu0 0.0
    %2127 = vmatprep.subr.mxu0 0.0
    %2128 = vmatpush2.msra.mxu0 0.0
    %2129 = vmatprep.subr.mxu0 0.0
    %2130 = vmatpush2.msra.mxu0 0.0
    %2131 = vmatprep.subr.mxu0 0.0
    %2132 = vmatpush2.msra.mxu0 0.0
    %2133 = vmatprep.subr.mxu0 0.0
    %2134 = vmatpush2.msra.mxu0 0.0
    %2135 = vmatprep.subr.mxu0 0.0
    %2136 = vmatpush2.msra.mxu0 0.0
    %2137 = vmatprep.subr.mxu0 0.0
    %2138 = vmatpush2.msra.mxu0 0.0
    %2139 = vmatprep.subr.mxu0 0.0
    %2140 = vmatpush2.msra.mxu0 0.0
    %2141 = vmatprep.subr.mxu0 0.0
    %2142 = vmatpush2.msra.mxu0 0.0
    %2143 = vmatprep.subr.mxu0 0.0
    %2144 = vmatpush2.msra.mxu0 0.0
    %2145 = vmatprep.subr.mxu0 0.0
    %2146 = vmatpush2.msra.mxu0 0.0
    %2147 = vmatprep.mubr.f32.mxu0 0.0
    %2148 = vmatmul.mubr.f32.gmra.mxu0 %v331
    %v2149 = vpop.f32.mrf.mxu0
    %v2150 = vadd.f32 0.0, %v2149
    %v2151 = vpop.f32.mrf.mxu0
    %v2152 = vadd.f32 0.0, %v2151
    %2153 = vdwg.mxu0
    %v2154 = vadd.f32 %v2079, %v2150
    %v2155 = vxor.u32 %v2154, 2147483648
    %v2156 = vmul.f32 %v2155, 1.442695
    %v2157 = vpow.pop %v2156
    %v2158 = vadd.f32 %v2157, 1.0
    %v2159 = vrcp.pop %v2158
    %v2160 = vmul.f32 1.0, %v2159
    %v2162 = vlaneseq
    %v2163 = vshrl.u32 %v2162, 7
    %v2164 = vsub.s32 0, %v2163
    %v2165 = vrot.slane %v1901, %v2164
    %2166 = vrot.lane.b32.xlu0 %v2165, 64
    %v2167 = vpop.permute.xlu0 %2166
    %v2169 = vadd.f32 %v2150, %v2167
    %2171 = vrot.lane.b32.xlu0 %v2169, 64
    %v2172 = vpop.permute.xlu0 %2171
    %v2174 = vmul.f32 %v2160, %v2172
    %2176 = vrot.lane.b32.xlu0 %v2174, 64
    %v2177 = vpop.permute.xlu0 %2176
    %v2179 = vadd.f32 %v2079, %v2177
    %v2180 = vtanh.pop %v2179
    %v2181 = vsub.f32 1.0, %v2160
    %2183 = vrot.lane.b32.xlu0 %v2180, 96
    %v2184 = vpop.permute.xlu0 %2183
    %v2186 = vmul.f32 %v2181, %v2184
    %v2187 = vmul.f32 %v2160, 0.0
    %v2188 = vadd.f32 %v2186, %v2187
    %v2189 = vadd.f32 %v2081, %v2150
    %v2190 = vxor.u32 %v2189, 2147483648
    %v2191 = vmul.f32 %v2190, 1.442695
    %v2192 = vpow.pop %v2191
    %v2193 = vadd.f32 %v2192, 1.0
    %v2194 = vrcp.pop %v2193
    %v2195 = vmul.f32 1.0, %v2194
    %v2196 = vadd.f32 %v2082, %v2152
    %v2197 = vxor.u32 %v2196, 2147483648
    %v2198 = vmul.f32 %v2197, 1.442695
    %v2199 = vpow.pop %v2198
    %v2200 = vadd.f32 %v2199, 1.0
    %v2201 = vrcp.pop %v2200
    %v2202 = vmul.f32 1.0, %v2201
    %v2204 = vadd.f32 %v2152, %v2165
    %2206 = vrot.lane.b32.xlu0 %v2204, 64
    %v2207 = vpop.permute.xlu0 %2206
    %v2209 = vmul.f32 %v2195, %v2207
    %2211 = vrot.lane.b32.xlu0 %v2209, 64
    %v2212 = vpop.permute.xlu0 %2211
    %v2214 = vadd.f32 %v2082, %v2212
    %v2215 = vtanh.pop %v2214
    %v2216 = vsub.f32 1.0, %v2202
    %2218 = vrot.lane.b32.xlu0 %v2215, 96
    %v2219 = vpop.permute.xlu0 %2218
    %v2221 = vmul.f32 %v2216, %v2219
    %v2222 = vmul.f32 %v2202, 0.0
    %v2223 = vadd.f32 %v2221, %v2222
    %2225 = vrot.lane.b32.xlu0 %v2188, 96
    %v2226 = vpop.permute.xlu0 %2225
    %2229 = vrot.lane.b32.xlu0 %v2223, 32
    %v2230 = vpop.permute.xlu0 %2229
    %v2232 = vsel %vm1721, %v2226, %v2230
    %v2234 = vsel %vm329, %v2232, 0
    %2236 = vmatprep.subr.mxu0 0.0
    %2237 = vmatpush1.msra.mxu0 0.0
    %2238 = vmatprep.subr.mxu0 0.0
    %2239 = vmatpush1.msra.mxu0 0.0
    %2240 = vmatprep.subr.mxu0 0.0
    %2241 = vmatpush1.msra.mxu0 0.0
    %2242 = vmatprep.subr.mxu0 0.0
    %2243 = vmatpush1.msra.mxu0 0.0
    %2244 = vmatprep.subr.mxu0 0.0
    %2245 = vmatpush1.msra.mxu0 0.0
    %2246 = vmatprep.subr.mxu0 0.0
    %2247 = vmatpush1.msra.mxu0 0.0
    %2248 = vmatprep.subr.mxu0 0.0
    %2249 = vmatpush1.msra.mxu0 0.0
    %2250 = vmatprep.subr.mxu0 0.0
    %2251 = vmatpush1.msra.mxu0 0.0
    %2252 = vmatprep.subr.mxu0 %v1897
    %2253 = vmatpush1.msra.mxu0 %v1896
    %2254 = vmatprep.subr.mxu0 %v1895
    %2255 = vmatpush1.msra.mxu0 %v1894
    %2256 = vmatprep.subr.mxu0 %v1893
    %2257 = vmatpush1.msra.mxu0 %v1892
    %2258 = vmatprep.subr.mxu0 %v1891
    %2259 = vmatpush1.msra.mxu0 %v1890
    %2260 = vmatprep.subr.mxu0 %v1889
    %2261 = vmatpush1.msra.mxu0 %v1888
    %2262 = vmatprep.subr.mxu0 %v1887
    %2263 = vmatpush1.msra.mxu0 %v1886
    %2264 = vmatprep.subr.mxu0 %v1885
    %2265 = vmatpush1.msra.mxu0 %v1884
    %2266 = vmatprep.subr.mxu0 %v1883
    %2267 = vmatpush1.msra.mxu0 %v1882
    %2268 = vmatprep.subr.mxu0 0.0
    %2269 = vmatpush2.msra.mxu0 0.0
    %2270 = vmatprep.subr.mxu0 0.0
    %2271 = vmatpush2.msra.mxu0 0.0
    %2272 = vmatprep.subr.mxu0 0.0
    %2273 = vmatpush2.msra.mxu0 0.0
    %2274 = vmatprep.subr.mxu0 0.0
    %2275 = vmatpush2.msra.mxu0 0.0
    %2276 = vmatprep.subr.mxu0 0.0
    %2277 = vmatpush2.msra.mxu0 0.0
    %2278 = vmatprep.subr.mxu0 0.0
    %2279 = vmatpush2.msra.mxu0 0.0
    %2280 = vmatprep.subr.mxu0 0.0
    %2281 = vmatpush2.msra.mxu0 0.0
    %2282 = vmatprep.subr.mxu0 0.0
    %2283 = vmatpush2.msra.mxu0 0.0
    %2284 = vmatprep.subr.mxu0 0.0
    %2285 = vmatpush2.msra.mxu0 0.0
    %2286 = vmatprep.subr.mxu0 0.0
    %2287 = vmatpush2.msra.mxu0 0.0
    %2288 = vmatprep.subr.mxu0 0.0
    %2289 = vmatpush2.msra.mxu0 0.0
    %2290 = vmatprep.subr.mxu0 0.0
    %2291 = vmatpush2.msra.mxu0 0.0
    %2292 = vmatprep.subr.mxu0 0.0
    %2293 = vmatpush2.msra.mxu0 0.0
    %2294 = vmatprep.subr.mxu0 0.0
    %2295 = vmatpush2.msra.mxu0 0.0
    %2296 = vmatprep.subr.mxu0 0.0
    %2297 = vmatpush2.msra.mxu0 0.0
    %2298 = vmatprep.subr.mxu0 0.0
    %2299 = vmatpush2.msra.mxu0 0.0
    %2300 = vmatprep.mubr.f32.mxu0 0.0
    %2301 = vmatmul.mubr.f32.gmra.mxu0 %v2234
    %v2302 = vpop.f32.mrf.mxu0
    %v2303 = vadd.f32 0.0, %v2302
    %v2304 = vpop.f32.mrf.mxu0
    %v2305 = vadd.f32 0.0, %v2304
    %2306 = vdwg.mxu0
    %v2307 = vadd.f32 %v2081, %v2303
    %v2308 = vxor.u32 %v2307, 2147483648
    %v2309 = vmul.f32 %v2308, 1.442695
    %v2310 = vpow.pop %v2309
    %v2311 = vadd.f32 %v2310, 1.0
    %v2312 = vrcp.pop %v2311
    %v2313 = vmul.f32 1.0, %v2312
    %v2314 = vadd.f32 %v2303, %v2167
    %2316 = vrot.lane.b32.xlu0 %v2314, 64
    %v2317 = vpop.permute.xlu0 %2316
    %v2319 = vmul.f32 %v2313, %v2317
    %2321 = vrot.lane.b32.xlu0 %v2319, 64
    %v2322 = vpop.permute.xlu0 %2321
    %v2324 = vadd.f32 %v2081, %v2322
    %v2325 = vtanh.pop %v2324
    %v2326 = vsub.f32 1.0, %v2313
    %2328 = vrot.lane.b32.xlu0 %v2325, 96
    %v2329 = vpop.permute.xlu0 %2328
    %v2331 = vmul.f32 %v2326, %v2329
    %2332 = vrot.lane.b32.xlu0 %v2232, 32
    %v2333 = vpop.permute.xlu0 %2332
    %v2335 = vmul.f32 %v2313, %v2333
    %v2336 = vadd.f32 %v2331, %v2335
    %v2337 = vadd.f32 %v2079, %v2303
    %v2338 = vxor.u32 %v2337, 2147483648
    %v2339 = vmul.f32 %v2338, 1.442695
    %v2340 = vpow.pop %v2339
    %v2341 = vadd.f32 %v2340, 1.0
    %v2342 = vrcp.pop %v2341
    %v2343 = vmul.f32 1.0, %v2342
    %v2344 = vadd.f32 %v2080, %v2305
    %v2345 = vxor.u32 %v2344, 2147483648
    %v2346 = vmul.f32 %v2345, 1.442695
    %v2347 = vpow.pop %v2346
    %v2348 = vadd.f32 %v2347, 1.0
    %v2349 = vrcp.pop %v2348
    %v2350 = vmul.f32 1.0, %v2349
    %v2351 = vadd.f32 %v2305, %v2165
    %2353 = vrot.lane.b32.xlu0 %v2351, 64
    %v2354 = vpop.permute.xlu0 %2353
    %v2356 = vmul.f32 %v2343, %v2354
    %2358 = vrot.lane.b32.xlu0 %v2356, 64
    %v2359 = vpop.permute.xlu0 %2358
    %v2361 = vadd.f32 %v2080, %v2359
    %v2362 = vtanh.pop %v2361
    %v2363 = vsub.f32 1.0, %v2350
    %2365 = vrot.lane.b32.xlu0 %v2362, 96
    %v2366 = vpop.permute.xlu0 %2365
    %v2368 = vmul.f32 %v2363, %v2366
    %2369 = vrot.lane.b32.xlu0 %v2232, 96
    %v2370 = vpop.permute.xlu0 %2369
    %v2372 = vmul.f32 %v2350, %v2370
    %v2373 = vadd.f32 %v2368, %v2372
    %s2374 = scalar_lea.vmem %s5, 256
    %v2375 = vld [vmem:[%s2374] sm:$0xff]
    %v2376 = vld [vmem:[%s2374 + $0x8] sm:$0xff]
    %v2377 = vld [vmem:[%s2374 + $0x10] sm:$0xff]
    %v2378 = vld [vmem:[%s2374 + $0x18] sm:$0xff]
    %v2379 = vld [vmem:[%s2374 + $0x20] sm:$0xff]
    %v2380 = vld [vmem:[%s2374 + $0x28] sm:$0xff]
    %v2381 = vld [vmem:[%s2374 + $0x30] sm:$0xff]
    %v2382 = vld [vmem:[%s2374 + $0x38] sm:$0xff]
    %v2383 = vld [vmem:[%s2374 + $0x40] sm:$0xff]
    %v2384 = vld [vmem:[%s2374 + $0x48] sm:$0xff]
    %v2385 = vld [vmem:[%s2374 + $0x50] sm:$0xff]
    %v2386 = vld [vmem:[%s2374 + $0x58] sm:$0xff]
    %v2387 = vld [vmem:[%s2374 + $0x60] sm:$0xff]
    %v2388 = vld [vmem:[%s2374 + $0x68] sm:$0xff]
    %v2389 = vld [vmem:[%s2374 + $0x70] sm:$0xff]
    %v2390 = vld [vmem:[%s2374 + $0x78] sm:$0xff]
    %s2391 = scalar_lea.vmem [#allocation9], 256
    %v2392 = vld [vmem:[%s2391] sm:$0xff]
    %v2393 = vld [vmem:[%s2391 + $0x8] sm:$0xff]
    %v2394 = vld [vmem:[%s2391 + $0x10] sm:$0xff]
    %v2395 = vld [vmem:[%s2391 + $0x18] sm:$0xff]
    %v2396 = vld [vmem:[%s2391 + $0x20] sm:$0xff]
    %v2397 = vld [vmem:[%s2391 + $0x28] sm:$0xff]
    %v2398 = vld [vmem:[%s2391 + $0x30] sm:$0xff]
    %v2399 = vld [vmem:[%s2391 + $0x38] sm:$0xff]
    %v2400 = vld [vmem:[%s2391 + $0x40] sm:$0xff]
    %v2401 = vld [vmem:[%s2391 + $0x48] sm:$0xff]
    %v2402 = vld [vmem:[%s2391 + $0x50] sm:$0xff]
    %v2403 = vld [vmem:[%s2391 + $0x58] sm:$0xff]
    %v2404 = vld [vmem:[%s2391 + $0x60] sm:$0xff]
    %v2405 = vld [vmem:[%s2391 + $0x68] sm:$0xff]
    %v2406 = vld [vmem:[%s2391 + $0x70] sm:$0xff]
    %v2407 = vld [vmem:[%s2391 + $0x78] sm:$0xff]
    %s2408 = scalar_lea.vmem %s7, 4
    %v2409 = vld [vmem:[%s2408] sm:$0x3]
    %s2410 = scalar_lea.vmem %s8, 2
    %v2411 = vld [vmem:[%s2410] sm:$0x1]
    %v2413 = vsel %vm1721, %v2373, 0
    %v2415 = vsel %vm1721, %v2223, 0
    %2417 = vmatprep.subr.mxu0 0.0
    %2418 = vmatpush1.msra.mxu0 0.0
    %2419 = vmatprep.subr.mxu0 0.0
    %2420 = vmatpush1.msra.mxu0 0.0
    %2421 = vmatprep.subr.mxu0 0.0
    %2422 = vmatpush1.msra.mxu0 0.0
    %2423 = vmatprep.subr.mxu0 0.0
    %2424 = vmatpush1.msra.mxu0 0.0
    %2425 = vmatprep.subr.mxu0 0.0
    %2426 = vmatpush1.msra.mxu0 0.0
    %2427 = vmatprep.subr.mxu0 0.0
    %2428 = vmatpush1.msra.mxu0 0.0
    %2429 = vmatprep.subr.mxu0 0.0
    %2430 = vmatpush1.msra.mxu0 0.0
    %2431 = vmatprep.subr.mxu0 0.0
    %2432 = vmatpush1.msra.mxu0 0.0
    %2433 = vmatprep.subr.mxu0 0.0
    %2434 = vmatpush1.msra.mxu0 0.0
    %2435 = vmatprep.subr.mxu0 0.0
    %2436 = vmatpush1.msra.mxu0 0.0
    %2437 = vmatprep.subr.mxu0 0.0
    %2438 = vmatpush1.msra.mxu0 0.0
    %2439 = vmatprep.subr.mxu0 0.0
    %2440 = vmatpush1.msra.mxu0 0.0
    %2441 = vmatprep.subr.mxu0 %v2390
    %2442 = vmatpush1.msra.mxu0 %v2389
    %2443 = vmatprep.subr.mxu0 %v2388
    %2444 = vmatpush1.msra.mxu0 %v2387
    %2445 = vmatprep.subr.mxu0 %v2386
    %2446 = vmatpush1.msra.mxu0 %v2385
    %2447 = vmatprep.subr.mxu0 %v2384
    %2448 = vmatpush1.msra.mxu0 %v2383
    %2449 = vmatprep.subr.mxu0 0.0
    %2450 = vmatpush2.msra.mxu0 0.0
    %2451 = vmatprep.subr.mxu0 0.0
    %2452 = vmatpush2.msra.mxu0 0.0
    %2453 = vmatprep.subr.mxu0 0.0
    %2454 = vmatpush2.msra.mxu0 0.0
    %2455 = vmatprep.subr.mxu0 0.0
    %2456 = vmatpush2.msra.mxu0 0.0
    %2457 = vmatprep.subr.mxu0 0.0
    %2458 = vmatpush2.msra.mxu0 0.0
    %2459 = vmatprep.subr.mxu0 0.0
    %2460 = vmatpush2.msra.mxu0 0.0
    %2461 = vmatprep.subr.mxu0 0.0
    %2462 = vmatpush2.msra.mxu0 0.0
    %2463 = vmatprep.subr.mxu0 0.0
    %2464 = vmatpush2.msra.mxu0 0.0
    %2465 = vmatprep.subr.mxu0 0.0
    %2466 = vmatpush2.msra.mxu0 0.0
    %2467 = vmatprep.subr.mxu0 0.0
    %2468 = vmatpush2.msra.mxu0 0.0
    %2469 = vmatprep.subr.mxu0 0.0
    %2470 = vmatpush2.msra.mxu0 0.0
    %2471 = vmatprep.subr.mxu0 0.0
    %2472 = vmatpush2.msra.mxu0 0.0
    %2473 = vmatprep.subr.mxu0 0.0
    %2474 = vmatpush2.msra.mxu0 0.0
    %2475 = vmatprep.subr.mxu0 0.0
    %2476 = vmatpush2.msra.mxu0 0.0
    %2477 = vmatprep.subr.mxu0 0.0
    %2478 = vmatpush2.msra.mxu0 0.0
    %2479 = vmatprep.subr.mxu0 0.0
    %2480 = vmatpush2.msra.mxu0 0.0
    %2481 = vmatprep.mubr.f32.mxu0 0.0
    %2482 = vmatmul.mubr.f32.gmra.mxu0 %v2413
    %v2483 = vpop.f32.mrf.mxu0
    %v2484 = vadd.f32 0.0, %v2483
    %v2485 = vpop.f32.mrf.mxu0
    %v2486 = vadd.f32 0.0, %v2485
    %2487 = vmatprep.mubr.f32.mxu0 0.0
    %2488 = vmatmul.mubr.f32.gmra.mxu0 %v2415
    %v2489 = vpop.f32.mrf.mxu0
    %v2490 = vadd.f32 0.0, %v2489
    %v2491 = vpop.f32.mrf.mxu0
    %v2492 = vadd.f32 0.0, %v2491
    %2493 = vdwg.mxu0
    %2495 = vrot.lane.b32.xlu0 %v2336, 96
    %v2496 = vpop.permute.xlu0 %2495
    %v2497 = vsel %vm1721, %v2226, 0
    %v2499 = vsel %vm1721, %v2496, 0
    %2501 = vmatprep.subr.mxu0 0.0
    %2502 = vmatpush1.msra.mxu0 0.0
    %2503 = vmatprep.subr.mxu0 0.0
    %2504 = vmatpush1.msra.mxu0 0.0
    %2505 = vmatprep.subr.mxu0 0.0
    %2506 = vmatpush1.msra.mxu0 0.0
    %2507 = vmatprep.subr.mxu0 0.0
    %2508 = vmatpush1.msra.mxu0 0.0
    %2509 = vmatprep.subr.mxu0 0.0
    %2510 = vmatpush1.msra.mxu0 0.0
    %2511 = vmatprep.subr.mxu0 0.0
    %2512 = vmatpush1.msra.mxu0 0.0
    %2513 = vmatprep.subr.mxu0 0.0
    %2514 = vmatpush1.msra.mxu0 0.0
    %2515 = vmatprep.subr.mxu0 0.0
    %2516 = vmatpush1.msra.mxu0 0.0
    %2517 = vmatprep.subr.mxu0 0.0
    %2518 = vmatpush1.msra.mxu0 0.0
    %2519 = vmatprep.subr.mxu0 0.0
    %2520 = vmatpush1.msra.mxu0 0.0
    %2521 = vmatprep.subr.mxu0 0.0
    %2522 = vmatpush1.msra.mxu0 0.0
    %2523 = vmatprep.subr.mxu0 0.0
    %2524 = vmatpush1.msra.mxu0 0.0
    %2525 = vmatprep.subr.mxu0 %v2382
    %2526 = vmatpush1.msra.mxu0 %v2381
    %2527 = vmatprep.subr.mxu0 %v2380
    %2528 = vmatpush1.msra.mxu0 %v2379
    %2529 = vmatprep.subr.mxu0 %v2378
    %2530 = vmatpush1.msra.mxu0 %v2377
    %2531 = vmatprep.subr.mxu0 %v2376
    %2532 = vmatpush1.msra.mxu0 %v2375
    %2533 = vmatprep.subr.mxu0 0.0
    %2534 = vmatpush2.msra.mxu0 0.0
    %2535 = vmatprep.subr.mxu0 0.0
    %2536 = vmatpush2.msra.mxu0 0.0
    %2537 = vmatprep.subr.mxu0 0.0
    %2538 = vmatpush2.msra.mxu0 0.0
    %2539 = vmatprep.subr.mxu0 0.0
    %2540 = vmatpush2.msra.mxu0 0.0
    %2541 = vmatprep.subr.mxu0 0.0
    %2542 = vmatpush2.msra.mxu0 0.0
    %2543 = vmatprep.subr.mxu0 0.0
    %2544 = vmatpush2.msra.mxu0 0.0
    %2545 = vmatprep.subr.mxu0 0.0
    %2546 = vmatpush2.msra.mxu0 0.0
    %2547 = vmatprep.subr.mxu0 0.0
    %2548 = vmatpush2.msra.mxu0 0.0
    %2549 = vmatprep.subr.mxu0 0.0
    %2550 = vmatpush2.msra.mxu0 0.0
    %2551 = vmatprep.subr.mxu0 0.0
    %2552 = vmatpush2.msra.mxu0 0.0
    %2553 = vmatprep.subr.mxu0 0.0
    %2554 = vmatpush2.msra.mxu0 0.0
    %2555 = vmatprep.subr.mxu0 0.0
    %2556 = vmatpush2.msra.mxu0 0.0
    %2557 = vmatprep.subr.mxu0 0.0
    %2558 = vmatpush2.msra.mxu0 0.0
    %2559 = vmatprep.subr.mxu0 0.0
    %2560 = vmatpush2.msra.mxu0 0.0
    %2561 = vmatprep.subr.mxu0 0.0
    %2562 = vmatpush2.msra.mxu0 0.0
    %2563 = vmatprep.subr.mxu0 0.0
    %2564 = vmatpush2.msra.mxu0 0.0
    %2565 = vmatprep.mubr.f32.mxu0 0.0
    %2566 = vmatmul.mubr.f32.gmra.mxu0 %v2497
    %v2567 = vpop.f32.mrf.mxu0
    %v2568 = vadd.f32 %v2484, %v2567
    %v2569 = vpop.f32.mrf.mxu0
    %v2570 = vadd.f32 %v2486, %v2569
    %2571 = vmatprep.mubr.f32.mxu0 0.0
    %2572 = vmatmul.mubr.f32.gmra.mxu0 %v2499
    %v2573 = vpop.f32.mrf.mxu0
    %v2574 = vadd.f32 %v2490, %v2573
    %v2575 = vpop.f32.mrf.mxu0
    %v2576 = vadd.f32 %v2492, %v2575
    %2577 = vdwg.mxu0
    %v2579 = vlaneseq
    %v2580 = vshrl.u32 %v2579, 7
    %v2581 = vsub.s32 0, %v2580
    %v2582 = vrot.slane %v2409, %v2581
    %v2583 = vlaneseq
    %v2584 = vshrl.u32 %v2583, 7
    %v2585 = vsub.s32 1, %v2584
    %v2586 = vrot.slane %v2409, %v2585
    %v2589 = vadd.f32 %v2568, %v2582
    %v2590 = vadd.f32 %v2570, %v2586
    %v2591 = vadd.f32 %v2574, %v2582
    %v2592 = vadd.f32 %v2576, %v2586
    %2593 = vmatprep.subr.mxu0 0.0
    %2594 = vmatpush1.msra.mxu0 0.0
    %2595 = vmatprep.subr.mxu0 0.0
    %2596 = vmatpush1.msra.mxu0 0.0
    %2597 = vmatprep.subr.mxu0 0.0
    %2598 = vmatpush1.msra.mxu0 0.0
    %2599 = vmatprep.subr.mxu0 0.0
    %2600 = vmatpush1.msra.mxu0 0.0
    %2601 = vmatprep.subr.mxu0 0.0
    %2602 = vmatpush1.msra.mxu0 0.0
    %2603 = vmatprep.subr.mxu0 0.0
    %2604 = vmatpush1.msra.mxu0 0.0
    %2605 = vmatprep.subr.mxu0 0.0
    %2606 = vmatpush1.msra.mxu0 0.0
    %2607 = vmatprep.subr.mxu0 0.0
    %2608 = vmatpush1.msra.mxu0 0.0
    %2609 = vmatprep.subr.mxu0 %v2407
    %2610 = vmatpush1.msra.mxu0 %v2406
    %2611 = vmatprep.subr.mxu0 %v2405
    %2612 = vmatpush1.msra.mxu0 %v2404
    %2613 = vmatprep.subr.mxu0 %v2403
    %2614 = vmatpush1.msra.mxu0 %v2402
    %2615 = vmatprep.subr.mxu0 %v2401
    %2616 = vmatpush1.msra.mxu0 %v2400
    %2617 = vmatprep.subr.mxu0 %v2399
    %2618 = vmatpush1.msra.mxu0 %v2398
    %2619 = vmatprep.subr.mxu0 %v2397
    %2620 = vmatpush1.msra.mxu0 %v2396
    %2621 = vmatprep.subr.mxu0 %v2395
    %2622 = vmatpush1.msra.mxu0 %v2394
    %2623 = vmatprep.subr.mxu0 %v2393
    %2624 = vmatpush1.msra.mxu0 %v2392
    %2625 = vmatprep.subr.mxu0 0.0
    %2626 = vmatpush2.msra.mxu0 0.0
    %2627 = vmatprep.subr.mxu0 0.0
    %2628 = vmatpush2.msra.mxu0 0.0
    %2629 = vmatprep.subr.mxu0 0.0
    %2630 = vmatpush2.msra.mxu0 0.0
    %2631 = vmatprep.subr.mxu0 0.0
    %2632 = vmatpush2.msra.mxu0 0.0
    %2633 = vmatprep.subr.mxu0 0.0
    %2634 = vmatpush2.msra.mxu0 0.0
    %2635 = vmatprep.subr.mxu0 0.0
    %2636 = vmatpush2.msra.mxu0 0.0
    %2637 = vmatprep.subr.mxu0 0.0
    %2638 = vmatpush2.msra.mxu0 0.0
    %2639 = vmatprep.subr.mxu0 0.0
    %2640 = vmatpush2.msra.mxu0 0.0
    %2641 = vmatprep.subr.mxu0 0.0
    %2642 = vmatpush2.msra.mxu0 0.0
    %2643 = vmatprep.subr.mxu0 0.0
    %2644 = vmatpush2.msra.mxu0 0.0
    %2645 = vmatprep.subr.mxu0 0.0
    %2646 = vmatpush2.msra.mxu0 0.0
    %2647 = vmatprep.subr.mxu0 0.0
    %2648 = vmatpush2.msra.mxu0 0.0
    %2649 = vmatprep.subr.mxu0 0.0
    %2650 = vmatpush2.msra.mxu0 0.0
    %2651 = vmatprep.subr.mxu0 0.0
    %2652 = vmatpush2.msra.mxu0 0.0
    %2653 = vmatprep.subr.mxu0 0.0
    %2654 = vmatpush2.msra.mxu0 0.0
    %2655 = vmatprep.subr.mxu0 0.0
    %2656 = vmatpush2.msra.mxu0 0.0
    %2657 = vmatprep.mubr.f32.mxu0 0.0
    %2658 = vmatmul.mubr.f32.gmra.mxu0 %v331
    %v2659 = vpop.f32.mrf.mxu0
    %v2660 = vadd.f32 0.0, %v2659
    %v2661 = vpop.f32.mrf.mxu0
    %v2662 = vadd.f32 0.0, %v2661
    %2663 = vdwg.mxu0
    %v2664 = vadd.f32 %v2589, %v2660
    %v2665 = vxor.u32 %v2664, 2147483648
    %v2666 = vmul.f32 %v2665, 1.442695
    %v2667 = vpow.pop %v2666
    %v2668 = vadd.f32 %v2667, 1.0
    %v2669 = vrcp.pop %v2668
    %v2670 = vmul.f32 1.0, %v2669
    %v2672 = vlaneseq
    %v2673 = vshrl.u32 %v2672, 7
    %v2674 = vsub.s32 0, %v2673
    %v2675 = vrot.slane %v2411, %v2674
    %2676 = vrot.lane.b32.xlu0 %v2675, 64
    %v2677 = vpop.permute.xlu0 %2676
    %v2679 = vadd.f32 %v2660, %v2677
    %2681 = vrot.lane.b32.xlu0 %v2679, 64
    %v2682 = vpop.permute.xlu0 %2681
    %v2684 = vmul.f32 %v2670, %v2682
    %2686 = vrot.lane.b32.xlu0 %v2684, 64
    %v2687 = vpop.permute.xlu0 %2686
    %v2689 = vadd.f32 %v2589, %v2687
    %v2690 = vtanh.pop %v2689
    %v2691 = vsub.f32 1.0, %v2670
    %2693 = vrot.lane.b32.xlu0 %v2690, 96
    %v2694 = vpop.permute.xlu0 %2693
    %v2696 = vmul.f32 %v2691, %v2694
    %v2697 = vmul.f32 %v2670, 0.0
    %v2698 = vadd.f32 %v2696, %v2697
    %v2699 = vadd.f32 %v2591, %v2660
    %v2700 = vxor.u32 %v2699, 2147483648
    %v2701 = vmul.f32 %v2700, 1.442695
    %v2702 = vpow.pop %v2701
    %v2703 = vadd.f32 %v2702, 1.0
    %v2704 = vrcp.pop %v2703
    %v2705 = vmul.f32 1.0, %v2704
    %v2706 = vadd.f32 %v2592, %v2662
    %v2707 = vxor.u32 %v2706, 2147483648
    %v2708 = vmul.f32 %v2707, 1.442695
    %v2709 = vpow.pop %v2708
    %v2710 = vadd.f32 %v2709, 1.0
    %v2711 = vrcp.pop %v2710
    %v2712 = vmul.f32 1.0, %v2711
    %v2714 = vadd.f32 %v2662, %v2675
    %2716 = vrot.lane.b32.xlu0 %v2714, 64
    %v2717 = vpop.permute.xlu0 %2716
    %v2719 = vmul.f32 %v2705, %v2717
    %2721 = vrot.lane.b32.xlu0 %v2719, 64
    %v2722 = vpop.permute.xlu0 %2721
    %v2724 = vadd.f32 %v2592, %v2722
    %v2725 = vtanh.pop %v2724
    %v2726 = vsub.f32 1.0, %v2712
    %2728 = vrot.lane.b32.xlu0 %v2725, 96
    %v2729 = vpop.permute.xlu0 %2728
    %v2731 = vmul.f32 %v2726, %v2729
    %v2732 = vmul.f32 %v2712, 0.0
    %v2733 = vadd.f32 %v2731, %v2732
    %2735 = vrot.lane.b32.xlu0 %v2698, 96
    %v2736 = vpop.permute.xlu0 %2735
    %2739 = vrot.lane.b32.xlu0 %v2733, 32
    %v2740 = vpop.permute.xlu0 %2739
    %v2742 = vsel %vm1721, %v2736, %v2740
    %v2744 = vsel %vm329, %v2742, 0
    %2746 = vmatprep.subr.mxu0 0.0
    %2747 = vmatpush1.msra.mxu0 0.0
    %2748 = vmatprep.subr.mxu0 0.0
    %2749 = vmatpush1.msra.mxu0 0.0
    %2750 = vmatprep.subr.mxu0 0.0
    %2751 = vmatpush1.msra.mxu0 0.0
    %2752 = vmatprep.subr.mxu0 0.0
    %2753 = vmatpush1.msra.mxu0 0.0
    %2754 = vmatprep.subr.mxu0 0.0
    %2755 = vmatpush1.msra.mxu0 0.0
    %2756 = vmatprep.subr.mxu0 0.0
    %2757 = vmatpush1.msra.mxu0 0.0
    %2758 = vmatprep.subr.mxu0 0.0
    %2759 = vmatpush1.msra.mxu0 0.0
    %2760 = vmatprep.subr.mxu0 0.0
    %2761 = vmatpush1.msra.mxu0 0.0
    %2762 = vmatprep.subr.mxu0 %v2407
    %2763 = vmatpush1.msra.mxu0 %v2406
    %2764 = vmatprep.subr.mxu0 %v2405
    %2765 = vmatpush1.msra.mxu0 %v2404
    %2766 = vmatprep.subr.mxu0 %v2403
    %2767 = vmatpush1.msra.mxu0 %v2402
    %2768 = vmatprep.subr.mxu0 %v2401
    %2769 = vmatpush1.msra.mxu0 %v2400
    %2770 = vmatprep.subr.mxu0 %v2399
    %2771 = vmatpush1.msra.mxu0 %v2398
    %2772 = vmatprep.subr.mxu0 %v2397
    %2773 = vmatpush1.msra.mxu0 %v2396
    %2774 = vmatprep.subr.mxu0 %v2395
    %2775 = vmatpush1.msra.mxu0 %v2394
    %2776 = vmatprep.subr.mxu0 %v2393
    %2777 = vmatpush1.msra.mxu0 %v2392
    %2778 = vmatprep.subr.mxu0 0.0
    %2779 = vmatpush2.msra.mxu0 0.0
    %2780 = vmatprep.subr.mxu0 0.0
    %2781 = vmatpush2.msra.mxu0 0.0
    %2782 = vmatprep.subr.mxu0 0.0
    %2783 = vmatpush2.msra.mxu0 0.0
    %2784 = vmatprep.subr.mxu0 0.0
    %2785 = vmatpush2.msra.mxu0 0.0
    %2786 = vmatprep.subr.mxu0 0.0
    %2787 = vmatpush2.msra.mxu0 0.0
    %2788 = vmatprep.subr.mxu0 0.0
    %2789 = vmatpush2.msra.mxu0 0.0
    %2790 = vmatprep.subr.mxu0 0.0
    %2791 = vmatpush2.msra.mxu0 0.0
    %2792 = vmatprep.subr.mxu0 0.0
    %2793 = vmatpush2.msra.mxu0 0.0
    %2794 = vmatprep.subr.mxu0 0.0
    %2795 = vmatpush2.msra.mxu0 0.0
    %2796 = vmatprep.subr.mxu0 0.0
    %2797 = vmatpush2.msra.mxu0 0.0
    %2798 = vmatprep.subr.mxu0 0.0
    %2799 = vmatpush2.msra.mxu0 0.0
    %2800 = vmatprep.subr.mxu0 0.0
    %2801 = vmatpush2.msra.mxu0 0.0
    %2802 = vmatprep.subr.mxu0 0.0
    %2803 = vmatpush2.msra.mxu0 0.0
    %2804 = vmatprep.subr.mxu0 0.0
    %2805 = vmatpush2.msra.mxu0 0.0
    %2806 = vmatprep.subr.mxu0 0.0
    %2807 = vmatpush2.msra.mxu0 0.0
    %2808 = vmatprep.subr.mxu0 0.0
    %2809 = vmatpush2.msra.mxu0 0.0
    %2810 = vmatprep.mubr.f32.mxu0 0.0
    %2811 = vmatmul.mubr.f32.gmra.mxu0 %v2744
    %v2812 = vpop.f32.mrf.mxu0
    %v2813 = vadd.f32 0.0, %v2812
    %v2814 = vpop.f32.mrf.mxu0
    %v2815 = vadd.f32 0.0, %v2814
    %2816 = vdwg.mxu0
    %v2817 = vadd.f32 %v2591, %v2813
    %v2818 = vxor.u32 %v2817, 2147483648
    %v2819 = vmul.f32 %v2818, 1.442695
    %v2820 = vpow.pop %v2819
    %v2821 = vadd.f32 %v2820, 1.0
    %v2822 = vrcp.pop %v2821
    %v2823 = vmul.f32 1.0, %v2822
    %v2824 = vadd.f32 %v2813, %v2677
    %2826 = vrot.lane.b32.xlu0 %v2824, 64
    %v2827 = vpop.permute.xlu0 %2826
    %v2829 = vmul.f32 %v2823, %v2827
    %2831 = vrot.lane.b32.xlu0 %v2829, 64
    %v2832 = vpop.permute.xlu0 %2831
    %v2834 = vadd.f32 %v2591, %v2832
    %v2835 = vtanh.pop %v2834
    %v2836 = vsub.f32 1.0, %v2823
    %2838 = vrot.lane.b32.xlu0 %v2835, 96
    %v2839 = vpop.permute.xlu0 %2838
    %v2841 = vmul.f32 %v2836, %v2839
    %2842 = vrot.lane.b32.xlu0 %v2742, 32
    %v2843 = vpop.permute.xlu0 %2842
    %v2845 = vmul.f32 %v2823, %v2843
    %v2846 = vadd.f32 %v2841, %v2845
    %v2847 = vadd.f32 %v2589, %v2813
    %v2848 = vxor.u32 %v2847, 2147483648
    %v2849 = vmul.f32 %v2848, 1.442695
    %v2850 = vpow.pop %v2849
    %v2851 = vadd.f32 %v2850, 1.0
    %v2852 = vrcp.pop %v2851
    %v2853 = vmul.f32 1.0, %v2852
    %v2854 = vadd.f32 %v2590, %v2815
    %v2855 = vxor.u32 %v2854, 2147483648
    %v2856 = vmul.f32 %v2855, 1.442695
    %v2857 = vpow.pop %v2856
    %v2858 = vadd.f32 %v2857, 1.0
    %v2859 = vrcp.pop %v2858
    %v2860 = vmul.f32 1.0, %v2859
    %v2861 = vadd.f32 %v2815, %v2675
    %2863 = vrot.lane.b32.xlu0 %v2861, 64
    %v2864 = vpop.permute.xlu0 %2863
    %v2866 = vmul.f32 %v2853, %v2864
    %2868 = vrot.lane.b32.xlu0 %v2866, 64
    %v2869 = vpop.permute.xlu0 %2868
    %v2871 = vadd.f32 %v2590, %v2869
    %v2872 = vtanh.pop %v2871
    %v2873 = vsub.f32 1.0, %v2860
    %2875 = vrot.lane.b32.xlu0 %v2872, 96
    %v2876 = vpop.permute.xlu0 %2875
    %v2878 = vmul.f32 %v2873, %v2876
    %2879 = vrot.lane.b32.xlu0 %v2742, 96
    %v2880 = vpop.permute.xlu0 %2879
    %v2882 = vmul.f32 %v2860, %v2880
    %v2883 = vadd.f32 %v2878, %v2882
    %s2884 = scalar_lea.vmem %s5, 384
    %v2885 = vld [vmem:[%s2884] sm:$0xff]
    %v2886 = vld [vmem:[%s2884 + $0x8] sm:$0xff]
    %v2887 = vld [vmem:[%s2884 + $0x10] sm:$0xff]
    %v2888 = vld [vmem:[%s2884 + $0x18] sm:$0xff]
    %v2889 = vld [vmem:[%s2884 + $0x20] sm:$0xff]
    %v2890 = vld [vmem:[%s2884 + $0x28] sm:$0xff]
    %v2891 = vld [vmem:[%s2884 + $0x30] sm:$0xff]
    %v2892 = vld [vmem:[%s2884 + $0x38] sm:$0xff]
    %v2893 = vld [vmem:[%s2884 + $0x40] sm:$0xff]
    %v2894 = vld [vmem:[%s2884 + $0x48] sm:$0xff]
    %v2895 = vld [vmem:[%s2884 + $0x50] sm:$0xff]
    %v2896 = vld [vmem:[%s2884 + $0x58] sm:$0xff]
    %v2897 = vld [vmem:[%s2884 + $0x60] sm:$0xff]
    %v2898 = vld [vmem:[%s2884 + $0x68] sm:$0xff]
    %v2899 = vld [vmem:[%s2884 + $0x70] sm:$0xff]
    %v2900 = vld [vmem:[%s2884 + $0x78] sm:$0xff]
    %s2901 = scalar_lea.vmem [#allocation9], 384
    %v2902 = vld [vmem:[%s2901] sm:$0xff]
    %v2903 = vld [vmem:[%s2901 + $0x8] sm:$0xff]
    %v2904 = vld [vmem:[%s2901 + $0x10] sm:$0xff]
    %v2905 = vld [vmem:[%s2901 + $0x18] sm:$0xff]
    %v2906 = vld [vmem:[%s2901 + $0x20] sm:$0xff]
    %v2907 = vld [vmem:[%s2901 + $0x28] sm:$0xff]
    %v2908 = vld [vmem:[%s2901 + $0x30] sm:$0xff]
    %v2909 = vld [vmem:[%s2901 + $0x38] sm:$0xff]
    %v2910 = vld [vmem:[%s2901 + $0x40] sm:$0xff]
    %v2911 = vld [vmem:[%s2901 + $0x48] sm:$0xff]
    %v2912 = vld [vmem:[%s2901 + $0x50] sm:$0xff]
    %v2913 = vld [vmem:[%s2901 + $0x58] sm:$0xff]
    %v2914 = vld [vmem:[%s2901 + $0x60] sm:$0xff]
    %v2915 = vld [vmem:[%s2901 + $0x68] sm:$0xff]
    %v2916 = vld [vmem:[%s2901 + $0x70] sm:$0xff]
    %v2917 = vld [vmem:[%s2901 + $0x78] sm:$0xff]
    %s2918 = scalar_lea.vmem %s7, 6
    %v2919 = vld [vmem:[%s2918] sm:$0x3]
    %s2920 = scalar_lea.vmem %s8, 3
    %v2921 = vld [vmem:[%s2920] sm:$0x1]
    %v2923 = vsel %vm1721, %v2883, 0
    %v2925 = vsel %vm1721, %v2733, 0
    %2927 = vmatprep.subr.mxu0 0.0
    %2928 = vmatpush1.msra.mxu0 0.0
    %2929 = vmatprep.subr.mxu0 0.0
    %2930 = vmatpush1.msra.mxu0 0.0
    %2931 = vmatprep.subr.mxu0 0.0
    %2932 = vmatpush1.msra.mxu0 0.0
    %2933 = vmatprep.subr.mxu0 0.0
    %2934 = vmatpush1.msra.mxu0 0.0
    %2935 = vmatprep.subr.mxu0 0.0
    %2936 = vmatpush1.msra.mxu0 0.0
    %2937 = vmatprep.subr.mxu0 0.0
    %2938 = vmatpush1.msra.mxu0 0.0
    %2939 = vmatprep.subr.mxu0 0.0
    %2940 = vmatpush1.msra.mxu0 0.0
    %2941 = vmatprep.subr.mxu0 0.0
    %2942 = vmatpush1.msra.mxu0 0.0
    %2943 = vmatprep.subr.mxu0 0.0
    %2944 = vmatpush1.msra.mxu0 0.0
    %2945 = vmatprep.subr.mxu0 0.0
    %2946 = vmatpush1.msra.mxu0 0.0
    %2947 = vmatprep.subr.mxu0 0.0
    %2948 = vmatpush1.msra.mxu0 0.0
    %2949 = vmatprep.subr.mxu0 0.0
    %2950 = vmatpush1.msra.mxu0 0.0
    %2951 = vmatprep.subr.mxu0 %v2900
    %2952 = vmatpush1.msra.mxu0 %v2899
    %2953 = vmatprep.subr.mxu0 %v2898
    %2954 = vmatpush1.msra.mxu0 %v2897
    %2955 = vmatprep.subr.mxu0 %v2896
    %2956 = vmatpush1.msra.mxu0 %v2895
    %2957 = vmatprep.subr.mxu0 %v2894
    %2958 = vmatpush1.msra.mxu0 %v2893
    %2959 = vmatprep.subr.mxu0 0.0
    %2960 = vmatpush2.msra.mxu0 0.0
    %2961 = vmatprep.subr.mxu0 0.0
    %2962 = vmatpush2.msra.mxu0 0.0
    %2963 = vmatprep.subr.mxu0 0.0
    %2964 = vmatpush2.msra.mxu0 0.0
    %2965 = vmatprep.subr.mxu0 0.0
    %2966 = vmatpush2.msra.mxu0 0.0
    %2967 = vmatprep.subr.mxu0 0.0
    %2968 = vmatpush2.msra.mxu0 0.0
    %2969 = vmatprep.subr.mxu0 0.0
    %2970 = vmatpush2.msra.mxu0 0.0
    %2971 = vmatprep.subr.mxu0 0.0
    %2972 = vmatpush2.msra.mxu0 0.0
    %2973 = vmatprep.subr.mxu0 0.0
    %2974 = vmatpush2.msra.mxu0 0.0
    %2975 = vmatprep.subr.mxu0 0.0
    %2976 = vmatpush2.msra.mxu0 0.0
    %2977 = vmatprep.subr.mxu0 0.0
    %2978 = vmatpush2.msra.mxu0 0.0
    %2979 = vmatprep.subr.mxu0 0.0
    %2980 = vmatpush2.msra.mxu0 0.0
    %2981 = vmatprep.subr.mxu0 0.0
    %2982 = vmatpush2.msra.mxu0 0.0
    %2983 = vmatprep.subr.mxu0 0.0
    %2984 = vmatpush2.msra.mxu0 0.0
    %2985 = vmatprep.subr.mxu0 0.0
    %2986 = vmatpush2.msra.mxu0 0.0
    %2987 = vmatprep.subr.mxu0 0.0
    %2988 = vmatpush2.msra.mxu0 0.0
    %2989 = vmatprep.subr.mxu0 0.0
    %2990 = vmatpush2.msra.mxu0 0.0
    %2991 = vmatprep.mubr.f32.mxu0 0.0
    %2992 = vmatmul.mubr.f32.gmra.mxu0 %v2923
    %v2993 = vpop.f32.mrf.mxu0
    %v2994 = vadd.f32 0.0, %v2993
    %v2995 = vpop.f32.mrf.mxu0
    %v2996 = vadd.f32 0.0, %v2995
    %2997 = vmatprep.mubr.f32.mxu0 0.0
    %2998 = vmatmul.mubr.f32.gmra.mxu0 %v2925
    %v2999 = vpop.f32.mrf.mxu0
    %v3000 = vadd.f32 0.0, %v2999
    %v3001 = vpop.f32.mrf.mxu0
    %v3002 = vadd.f32 0.0, %v3001
    %3003 = vdwg.mxu0
    %3005 = vrot.lane.b32.xlu0 %v2846, 96
    %v3006 = vpop.permute.xlu0 %3005
    %v3007 = vsel %vm1721, %v2736, 0
    %v3009 = vsel %vm1721, %v3006, 0
    %3011 = vmatprep.subr.mxu0 0.0
    %3012 = vmatpush1.msra.mxu0 0.0
    %3013 = vmatprep.subr.mxu0 0.0
    %3014 = vmatpush1.msra.mxu0 0.0
    %3015 = vmatprep.subr.mxu0 0.0
    %3016 = vmatpush1.msra.mxu0 0.0
    %3017 = vmatprep.subr.mxu0 0.0
    %3018 = vmatpush1.msra.mxu0 0.0
    %3019 = vmatprep.subr.mxu0 0.0
    %3020 = vmatpush1.msra.mxu0 0.0
    %3021 = vmatprep.subr.mxu0 0.0
    %3022 = vmatpush1.msra.mxu0 0.0
    %3023 = vmatprep.subr.mxu0 0.0
    %3024 = vmatpush1.msra.mxu0 0.0
    %3025 = vmatprep.subr.mxu0 0.0
    %3026 = vmatpush1.msra.mxu0 0.0
    %3027 = vmatprep.subr.mxu0 0.0
    %3028 = vmatpush1.msra.mxu0 0.0
    %3029 = vmatprep.subr.mxu0 0.0
    %3030 = vmatpush1.msra.mxu0 0.0
    %3031 = vmatprep.subr.mxu0 0.0
    %3032 = vmatpush1.msra.mxu0 0.0
    %3033 = vmatprep.subr.mxu0 0.0
    %3034 = vmatpush1.msra.mxu0 0.0
    %3035 = vmatprep.subr.mxu0 %v2892
    %3036 = vmatpush1.msra.mxu0 %v2891
    %3037 = vmatprep.subr.mxu0 %v2890
    %3038 = vmatpush1.msra.mxu0 %v2889
    %3039 = vmatprep.subr.mxu0 %v2888
    %3040 = vmatpush1.msra.mxu0 %v2887
    %3041 = vmatprep.subr.mxu0 %v2886
    %3042 = vmatpush1.msra.mxu0 %v2885
    %3043 = vmatprep.subr.mxu0 0.0
    %3044 = vmatpush2.msra.mxu0 0.0
    %3045 = vmatprep.subr.mxu0 0.0
    %3046 = vmatpush2.msra.mxu0 0.0
    %3047 = vmatprep.subr.mxu0 0.0
    %3048 = vmatpush2.msra.mxu0 0.0
    %3049 = vmatprep.subr.mxu0 0.0
    %3050 = vmatpush2.msra.mxu0 0.0
    %3051 = vmatprep.subr.mxu0 0.0
    %3052 = vmatpush2.msra.mxu0 0.0
    %3053 = vmatprep.subr.mxu0 0.0
    %3054 = vmatpush2.msra.mxu0 0.0
    %3055 = vmatprep.subr.mxu0 0.0
    %3056 = vmatpush2.msra.mxu0 0.0
    %3057 = vmatprep.subr.mxu0 0.0
    %3058 = vmatpush2.msra.mxu0 0.0
    %3059 = vmatprep.subr.mxu0 0.0
    %3060 = vmatpush2.msra.mxu0 0.0
    %3061 = vmatprep.subr.mxu0 0.0
    %3062 = vmatpush2.msra.mxu0 0.0
    %3063 = vmatprep.subr.mxu0 0.0
    %3064 = vmatpush2.msra.mxu0 0.0
    %3065 = vmatprep.subr.mxu0 0.0
    %3066 = vmatpush2.msra.mxu0 0.0
    %3067 = vmatprep.subr.mxu0 0.0
    %3068 = vmatpush2.msra.mxu0 0.0
    %3069 = vmatprep.subr.mxu0 0.0
    %3070 = vmatpush2.msra.mxu0 0.0
    %3071 = vmatprep.subr.mxu0 0.0
    %3072 = vmatpush2.msra.mxu0 0.0
    %3073 = vmatprep.subr.mxu0 0.0
    %3074 = vmatpush2.msra.mxu0 0.0
    %3075 = vmatprep.mubr.f32.mxu0 0.0
    %3076 = vmatmul.mubr.f32.gmra.mxu0 %v3007
    %v3077 = vpop.f32.mrf.mxu0
    %v3078 = vadd.f32 %v2994, %v3077
    %v3079 = vpop.f32.mrf.mxu0
    %v3080 = vadd.f32 %v2996, %v3079
    %3081 = vmatprep.mubr.f32.mxu0 0.0
    %3082 = vmatmul.mubr.f32.gmra.mxu0 %v3009
    %v3083 = vpop.f32.mrf.mxu0
    %v3084 = vadd.f32 %v3000, %v3083
    %v3085 = vpop.f32.mrf.mxu0
    %v3086 = vadd.f32 %v3002, %v3085
    %3087 = vdwg.mxu0
    %v3089 = vlaneseq
    %v3090 = vshrl.u32 %v3089, 7
    %v3091 = vsub.s32 0, %v3090
    %v3092 = vrot.slane %v2919, %v3091
    %v3093 = vlaneseq
    %v3094 = vshrl.u32 %v3093, 7
    %v3095 = vsub.s32 1, %v3094
    %v3096 = vrot.slane %v2919, %v3095
    %v3099 = vadd.f32 %v3078, %v3092
    %v3100 = vadd.f32 %v3080, %v3096
    %v3101 = vadd.f32 %v3084, %v3092
    %v3102 = vadd.f32 %v3086, %v3096
    %3103 = vmatprep.subr.mxu0 0.0
    %3104 = vmatpush1.msra.mxu0 0.0
    %3105 = vmatprep.subr.mxu0 0.0
    %3106 = vmatpush1.msra.mxu0 0.0
    %3107 = vmatprep.subr.mxu0 0.0
    %3108 = vmatpush1.msra.mxu0 0.0
    %3109 = vmatprep.subr.mxu0 0.0
    %3110 = vmatpush1.msra.mxu0 0.0
    %3111 = vmatprep.subr.mxu0 0.0
    %3112 = vmatpush1.msra.mxu0 0.0
    %3113 = vmatprep.subr.mxu0 0.0
    %3114 = vmatpush1.msra.mxu0 0.0
    %3115 = vmatprep.subr.mxu0 0.0
    %3116 = vmatpush1.msra.mxu0 0.0
    %3117 = vmatprep.subr.mxu0 0.0
    %3118 = vmatpush1.msra.mxu0 0.0
    %3119 = vmatprep.subr.mxu0 %v2917
    %3120 = vmatpush1.msra.mxu0 %v2916
    %3121 = vmatprep.subr.mxu0 %v2915
    %3122 = vmatpush1.msra.mxu0 %v2914
    %3123 = vmatprep.subr.mxu0 %v2913
    %3124 = vmatpush1.msra.mxu0 %v2912
    %3125 = vmatprep.subr.mxu0 %v2911
    %3126 = vmatpush1.msra.mxu0 %v2910
    %3127 = vmatprep.subr.mxu0 %v2909
    %3128 = vmatpush1.msra.mxu0 %v2908
    %3129 = vmatprep.subr.mxu0 %v2907
    %3130 = vmatpush1.msra.mxu0 %v2906
    %3131 = vmatprep.subr.mxu0 %v2905
    %3132 = vmatpush1.msra.mxu0 %v2904
    %3133 = vmatprep.subr.mxu0 %v2903
    %3134 = vmatpush1.msra.mxu0 %v2902
    %3135 = vmatprep.subr.mxu0 0.0
    %3136 = vmatpush2.msra.mxu0 0.0
    %3137 = vmatprep.subr.mxu0 0.0
    %3138 = vmatpush2.msra.mxu0 0.0
    %3139 = vmatprep.subr.mxu0 0.0
    %3140 = vmatpush2.msra.mxu0 0.0
    %3141 = vmatprep.subr.mxu0 0.0
    %3142 = vmatpush2.msra.mxu0 0.0
    %3143 = vmatprep.subr.mxu0 0.0
    %3144 = vmatpush2.msra.mxu0 0.0
    %3145 = vmatprep.subr.mxu0 0.0
    %3146 = vmatpush2.msra.mxu0 0.0
    %3147 = vmatprep.subr.mxu0 0.0
    %3148 = vmatpush2.msra.mxu0 0.0
    %3149 = vmatprep.subr.mxu0 0.0
    %3150 = vmatpush2.msra.mxu0 0.0
    %3151 = vmatprep.subr.mxu0 0.0
    %3152 = vmatpush2.msra.mxu0 0.0
    %3153 = vmatprep.subr.mxu0 0.0
    %3154 = vmatpush2.msra.mxu0 0.0
    %3155 = vmatprep.subr.mxu0 0.0
    %3156 = vmatpush2.msra.mxu0 0.0
    %3157 = vmatprep.subr.mxu0 0.0
    %3158 = vmatpush2.msra.mxu0 0.0
    %3159 = vmatprep.subr.mxu0 0.0
    %3160 = vmatpush2.msra.mxu0 0.0
    %3161 = vmatprep.subr.mxu0 0.0
    %3162 = vmatpush2.msra.mxu0 0.0
    %3163 = vmatprep.subr.mxu0 0.0
    %3164 = vmatpush2.msra.mxu0 0.0
    %3165 = vmatprep.subr.mxu0 0.0
    %3166 = vmatpush2.msra.mxu0 0.0
    %3167 = vmatprep.mubr.f32.mxu0 0.0
    %3168 = vmatmul.mubr.f32.gmra.mxu0 %v331
    %v3169 = vpop.f32.mrf.mxu0
    %v3170 = vadd.f32 0.0, %v3169
    %v3171 = vpop.f32.mrf.mxu0
    %v3172 = vadd.f32 0.0, %v3171
    %3173 = vdwg.mxu0
    %v3174 = vadd.f32 %v3099, %v3170
    %v3175 = vxor.u32 %v3174, 2147483648
    %v3176 = vmul.f32 %v3175, 1.442695
    %v3177 = vpow.pop %v3176
    %v3178 = vadd.f32 %v3177, 1.0
    %v3179 = vrcp.pop %v3178
    %v3180 = vmul.f32 1.0, %v3179
    %v3182 = vlaneseq
    %v3183 = vshrl.u32 %v3182, 7
    %v3184 = vsub.s32 0, %v3183
    %v3185 = vrot.slane %v2921, %v3184
    %3186 = vrot.lane.b32.xlu0 %v3185, 64
    %v3187 = vpop.permute.xlu0 %3186
    %v3189 = vadd.f32 %v3170, %v3187
    %3191 = vrot.lane.b32.xlu0 %v3189, 64
    %v3192 = vpop.permute.xlu0 %3191
    %v3194 = vmul.f32 %v3180, %v3192
    %3196 = vrot.lane.b32.xlu0 %v3194, 64
    %v3197 = vpop.permute.xlu0 %3196
    %v3199 = vadd.f32 %v3099, %v3197
    %v3200 = vtanh.pop %v3199
    %v3201 = vsub.f32 1.0, %v3180
    %3203 = vrot.lane.b32.xlu0 %v3200, 96
    %v3204 = vpop.permute.xlu0 %3203
    %v3206 = vmul.f32 %v3201, %v3204
    %v3207 = vmul.f32 %v3180, 0.0
    %v3208 = vadd.f32 %v3206, %v3207
    %v3209 = vadd.f32 %v3101, %v3170
    %v3210 = vxor.u32 %v3209, 2147483648
    %v3211 = vmul.f32 %v3210, 1.442695
    %v3212 = vpow.pop %v3211
    %v3213 = vadd.f32 %v3212, 1.0
    %v3214 = vrcp.pop %v3213
    %v3215 = vmul.f32 1.0, %v3214
    %v3216 = vadd.f32 %v3102, %v3172
    %v3217 = vxor.u32 %v3216, 2147483648
    %v3218 = vmul.f32 %v3217, 1.442695
    %v3219 = vpow.pop %v3218
    %v3220 = vadd.f32 %v3219, 1.0
    %v3221 = vrcp.pop %v3220
    %v3222 = vmul.f32 1.0, %v3221
    %v3224 = vadd.f32 %v3172, %v3185
    %3226 = vrot.lane.b32.xlu0 %v3224, 64
    %v3227 = vpop.permute.xlu0 %3226
    %v3229 = vmul.f32 %v3215, %v3227
    %3231 = vrot.lane.b32.xlu0 %v3229, 64
    %v3232 = vpop.permute.xlu0 %3231
    %v3234 = vadd.f32 %v3102, %v3232
    %v3235 = vtanh.pop %v3234
    %v3236 = vsub.f32 1.0, %v3222
    %3238 = vrot.lane.b32.xlu0 %v3235, 96
    %v3239 = vpop.permute.xlu0 %3238
    %v3241 = vmul.f32 %v3236, %v3239
    %v3242 = vmul.f32 %v3222, 0.0
    %v3243 = vadd.f32 %v3241, %v3242
    %3245 = vrot.lane.b32.xlu0 %v3208, 96
    %v3246 = vpop.permute.xlu0 %3245
    %3249 = vrot.lane.b32.xlu0 %v3243, 32
    %v3250 = vpop.permute.xlu0 %3249
    %v3252 = vsel %vm1721, %v3246, %v3250
    %v3254 = vsel %vm329, %v3252, 0
    %3256 = vmatprep.subr.mxu0 0.0
    %3257 = vmatpush1.msra.mxu0 0.0
    %3258 = vmatprep.subr.mxu0 0.0
    %3259 = vmatpush1.msra.mxu0 0.0
    %3260 = vmatprep.subr.mxu0 0.0
    %3261 = vmatpush1.msra.mxu0 0.0
    %3262 = vmatprep.subr.mxu0 0.0
    %3263 = vmatpush1.msra.mxu0 0.0
    %3264 = vmatprep.subr.mxu0 0.0
    %3265 = vmatpush1.msra.mxu0 0.0
    %3266 = vmatprep.subr.mxu0 0.0
    %3267 = vmatpush1.msra.mxu0 0.0
    %3268 = vmatprep.subr.mxu0 0.0
    %3269 = vmatpush1.msra.mxu0 0.0
    %3270 = vmatprep.subr.mxu0 0.0
    %3271 = vmatpush1.msra.mxu0 0.0
    %3272 = vmatprep.subr.mxu0 %v2917
    %3273 = vmatpush1.msra.mxu0 %v2916
    %3274 = vmatprep.subr.mxu0 %v2915
    %3275 = vmatpush1.msra.mxu0 %v2914
    %3276 = vmatprep.subr.mxu0 %v2913
    %3277 = vmatpush1.msra.mxu0 %v2912
    %3278 = vmatprep.subr.mxu0 %v2911
    %3279 = vmatpush1.msra.mxu0 %v2910
    %3280 = vmatprep.subr.mxu0 %v2909
    %3281 = vmatpush1.msra.mxu0 %v2908
    %3282 = vmatprep.subr.mxu0 %v2907
    %3283 = vmatpush1.msra.mxu0 %v2906
    %3284 = vmatprep.subr.mxu0 %v2905
    %3285 = vmatpush1.msra.mxu0 %v2904
    %3286 = vmatprep.subr.mxu0 %v2903
    %3287 = vmatpush1.msra.mxu0 %v2902
    %3288 = vmatprep.subr.mxu0 0.0
    %3289 = vmatpush2.msra.mxu0 0.0
    %3290 = vmatprep.subr.mxu0 0.0
    %3291 = vmatpush2.msra.mxu0 0.0
    %3292 = vmatprep.subr.mxu0 0.0
    %3293 = vmatpush2.msra.mxu0 0.0
    %3294 = vmatprep.subr.mxu0 0.0
    %3295 = vmatpush2.msra.mxu0 0.0
    %3296 = vmatprep.subr.mxu0 0.0
    %3297 = vmatpush2.msra.mxu0 0.0
    %3298 = vmatprep.subr.mxu0 0.0
    %3299 = vmatpush2.msra.mxu0 0.0
    %3300 = vmatprep.subr.mxu0 0.0
    %3301 = vmatpush2.msra.mxu0 0.0
    %3302 = vmatprep.subr.mxu0 0.0
    %3303 = vmatpush2.msra.mxu0 0.0
    %3304 = vmatprep.subr.mxu0 0.0
    %3305 = vmatpush2.msra.mxu0 0.0
    %3306 = vmatprep.subr.mxu0 0.0
    %3307 = vmatpush2.msra.mxu0 0.0
    %3308 = vmatprep.subr.mxu0 0.0
    %3309 = vmatpush2.msra.mxu0 0.0
    %3310 = vmatprep.subr.mxu0 0.0
    %3311 = vmatpush2.msra.mxu0 0.0
    %3312 = vmatprep.subr.mxu0 0.0
    %3313 = vmatpush2.msra.mxu0 0.0
    %3314 = vmatprep.subr.mxu0 0.0
    %3315 = vmatpush2.msra.mxu0 0.0
    %3316 = vmatprep.subr.mxu0 0.0
    %3317 = vmatpush2.msra.mxu0 0.0
    %3318 = vmatprep.subr.mxu0 0.0
    %3319 = vmatpush2.msra.mxu0 0.0
    %3320 = vmatprep.mubr.f32.mxu0 0.0
    %3321 = vmatmul.mubr.f32.gmra.mxu0 %v3254
    %v3322 = vpop.f32.mrf.mxu0
    %v3323 = vadd.f32 0.0, %v3322
    %v3324 = vpop.f32.mrf.mxu0
    %v3325 = vadd.f32 0.0, %v3324
    %3326 = vdwg.mxu0
    %v3327 = vadd.f32 %v3101, %v3323
    %v3328 = vxor.u32 %v3327, 2147483648
    %v3329 = vmul.f32 %v3328, 1.442695
    %v3330 = vpow.pop %v3329
    %v3331 = vadd.f32 %v3330, 1.0
    %v3332 = vrcp.pop %v3331
    %v3333 = vmul.f32 1.0, %v3332
    %v3334 = vadd.f32 %v3323, %v3187
    %3336 = vrot.lane.b32.xlu0 %v3334, 64
    %v3337 = vpop.permute.xlu0 %3336
    %v3339 = vmul.f32 %v3333, %v3337
    %3341 = vrot.lane.b32.xlu0 %v3339, 64
    %v3342 = vpop.permute.xlu0 %3341
    %v3344 = vadd.f32 %v3101, %v3342
    %v3345 = vtanh.pop %v3344
    %v3346 = vsub.f32 1.0, %v3333
    %3348 = vrot.lane.b32.xlu0 %v3345, 96
    %v3349 = vpop.permute.xlu0 %3348
    %v3351 = vmul.f32 %v3346, %v3349
    %3352 = vrot.lane.b32.xlu0 %v3252, 32
    %v3353 = vpop.permute.xlu0 %3352
    %v3355 = vmul.f32 %v3333, %v3353
    %v3356 = vadd.f32 %v3351, %v3355
    %v3357 = vadd.f32 %v3099, %v3323
    %v3358 = vxor.u32 %v3357, 2147483648
    %v3359 = vmul.f32 %v3358, 1.442695
    %v3360 = vpow.pop %v3359
    %v3361 = vadd.f32 %v3360, 1.0
    %v3362 = vrcp.pop %v3361
    %v3363 = vmul.f32 1.0, %v3362
    %v3364 = vadd.f32 %v3100, %v3325
    %v3365 = vxor.u32 %v3364, 2147483648
    %v3366 = vmul.f32 %v3365, 1.442695
    %v3367 = vpow.pop %v3366
    %v3368 = vadd.f32 %v3367, 1.0
    %v3369 = vrcp.pop %v3368
    %v3370 = vmul.f32 1.0, %v3369
    %v3371 = vadd.f32 %v3325, %v3185
    %3373 = vrot.lane.b32.xlu0 %v3371, 64
    %v3374 = vpop.permute.xlu0 %3373
    %v3376 = vmul.f32 %v3363, %v3374
    %3378 = vrot.lane.b32.xlu0 %v3376, 64
    %v3379 = vpop.permute.xlu0 %3378
    %v3381 = vadd.f32 %v3100, %v3379
    %v3382 = vtanh.pop %v3381
    %v3383 = vsub.f32 1.0, %v3370
    %3385 = vrot.lane.b32.xlu0 %v3382, 96
    %v3386 = vpop.permute.xlu0 %3385
    %v3388 = vmul.f32 %v3383, %v3386
    %3389 = vrot.lane.b32.xlu0 %v3252, 96
    %v3390 = vpop.permute.xlu0 %3389
    %v3392 = vmul.f32 %v3370, %v3390
    %v3393 = vadd.f32 %v3388, %v3392
    %s3394 = scalar_lea.vmem %s5, 512
    %v3395 = vld [vmem:[%s3394] sm:$0xff]
    %v3396 = vld [vmem:[%s3394 + $0x8] sm:$0xff]
    %v3397 = vld [vmem:[%s3394 + $0x10] sm:$0xff]
    %v3398 = vld [vmem:[%s3394 + $0x18] sm:$0xff]
    %v3399 = vld [vmem:[%s3394 + $0x20] sm:$0xff]
    %v3400 = vld [vmem:[%s3394 + $0x28] sm:$0xff]
    %v3401 = vld [vmem:[%s3394 + $0x30] sm:$0xff]
    %v3402 = vld [vmem:[%s3394 + $0x38] sm:$0xff]
    %v3403 = vld [vmem:[%s3394 + $0x40] sm:$0xff]
    %v3404 = vld [vmem:[%s3394 + $0x48] sm:$0xff]
    %v3405 = vld [vmem:[%s3394 + $0x50] sm:$0xff]
    %v3406 = vld [vmem:[%s3394 + $0x58] sm:$0xff]
    %v3407 = vld [vmem:[%s3394 + $0x60] sm:$0xff]
    %v3408 = vld [vmem:[%s3394 + $0x68] sm:$0xff]
    %v3409 = vld [vmem:[%s3394 + $0x70] sm:$0xff]
    %v3410 = vld [vmem:[%s3394 + $0x78] sm:$0xff]
    %s3411 = scalar_lea.vmem [#allocation9], 512
    %v3412 = vld [vmem:[%s3411] sm:$0xff]
    %v3413 = vld [vmem:[%s3411 + $0x8] sm:$0xff]
    %v3414 = vld [vmem:[%s3411 + $0x10] sm:$0xff]
    %v3415 = vld [vmem:[%s3411 + $0x18] sm:$0xff]
    %v3416 = vld [vmem:[%s3411 + $0x20] sm:$0xff]
    %v3417 = vld [vmem:[%s3411 + $0x28] sm:$0xff]
    %v3418 = vld [vmem:[%s3411 + $0x30] sm:$0xff]
    %v3419 = vld [vmem:[%s3411 + $0x38] sm:$0xff]
    %v3420 = vld [vmem:[%s3411 + $0x40] sm:$0xff]
    %v3421 = vld [vmem:[%s3411 + $0x48] sm:$0xff]
    %v3422 = vld [vmem:[%s3411 + $0x50] sm:$0xff]
    %v3423 = vld [vmem:[%s3411 + $0x58] sm:$0xff]
    %v3424 = vld [vmem:[%s3411 + $0x60] sm:$0xff]
    %v3425 = vld [vmem:[%s3411 + $0x68] sm:$0xff]
    %v3426 = vld [vmem:[%s3411 + $0x70] sm:$0xff]
    %v3427 = vld [vmem:[%s3411 + $0x78] sm:$0xff]
    %s3428 = scalar_lea.vmem %s7, 8
    %v3429 = vld [vmem:[%s3428] sm:$0x3]
    %s3430 = scalar_lea.vmem %s8, 4
    %v3431 = vld [vmem:[%s3430] sm:$0x1]
    %v3433 = vsel %vm1721, %v3393, 0
    %v3435 = vsel %vm1721, %v3243, 0
    %3437 = vmatprep.subr.mxu0 0.0
    %3438 = vmatpush1.msra.mxu0 0.0
    %3439 = vmatprep.subr.mxu0 0.0
    %3440 = vmatpush1.msra.mxu0 0.0
    %3441 = vmatprep.subr.mxu0 0.0
    %3442 = vmatpush1.msra.mxu0 0.0
    %3443 = vmatprep.subr.mxu0 0.0
    %3444 = vmatpush1.msra.mxu0 0.0
    %3445 = vmatprep.subr.mxu0 0.0
    %3446 = vmatpush1.msra.mxu0 0.0
    %3447 = vmatprep.subr.mxu0 0.0
    %3448 = vmatpush1.msra.mxu0 0.0
    %3449 = vmatprep.subr.mxu0 0.0
    %3450 = vmatpush1.msra.mxu0 0.0
    %3451 = vmatprep.subr.mxu0 0.0
    %3452 = vmatpush1.msra.mxu0 0.0
    %3453 = vmatprep.subr.mxu0 0.0
    %3454 = vmatpush1.msra.mxu0 0.0
    %3455 = vmatprep.subr.mxu0 0.0
    %3456 = vmatpush1.msra.mxu0 0.0
    %3457 = vmatprep.subr.mxu0 0.0
    %3458 = vmatpush1.msra.mxu0 0.0
    %3459 = vmatprep.subr.mxu0 0.0
    %3460 = vmatpush1.msra.mxu0 0.0
    %3461 = vmatprep.subr.mxu0 %v3410
    %3462 = vmatpush1.msra.mxu0 %v3409
    %3463 = vmatprep.subr.mxu0 %v3408
    %3464 = vmatpush1.msra.mxu0 %v3407
    %3465 = vmatprep.subr.mxu0 %v3406
    %3466 = vmatpush1.msra.mxu0 %v3405
    %3467 = vmatprep.subr.mxu0 %v3404
    %3468 = vmatpush1.msra.mxu0 %v3403
    %3469 = vmatprep.subr.mxu0 0.0
    %3470 = vmatpush2.msra.mxu0 0.0
    %3471 = vmatprep.subr.mxu0 0.0
    %3472 = vmatpush2.msra.mxu0 0.0
    %3473 = vmatprep.subr.mxu0 0.0
    %3474 = vmatpush2.msra.mxu0 0.0
    %3475 = vmatprep.subr.mxu0 0.0
    %3476 = vmatpush2.msra.mxu0 0.0
    %3477 = vmatprep.subr.mxu0 0.0
    %3478 = vmatpush2.msra.mxu0 0.0
    %3479 = vmatprep.subr.mxu0 0.0
    %3480 = vmatpush2.msra.mxu0 0.0
    %3481 = vmatprep.subr.mxu0 0.0
    %3482 = vmatpush2.msra.mxu0 0.0
    %3483 = vmatprep.subr.mxu0 0.0
    %3484 = vmatpush2.msra.mxu0 0.0
    %3485 = vmatprep.subr.mxu0 0.0
    %3486 = vmatpush2.msra.mxu0 0.0
    %3487 = vmatprep.subr.mxu0 0.0
    %3488 = vmatpush2.msra.mxu0 0.0
    %3489 = vmatprep.subr.mxu0 0.0
    %3490 = vmatpush2.msra.mxu0 0.0
    %3491 = vmatprep.subr.mxu0 0.0
    %3492 = vmatpush2.msra.mxu0 0.0
    %3493 = vmatprep.subr.mxu0 0.0
    %3494 = vmatpush2.msra.mxu0 0.0
    %3495 = vmatprep.subr.mxu0 0.0
    %3496 = vmatpush2.msra.mxu0 0.0
    %3497 = vmatprep.subr.mxu0 0.0
    %3498 = vmatpush2.msra.mxu0 0.0
    %3499 = vmatprep.subr.mxu0 0.0
    %3500 = vmatpush2.msra.mxu0 0.0
    %3501 = vmatprep.mubr.f32.mxu0 0.0
    %3502 = vmatmul.mubr.f32.gmra.mxu0 %v3433
    %v3503 = vpop.f32.mrf.mxu0
    %v3504 = vadd.f32 0.0, %v3503
    %v3505 = vpop.f32.mrf.mxu0
    %v3506 = vadd.f32 0.0, %v3505
    %3507 = vmatprep.mubr.f32.mxu0 0.0
    %3508 = vmatmul.mubr.f32.gmra.mxu0 %v3435
    %v3509 = vpop.f32.mrf.mxu0
    %v3510 = vadd.f32 0.0, %v3509
    %v3511 = vpop.f32.mrf.mxu0
    %v3512 = vadd.f32 0.0, %v3511
    %3513 = vdwg.mxu0
    %3515 = vrot.lane.b32.xlu0 %v3356, 96
    %v3516 = vpop.permute.xlu0 %3515
    %v3517 = vsel %vm1721, %v3246, 0
    %v3519 = vsel %vm1721, %v3516, 0
    %3521 = vmatprep.subr.mxu0 0.0
    %3522 = vmatpush1.msra.mxu0 0.0
    %3523 = vmatprep.subr.mxu0 0.0
    %3524 = vmatpush1.msra.mxu0 0.0
    %3525 = vmatprep.subr.mxu0 0.0
    %3526 = vmatpush1.msra.mxu0 0.0
    %3527 = vmatprep.subr.mxu0 0.0
    %3528 = vmatpush1.msra.mxu0 0.0
    %3529 = vmatprep.subr.mxu0 0.0
    %3530 = vmatpush1.msra.mxu0 0.0
    %3531 = vmatprep.subr.mxu0 0.0
    %3532 = vmatpush1.msra.mxu0 0.0
    %3533 = vmatprep.subr.mxu0 0.0
    %3534 = vmatpush1.msra.mxu0 0.0
    %3535 = vmatprep.subr.mxu0 0.0
    %3536 = vmatpush1.msra.mxu0 0.0
    %3537 = vmatprep.subr.mxu0 0.0
    %3538 = vmatpush1.msra.mxu0 0.0
    %3539 = vmatprep.subr.mxu0 0.0
    %3540 = vmatpush1.msra.mxu0 0.0
    %3541 = vmatprep.subr.mxu0 0.0
    %3542 = vmatpush1.msra.mxu0 0.0
    %3543 = vmatprep.subr.mxu0 0.0
    %3544 = vmatpush1.msra.mxu0 0.0
    %3545 = vmatprep.subr.mxu0 %v3402
    %3546 = vmatpush1.msra.mxu0 %v3401
    %3547 = vmatprep.subr.mxu0 %v3400
    %3548 = vmatpush1.msra.mxu0 %v3399
    %3549 = vmatprep.subr.mxu0 %v3398
    %3550 = vmatpush1.msra.mxu0 %v3397
    %3551 = vmatprep.subr.mxu0 %v3396
    %3552 = vmatpush1.msra.mxu0 %v3395
    %3553 = vmatprep.subr.mxu0 0.0
    %3554 = vmatpush2.msra.mxu0 0.0
    %3555 = vmatprep.subr.mxu0 0.0
    %3556 = vmatpush2.msra.mxu0 0.0
    %3557 = vmatprep.subr.mxu0 0.0
    %3558 = vmatpush2.msra.mxu0 0.0
    %3559 = vmatprep.subr.mxu0 0.0
    %3560 = vmatpush2.msra.mxu0 0.0
    %3561 = vmatprep.subr.mxu0 0.0
    %3562 = vmatpush2.msra.mxu0 0.0
    %3563 = vmatprep.subr.mxu0 0.0
    %3564 = vmatpush2.msra.mxu0 0.0
    %3565 = vmatprep.subr.mxu0 0.0
    %3566 = vmatpush2.msra.mxu0 0.0
    %3567 = vmatprep.subr.mxu0 0.0
    %3568 = vmatpush2.msra.mxu0 0.0
    %3569 = vmatprep.subr.mxu0 0.0
    %3570 = vmatpush2.msra.mxu0 0.0
    %3571 = vmatprep.subr.mxu0 0.0
    %3572 = vmatpush2.msra.mxu0 0.0
    %3573 = vmatprep.subr.mxu0 0.0
    %3574 = vmatpush2.msra.mxu0 0.0
    %3575 = vmatprep.subr.mxu0 0.0
    %3576 = vmatpush2.msra.mxu0 0.0
    %3577 = vmatprep.subr.mxu0 0.0
    %3578 = vmatpush2.msra.mxu0 0.0
    %3579 = vmatprep.subr.mxu0 0.0
    %3580 = vmatpush2.msra.mxu0 0.0
    %3581 = vmatprep.subr.mxu0 0.0
    %3582 = vmatpush2.msra.mxu0 0.0
    %3583 = vmatprep.subr.mxu0 0.0
    %3584 = vmatpush2.msra.mxu0 0.0
    %3585 = vmatprep.mubr.f32.mxu0 0.0
    %3586 = vmatmul.mubr.f32.gmra.mxu0 %v3517
    %v3587 = vpop.f32.mrf.mxu0
    %v3588 = vadd.f32 %v3504, %v3587
    %v3589 = vpop.f32.mrf.mxu0
    %v3590 = vadd.f32 %v3506, %v3589
    %3591 = vmatprep.mubr.f32.mxu0 0.0
    %3592 = vmatmul.mubr.f32.gmra.mxu0 %v3519
    %v3593 = vpop.f32.mrf.mxu0
    %v3594 = vadd.f32 %v3510, %v3593
    %v3595 = vpop.f32.mrf.mxu0
    %v3596 = vadd.f32 %v3512, %v3595
    %3597 = vdwg.mxu0
    %v3599 = vlaneseq
    %v3600 = vshrl.u32 %v3599, 7
    %v3601 = vsub.s32 0, %v3600
    %v3602 = vrot.slane %v3429, %v3601
    %v3603 = vlaneseq
    %v3604 = vshrl.u32 %v3603, 7
    %v3605 = vsub.s32 1, %v3604
    %v3606 = vrot.slane %v3429, %v3605
    %v3609 = vadd.f32 %v3588, %v3602
    %v3610 = vadd.f32 %v3590, %v3606
    %v3611 = vadd.f32 %v3594, %v3602
    %v3612 = vadd.f32 %v3596, %v3606
    %3613 = vmatprep.subr.mxu0 0.0
    %3614 = vmatpush1.msra.mxu0 0.0
    %3615 = vmatprep.subr.mxu0 0.0
    %3616 = vmatpush1.msra.mxu0 0.0
    %3617 = vmatprep.subr.mxu0 0.0
    %3618 = vmatpush1.msra.mxu0 0.0
    %3619 = vmatprep.subr.mxu0 0.0
    %3620 = vmatpush1.msra.mxu0 0.0
    %3621 = vmatprep.subr.mxu0 0.0
    %3622 = vmatpush1.msra.mxu0 0.0
    %3623 = vmatprep.subr.mxu0 0.0
    %3624 = vmatpush1.msra.mxu0 0.0
    %3625 = vmatprep.subr.mxu0 0.0
    %3626 = vmatpush1.msra.mxu0 0.0
    %3627 = vmatprep.subr.mxu0 0.0
    %3628 = vmatpush1.msra.mxu0 0.0
    %3629 = vmatprep.subr.mxu0 %v3427
    %3630 = vmatpush1.msra.mxu0 %v3426
    %3631 = vmatprep.subr.mxu0 %v3425
    %3632 = vmatpush1.msra.mxu0 %v3424
    %3633 = vmatprep.subr.mxu0 %v3423
    %3634 = vmatpush1.msra.mxu0 %v3422
    %3635 = vmatprep.subr.mxu0 %v3421
    %3636 = vmatpush1.msra.mxu0 %v3420
    %3637 = vmatprep.subr.mxu0 %v3419
    %3638 = vmatpush1.msra.mxu0 %v3418
    %3639 = vmatprep.subr.mxu0 %v3417
    %3640 = vmatpush1.msra.mxu0 %v3416
    %3641 = vmatprep.subr.mxu0 %v3415
    %3642 = vmatpush1.msra.mxu0 %v3414
    %3643 = vmatprep.subr.mxu0 %v3413
    %3644 = vmatpush1.msra.mxu0 %v3412
    %3645 = vmatprep.subr.mxu0 0.0
    %3646 = vmatpush2.msra.mxu0 0.0
    %3647 = vmatprep.subr.mxu0 0.0
    %3648 = vmatpush2.msra.mxu0 0.0
    %3649 = vmatprep.subr.mxu0 0.0
    %3650 = vmatpush2.msra.mxu0 0.0
    %3651 = vmatprep.subr.mxu0 0.0
    %3652 = vmatpush2.msra.mxu0 0.0
    %3653 = vmatprep.subr.mxu0 0.0
    %3654 = vmatpush2.msra.mxu0 0.0
    %3655 = vmatprep.subr.mxu0 0.0
    %3656 = vmatpush2.msra.mxu0 0.0
    %3657 = vmatprep.subr.mxu0 0.0
    %3658 = vmatpush2.msra.mxu0 0.0
    %3659 = vmatprep.subr.mxu0 0.0
    %3660 = vmatpush2.msra.mxu0 0.0
    %3661 = vmatprep.subr.mxu0 0.0
    %3662 = vmatpush2.msra.mxu0 0.0
    %3663 = vmatprep.subr.mxu0 0.0
    %3664 = vmatpush2.msra.mxu0 0.0
    %3665 = vmatprep.subr.mxu0 0.0
    %3666 = vmatpush2.msra.mxu0 0.0
    %3667 = vmatprep.subr.mxu0 0.0
    %3668 = vmatpush2.msra.mxu0 0.0
    %3669 = vmatprep.subr.mxu0 0.0
    %3670 = vmatpush2.msra.mxu0 0.0
    %3671 = vmatprep.subr.mxu0 0.0
    %3672 = vmatpush2.msra.mxu0 0.0
    %3673 = vmatprep.subr.mxu0 0.0
    %3674 = vmatpush2.msra.mxu0 0.0
    %3675 = vmatprep.subr.mxu0 0.0
    %3676 = vmatpush2.msra.mxu0 0.0
    %3677 = vmatprep.mubr.f32.mxu0 0.0
    %3678 = vmatmul.mubr.f32.gmra.mxu0 %v331
    %v3679 = vpop.f32.mrf.mxu0
    %v3680 = vadd.f32 0.0, %v3679
    %v3681 = vpop.f32.mrf.mxu0
    %v3682 = vadd.f32 0.0, %v3681
    %3683 = vdwg.mxu0
    %v3684 = vadd.f32 %v3609, %v3680
    %v3685 = vxor.u32 %v3684, 2147483648
    %v3686 = vmul.f32 %v3685, 1.442695
    %v3687 = vpow.pop %v3686
    %v3688 = vadd.f32 %v3687, 1.0
    %v3689 = vrcp.pop %v3688
    %v3690 = vmul.f32 1.0, %v3689
    %v3692 = vlaneseq
    %v3693 = vshrl.u32 %v3692, 7
    %v3694 = vsub.s32 0, %v3693
    %v3695 = vrot.slane %v3431, %v3694
    %3696 = vrot.lane.b32.xlu0 %v3695, 64
    %v3697 = vpop.permute.xlu0 %3696
    %v3699 = vadd.f32 %v3680, %v3697
    %3701 = vrot.lane.b32.xlu0 %v3699, 64
    %v3702 = vpop.permute.xlu0 %3701
    %v3704 = vmul.f32 %v3690, %v3702
    %3706 = vrot.lane.b32.xlu0 %v3704, 64
    %v3707 = vpop.permute.xlu0 %3706
    %v3709 = vadd.f32 %v3609, %v3707
    %v3710 = vtanh.pop %v3709
    %v3711 = vsub.f32 1.0, %v3690
    %3713 = vrot.lane.b32.xlu0 %v3710, 96
    %v3714 = vpop.permute.xlu0 %3713
    %v3716 = vmul.f32 %v3711, %v3714
    %v3717 = vmul.f32 %v3690, 0.0
    %v3718 = vadd.f32 %v3716, %v3717
    %v3719 = vadd.f32 %v3611, %v3680
    %v3720 = vxor.u32 %v3719, 2147483648
    %v3721 = vmul.f32 %v3720, 1.442695
    %v3722 = vpow.pop %v3721
    %v3723 = vadd.f32 %v3722, 1.0
    %v3724 = vrcp.pop %v3723
    %v3725 = vmul.f32 1.0, %v3724
    %v3726 = vadd.f32 %v3612, %v3682
    %v3727 = vxor.u32 %v3726, 2147483648
    %v3728 = vmul.f32 %v3727, 1.442695
    %v3729 = vpow.pop %v3728
    %v3730 = vadd.f32 %v3729, 1.0
    %v3731 = vrcp.pop %v3730
    %v3732 = vmul.f32 1.0, %v3731
    %v3734 = vadd.f32 %v3682, %v3695
    %3736 = vrot.lane.b32.xlu0 %v3734, 64
    %v3737 = vpop.permute.xlu0 %3736
    %v3739 = vmul.f32 %v3725, %v3737
    %3741 = vrot.lane.b32.xlu0 %v3739, 64
    %v3742 = vpop.permute.xlu0 %3741
    %v3744 = vadd.f32 %v3612, %v3742
    %v3745 = vtanh.pop %v3744
    %v3746 = vsub.f32 1.0, %v3732
    %3748 = vrot.lane.b32.xlu0 %v3745, 96
    %v3749 = vpop.permute.xlu0 %3748
    %v3751 = vmul.f32 %v3746, %v3749
    %v3752 = vmul.f32 %v3732, 0.0
    %v3753 = vadd.f32 %v3751, %v3752
    %3755 = vrot.lane.b32.xlu0 %v3718, 96
    %v3756 = vpop.permute.xlu0 %3755
    %3759 = vrot.lane.b32.xlu0 %v3753, 32
    %v3760 = vpop.permute.xlu0 %3759
    %v3762 = vsel %vm1721, %v3756, %v3760
    %v3764 = vsel %vm329, %v3762, 0
    %3766 = vmatprep.subr.mxu0 0.0
    %3767 = vmatpush1.msra.mxu0 0.0
    %3768 = vmatprep.subr.mxu0 0.0
    %3769 = vmatpush1.msra.mxu0 0.0
    %3770 = vmatprep.subr.mxu0 0.0
    %3771 = vmatpush1.msra.mxu0 0.0
    %3772 = vmatprep.subr.mxu0 0.0
    %3773 = vmatpush1.msra.mxu0 0.0
    %3774 = vmatprep.subr.mxu0 0.0
    %3775 = vmatpush1.msra.mxu0 0.0
    %3776 = vmatprep.subr.mxu0 0.0
    %3777 = vmatpush1.msra.mxu0 0.0
    %3778 = vmatprep.subr.mxu0 0.0
    %3779 = vmatpush1.msra.mxu0 0.0
    %3780 = vmatprep.subr.mxu0 0.0
    %3781 = vmatpush1.msra.mxu0 0.0
    %3782 = vmatprep.subr.mxu0 %v3427
    %3783 = vmatpush1.msra.mxu0 %v3426
    %3784 = vmatprep.subr.mxu0 %v3425
    %3785 = vmatpush1.msra.mxu0 %v3424
    %3786 = vmatprep.subr.mxu0 %v3423
    %3787 = vmatpush1.msra.mxu0 %v3422
    %3788 = vmatprep.subr.mxu0 %v3421
    %3789 = vmatpush1.msra.mxu0 %v3420
    %3790 = vmatprep.subr.mxu0 %v3419
    %3791 = vmatpush1.msra.mxu0 %v3418
    %3792 = vmatprep.subr.mxu0 %v3417
    %3793 = vmatpush1.msra.mxu0 %v3416
    %3794 = vmatprep.subr.mxu0 %v3415
    %3795 = vmatpush1.msra.mxu0 %v3414
    %3796 = vmatprep.subr.mxu0 %v3413
    %3797 = vmatpush1.msra.mxu0 %v3412
    %3798 = vmatprep.subr.mxu0 0.0
    %3799 = vmatpush2.msra.mxu0 0.0
    %3800 = vmatprep.subr.mxu0 0.0
    %3801 = vmatpush2.msra.mxu0 0.0
    %3802 = vmatprep.subr.mxu0 0.0
    %3803 = vmatpush2.msra.mxu0 0.0
    %3804 = vmatprep.subr.mxu0 0.0
    %3805 = vmatpush2.msra.mxu0 0.0
    %3806 = vmatprep.subr.mxu0 0.0
    %3807 = vmatpush2.msra.mxu0 0.0
    %3808 = vmatprep.subr.mxu0 0.0
    %3809 = vmatpush2.msra.mxu0 0.0
    %3810 = vmatprep.subr.mxu0 0.0
    %3811 = vmatpush2.msra.mxu0 0.0
    %3812 = vmatprep.subr.mxu0 0.0
    %3813 = vmatpush2.msra.mxu0 0.0
    %3814 = vmatprep.subr.mxu0 0.0
    %3815 = vmatpush2.msra.mxu0 0.0
    %3816 = vmatprep.subr.mxu0 0.0
    %3817 = vmatpush2.msra.mxu0 0.0
    %3818 = vmatprep.subr.mxu0 0.0
    %3819 = vmatpush2.msra.mxu0 0.0
    %3820 = vmatprep.subr.mxu0 0.0
    %3821 = vmatpush2.msra.mxu0 0.0
    %3822 = vmatprep.subr.mxu0 0.0
    %3823 = vmatpush2.msra.mxu0 0.0
    %3824 = vmatprep.subr.mxu0 0.0
    %3825 = vmatpush2.msra.mxu0 0.0
    %3826 = vmatprep.subr.mxu0 0.0
    %3827 = vmatpush2.msra.mxu0 0.0
    %3828 = vmatprep.subr.mxu0 0.0
    %3829 = vmatpush2.msra.mxu0 0.0
    %3830 = vmatprep.mubr.f32.mxu0 0.0
    %3831 = vmatmul.mubr.f32.gmra.mxu0 %v3764
    %v3832 = vpop.f32.mrf.mxu0
    %v3833 = vadd.f32 0.0, %v3832
    %v3834 = vpop.f32.mrf.mxu0
    %v3835 = vadd.f32 0.0, %v3834
    %3836 = vdwg.mxu0
    %v3837 = vadd.f32 %v3611, %v3833
    %v3838 = vxor.u32 %v3837, 2147483648
    %v3839 = vmul.f32 %v3838, 1.442695
    %v3840 = vpow.pop %v3839
    %v3841 = vadd.f32 %v3840, 1.0
    %v3842 = vrcp.pop %v3841
    %v3843 = vmul.f32 1.0, %v3842
    %v3844 = vadd.f32 %v3833, %v3697
    %3846 = vrot.lane.b32.xlu0 %v3844, 64
    %v3847 = vpop.permute.xlu0 %3846
    %v3849 = vmul.f32 %v3843, %v3847
    %3851 = vrot.lane.b32.xlu0 %v3849, 64
    %v3852 = vpop.permute.xlu0 %3851
    %v3854 = vadd.f32 %v3611, %v3852
    %v3855 = vtanh.pop %v3854
    %v3856 = vsub.f32 1.0, %v3843
    %3858 = vrot.lane.b32.xlu0 %v3855, 96
    %v3859 = vpop.permute.xlu0 %3858
    %v3861 = vmul.f32 %v3856, %v3859
    %3862 = vrot.lane.b32.xlu0 %v3762, 32
    %v3863 = vpop.permute.xlu0 %3862
    %v3865 = vmul.f32 %v3843, %v3863
    %v3866 = vadd.f32 %v3861, %v3865
    %v3867 = vadd.f32 %v3609, %v3833
    %v3868 = vxor.u32 %v3867, 2147483648
    %v3869 = vmul.f32 %v3868, 1.442695
    %v3870 = vpow.pop %v3869
    %v3871 = vadd.f32 %v3870, 1.0
    %v3872 = vrcp.pop %v3871
    %v3873 = vmul.f32 1.0, %v3872
    %v3874 = vadd.f32 %v3610, %v3835
    %v3875 = vxor.u32 %v3874, 2147483648
    %v3876 = vmul.f32 %v3875, 1.442695
    %v3877 = vpow.pop %v3876
    %v3878 = vadd.f32 %v3877, 1.0
    %v3879 = vrcp.pop %v3878
    %v3880 = vmul.f32 1.0, %v3879
    %v3881 = vadd.f32 %v3835, %v3695
    %3883 = vrot.lane.b32.xlu0 %v3881, 64
    %v3884 = vpop.permute.xlu0 %3883
    %v3886 = vmul.f32 %v3873, %v3884
    %3888 = vrot.lane.b32.xlu0 %v3886, 64
    %v3889 = vpop.permute.xlu0 %3888
    %v3891 = vadd.f32 %v3610, %v3889
    %v3892 = vtanh.pop %v3891
    %v3893 = vsub.f32 1.0, %v3880
    %3895 = vrot.lane.b32.xlu0 %v3892, 96
    %v3896 = vpop.permute.xlu0 %3895
    %v3898 = vmul.f32 %v3893, %v3896
    %3899 = vrot.lane.b32.xlu0 %v3762, 96
    %v3900 = vpop.permute.xlu0 %3899
    %v3902 = vmul.f32 %v3880, %v3900
    %v3903 = vadd.f32 %v3898, %v3902
    %s3904 = smul.u32 4, 8
    %s3905 = smul.u32 %s3904, 8
    %s3906 = sshll.u32 %s3905, 4
    %3907 = dma.done [#allocation5], %s3906
    %s3908 = smul.u32 4, 128
    %s3909 = smul.u32 %s3908, 1
    %s3910 = sshll.u32 %s3909, 4
    %3911 = dma.done %s98, %s3910
    %v3912 = vld [vmem:[#allocation3] sm:$0xff]
    %v3913 = vld [vmem:[#allocation3 + $0x8] sm:$0xff]
    %v3914 = vld [vmem:[#allocation3 + $0x10] sm:$0xff]
    %v3915 = vld [vmem:[#allocation3 + $0x18] sm:$0xff]
    %v3916 = vld [vmem:[#allocation3 + $0x20] sm:$0xff]
    %v3917 = vld [vmem:[#allocation3 + $0x28] sm:$0xff]
    %v3918 = vld [vmem:[#allocation3 + $0x30] sm:$0xff]
    %v3919 = vld [vmem:[#allocation3 + $0x38] sm:$0xff]
    %v3920 = vld [vmem:[#allocation3 + $0x40] sm:$0xff]
    %v3921 = vld [vmem:[#allocation3 + $0x48] sm:$0xff]
    %v3922 = vld [vmem:[#allocation3 + $0x50] sm:$0xff]
    %v3923 = vld [vmem:[#allocation3 + $0x58] sm:$0xff]
    %v3924 = vld [vmem:[#allocation3 + $0x60] sm:$0xff]
    %v3925 = vld [vmem:[#allocation3 + $0x68] sm:$0xff]
    %v3926 = vld [vmem:[#allocation3 + $0x70] sm:$0xff]
    %v3927 = vld [vmem:[#allocation3 + $0x78] sm:$0xff]
    %v3928 = vld [vmem:[#allocation3 + $0x80] sm:$0xff]
    %v3929 = vld [vmem:[#allocation3 + $0x88] sm:$0xff]
    %v3930 = vld [vmem:[#allocation3 + $0x90] sm:$0xff]
    %v3931 = vld [vmem:[#allocation3 + $0x98] sm:$0xff]
    %v3932 = vld [vmem:[#allocation3 + $0xa0] sm:$0xff]
    %v3933 = vld [vmem:[#allocation3 + $0xa8] sm:$0xff]
    %v3934 = vld [vmem:[#allocation3 + $0xb0] sm:$0xff]
    %v3935 = vld [vmem:[#allocation3 + $0xb8] sm:$0xff]
    %v3936 = vld [vmem:[#allocation3 + $0xc0] sm:$0xff]
    %v3937 = vld [vmem:[#allocation3 + $0xc8] sm:$0xff]
    %v3938 = vld [vmem:[#allocation3 + $0xd0] sm:$0xff]
    %v3939 = vld [vmem:[#allocation3 + $0xd8] sm:$0xff]
    %v3940 = vld [vmem:[#allocation3 + $0xe0] sm:$0xff]
    %v3941 = vld [vmem:[#allocation3 + $0xe8] sm:$0xff]
    %v3942 = vld [vmem:[#allocation3 + $0xf0] sm:$0xff]
    %v3943 = vld [vmem:[#allocation3 + $0xf8] sm:$0xff]
    %v3944 = vld [vmem:[#allocation4] sm:$0xf]
    %v3945 = vld [vmem:[#allocation4 + $0x4] sm:$0xf]
    %v3946 = vld [vmem:[#allocation4 + $0x8] sm:$0xf]
    %v3947 = vld [vmem:[#allocation4 + $0xc] sm:$0xf]
    %v3948 = vld [vmem:[#allocation4 + $0x10] sm:$0xf]
    %v3949 = vld [vmem:[#allocation4 + $0x14] sm:$0xf]
    %v3950 = vld [vmem:[#allocation4 + $0x18] sm:$0xf]
    %v3951 = vld [vmem:[#allocation4 + $0x1c] sm:$0xf]
    %v3952 = vld [vmem:[#allocation4 + $0x20] sm:$0xf]
    %v3953 = vld [vmem:[#allocation4 + $0x24] sm:$0xf]
    %v3954 = vld [vmem:[#allocation4 + $0x28] sm:$0xf]
    %v3955 = vld [vmem:[#allocation4 + $0x2c] sm:$0xf]
    %v3956 = vld [vmem:[#allocation4 + $0x30] sm:$0xf]
    %v3957 = vld [vmem:[#allocation4 + $0x34] sm:$0xf]
    %v3958 = vld [vmem:[#allocation4 + $0x38] sm:$0xf]
    %v3959 = vld [vmem:[#allocation4 + $0x3c] sm:$0xf]
    %v3960 = vld [vmem:[#allocation4 + $0x40] sm:$0xf]
    %v3961 = vld [vmem:[#allocation4 + $0x44] sm:$0xf]
    %v3962 = vld [vmem:[#allocation4 + $0x48] sm:$0xf]
    %v3963 = vld [vmem:[#allocation4 + $0x4c] sm:$0xf]
    %v3964 = vld [vmem:[#allocation4 + $0x50] sm:$0xf]
    %v3965 = vld [vmem:[#allocation4 + $0x54] sm:$0xf]
    %v3966 = vld [vmem:[#allocation4 + $0x58] sm:$0xf]
    %v3967 = vld [vmem:[#allocation4 + $0x5c] sm:$0xf]
    %v3968 = vld [vmem:[#allocation4 + $0x60] sm:$0xf]
    %v3969 = vld [vmem:[#allocation4 + $0x64] sm:$0xf]
    %v3970 = vld [vmem:[#allocation4 + $0x68] sm:$0xf]
    %v3971 = vld [vmem:[#allocation4 + $0x6c] sm:$0xf]
    %v3972 = vld [vmem:[#allocation4 + $0x70] sm:$0xf]
    %v3973 = vld [vmem:[#allocation4 + $0x74] sm:$0xf]
    %v3974 = vld [vmem:[#allocation4 + $0x78] sm:$0xf]
    %v3975 = vld [vmem:[#allocation4 + $0x7c] sm:$0xf]
    %v3976 = vld [vmem:[#allocation4 + $0x80] sm:$0xf]
    %v3977 = vld [vmem:[#allocation4 + $0x84] sm:$0xf]
    %v3978 = vld [vmem:[#allocation4 + $0x88] sm:$0xf]
    %v3979 = vld [vmem:[#allocation4 + $0x8c] sm:$0xf]
    %v3980 = vld [vmem:[#allocation4 + $0x90] sm:$0xf]
    %v3981 = vld [vmem:[#allocation4 + $0x94] sm:$0xf]
    %v3982 = vld [vmem:[#allocation4 + $0x98] sm:$0xf]
    %v3983 = vld [vmem:[#allocation4 + $0x9c] sm:$0xf]
    %v3984 = vld [vmem:[#allocation4 + $0xa0] sm:$0xf]
    %v3985 = vld [vmem:[#allocation4 + $0xa4] sm:$0xf]
    %v3986 = vld [vmem:[#allocation4 + $0xa8] sm:$0xf]
    %v3987 = vld [vmem:[#allocation4 + $0xac] sm:$0xf]
    %v3988 = vld [vmem:[#allocation4 + $0xb0] sm:$0xf]
    %v3989 = vld [vmem:[#allocation4 + $0xb4] sm:$0xf]
    %v3990 = vld [vmem:[#allocation4 + $0xb8] sm:$0xf]
    %v3991 = vld [vmem:[#allocation4 + $0xbc] sm:$0xf]
    %v3992 = vld [vmem:[#allocation4 + $0xc0] sm:$0xf]
    %v3993 = vld [vmem:[#allocation4 + $0xc4] sm:$0xf]
    %v3994 = vld [vmem:[#allocation4 + $0xc8] sm:$0xf]
    %v3995 = vld [vmem:[#allocation4 + $0xcc] sm:$0xf]
    %v3996 = vld [vmem:[#allocation4 + $0xd0] sm:$0xf]
    %v3997 = vld [vmem:[#allocation4 + $0xd4] sm:$0xf]
    %v3998 = vld [vmem:[#allocation4 + $0xd8] sm:$0xf]
    %v3999 = vld [vmem:[#allocation4 + $0xdc] sm:$0xf]
    %v4000 = vld [vmem:[#allocation4 + $0xe0] sm:$0xf]
    %v4001 = vld [vmem:[#allocation4 + $0xe4] sm:$0xf]
    %v4002 = vld [vmem:[#allocation4 + $0xe8] sm:$0xf]
    %v4003 = vld [vmem:[#allocation4 + $0xec] sm:$0xf]
    %v4004 = vld [vmem:[#allocation4 + $0xf0] sm:$0xf]
    %v4005 = vld [vmem:[#allocation4 + $0xf4] sm:$0xf]
    %v4006 = vld [vmem:[#allocation4 + $0xf8] sm:$0xf]
    %v4007 = vld [vmem:[#allocation4 + $0xfc] sm:$0xf]
    %v4008 = vld [vmem:[#allocation4 + $0x100] sm:$0xf]
    %v4009 = vld [vmem:[#allocation4 + $0x104] sm:$0xf]
    %v4010 = vld [vmem:[#allocation4 + $0x108] sm:$0xf]
    %v4011 = vld [vmem:[#allocation4 + $0x10c] sm:$0xf]
    %v4012 = vld [vmem:[#allocation4 + $0x110] sm:$0xf]
    %v4013 = vld [vmem:[#allocation4 + $0x114] sm:$0xf]
    %v4014 = vld [vmem:[#allocation4 + $0x118] sm:$0xf]
    %v4015 = vld [vmem:[#allocation4 + $0x11c] sm:$0xf]
    %v4016 = vld [vmem:[#allocation4 + $0x120] sm:$0xf]
    %v4017 = vld [vmem:[#allocation4 + $0x124] sm:$0xf]
    %v4018 = vld [vmem:[#allocation4 + $0x128] sm:$0xf]
    %v4019 = vld [vmem:[#allocation4 + $0x12c] sm:$0xf]
    %v4020 = vld [vmem:[#allocation4 + $0x130] sm:$0xf]
    %v4021 = vld [vmem:[#allocation4 + $0x134] sm:$0xf]
    %v4022 = vld [vmem:[#allocation4 + $0x138] sm:$0xf]
    %v4023 = vld [vmem:[#allocation4 + $0x13c] sm:$0xf]
    %v4024 = vld [vmem:[#allocation4 + $0x140] sm:$0xf]
    %v4025 = vld [vmem:[#allocation4 + $0x144] sm:$0xf]
    %v4026 = vld [vmem:[#allocation4 + $0x148] sm:$0xf]
    %v4027 = vld [vmem:[#allocation4 + $0x14c] sm:$0xf]
    %v4028 = vld [vmem:[#allocation4 + $0x150] sm:$0xf]
    %v4029 = vld [vmem:[#allocation4 + $0x154] sm:$0xf]
    %v4030 = vld [vmem:[#allocation4 + $0x158] sm:$0xf]
    %v4031 = vld [vmem:[#allocation4 + $0x15c] sm:$0xf]
    %v4032 = vld [vmem:[#allocation4 + $0x160] sm:$0xf]
    %v4033 = vld [vmem:[#allocation4 + $0x164] sm:$0xf]
    %v4034 = vld [vmem:[#allocation4 + $0x168] sm:$0xf]
    %v4035 = vld [vmem:[#allocation4 + $0x16c] sm:$0xf]
    %v4036 = vld [vmem:[#allocation4 + $0x170] sm:$0xf]
    %v4037 = vld [vmem:[#allocation4 + $0x174] sm:$0xf]
    %v4038 = vld [vmem:[#allocation4 + $0x178] sm:$0xf]
    %v4039 = vld [vmem:[#allocation4 + $0x17c] sm:$0xf]
    %v4040 = vld [vmem:[#allocation4 + $0x180] sm:$0xf]
    %v4041 = vld [vmem:[#allocation4 + $0x184] sm:$0xf]
    %v4042 = vld [vmem:[#allocation4 + $0x188] sm:$0xf]
    %v4043 = vld [vmem:[#allocation4 + $0x18c] sm:$0xf]
    %v4044 = vld [vmem:[#allocation4 + $0x190] sm:$0xf]
    %v4045 = vld [vmem:[#allocation4 + $0x194] sm:$0xf]
    %v4046 = vld [vmem:[#allocation4 + $0x198] sm:$0xf]
    %v4047 = vld [vmem:[#allocation4 + $0x19c] sm:$0xf]
    %v4048 = vld [vmem:[#allocation4 + $0x1a0] sm:$0xf]
    %v4049 = vld [vmem:[#allocation4 + $0x1a4] sm:$0xf]
    %v4050 = vld [vmem:[#allocation4 + $0x1a8] sm:$0xf]
    %v4051 = vld [vmem:[#allocation4 + $0x1ac] sm:$0xf]
    %v4052 = vld [vmem:[#allocation4 + $0x1b0] sm:$0xf]
    %v4053 = vld [vmem:[#allocation4 + $0x1b4] sm:$0xf]
    %v4054 = vld [vmem:[#allocation4 + $0x1b8] sm:$0xf]
    %v4055 = vld [vmem:[#allocation4 + $0x1bc] sm:$0xf]
    %v4056 = vld [vmem:[#allocation4 + $0x1c0] sm:$0xf]
    %v4057 = vld [vmem:[#allocation4 + $0x1c4] sm:$0xf]
    %v4058 = vld [vmem:[#allocation4 + $0x1c8] sm:$0xf]
    %v4059 = vld [vmem:[#allocation4 + $0x1cc] sm:$0xf]
    %v4060 = vld [vmem:[#allocation4 + $0x1d0] sm:$0xf]
    %v4061 = vld [vmem:[#allocation4 + $0x1d4] sm:$0xf]
    %v4062 = vld [vmem:[#allocation4 + $0x1d8] sm:$0xf]
    %v4063 = vld [vmem:[#allocation4 + $0x1dc] sm:$0xf]
    %v4064 = vld [vmem:[#allocation4 + $0x1e0] sm:$0xf]
    %v4065 = vld [vmem:[#allocation4 + $0x1e4] sm:$0xf]
    %v4066 = vld [vmem:[#allocation4 + $0x1e8] sm:$0xf]
    %v4067 = vld [vmem:[#allocation4 + $0x1ec] sm:$0xf]
    %v4068 = vld [vmem:[#allocation4 + $0x1f0] sm:$0xf]
    %v4069 = vld [vmem:[#allocation4 + $0x1f4] sm:$0xf]
    %v4070 = vld [vmem:[#allocation4 + $0x1f8] sm:$0xf]
    %v4071 = vld [vmem:[#allocation4 + $0x1fc] sm:$0xf]
    %v4072 = vpack.c.bf16 %v3866, %v3718
    %v4073 = vpack.c.bf16 %v3753, %v3903
    %v4090 = vunpack.c.l.b16 %v3928
    %v4091 = vunpack.c.h.b16 %v3928
    %v4092 = vunpack.c.l.b16 %v3929
    %v4093 = vunpack.c.h.b16 %v3929
    %v4094 = vunpack.c.l.b16 %v3930
    %v4095 = vunpack.c.h.b16 %v3930
    %v4096 = vunpack.c.l.b16 %v3931
    %v4097 = vunpack.c.h.b16 %v3931
    %v4098 = vunpack.c.l.b16 %v3932
    %v4099 = vunpack.c.h.b16 %v3932
    %v4100 = vunpack.c.l.b16 %v3933
    %v4101 = vunpack.c.h.b16 %v3933
    %v4102 = vunpack.c.l.b16 %v3934
    %v4103 = vunpack.c.h.b16 %v3934
    %v4104 = vunpack.c.l.b16 %v3935
    %v4105 = vunpack.c.h.b16 %v3935
    %v4106 = vunpack.c.l.b16 %v3936
    %v4107 = vunpack.c.h.b16 %v3936
    %v4108 = vunpack.c.l.b16 %v3937
    %v4109 = vunpack.c.h.b16 %v3937
    %v4110 = vunpack.c.l.b16 %v3938
    %v4111 = vunpack.c.h.b16 %v3938
    %v4112 = vunpack.c.l.b16 %v3939
    %v4113 = vunpack.c.h.b16 %v3939
    %v4114 = vunpack.c.l.b16 %v3940
    %v4115 = vunpack.c.h.b16 %v3940
    %v4116 = vunpack.c.l.b16 %v3941
    %v4117 = vunpack.c.h.b16 %v3941
    %v4118 = vunpack.c.l.b16 %v3942
    %v4119 = vunpack.c.h.b16 %v3942
    %v4120 = vunpack.c.l.b16 %v3943
    %v4121 = vunpack.c.h.b16 %v3943
    %v4122 = vpack.c.b16 %v4098, %v4090
    %v4123 = vpack.c.b16 %v4099, %v4091
    %v4124 = vpack.c.b16 %v4100, %v4092
    %v4125 = vpack.c.b16 %v4101, %v4093
    %v4126 = vpack.c.b16 %v4102, %v4094
    %v4127 = vpack.c.b16 %v4103, %v4095
    %v4128 = vpack.c.b16 %v4104, %v4096
    %v4129 = vpack.c.b16 %v4105, %v4097
    %v4130 = vpack.c.b16 %v4114, %v4106
    %v4131 = vpack.c.b16 %v4115, %v4107
    %v4132 = vpack.c.b16 %v4116, %v4108
    %v4133 = vpack.c.b16 %v4117, %v4109
    %v4134 = vpack.c.b16 %v4118, %v4110
    %v4135 = vpack.c.b16 %v4119, %v4111
    %v4136 = vpack.c.b16 %v4120, %v4112
    %v4137 = vpack.c.b16 %v4121, %v4113
    %v4155 = vsel %vm1721, %v4073, 0
    %4157 = vmatprep.subr.bf16.mxu0 0
    %4158 = vmatpush1.bf16.msra.mxu0 0
    %4159 = vmatprep.subr.bf16.mxu0 0
    %4160 = vmatpush1.bf16.msra.mxu0 0
    %4161 = vmatprep.subr.bf16.mxu0 0
    %4162 = vmatpush1.bf16.msra.mxu0 0
    %4163 = vmatprep.subr.bf16.mxu0 0
    %4164 = vmatpush1.bf16.msra.mxu0 0
    %4165 = vmatprep.subr.bf16.mxu0 0
    %4166 = vmatpush1.bf16.msra.mxu0 0
    %4167 = vmatprep.subr.bf16.mxu0 0
    %4168 = vmatpush1.bf16.msra.mxu0 0
    %4169 = vmatprep.subr.bf16.mxu0 %v4131
    %4170 = vmatpush1.bf16.msra.mxu0 %v4130
    %4171 = vmatprep.subr.bf16.mxu0 %v4123
    %4172 = vmatpush1.bf16.msra.mxu0 %v4122
    %4173 = vmatprep.subr.bf16.mxu0 0
    %4174 = vmatpush2.bf16.msra.mxu0 0
    %4175 = vmatprep.subr.bf16.mxu0 0
    %4176 = vmatpush2.bf16.msra.mxu0 0
    %4177 = vmatprep.subr.bf16.mxu0 0
    %4178 = vmatpush2.bf16.msra.mxu0 0
    %4179 = vmatprep.subr.bf16.mxu0 0
    %4180 = vmatpush2.bf16.msra.mxu0 0
    %4181 = vmatprep.subr.bf16.mxu0 0
    %4182 = vmatpush2.bf16.msra.mxu0 0
    %4183 = vmatprep.subr.bf16.mxu0 0
    %4184 = vmatpush2.bf16.msra.mxu0 0
    %4185 = vmatprep.subr.bf16.mxu0 0
    %4186 = vmatpush2.bf16.msra.mxu0 0
    %4187 = vmatprep.subr.bf16.mxu0 0
    %4188 = vmatpush2.bf16.msra.mxu0 0
    %4189 = vmatprep.mubr.bf16.mxu0 0
    %4190 = vmatmul.mubr.bf16.gmra.mxu0 %v4155
    %v4191 = vpop.f32.mrf.mxu0
    %v4192 = vadd.f32 0.0, %v4191
    %v4193 = vpop.f32.mrf.mxu0
    %v4194 = vadd.f32 0.0, %v4193
    %v4195 = vpop.f32.mrf.mxu0
    %v4196 = vadd.f32 0.0, %v4195
    %v4197 = vpop.f32.mrf.mxu0
    %v4198 = vadd.f32 0.0, %v4197
    %4199 = vdwg.mxu0
    %4200 = vmatprep.subr.bf16.mxu0 0
    %4201 = vmatpush1.bf16.msra.mxu0 0
    %4202 = vmatprep.subr.bf16.mxu0 0
    %4203 = vmatpush1.bf16.msra.mxu0 0
    %4204 = vmatprep.subr.bf16.mxu0 0
    %4205 = vmatpush1.bf16.msra.mxu0 0
    %4206 = vmatprep.subr.bf16.mxu0 0
    %4207 = vmatpush1.bf16.msra.mxu0 0
    %4208 = vmatprep.subr.bf16.mxu0 0
    %4209 = vmatpush1.bf16.msra.mxu0 0
    %4210 = vmatprep.subr.bf16.mxu0 0
    %4211 = vmatpush1.bf16.msra.mxu0 0
    %4212 = vmatprep.subr.bf16.mxu0 %v4133
    %4213 = vmatpush1.bf16.msra.mxu0 %v4132
    %4214 = vmatprep.subr.bf16.mxu0 %v4125
    %4215 = vmatpush1.bf16.msra.mxu0 %v4124
    %4216 = vmatprep.subr.bf16.mxu0 0
    %4217 = vmatpush2.bf16.msra.mxu0 0
    %4218 = vmatprep.subr.bf16.mxu0 0
    %4219 = vmatpush2.bf16.msra.mxu0 0
    %4220 = vmatprep.subr.bf16.mxu0 0
    %4221 = vmatpush2.bf16.msra.mxu0 0
    %4222 = vmatprep.subr.bf16.mxu0 0
    %4223 = vmatpush2.bf16.msra.mxu0 0
    %4224 = vmatprep.subr.bf16.mxu0 0
    %4225 = vmatpush2.bf16.msra.mxu0 0
    %4226 = vmatprep.subr.bf16.mxu0 0
    %4227 = vmatpush2.bf16.msra.mxu0 0
    %4228 = vmatprep.subr.bf16.mxu0 0
    %4229 = vmatpush2.bf16.msra.mxu0 0
    %4230 = vmatprep.subr.bf16.mxu0 0
    %4231 = vmatpush2.bf16.msra.mxu0 0
    %4232 = vmatprep.mubr.bf16.mxu0 0
    %4233 = vmatmul.mubr.bf16.gmra.mxu0 %v4155
    %v4234 = vpop.f32.mrf.mxu0
    %v4235 = vadd.f32 0.0, %v4234
    %v4236 = vpop.f32.mrf.mxu0
    %v4237 = vadd.f32 0.0, %v4236
    %v4238 = vpop.f32.mrf.mxu0
    %v4239 = vadd.f32 0.0, %v4238
    %v4240 = vpop.f32.mrf.mxu0
    %v4241 = vadd.f32 0.0, %v4240
    %4242 = vdwg.mxu0
    %4243 = vmatprep.subr.bf16.mxu0 0
    %4244 = vmatpush1.bf16.msra.mxu0 0
    %4245 = vmatprep.subr.bf16.mxu0 0
    %4246 = vmatpush1.bf16.msra.mxu0 0
    %4247 = vmatprep.subr.bf16.mxu0 0
    %4248 = vmatpush1.bf16.msra.mxu0 0
    %4249 = vmatprep.subr.bf16.mxu0 0
    %4250 = vmatpush1.bf16.msra.mxu0 0
    %4251 = vmatprep.subr.bf16.mxu0 0
    %4252 = vmatpush1.bf16.msra.mxu0 0
    %4253 = vmatprep.subr.bf16.mxu0 0
    %4254 = vmatpush1.bf16.msra.mxu0 0
    %4255 = vmatprep.subr.bf16.mxu0 %v4135
    %4256 = vmatpush1.bf16.msra.mxu0 %v4134
    %4257 = vmatprep.subr.bf16.mxu0 %v4127
    %4258 = vmatpush1.bf16.msra.mxu0 %v4126
    %4259 = vmatprep.subr.bf16.mxu0 0
    %4260 = vmatpush2.bf16.msra.mxu0 0
    %4261 = vmatprep.subr.bf16.mxu0 0
    %4262 = vmatpush2.bf16.msra.mxu0 0
    %4263 = vmatprep.subr.bf16.mxu0 0
    %4264 = vmatpush2.bf16.msra.mxu0 0
    %4265 = vmatprep.subr.bf16.mxu0 0
    %4266 = vmatpush2.bf16.msra.mxu0 0
    %4267 = vmatprep.subr.bf16.mxu0 0
    %4268 = vmatpush2.bf16.msra.mxu0 0
    %4269 = vmatprep.subr.bf16.mxu0 0
    %4270 = vmatpush2.bf16.msra.mxu0 0
    %4271 = vmatprep.subr.bf16.mxu0 0
    %4272 = vmatpush2.bf16.msra.mxu0 0
    %4273 = vmatprep.subr.bf16.mxu0 0
    %4274 = vmatpush2.bf16.msra.mxu0 0
    %4275 = vmatprep.mubr.bf16.mxu0 0
    %4276 = vmatmul.mubr.bf16.gmra.mxu0 %v4155
    %v4277 = vpop.f32.mrf.mxu0
    %v4278 = vadd.f32 0.0, %v4277
    %v4279 = vpop.f32.mrf.mxu0
    %v4280 = vadd.f32 0.0, %v4279
    %v4281 = vpop.f32.mrf.mxu0
    %v4282 = vadd.f32 0.0, %v4281
    %v4283 = vpop.f32.mrf.mxu0
    %v4284 = vadd.f32 0.0, %v4283
    %4285 = vdwg.mxu0
    %4286 = vmatprep.subr.bf16.mxu0 0
    %4287 = vmatpush1.bf16.msra.mxu0 0
    %4288 = vmatprep.subr.bf16.mxu0 0
    %4289 = vmatpush1.bf16.msra.mxu0 0
    %4290 = vmatprep.subr.bf16.mxu0 0
    %4291 = vmatpush1.bf16.msra.mxu0 0
    %4292 = vmatprep.subr.bf16.mxu0 0
    %4293 = vmatpush1.bf16.msra.mxu0 0
    %4294 = vmatprep.subr.bf16.mxu0 0
    %4295 = vmatpush1.bf16.msra.mxu0 0
    %4296 = vmatprep.subr.bf16.mxu0 0
    %4297 = vmatpush1.bf16.msra.mxu0 0
    %4298 = vmatprep.subr.bf16.mxu0 %v4137
    %4299 = vmatpush1.bf16.msra.mxu0 %v4136
    %4300 = vmatprep.subr.bf16.mxu0 %v4129
    %4301 = vmatpush1.bf16.msra.mxu0 %v4128
    %4302 = vmatprep.subr.bf16.mxu0 0
    %4303 = vmatpush2.bf16.msra.mxu0 0
    %4304 = vmatprep.subr.bf16.mxu0 0
    %4305 = vmatpush2.bf16.msra.mxu0 0
    %4306 = vmatprep.subr.bf16.mxu0 0
    %4307 = vmatpush2.bf16.msra.mxu0 0
    %4308 = vmatprep.subr.bf16.mxu0 0
    %4309 = vmatpush2.bf16.msra.mxu0 0
    %4310 = vmatprep.subr.bf16.mxu0 0
    %4311 = vmatpush2.bf16.msra.mxu0 0
    %4312 = vmatprep.subr.bf16.mxu0 0
    %4313 = vmatpush2.bf16.msra.mxu0 0
    %4314 = vmatprep.subr.bf16.mxu0 0
    %4315 = vmatpush2.bf16.msra.mxu0 0
    %4316 = vmatprep.subr.bf16.mxu0 0
    %4317 = vmatpush2.bf16.msra.mxu0 0
    %4318 = vmatprep.mubr.bf16.mxu0 0
    %4319 = vmatmul.mubr.bf16.gmra.mxu0 %v4155
    %v4320 = vpop.f32.mrf.mxu0
    %v4321 = vadd.f32 0.0, %v4320
    %v4322 = vpop.f32.mrf.mxu0
    %v4323 = vadd.f32 0.0, %v4322
    %v4324 = vpop.f32.mrf.mxu0
    %v4325 = vadd.f32 0.0, %v4324
    %v4326 = vpop.f32.mrf.mxu0
    %v4327 = vadd.f32 0.0, %v4326
    %4328 = vdwg.mxu0
    %4330 = vrot.lane.b32.xlu0 %v4072, 96
    %v4331 = vpop.permute.xlu0 %4330
    %v4348 = vunpack.c.l.b16 %v3912
    %v4349 = vunpack.c.h.b16 %v3912
    %v4350 = vunpack.c.l.b16 %v3913
    %v4351 = vunpack.c.h.b16 %v3913
    %v4352 = vunpack.c.l.b16 %v3914
    %v4353 = vunpack.c.h.b16 %v3914
    %v4354 = vunpack.c.l.b16 %v3915
    %v4355 = vunpack.c.h.b16 %v3915
    %v4356 = vunpack.c.l.b16 %v3916
    %v4357 = vunpack.c.h.b16 %v3916
    %v4358 = vunpack.c.l.b16 %v3917
    %v4359 = vunpack.c.h.b16 %v3917
    %v4360 = vunpack.c.l.b16 %v3918
    %v4361 = vunpack.c.h.b16 %v3918
    %v4362 = vunpack.c.l.b16 %v3919
    %v4363 = vunpack.c.h.b16 %v3919
    %v4364 = vunpack.c.l.b16 %v3920
    %v4365 = vunpack.c.h.b16 %v3920
    %v4366 = vunpack.c.l.b16 %v3921
    %v4367 = vunpack.c.h.b16 %v3921
    %v4368 = vunpack.c.l.b16 %v3922
    %v4369 = vunpack.c.h.b16 %v3922
    %v4370 = vunpack.c.l.b16 %v3923
    %v4371 = vunpack.c.h.b16 %v3923
    %v4372 = vunpack.c.l.b16 %v3924
    %v4373 = vunpack.c.h.b16 %v3924
    %v4374 = vunpack.c.l.b16 %v3925
    %v4375 = vunpack.c.h.b16 %v3925
    %v4376 = vunpack.c.l.b16 %v3926
    %v4377 = vunpack.c.h.b16 %v3926
    %v4378 = vunpack.c.l.b16 %v3927
    %v4379 = vunpack.c.h.b16 %v3927
    %v4380 = vpack.c.b16 %v4356, %v4348
    %v4381 = vpack.c.b16 %v4357, %v4349
    %v4382 = vpack.c.b16 %v4358, %v4350
    %v4383 = vpack.c.b16 %v4359, %v4351
    %v4384 = vpack.c.b16 %v4360, %v4352
    %v4385 = vpack.c.b16 %v4361, %v4353
    %v4386 = vpack.c.b16 %v4362, %v4354
    %v4387 = vpack.c.b16 %v4363, %v4355
    %v4388 = vpack.c.b16 %v4372, %v4364
    %v4389 = vpack.c.b16 %v4373, %v4365
    %v4390 = vpack.c.b16 %v4374, %v4366
    %v4391 = vpack.c.b16 %v4375, %v4367
    %v4392 = vpack.c.b16 %v4376, %v4368
    %v4393 = vpack.c.b16 %v4377, %v4369
    %v4394 = vpack.c.b16 %v4378, %v4370
    %v4395 = vpack.c.b16 %v4379, %v4371
    %v4413 = vsel %vm1721, %v4331, 0
    %4415 = vmatprep.subr.bf16.mxu0 0
    %4416 = vmatpush1.bf16.msra.mxu0 0
    %4417 = vmatprep.subr.bf16.mxu0 0
    %4418 = vmatpush1.bf16.msra.mxu0 0
    %4419 = vmatprep.subr.bf16.mxu0 0
    %4420 = vmatpush1.bf16.msra.mxu0 0
    %4421 = vmatprep.subr.bf16.mxu0 0
    %4422 = vmatpush1.bf16.msra.mxu0 0
    %4423 = vmatprep.subr.bf16.mxu0 0
    %4424 = vmatpush1.bf16.msra.mxu0 0
    %4425 = vmatprep.subr.bf16.mxu0 0
    %4426 = vmatpush1.bf16.msra.mxu0 0
    %4427 = vmatprep.subr.bf16.mxu0 %v4389
    %4428 = vmatpush1.bf16.msra.mxu0 %v4388
    %4429 = vmatprep.subr.bf16.mxu0 %v4381
    %4430 = vmatpush1.bf16.msra.mxu0 %v4380
    %4431 = vmatprep.subr.bf16.mxu0 0
    %4432 = vmatpush2.bf16.msra.mxu0 0
    %4433 = vmatprep.subr.bf16.mxu0 0
    %4434 = vmatpush2.bf16.msra.mxu0 0
    %4435 = vmatprep.subr.bf16.mxu0 0
    %4436 = vmatpush2.bf16.msra.mxu0 0
    %4437 = vmatprep.subr.bf16.mxu0 0
    %4438 = vmatpush2.bf16.msra.mxu0 0
    %4439 = vmatprep.subr.bf16.mxu0 0
    %4440 = vmatpush2.bf16.msra.mxu0 0
    %4441 = vmatprep.subr.bf16.mxu0 0
    %4442 = vmatpush2.bf16.msra.mxu0 0
    %4443 = vmatprep.subr.bf16.mxu0 0
    %4444 = vmatpush2.bf16.msra.mxu0 0
    %4445 = vmatprep.subr.bf16.mxu0 0
    %4446 = vmatpush2.bf16.msra.mxu0 0
    %4447 = vmatprep.mubr.bf16.mxu0 0
    %4448 = vmatmul.mubr.bf16.gmra.mxu0 %v4413
    %v4449 = vpop.f32.mrf.mxu0
    %v4450 = vadd.f32 %v4192, %v4449
    %v4451 = vpop.f32.mrf.mxu0
    %v4452 = vadd.f32 %v4194, %v4451
    %v4453 = vpop.f32.mrf.mxu0
    %v4454 = vadd.f32 %v4196, %v4453
    %v4455 = vpop.f32.mrf.mxu0
    %v4456 = vadd.f32 %v4198, %v4455
    %4457 = vdwg.mxu0
    %4458 = vmatprep.subr.bf16.mxu0 0
    %4459 = vmatpush1.bf16.msra.mxu0 0
    %4460 = vmatprep.subr.bf16.mxu0 0
    %4461 = vmatpush1.bf16.msra.mxu0 0
    %4462 = vmatprep.subr.bf16.mxu0 0
    %4463 = vmatpush1.bf16.msra.mxu0 0
    %4464 = vmatprep.subr.bf16.mxu0 0
    %4465 = vmatpush1.bf16.msra.mxu0 0
    %4466 = vmatprep.subr.bf16.mxu0 0
    %4467 = vmatpush1.bf16.msra.mxu0 0
    %4468 = vmatprep.subr.bf16.mxu0 0
    %4469 = vmatpush1.bf16.msra.mxu0 0
    %4470 = vmatprep.subr.bf16.mxu0 %v4391
    %4471 = vmatpush1.bf16.msra.mxu0 %v4390
    %4472 = vmatprep.subr.bf16.mxu0 %v4383
    %4473 = vmatpush1.bf16.msra.mxu0 %v4382
    %4474 = vmatprep.subr.bf16.mxu0 0
    %4475 = vmatpush2.bf16.msra.mxu0 0
    %4476 = vmatprep.subr.bf16.mxu0 0
    %4477 = vmatpush2.bf16.msra.mxu0 0
    %4478 = vmatprep.subr.bf16.mxu0 0
    %4479 = vmatpush2.bf16.msra.mxu0 0
    %4480 = vmatprep.subr.bf16.mxu0 0
    %4481 = vmatpush2.bf16.msra.mxu0 0
    %4482 = vmatprep.subr.bf16.mxu0 0
    %4483 = vmatpush2.bf16.msra.mxu0 0
    %4484 = vmatprep.subr.bf16.mxu0 0
    %4485 = vmatpush2.bf16.msra.mxu0 0
    %4486 = vmatprep.subr.bf16.mxu0 0
    %4487 = vmatpush2.bf16.msra.mxu0 0
    %4488 = vmatprep.subr.bf16.mxu0 0
    %4489 = vmatpush2.bf16.msra.mxu0 0
    %4490 = vmatprep.mubr.bf16.mxu0 0
    %4491 = vmatmul.mubr.bf16.gmra.mxu0 %v4413
    %v4492 = vpop.f32.mrf.mxu0
    %v4493 = vadd.f32 %v4235, %v4492
    %v4494 = vpop.f32.mrf.mxu0
    %v4495 = vadd.f32 %v4237, %v4494
    %v4496 = vpop.f32.mrf.mxu0
    %v4497 = vadd.f32 %v4239, %v4496
    %v4498 = vpop.f32.mrf.mxu0
    %v4499 = vadd.f32 %v4241, %v4498
    %4500 = vdwg.mxu0
    %4501 = vmatprep.subr.bf16.mxu0 0
    %4502 = vmatpush1.bf16.msra.mxu0 0
    %4503 = vmatprep.subr.bf16.mxu0 0
    %4504 = vmatpush1.bf16.msra.mxu0 0
    %4505 = vmatprep.subr.bf16.mxu0 0
    %4506 = vmatpush1.bf16.msra.mxu0 0
    %4507 = vmatprep.subr.bf16.mxu0 0
    %4508 = vmatpush1.bf16.msra.mxu0 0
    %4509 = vmatprep.subr.bf16.mxu0 0
    %4510 = vmatpush1.bf16.msra.mxu0 0
    %4511 = vmatprep.subr.bf16.mxu0 0
    %4512 = vmatpush1.bf16.msra.mxu0 0
    %4513 = vmatprep.subr.bf16.mxu0 %v4393
    %4514 = vmatpush1.bf16.msra.mxu0 %v4392
    %4515 = vmatprep.subr.bf16.mxu0 %v4385
    %4516 = vmatpush1.bf16.msra.mxu0 %v4384
    %4517 = vmatprep.subr.bf16.mxu0 0
    %4518 = vmatpush2.bf16.msra.mxu0 0
    %4519 = vmatprep.subr.bf16.mxu0 0
    %4520 = vmatpush2.bf16.msra.mxu0 0
    %4521 = vmatprep.subr.bf16.mxu0 0
    %4522 = vmatpush2.bf16.msra.mxu0 0
    %4523 = vmatprep.subr.bf16.mxu0 0
    %4524 = vmatpush2.bf16.msra.mxu0 0
    %4525 = vmatprep.subr.bf16.mxu0 0
    %4526 = vmatpush2.bf16.msra.mxu0 0
    %4527 = vmatprep.subr.bf16.mxu0 0
    %4528 = vmatpush2.bf16.msra.mxu0 0
    %4529 = vmatprep.subr.bf16.mxu0 0
    %4530 = vmatpush2.bf16.msra.mxu0 0
    %4531 = vmatprep.subr.bf16.mxu0 0
    %4532 = vmatpush2.bf16.msra.mxu0 0
    %4533 = vmatprep.mubr.bf16.mxu0 0
    %4534 = vmatmul.mubr.bf16.gmra.mxu0 %v4413
    %v4535 = vpop.f32.mrf.mxu0
    %v4536 = vadd.f32 %v4278, %v4535
    %v4537 = vpop.f32.mrf.mxu0
    %v4538 = vadd.f32 %v4280, %v4537
    %v4539 = vpop.f32.mrf.mxu0
    %v4540 = vadd.f32 %v4282, %v4539
    %v4541 = vpop.f32.mrf.mxu0
    %v4542 = vadd.f32 %v4284, %v4541
    %4543 = vdwg.mxu0
    %4544 = vmatprep.subr.bf16.mxu0 0
    %4545 = vmatpush1.bf16.msra.mxu0 0
    %4546 = vmatprep.subr.bf16.mxu0 0
    %4547 = vmatpush1.bf16.msra.mxu0 0
    %4548 = vmatprep.subr.bf16.mxu0 0
    %4549 = vmatpush1.bf16.msra.mxu0 0
    %4550 = vmatprep.subr.bf16.mxu0 0
    %4551 = vmatpush1.bf16.msra.mxu0 0
    %4552 = vmatprep.subr.bf16.mxu0 0
    %4553 = vmatpush1.bf16.msra.mxu0 0
    %4554 = vmatprep.subr.bf16.mxu0 0
    %4555 = vmatpush1.bf16.msra.mxu0 0
    %4556 = vmatprep.subr.bf16.mxu0 %v4395
    %4557 = vmatpush1.bf16.msra.mxu0 %v4394
    %4558 = vmatprep.subr.bf16.mxu0 %v4387
    %4559 = vmatpush1.bf16.msra.mxu0 %v4386
    %4560 = vmatprep.subr.bf16.mxu0 0
    %4561 = vmatpush2.bf16.msra.mxu0 0
    %4562 = vmatprep.subr.bf16.mxu0 0
    %4563 = vmatpush2.bf16.msra.mxu0 0
    %4564 = vmatprep.subr.bf16.mxu0 0
    %4565 = vmatpush2.bf16.msra.mxu0 0
    %4566 = vmatprep.subr.bf16.mxu0 0
    %4567 = vmatpush2.bf16.msra.mxu0 0
    %4568 = vmatprep.subr.bf16.mxu0 0
    %4569 = vmatpush2.bf16.msra.mxu0 0
    %4570 = vmatprep.subr.bf16.mxu0 0
    %4571 = vmatpush2.bf16.msra.mxu0 0
    %4572 = vmatprep.subr.bf16.mxu0 0
    %4573 = vmatpush2.bf16.msra.mxu0 0
    %4574 = vmatprep.subr.bf16.mxu0 0
    %4575 = vmatpush2.bf16.msra.mxu0 0
    %4576 = vmatprep.mubr.bf16.mxu0 0
    %4577 = vmatmul.mubr.bf16.gmra.mxu0 %v4413
    %v4578 = vpop.f32.mrf.mxu0
    %v4579 = vadd.f32 %v4321, %v4578
    %v4580 = vpop.f32.mrf.mxu0
    %v4581 = vadd.f32 %v4323, %v4580
    %v4582 = vpop.f32.mrf.mxu0
    %v4583 = vadd.f32 %v4325, %v4582
    %v4584 = vpop.f32.mrf.mxu0
    %v4585 = vadd.f32 %v4327, %v4584
    %4586 = vdwg.mxu0
    %v4587 = vld [vmem:[%s10] sm:$0xff]
    %v4589 = vlaneseq
    %v4590 = vshrl.u32 %v4589, 7
    %v4591 = vsub.s32 0, %v4590
    %v4592 = vrot.slane %v4587, %v4591
    %v4593 = vlaneseq
    %v4594 = vshrl.u32 %v4593, 7
    %v4595 = vsub.s32 1, %v4594
    %v4596 = vrot.slane %v4587, %v4595
    %v4597 = vlaneseq
    %v4598 = vshrl.u32 %v4597, 7
    %v4599 = vsub.s32 2, %v4598
    %v4600 = vrot.slane %v4587, %v4599
    %v4601 = vlaneseq
    %v4602 = vshrl.u32 %v4601, 7
    %v4603 = vsub.s32 3, %v4602
    %v4604 = vrot.slane %v4587, %v4603
    %v4605 = vlaneseq
    %v4606 = vshrl.u32 %v4605, 7
    %v4607 = vsub.s32 4, %v4606
    %v4608 = vrot.slane %v4587, %v4607
    %v4609 = vlaneseq
    %v4610 = vshrl.u32 %v4609, 7
    %v4611 = vsub.s32 5, %v4610
    %v4612 = vrot.slane %v4587, %v4611
    %v4613 = vlaneseq
    %v4614 = vshrl.u32 %v4613, 7
    %v4615 = vsub.s32 6, %v4614
    %v4616 = vrot.slane %v4587, %v4615
    %v4617 = vlaneseq
    %v4618 = vshrl.u32 %v4617, 7
    %v4619 = vsub.s32 7, %v4618
    %v4620 = vrot.slane %v4587, %v4619
    %v4629 = vadd.f32 %v4450, %v4592
    %v4630 = vadd.f32 %v4452, %v4596
    %v4631 = vadd.f32 %v4493, %v4600
    %v4632 = vadd.f32 %v4495, %v4604
    %v4633 = vadd.f32 %v4536, %v4608
    %v4634 = vadd.f32 %v4538, %v4612
    %v4635 = vadd.f32 %v4579, %v4616
    %v4636 = vadd.f32 %v4581, %v4620
    %v4637 = vadd.f32 %v4454, %v4592
    %v4638 = vadd.f32 %v4456, %v4596
    %v4639 = vadd.f32 %v4497, %v4600
    %v4640 = vadd.f32 %v4499, %v4604
    %v4641 = vadd.f32 %v4540, %v4608
    %v4642 = vadd.f32 %v4542, %v4612
    %v4643 = vadd.f32 %v4583, %v4616
    %v4644 = vadd.f32 %v4585, %v4620
    %v4645 = vpack.c.bf16 %v4637, %v4629
    %v4646 = vpack.c.bf16 %v4638, %v4630
    %v4647 = vpack.c.bf16 %v4639, %v4631
    %v4648 = vpack.c.bf16 %v4640, %v4632
    %v4649 = vpack.c.bf16 %v4641, %v4633
    %v4650 = vpack.c.bf16 %v4642, %v4634
    %v4651 = vpack.c.bf16 %v4643, %v4635
    %v4652 = vpack.c.bf16 %v4644, %v4636
    %v4653 = vld [vmem:[%s12] sm:$0x1]
    %v4655 = vlaneseq
    %v4656 = vshrl.u32 %v4655, 7
    %v4657 = vsub.s32 0, %v4656
    %v4658 = vrot.slane %v4653, %v4657
    %v4788 = vunpack.c.l.b16 %v3944
    %v4789 = vunpack.c.l.b16 %v3945
    %v4790 = vunpack.c.l.b16 %v3946
    %v4791 = vunpack.c.l.b16 %v3947
    %v4792 = vunpack.c.l.b16 %v3948
    %v4793 = vunpack.c.l.b16 %v3949
    %v4794 = vunpack.c.l.b16 %v3950
    %v4795 = vunpack.c.l.b16 %v3951
    %v4796 = vunpack.c.l.b16 %v3952
    %v4797 = vunpack.c.l.b16 %v3953
    %v4798 = vunpack.c.l.b16 %v3954
    %v4799 = vunpack.c.l.b16 %v3955
    %v4800 = vunpack.c.l.b16 %v3956
    %v4801 = vunpack.c.l.b16 %v3957
    %v4802 = vunpack.c.l.b16 %v3958
    %v4803 = vunpack.c.l.b16 %v3959
    %v4804 = vunpack.c.l.b16 %v3960
    %v4805 = vunpack.c.l.b16 %v3961
    %v4806 = vunpack.c.l.b16 %v3962
    %v4807 = vunpack.c.l.b16 %v3963
    %v4808 = vunpack.c.l.b16 %v3964
    %v4809 = vunpack.c.l.b16 %v3965
    %v4810 = vunpack.c.l.b16 %v3966
    %v4811 = vunpack.c.l.b16 %v3967
    %v4812 = vunpack.c.l.b16 %v3968
    %v4813 = vunpack.c.l.b16 %v3969
    %v4814 = vunpack.c.l.b16 %v3970
    %v4815 = vunpack.c.l.b16 %v3971
    %v4816 = vunpack.c.l.b16 %v3972
    %v4817 = vunpack.c.l.b16 %v3973
    %v4818 = vunpack.c.l.b16 %v3974
    %v4819 = vunpack.c.l.b16 %v3975
    %v4820 = vunpack.c.l.b16 %v3976
    %v4821 = vunpack.c.l.b16 %v3977
    %v4822 = vunpack.c.l.b16 %v3978
    %v4823 = vunpack.c.l.b16 %v3979
    %v4824 = vunpack.c.l.b16 %v3980
    %v4825 = vunpack.c.l.b16 %v3981
    %v4826 = vunpack.c.l.b16 %v3982
    %v4827 = vunpack.c.l.b16 %v3983
    %v4828 = vunpack.c.l.b16 %v3984
    %v4829 = vunpack.c.l.b16 %v3985
    %v4830 = vunpack.c.l.b16 %v3986
    %v4831 = vunpack.c.l.b16 %v3987
    %v4832 = vunpack.c.l.b16 %v3988
    %v4833 = vunpack.c.l.b16 %v3989
    %v4834 = vunpack.c.l.b16 %v3990
    %v4835 = vunpack.c.l.b16 %v3991
    %v4836 = vunpack.c.l.b16 %v3992
    %v4837 = vunpack.c.l.b16 %v3993
    %v4838 = vunpack.c.l.b16 %v3994
    %v4839 = vunpack.c.l.b16 %v3995
    %v4840 = vunpack.c.l.b16 %v3996
    %v4841 = vunpack.c.l.b16 %v3997
    %v4842 = vunpack.c.l.b16 %v3998
    %v4843 = vunpack.c.l.b16 %v3999
    %v4844 = vunpack.c.l.b16 %v4000
    %v4845 = vunpack.c.l.b16 %v4001
    %v4846 = vunpack.c.l.b16 %v4002
    %v4847 = vunpack.c.l.b16 %v4003
    %v4848 = vunpack.c.l.b16 %v4004
    %v4849 = vunpack.c.l.b16 %v4005
    %v4850 = vunpack.c.l.b16 %v4006
    %v4851 = vunpack.c.l.b16 %v4007
    %v4852 = vunpack.c.l.b16 %v4008
    %v4853 = vunpack.c.l.b16 %v4009
    %v4854 = vunpack.c.l.b16 %v4010
    %v4855 = vunpack.c.l.b16 %v4011
    %v4856 = vunpack.c.l.b16 %v4012
    %v4857 = vunpack.c.l.b16 %v4013
    %v4858 = vunpack.c.l.b16 %v4014
    %v4859 = vunpack.c.l.b16 %v4015
    %v4860 = vunpack.c.l.b16 %v4016
    %v4861 = vunpack.c.l.b16 %v4017
    %v4862 = vunpack.c.l.b16 %v4018
    %v4863 = vunpack.c.l.b16 %v4019
    %v4864 = vunpack.c.l.b16 %v4020
    %v4865 = vunpack.c.l.b16 %v4021
    %v4866 = vunpack.c.l.b16 %v4022
    %v4867 = vunpack.c.l.b16 %v4023
    %v4868 = vunpack.c.l.b16 %v4024
    %v4869 = vunpack.c.l.b16 %v4025
    %v4870 = vunpack.c.l.b16 %v4026
    %v4871 = vunpack.c.l.b16 %v4027
    %v4872 = vunpack.c.l.b16 %v4028
    %v4873 = vunpack.c.l.b16 %v4029
    %v4874 = vunpack.c.l.b16 %v4030
    %v4875 = vunpack.c.l.b16 %v4031
    %v4876 = vunpack.c.l.b16 %v4032
    %v4877 = vunpack.c.l.b16 %v4033
    %v4878 = vunpack.c.l.b16 %v4034
    %v4879 = vunpack.c.l.b16 %v4035
    %v4880 = vunpack.c.l.b16 %v4036
    %v4881 = vunpack.c.l.b16 %v4037
    %v4882 = vunpack.c.l.b16 %v4038
    %v4883 = vunpack.c.l.b16 %v4039
    %v4884 = vunpack.c.l.b16 %v4040
    %v4885 = vunpack.c.l.b16 %v4041
    %v4886 = vunpack.c.l.b16 %v4042
    %v4887 = vunpack.c.l.b16 %v4043
    %v4888 = vunpack.c.l.b16 %v4044
    %v4889 = vunpack.c.l.b16 %v4045
    %v4890 = vunpack.c.l.b16 %v4046
    %v4891 = vunpack.c.l.b16 %v4047
    %v4892 = vunpack.c.l.b16 %v4048
    %v4893 = vunpack.c.l.b16 %v4049
    %v4894 = vunpack.c.l.b16 %v4050
    %v4895 = vunpack.c.l.b16 %v4051
    %v4896 = vunpack.c.l.b16 %v4052
    %v4897 = vunpack.c.l.b16 %v4053
    %v4898 = vunpack.c.l.b16 %v4054
    %v4899 = vunpack.c.l.b16 %v4055
    %v4900 = vunpack.c.l.b16 %v4056
    %v4901 = vunpack.c.l.b16 %v4057
    %v4902 = vunpack.c.l.b16 %v4058
    %v4903 = vunpack.c.l.b16 %v4059
    %v4904 = vunpack.c.l.b16 %v4060
    %v4905 = vunpack.c.l.b16 %v4061
    %v4906 = vunpack.c.l.b16 %v4062
    %v4907 = vunpack.c.l.b16 %v4063
    %v4908 = vunpack.c.l.b16 %v4064
    %v4909 = vunpack.c.l.b16 %v4065
    %v4910 = vunpack.c.l.b16 %v4066
    %v4911 = vunpack.c.l.b16 %v4067
    %v4912 = vunpack.c.l.b16 %v4068
    %v4913 = vunpack.c.l.b16 %v4069
    %v4914 = vunpack.c.l.b16 %v4070
    %v4915 = vunpack.c.l.b16 %v4071
    %v4916 = vpack.c.b16 %v4789, %v4788
    %v4917 = vpack.c.b16 %v4791, %v4790
    %v4918 = vpack.c.b16 %v4793, %v4792
    %v4919 = vpack.c.b16 %v4795, %v4794
    %v4920 = vpack.c.b16 %v4797, %v4796
    %v4921 = vpack.c.b16 %v4799, %v4798
    %v4922 = vpack.c.b16 %v4801, %v4800
    %v4923 = vpack.c.b16 %v4803, %v4802
    %v4924 = vpack.c.b16 %v4805, %v4804
    %v4925 = vpack.c.b16 %v4807, %v4806
    %v4926 = vpack.c.b16 %v4809, %v4808
    %v4927 = vpack.c.b16 %v4811, %v4810
    %v4928 = vpack.c.b16 %v4813, %v4812
    %v4929 = vpack.c.b16 %v4815, %v4814
    %v4930 = vpack.c.b16 %v4817, %v4816
    %v4931 = vpack.c.b16 %v4819, %v4818
    %v4932 = vpack.c.b16 %v4821, %v4820
    %v4933 = vpack.c.b16 %v4823, %v4822
    %v4934 = vpack.c.b16 %v4825, %v4824
    %v4935 = vpack.c.b16 %v4827, %v4826
    %v4936 = vpack.c.b16 %v4829, %v4828
    %v4937 = vpack.c.b16 %v4831, %v4830
    %v4938 = vpack.c.b16 %v4833, %v4832
    %v4939 = vpack.c.b16 %v4835, %v4834
    %v4940 = vpack.c.b16 %v4837, %v4836
    %v4941 = vpack.c.b16 %v4839, %v4838
    %v4942 = vpack.c.b16 %v4841, %v4840
    %v4943 = vpack.c.b16 %v4843, %v4842
    %v4944 = vpack.c.b16 %v4845, %v4844
    %v4945 = vpack.c.b16 %v4847, %v4846
    %v4946 = vpack.c.b16 %v4849, %v4848
    %v4947 = vpack.c.b16 %v4851, %v4850
    %v4948 = vpack.c.b16 %v4853, %v4852
    %v4949 = vpack.c.b16 %v4855, %v4854
    %v4950 = vpack.c.b16 %v4857, %v4856
    %v4951 = vpack.c.b16 %v4859, %v4858
    %v4952 = vpack.c.b16 %v4861, %v4860
    %v4953 = vpack.c.b16 %v4863, %v4862
    %v4954 = vpack.c.b16 %v4865, %v4864
    %v4955 = vpack.c.b16 %v4867, %v4866
    %v4956 = vpack.c.b16 %v4869, %v4868
    %v4957 = vpack.c.b16 %v4871, %v4870
    %v4958 = vpack.c.b16 %v4873, %v4872
    %v4959 = vpack.c.b16 %v4875, %v4874
    %v4960 = vpack.c.b16 %v4877, %v4876
    %v4961 = vpack.c.b16 %v4879, %v4878
    %v4962 = vpack.c.b16 %v4881, %v4880
    %v4963 = vpack.c.b16 %v4883, %v4882
    %v4964 = vpack.c.b16 %v4885, %v4884
    %v4965 = vpack.c.b16 %v4887, %v4886
    %v4966 = vpack.c.b16 %v4889, %v4888
    %v4967 = vpack.c.b16 %v4891, %v4890
    %v4968 = vpack.c.b16 %v4893, %v4892
    %v4969 = vpack.c.b16 %v4895, %v4894
    %v4970 = vpack.c.b16 %v4897, %v4896
    %v4971 = vpack.c.b16 %v4899, %v4898
    %v4972 = vpack.c.b16 %v4901, %v4900
    %v4973 = vpack.c.b16 %v4903, %v4902
    %v4974 = vpack.c.b16 %v4905, %v4904
    %v4975 = vpack.c.b16 %v4907, %v4906
    %v4976 = vpack.c.b16 %v4909, %v4908
    %v4977 = vpack.c.b16 %v4911, %v4910
    %v4978 = vpack.c.b16 %v4913, %v4912
    %v4979 = vpack.c.b16 %v4915, %v4914
    %5044 = vmatprep.subr.bf16.mxu0 0
    %5045 = vmatpush1.bf16.msra.mxu0 %v4923
    %5046 = vmatprep.subr.bf16.mxu0 0
    %5047 = vmatpush1.bf16.msra.mxu0 %v4922
    %5048 = vmatprep.subr.bf16.mxu0 0
    %5049 = vmatpush1.bf16.msra.mxu0 %v4921
    %5050 = vmatprep.subr.bf16.mxu0 0
    %5051 = vmatpush1.bf16.msra.mxu0 %v4920
    %5052 = vmatprep.subr.bf16.mxu0 0
    %5053 = vmatpush1.bf16.msra.mxu0 %v4919
    %5054 = vmatprep.subr.bf16.mxu0 0
    %5055 = vmatpush1.bf16.msra.mxu0 %v4918
    %5056 = vmatprep.subr.bf16.mxu0 0
    %5057 = vmatpush1.bf16.msra.mxu0 %v4917
    %5058 = vmatprep.subr.bf16.mxu0 0
    %5059 = vmatpush1.bf16.msra.mxu0 %v4916
    %5060 = vmatprep.subr.bf16.mxu0 0
    %5061 = vmatpush2.bf16.msra.mxu0 %v4931
    %5062 = vmatprep.subr.bf16.mxu0 0
    %5063 = vmatpush2.bf16.msra.mxu0 %v4930
    %5064 = vmatprep.subr.bf16.mxu0 0
    %5065 = vmatpush2.bf16.msra.mxu0 %v4929
    %5066 = vmatprep.subr.bf16.mxu0 0
    %5067 = vmatpush2.bf16.msra.mxu0 %v4928
    %5068 = vmatprep.subr.bf16.mxu0 0
    %5069 = vmatpush2.bf16.msra.mxu0 %v4927
    %5070 = vmatprep.subr.bf16.mxu0 0
    %5071 = vmatpush2.bf16.msra.mxu0 %v4926
    %5072 = vmatprep.subr.bf16.mxu0 0
    %5073 = vmatpush2.bf16.msra.mxu0 %v4925
    %5074 = vmatprep.subr.bf16.mxu0 0
    %5075 = vmatpush2.bf16.msra.mxu0 %v4924
    %5076 = vmatprep.mubr.bf16.mxu0 %v4646
    %5077 = vmatmul.mubr.bf16.gmra.mxu0 %v4645
    %v5078 = vpop.f32.mrf.mxu0
    %v5079 = vadd.f32 %v4658, %v5078
    %v5080 = vpop.f32.mrf.mxu0
    %v5081 = vpop.f32.mrf.mxu0
    %v5082 = vadd.f32 %v4658, %v5081
    %v5083 = vpop.f32.mrf.mxu0
    %5084 = vdwg.mxu0
    %5085 = vmatprep.subr.bf16.mxu0 0
    %5086 = vmatpush1.bf16.msra.mxu0 %v4939
    %5087 = vmatprep.subr.bf16.mxu0 0
    %5088 = vmatpush1.bf16.msra.mxu0 %v4938
    %5089 = vmatprep.subr.bf16.mxu0 0
    %5090 = vmatpush1.bf16.msra.mxu0 %v4937
    %5091 = vmatprep.subr.bf16.mxu0 0
    %5092 = vmatpush1.bf16.msra.mxu0 %v4936
    %5093 = vmatprep.subr.bf16.mxu0 0
    %5094 = vmatpush1.bf16.msra.mxu0 %v4935
    %5095 = vmatprep.subr.bf16.mxu0 0
    %5096 = vmatpush1.bf16.msra.mxu0 %v4934
    %5097 = vmatprep.subr.bf16.mxu0 0
    %5098 = vmatpush1.bf16.msra.mxu0 %v4933
    %5099 = vmatprep.subr.bf16.mxu0 0
    %5100 = vmatpush1.bf16.msra.mxu0 %v4932
    %5101 = vmatprep.subr.bf16.mxu0 0
    %5102 = vmatpush2.bf16.msra.mxu0 %v4947
    %5103 = vmatprep.subr.bf16.mxu0 0
    %5104 = vmatpush2.bf16.msra.mxu0 %v4946
    %5105 = vmatprep.subr.bf16.mxu0 0
    %5106 = vmatpush2.bf16.msra.mxu0 %v4945
    %5107 = vmatprep.subr.bf16.mxu0 0
    %5108 = vmatpush2.bf16.msra.mxu0 %v4944
    %5109 = vmatprep.subr.bf16.mxu0 0
    %5110 = vmatpush2.bf16.msra.mxu0 %v4943
    %5111 = vmatprep.subr.bf16.mxu0 0
    %5112 = vmatpush2.bf16.msra.mxu0 %v4942
    %5113 = vmatprep.subr.bf16.mxu0 0
    %5114 = vmatpush2.bf16.msra.mxu0 %v4941
    %5115 = vmatprep.subr.bf16.mxu0 0
    %5116 = vmatpush2.bf16.msra.mxu0 %v4940
    %5117 = vmatprep.mubr.bf16.mxu0 %v4648
    %5118 = vmatmul.mubr.bf16.gmra.mxu0 %v4647
    %v5119 = vpop.f32.mrf.mxu0
    %v5120 = vadd.f32 %v5079, %v5119
    %v5121 = vpop.f32.mrf.mxu0
    %v5122 = vpop.f32.mrf.mxu0
    %v5123 = vadd.f32 %v5082, %v5122
    %v5124 = vpop.f32.mrf.mxu0
    %5125 = vdwg.mxu0
    %5126 = vmatprep.subr.bf16.mxu0 0
    %5127 = vmatpush1.bf16.msra.mxu0 %v4955
    %5128 = vmatprep.subr.bf16.mxu0 0
    %5129 = vmatpush1.bf16.msra.mxu0 %v4954
    %5130 = vmatprep.subr.bf16.mxu0 0
    %5131 = vmatpush1.bf16.msra.mxu0 %v4953
    %5132 = vmatprep.subr.bf16.mxu0 0
    %5133 = vmatpush1.bf16.msra.mxu0 %v4952
    %5134 = vmatprep.subr.bf16.mxu0 0
    %5135 = vmatpush1.bf16.msra.mxu0 %v4951
    %5136 = vmatprep.subr.bf16.mxu0 0
    %5137 = vmatpush1.bf16.msra.mxu0 %v4950
    %5138 = vmatprep.subr.bf16.mxu0 0
    %5139 = vmatpush1.bf16.msra.mxu0 %v4949
    %5140 = vmatprep.subr.bf16.mxu0 0
    %5141 = vmatpush1.bf16.msra.mxu0 %v4948
    %5142 = vmatprep.subr.bf16.mxu0 0
    %5143 = vmatpush2.bf16.msra.mxu0 %v4963
    %5144 = vmatprep.subr.bf16.mxu0 0
    %5145 = vmatpush2.bf16.msra.mxu0 %v4962
    %5146 = vmatprep.subr.bf16.mxu0 0
    %5147 = vmatpush2.bf16.msra.mxu0 %v4961
    %5148 = vmatprep.subr.bf16.mxu0 0
    %5149 = vmatpush2.bf16.msra.mxu0 %v4960
    %5150 = vmatprep.subr.bf16.mxu0 0
    %5151 = vmatpush2.bf16.msra.mxu0 %v4959
    %5152 = vmatprep.subr.bf16.mxu0 0
    %5153 = vmatpush2.bf16.msra.mxu0 %v4958
    %5154 = vmatprep.subr.bf16.mxu0 0
    %5155 = vmatpush2.bf16.msra.mxu0 %v4957
    %5156 = vmatprep.subr.bf16.mxu0 0
    %5157 = vmatpush2.bf16.msra.mxu0 %v4956
    %5158 = vmatprep.mubr.bf16.mxu0 %v4650
    %5159 = vmatmul.mubr.bf16.gmra.mxu0 %v4649
    %v5160 = vpop.f32.mrf.mxu0
    %v5161 = vadd.f32 %v5120, %v5160
    %v5162 = vpop.f32.mrf.mxu0
    %v5163 = vpop.f32.mrf.mxu0
    %v5164 = vadd.f32 %v5123, %v5163
    %v5165 = vpop.f32.mrf.mxu0
    %5166 = vdwg.mxu0
    %5167 = vmatprep.subr.bf16.mxu0 0
    %5168 = vmatpush1.bf16.msra.mxu0 %v4971
    %5169 = vmatprep.subr.bf16.mxu0 0
    %5170 = vmatpush1.bf16.msra.mxu0 %v4970
    %5171 = vmatprep.subr.bf16.mxu0 0
    %5172 = vmatpush1.bf16.msra.mxu0 %v4969
    %5173 = vmatprep.subr.bf16.mxu0 0
    %5174 = vmatpush1.bf16.msra.mxu0 %v4968
    %5175 = vmatprep.subr.bf16.mxu0 0
    %5176 = vmatpush1.bf16.msra.mxu0 %v4967
    %5177 = vmatprep.subr.bf16.mxu0 0
    %5178 = vmatpush1.bf16.msra.mxu0 %v4966
    %5179 = vmatprep.subr.bf16.mxu0 0
    %5180 = vmatpush1.bf16.msra.mxu0 %v4965
    %5181 = vmatprep.subr.bf16.mxu0 0
    %5182 = vmatpush1.bf16.msra.mxu0 %v4964
    %5183 = vmatprep.subr.bf16.mxu0 0
    %5184 = vmatpush2.bf16.msra.mxu0 %v4979
    %5185 = vmatprep.subr.bf16.mxu0 0
    %5186 = vmatpush2.bf16.msra.mxu0 %v4978
    %5187 = vmatprep.subr.bf16.mxu0 0
    %5188 = vmatpush2.bf16.msra.mxu0 %v4977
    %5189 = vmatprep.subr.bf16.mxu0 0
    %5190 = vmatpush2.bf16.msra.mxu0 %v4976
    %5191 = vmatprep.subr.bf16.mxu0 0
    %5192 = vmatpush2.bf16.msra.mxu0 %v4975
    %5193 = vmatprep.subr.bf16.mxu0 0
    %5194 = vmatpush2.bf16.msra.mxu0 %v4974
    %5195 = vmatprep.subr.bf16.mxu0 0
    %5196 = vmatpush2.bf16.msra.mxu0 %v4973
    %5197 = vmatprep.subr.bf16.mxu0 0
    %5198 = vmatpush2.bf16.msra.mxu0 %v4972
    %5199 = vmatprep.mubr.bf16.mxu0 %v4652
    %5200 = vmatmul.mubr.bf16.gmra.mxu0 %v4651
    %v5201 = vpop.f32.mrf.mxu0
    %v5202 = vadd.f32 %v5161, %v5201
    %v5203 = vpop.f32.mrf.mxu0
    %v5204 = vpop.f32.mrf.mxu0
    %v5205 = vadd.f32 %v5164, %v5204
    %v5206 = vpop.f32.mrf.mxu0
    %5207 = vdwg.mxu0
    %v5208 = vld [vmem:[#allocation11] sm:$0xff]
    %v5209 = vld [vmem:[#allocation11 + $0x8] sm:$0xff]
    %v5210 = vld [vmem:[#allocation11 + $0x10] sm:$0xff]
    %v5211 = vld [vmem:[#allocation11 + $0x18] sm:$0xff]
    %v5212 = vld [vmem:[#allocation11 + $0x20] sm:$0xff]
    %v5213 = vld [vmem:[#allocation11 + $0x28] sm:$0xff]
    %v5214 = vld [vmem:[#allocation11 + $0x30] sm:$0xff]
    %v5215 = vld [vmem:[#allocation11 + $0x38] sm:$0xff]
    %v5216 = vld [vmem:[%s14] sm:$0x1]
    %v5218 = vlaneseq
    %v5219 = vshrl.u32 %v5218, 7
    %v5220 = vsub.s32 0, %v5219
    %v5221 = vrot.slane %v5216, %v5220
    %v5224 = vsel %vm329, %v5202, 0
    %v5227 = vsel %vm329, %v5205, 0
    %5229 = vmatprep.subr.mxu0 0.0
    %5230 = vmatpush1.msra.mxu0 0.0
    %5231 = vmatprep.subr.mxu0 0.0
    %5232 = vmatpush1.msra.mxu0 0.0
    %5233 = vmatprep.subr.mxu0 0.0
    %5234 = vmatpush1.msra.mxu0 0.0
    %5235 = vmatprep.subr.mxu0 0.0
    %5236 = vmatpush1.msra.mxu0 0.0
    %5237 = vmatprep.subr.mxu0 0.0
    %5238 = vmatpush1.msra.mxu0 0.0
    %5239 = vmatprep.subr.mxu0 0.0
    %5240 = vmatpush1.msra.mxu0 0.0
    %5241 = vmatprep.subr.mxu0 0.0
    %5242 = vmatpush1.msra.mxu0 0.0
    %5243 = vmatprep.subr.mxu0 0.0
    %5244 = vmatpush1.msra.mxu0 0.0
    %5245 = vmatprep.subr.mxu0 0.0
    %5246 = vmatpush1.msra.mxu0 %v5215
    %5247 = vmatprep.subr.mxu0 0.0
    %5248 = vmatpush1.msra.mxu0 %v5214
    %5249 = vmatprep.subr.mxu0 0.0
    %5250 = vmatpush1.msra.mxu0 %v5213
    %5251 = vmatprep.subr.mxu0 0.0
    %5252 = vmatpush1.msra.mxu0 %v5212
    %5253 = vmatprep.subr.mxu0 0.0
    %5254 = vmatpush1.msra.mxu0 %v5211
    %5255 = vmatprep.subr.mxu0 0.0
    %5256 = vmatpush1.msra.mxu0 %v5210
    %5257 = vmatprep.subr.mxu0 0.0
    %5258 = vmatpush1.msra.mxu0 %v5209
    %5259 = vmatprep.subr.mxu0 0.0
    %5260 = vmatpush1.msra.mxu0 %v5208
    %5261 = vmatprep.subr.mxu0 0.0
    %5262 = vmatpush2.msra.mxu0 0.0
    %5263 = vmatprep.subr.mxu0 0.0
    %5264 = vmatpush2.msra.mxu0 0.0
    %5265 = vmatprep.subr.mxu0 0.0
    %5266 = vmatpush2.msra.mxu0 0.0
    %5267 = vmatprep.subr.mxu0 0.0
    %5268 = vmatpush2.msra.mxu0 0.0
    %5269 = vmatprep.subr.mxu0 0.0
    %5270 = vmatpush2.msra.mxu0 0.0
    %5271 = vmatprep.subr.mxu0 0.0
    %5272 = vmatpush2.msra.mxu0 0.0
    %5273 = vmatprep.subr.mxu0 0.0
    %5274 = vmatpush2.msra.mxu0 0.0
    %5275 = vmatprep.subr.mxu0 0.0
    %5276 = vmatpush2.msra.mxu0 0.0
    %5277 = vmatprep.subr.mxu0 0.0
    %5278 = vmatpush2.msra.mxu0 0.0
    %5279 = vmatprep.subr.mxu0 0.0
    %5280 = vmatpush2.msra.mxu0 0.0
    %5281 = vmatprep.subr.mxu0 0.0
    %5282 = vmatpush2.msra.mxu0 0.0
    %5283 = vmatprep.subr.mxu0 0.0
    %5284 = vmatpush2.msra.mxu0 0.0
    %5285 = vmatprep.subr.mxu0 0.0
    %5286 = vmatpush2.msra.mxu0 0.0
    %5287 = vmatprep.subr.mxu0 0.0
    %5288 = vmatpush2.msra.mxu0 0.0
    %5289 = vmatprep.subr.mxu0 0.0
    %5290 = vmatpush2.msra.mxu0 0.0
    %5291 = vmatprep.subr.mxu0 0.0
    %5292 = vmatpush2.msra.mxu0 0.0
    %5293 = vmatprep.mubr.f32.mxu0 0.0
    %5294 = vmatmul.mubr.f32.gmra.mxu0 %v5224
    %v5295 = vpop.f32.mrf.mxu0
    %v5296 = vadd.f32 %v5221, %v5295
    %v5297 = vpop.f32.mrf.mxu0
    %5298 = vmatprep.mubr.f32.mxu0 0.0
    %5299 = vmatmul.mubr.f32.gmra.mxu0 %v5227
    %v5300 = vpop.f32.mrf.mxu0
    %v5301 = vadd.f32 %v5221, %v5300
    %v5302 = vpop.f32.mrf.mxu0
    %5303 = vdwg.mxu0
    %5304 = vmax.xlane.f32.xlu0 %v5296
    %v5305 = vpop.xlane.xlu0 %5304
    %5306 = vmax.xlane.f32.xlu0 %v5301
    %v5307 = vpop.xlane.xlu0 %5306
    %v5308 = vsub.f32 %v5296, %v5305
    %v5309 = vsub.f32 %v5301, %v5307
    %v5310 = vmul.f32 %v5308, 1.442695
    %v5311 = vpow.pop %v5310
    %v5312 = vmul.f32 %v5309, 1.442695
    %v5313 = vpow.pop %v5312
    %5314 = vadd.xlane.f32.xlu0 %v5311
    %v5315 = vpop.xlane.xlu0 %5314
    %5316 = vadd.xlane.f32.xlu0 %v5313
    %v5317 = vpop.xlane.xlu0 %5316
    %v5318 = vrcp.pop %v5315
    %v5319 = vmul.f32 %v5311, %v5318
    %v5320 = vrcp.pop %v5317
    %v5321 = vmul.f32 %v5313, %v5320
    %5322 = vst [vmem:[#allocation12] sm:$0xff] %v5319
    %5323 = vst [vmem:[#allocation12 + $0x8] sm:$0xff] %v5321
    // Predicated region
    $region104: #{tpu_custom_call.1} parent=1 // pred_check
      _
    $region105: #{tpu_custom_call.1} parent=1 // pred_check_branch
      %5325 = sbr.rel (0) target = $region107
    $region106: #{tpu_custom_call.1} parent=1 // pred_region
      %s5327 = ssub.s32 256, 256
      %5328 = vsyncadd [#allocation8], %s5327
      %s5329 = sshll.u32 [#allocation12], 4
      %s5330 = int_to_ptr.vmem [resolvable:$true] %s5329
      %5335 = dma.vmem_to_hbm [thread:$0]  %s5330, 256, %s15, [#allocation8], 128, 128, 8
    $region107: #{tpu_custom_call.1} parent=1 // pred_fallthru
      _
    // Predicated region
    $region108: #{tpu_custom_call.1} parent=1 // pred_check
      _
    $region109: #{tpu_custom_call.1} parent=1 // pred_check_branch
      %5337 = sbr.rel (0) target = $region111
    $region110: #{tpu_custom_call.1} parent=1 // pred_region
      %5338 = dma.done [#allocation8], 256
    $region111: #{tpu_custom_call.1} parent=1 // pred_fallthru
      _
    %5339 = vsyncpa [#allocation7], 1
    %5340 = vsyncpa [#allocation10], 1
    %5341 = vsyncpa [#allocation8], 1
  %5342 = vsyncmov [#allocation5]
  %s5343 = vpop.sfrf %5342
  %p5344 = scmp.eq.s32.totalorder %s5343, 0
  %p5345 = pneg %p5344
  %5347 = shalt.err (%p5345)
  %s5348 = scalar_lea.sflag [#allocation5], 1
  %5349 = vsyncmov %s5348
  %s5350 = vpop.sfrf %5349
  %p5351 = scmp.eq.s32.totalorder %s5350, 0
  %p5352 = pneg %p5351
  %5354 = shalt.err (%p5352)

</llo_original>
